<compile_context>
chip_gen: v6e
topology: v6e:2x2x1
jax: 0.10.0
libtpu: 0.0.40
codegen_flags: <defaults>
</compile_context>

<pallas_src>
import functools

import jax
import jax.numpy as jnp
from jax.experimental import pallas as pl
from jax.experimental.pallas import tpu as pltpu


# --------------------------------------------------------------------------------------
# In-kernel helpers (operate on VMEM-resident values)
# --------------------------------------------------------------------------------------
def _shifted_window(xpad, ky, kx, ho, wo, stride):
    """Tap (ky, kx) of a 3x3/stride-s conv over a padded (Hp, Wp, C) activation."""
    if stride == 1:
        return xpad[ky:ky + ho, kx:kx + wo, :]
    return xpad[ky:ky + stride * ho:stride, kx:kx + stride * wo:stride, :]


def _conv3x3_mxu(xpad, w, ho, wo, stride):
    """3x3 conv (padding already applied) as 9 shifted-window MXU matmuls.

    Accumulates in a local f32 value — no scratch-ref round trips.
    xpad: (Hp, Wp, Cin) value; w: (3, 3, Cin, Cout) value.  Returns (ho*wo, Cout) f32.
    """
    cin = xpad.shape[-1]
    acc = None
    for ky in range(3):
        for kx in range(3):
            patch = _shifted_window(xpad, ky, kx, ho, wo, stride).reshape(ho * wo, cin)
            tap = jnp.dot(patch, w[ky, kx], preferred_element_type=jnp.float32)
            acc = tap if acc is None else acc + tap
    return acc


# --------------------------------------------------------------------------------------
# Fused BasicBlock kernel (one batch element per grid step)
# --------------------------------------------------------------------------------------
def _basic_block_kernel(x_ref, w1_ref, s1_ref, b1_ref, w2_ref, s2_ref, b2_ref,
                        *rest, stride, has_proj):
    if has_proj:
        ws_ref, ss_ref, bs_ref, o_ref, pad_ref = rest
    else:
        o_ref, pad_ref = rest

    _, ho, wo, cm = o_ref.shape
    xpad = x_ref[0]                                        # (H+2, W+2, Cin) in VMEM

    # ---- conv1 (3x3, stride, pad=1, no bias) + folded BN1 + ReLU ----
    h1 = _conv3x3_mxu(xpad, w1_ref[...], ho, wo, stride)   # (ho*wo, cm) f32
    h1 = jnp.maximum(h1 * s1_ref[...] + b1_ref[...], 0.0)

    # ---- re-pad the intermediate inside VMEM for conv2 (stride 1, pad 1) ----
    pad_ref[...] = jnp.zeros_like(pad_ref)                 # cheap; keeps border zero
    pad_ref[1:ho + 1, 1:wo + 1, :] = h1.reshape(ho, wo, cm)

    # ---- conv2 (3x3, stride 1, pad=1, no bias) + folded BN2 (ReLU deferred) ----
    h2 = _conv3x3_mxu(pad_ref[...], w2_ref[...], ho, wo, 1)
    h2 = h2 * s2_ref[...] + b2_ref[...]

    # ---- shortcut branch ----
    xs = _shifted_window(xpad, 1, 1, ho, wo, stride)       # center crop of unpadded x
    if has_proj:
        sc = jnp.dot(xs.reshape(ho * wo, xpad.shape[-1]), ws_ref[...],
                     preferred_element_type=jnp.float32)   # 1x1 conv on the MXU
        sc = sc * ss_ref[...] + bs_ref[...]                 # folded shortcut BN
    else:
        sc = xs.reshape(ho * wo, cm).astype(jnp.float32)    # identity shortcut

    out = jnp.maximum(h2 + sc, 0.0)                         # residual add + final ReLU
    o_ref[...] = out.reshape(1, ho, wo, cm).astype(o_ref.dtype)


# --------------------------------------------------------------------------------------
# Host-side wrapper
# --------------------------------------------------------------------------------------
def _fold_bn(bn, eps=1e-5):
    # TODO(synk): training-mode BatchNorm (batch statistics) not implemented;
    # eval-mode running-stats BN is folded into per-channel scale/shift.
    scale = bn["gamma"] / jnp.sqrt(bn["var"] + eps)
    shift = bn["beta"] - bn["mean"] * scale
    c = scale.shape[0]
    return scale.reshape(1, c).astype(jnp.float32), shift.reshape(1, c).astype(jnp.float32)


def basic_block_forward(params, x_nchw, *, stride=1, eps=1e-5):
    """ResNet BasicBlock forward.  x_nchw: (N, Cin, H, W) like PyTorch; returns NCHW."""
    x = jnp.transpose(x_nchw, (0, 2, 3, 1)).astype(jnp.float32)     # NCHW -> NHWC
    n, h, w, cin = x.shape
    cm = params["conv1_w"].shape[-1]
    ho = (h + 2 - 3) // stride + 1
    wo = (w + 2 - 3) // stride + 1
    has_proj = (stride != 1) or (cin != cm)

    xp = jnp.pad(x, ((0, 0), (1, 1), (1, 1), (0, 0)))               # padding=1 (glue)

    s1, b1 = _fold_bn(params["bn1"], eps)
    s2, b2 = _fold_bn(params["bn2"], eps)

    inputs = [xp, params["conv1_w"], s1, b1, params["conv2_w"], s2, b2]
    in_specs = [
        pl.BlockSpec((1, h + 2, w + 2, cin), lambda i: (i, 0, 0, 0)),
        pl.BlockSpec((3, 3, cin, cm), lambda i: (0, 0, 0, 0)),
        pl.BlockSpec((1, cm), lambda i: (0, 0)),
        pl.BlockSpec((1, cm), lambda i: (0, 0)),
        pl.BlockSpec((3, 3, cm, cm), lambda i: (0, 0, 0, 0)),
        pl.BlockSpec((1, cm), lambda i: (0, 0)),
        pl.BlockSpec((1, cm), lambda i: (0, 0)),
    ]
    if has_proj:
        ss, bs = _fold_bn(params["bns"], eps)
        ws = params["convs_w"].reshape(cin, cm)                      # 1x1 conv as matmul
        inputs += [ws, ss, bs]
        in_specs += [
            pl.BlockSpec((cin, cm), lambda i: (0, 0)),
            pl.BlockSpec((1, cm), lambda i: (0, 0)),
            pl.BlockSpec((1, cm), lambda i: (0, 0)),
        ]

    kernel = functools.partial(_basic_block_kernel, stride=stride, has_proj=has_proj)
    out_nhwc = pl.pallas_call(
        kernel,
        out_shape=jax.ShapeDtypeStruct((n, ho, wo, cm), jnp.float32),
        grid_spec=pltpu.PrefetchScalarGridSpec(
            num_scalar_prefetch=0,
            grid=(n,),
            in_specs=in_specs,
            out_specs=pl.BlockSpec((1, ho, wo, cm), lambda i: (i, 0, 0, 0)),
            scratch_shapes=[pltpu.VMEM((ho + 2, wo + 2, cm), jnp.float32)],
        ),
        compiler_params=pltpu.CompilerParams(dimension_semantics=("parallel",)),
    )(*inputs)
    return jnp.transpose(out_nhwc, (0, 3, 1, 2))                     # NHWC -> NCHW


# --------------------------------------------------------------------------------------
# Parameter init + pure-JAX reference (for correctness check only)
# --------------------------------------------------------------------------------------
def init_params(key, in_planes, planes, stride):
    def bn_params(k, c):
        k1, k2, k3, k4 = jax.random.split(k, 4)
        return {
            "gamma": jax.random.uniform(k1, (c,), jnp.float32, 0.5, 1.5),
            "beta": 0.1 * jax.random.normal(k2, (c,), jnp.float32),
            "mean": 0.1 * jax.random.normal(k3, (c,), jnp.float32),
            "var": jax.random.uniform(k4, (c,), jnp.float32, 0.5, 1.5),
        }

    ks = jax.random.split(key, 6)
    p = {
        "conv1_w": jax.random.normal(ks[0], (3, 3, in_planes, planes), jnp.float32)
                   * (2.0 / (9 * in_planes)) ** 0.5,
        "bn1": bn_params(ks[1], planes),
        "conv2_w": jax.random.normal(ks[2], (3, 3, planes, planes), jnp.float32)
                   * (2.0 / (9 * planes)) ** 0.5,
        "bn2": bn_params(ks[3], planes),
    }
    if stride != 1 or in_planes != planes:
        p["convs_w"] = jax.random.normal(ks[4], (1, 1, in_planes, planes), jnp.float32) \
                       * (2.0 / in_planes) ** 0.5
        p["bns"] = bn_params(ks[5], planes)
    return p


def _reference_forward(params, x_nchw, stride, eps=1e-5):
    x = jnp.transpose(x_nchw, (0, 2, 3, 1)).astype(jnp.float32)

    def conv(a, w, s, pad):
        return jax.lax.conv_general_dilated(
            a, w, (s, s), ((pad, pad), (pad, pad)),
            dimension_numbers=("NHWC", "HWIO", "NHWC"),
            precision=jax.lax.Precision.HIGHEST)

    def bn(a, p):
        sc = p["gamma"] / jnp.sqrt(p["var"] + eps)
        return a * sc + (p["beta"] - p["mean"] * sc)

    out = jax.nn.relu(bn(conv(x, params["conv1_w"], stride, 1), params["bn1"]))
    out = bn(conv(out, params["conv2_w"], 1, 1), params["bn2"])
    if "convs_w" in params:
        sc = bn(conv(x, params["convs_w"], stride, 0), params["bns"])
    else:
        sc = x
    out = jax.nn.relu(out + sc)
    return jnp.transpose(out, (0, 3, 1, 2))


# --------------------------------------------------------------------------------------
if __name__ == "__main__":
    key = jax.random.PRNGKey(0)
    k_x, k_p = jax.random.split(key)

    # Small shapes: batch=2, in_planes=32 -> planes=64, spatial 16x16, stride=1.
    # in_planes != planes exercises the 1x1-conv + BN projection shortcut.
    N, C_IN, H, W = 2, 32, 16, 16
    PLANES, STRIDE = 64, 1

    x = jax.random.normal(k_x, (N, C_IN, H, W), jnp.float32)         # NCHW, like PyTorch
    params = init_params(k_p, C_IN, PLANES, STRIDE)

    out = basic_block_forward(params, x, stride=STRIDE)
    out = jax.block_until_ready(out)

    assert out.shape == (N, PLANES, H // STRIDE, W // STRIDE), out.shape
    assert bool(jnp.all(jnp.isfinite(out)))

    ref = _reference_forward(params, x, STRIDE)
    err = float(jnp.max(jnp.abs(out - ref)))
    assert err < 5e-2, f"max abs error vs reference: {err}"

    print("KERNEL_OK")
</pallas_src>

<mosaic_0001>
module attributes {stable_mosaic.version = 11 : i64} {
  func.func @_basic_block_kernel(%arg0: i32, %arg1: memref<1x18x18x32xf32, #tpu.memory_space<vmem>>, %arg2: memref<3x3x32x64xf32, #tpu.memory_space<vmem>>, %arg3: memref<1x64xf32, #tpu.memory_space<vmem>>, %arg4: memref<1x64xf32, #tpu.memory_space<vmem>>, %arg5: memref<3x3x64x64xf32, #tpu.memory_space<vmem>>, %arg6: memref<1x64xf32, #tpu.memory_space<vmem>>, %arg7: memref<1x64xf32, #tpu.memory_space<vmem>>, %arg8: memref<32x64xf32, #tpu.memory_space<vmem>>, %arg9: memref<1x64xf32, #tpu.memory_space<vmem>>, %arg10: memref<1x64xf32, #tpu.memory_space<vmem>>, %arg11: memref<1x16x16x64xf32, #tpu.memory_space<vmem>>, %arg12: memref<18x18x64xf32, #tpu.memory_space<vmem>>) attributes {dimension_semantics = [#tpu.dimension_semantics<parallel>], iteration_bounds = array<i64: 2>, scalar_prefetch = 0 : i64, scratch_operands = 1 : i64, tpu.core_type = #tpu.core_type<tc>, window_params = [{transform_indices = @transform_0, window_bounds = array<i64: 1, 18, 18, 32>}, {pipeline_mode = #tpu.pipeline_mode<synchronous>, transform_indices = @transform_1, window_bounds = array<i64: 3, 3, 32, 64>}, {pipeline_mode = #tpu.pipeline_mode<synchronous>, transform_indices = @transform_2, window_bounds = array<i64: 1, 64>}, {pipeline_mode = #tpu.pipeline_mode<synchronous>, transform_indices = @transform_3, window_bounds = array<i64: 1, 64>}, {pipeline_mode = #tpu.pipeline_mode<synchronous>, transform_indices = @transform_4, window_bounds = array<i64: 3, 3, 64, 64>}, {pipeline_mode = #tpu.pipeline_mode<synchronous>, transform_indices = @transform_5, window_bounds = array<i64: 1, 64>}, {pipeline_mode = #tpu.pipeline_mode<synchronous>, transform_indices = @transform_6, window_bounds = array<i64: 1, 64>}, {pipeline_mode = #tpu.pipeline_mode<synchronous>, transform_indices = @transform_7, window_bounds = array<i64: 32, 64>}, {pipeline_mode = #tpu.pipeline_mode<synchronous>, transform_indices = @transform_8, window_bounds = array<i64: 1, 64>}, {pipeline_mode = #tpu.pipeline_mode<synchronous>, transform_indices = @transform_9, window_bounds = array<i64: 1, 64>}, {transform_indices = @transform_10, window_bounds = array<i64: 1, 16, 16, 64>}]} {
    %c0 = arith.constant 0 : index
    %c0_0 = arith.constant 0 : index
    %c0_1 = arith.constant 0 : index
    %c0_2 = arith.constant 0 : index
    %0 = vector.load %arg1[%c0, %c0_0, %c0_1, %c0_2] : memref<1x18x18x32xf32, #tpu.memory_space<vmem>>, vector<1x18x18x32xf32>
    %1 = vector.shape_cast %0 : vector<1x18x18x32xf32> to vector<18x18x32xf32>
    %c0_3 = arith.constant 0 : index
    %c0_4 = arith.constant 0 : index
    %c0_5 = arith.constant 0 : index
    %c0_6 = arith.constant 0 : index
    %2 = vector.load %arg2[%c0_3, %c0_4, %c0_5, %c0_6] : memref<3x3x32x64xf32, #tpu.memory_space<vmem>>, vector<3x3x32x64xf32>
    %3 = vector.extract_strided_slice %1 {offsets = [0, 0, 0], sizes = [16, 16, 32], strides = [1, 1, 1]} : vector<18x18x32xf32> to vector<16x16x32xf32>
    %4 = vector.shape_cast %3 : vector<16x16x32xf32> to vector<256x32xf32>
    %5 = vector.extract_strided_slice %2 {offsets = [0, 0, 0, 0], sizes = [1, 1, 32, 64], strides = [1, 1, 1, 1]} : vector<3x3x32x64xf32> to vector<1x1x32x64xf32>
    %6 = vector.shape_cast %5 : vector<1x1x32x64xf32> to vector<32x64xf32>
    %cst = arith.constant dense<0.000000e+00> : vector<256x64xf32>
    %7 = tpu.matmul %4, %6, %cst {dimension_numbers = #tpu.dot_dimension_numbers<[1], [0], [0], [1], [0, 0, 1, 1], [], []>} : vector<256x32xf32>, vector<32x64xf32>, vector<256x64xf32> -> vector<256x64xf32>
    %8 = vector.extract_strided_slice %1 {offsets = [0, 1, 0], sizes = [16, 16, 32], strides = [1, 1, 1]} : vector<18x18x32xf32> to vector<16x16x32xf32>
    %9 = vector.shape_cast %8 : vector<16x16x32xf32> to vector<256x32xf32>
    %10 = vector.extract_strided_slice %2 {offsets = [0, 1, 0, 0], sizes = [1, 1, 32, 64], strides = [1, 1, 1, 1]} : vector<3x3x32x64xf32> to vector<1x1x32x64xf32>
    %11 = vector.shape_cast %10 : vector<1x1x32x64xf32> to vector<32x64xf32>
    %cst_7 = arith.constant dense<0.000000e+00> : vector<256x64xf32>
    %12 = tpu.matmul %9, %11, %cst_7 {dimension_numbers = #tpu.dot_dimension_numbers<[1], [0], [0], [1], [0, 0, 1, 1], [], []>} : vector<256x32xf32>, vector<32x64xf32>, vector<256x64xf32> -> vector<256x64xf32>
    %13 = arith.addf %7, %12 : vector<256x64xf32>
    %14 = vector.extract_strided_slice %1 {offsets = [0, 2, 0], sizes = [16, 16, 32], strides = [1, 1, 1]} : vector<18x18x32xf32> to vector<16x16x32xf32>
    %15 = vector.shape_cast %14 : vector<16x16x32xf32> to vector<256x32xf32>
    %16 = vector.extract_strided_slice %2 {offsets = [0, 2, 0, 0], sizes = [1, 1, 32, 64], strides = [1, 1, 1, 1]} : vector<3x3x32x64xf32> to vector<1x1x32x64xf32>
    %17 = vector.shape_cast %16 : vector<1x1x32x64xf32> to vector<32x64xf32>
    %cst_8 = arith.constant dense<0.000000e+00> : vector<256x64xf32>
    %18 = tpu.matmul %15, %17, %cst_8 {dimension_numbers = #tpu.dot_dimension_numbers<[1], [0], [0], [1], [0, 0, 1, 1], [], []>} : vector<256x32xf32>, vector<32x64xf32>, vector<256x64xf32> -> vector<256x64xf32>
    %19 = arith.addf %13, %18 : vector<256x64xf32>
    %20 = vector.extract_strided_slice %1 {offsets = [1, 0, 0], sizes = [16, 16, 32], strides = [1, 1, 1]} : vector<18x18x32xf32> to vector<16x16x32xf32>
    %21 = vector.shape_cast %20 : vector<16x16x32xf32> to vector<256x32xf32>
    %22 = vector.extract_strided_slice %2 {offsets = [1, 0, 0, 0], sizes = [1, 1, 32, 64], strides = [1, 1, 1, 1]} : vector<3x3x32x64xf32> to vector<1x1x32x64xf32>
    %23 = vector.shape_cast %22 : vector<1x1x32x64xf32> to vector<32x64xf32>
    %cst_9 = arith.constant dense<0.000000e+00> : vector<256x64xf32>
    %24 = tpu.matmul %21, %23, %cst_9 {dimension_numbers = #tpu.dot_dimension_numbers<[1], [0], [0], [1], [0, 0, 1, 1], [], []>} : vector<256x32xf32>, vector<32x64xf32>, vector<256x64xf32> -> vector<256x64xf32>
    %25 = arith.addf %19, %24 : vector<256x64xf32>
    %26 = vector.extract_strided_slice %1 {offsets = [1, 1, 0], sizes = [16, 16, 32], strides = [1, 1, 1]} : vector<18x18x32xf32> to vector<16x16x32xf32>
    %27 = vector.shape_cast %26 : vector<16x16x32xf32> to vector<256x32xf32>
    %28 = vector.extract_strided_slice %2 {offsets = [1, 1, 0, 0], sizes = [1, 1, 32, 64], strides = [1, 1, 1, 1]} : vector<3x3x32x64xf32> to vector<1x1x32x64xf32>
    %29 = vector.shape_cast %28 : vector<1x1x32x64xf32> to vector<32x64xf32>
    %cst_10 = arith.constant dense<0.000000e+00> : vector<256x64xf32>
    %30 = tpu.matmul %27, %29, %cst_10 {dimension_numbers = #tpu.dot_dimension_numbers<[1], [0], [0], [1], [0, 0, 1, 1], [], []>} : vector<256x32xf32>, vector<32x64xf32>, vector<256x64xf32> -> vector<256x64xf32>
    %31 = arith.addf %25, %30 : vector<256x64xf32>
    %32 = vector.extract_strided_slice %1 {offsets = [1, 2, 0], sizes = [16, 16, 32], strides = [1, 1, 1]} : vector<18x18x32xf32> to vector<16x16x32xf32>
    %33 = vector.shape_cast %32 : vector<16x16x32xf32> to vector<256x32xf32>
    %34 = vector.extract_strided_slice %2 {offsets = [1, 2, 0, 0], sizes = [1, 1, 32, 64], strides = [1, 1, 1, 1]} : vector<3x3x32x64xf32> to vector<1x1x32x64xf32>
    %35 = vector.shape_cast %34 : vector<1x1x32x64xf32> to vector<32x64xf32>
    %cst_11 = arith.constant dense<0.000000e+00> : vector<256x64xf32>
    %36 = tpu.matmul %33, %35, %cst_11 {dimension_numbers = #tpu.dot_dimension_numbers<[1], [0], [0], [1], [0, 0, 1, 1], [], []>} : vector<256x32xf32>, vector<32x64xf32>, vector<256x64xf32> -> vector<256x64xf32>
    %37 = arith.addf %31, %36 : vector<256x64xf32>
    %38 = vector.extract_strided_slice %1 {offsets = [2, 0, 0], sizes = [16, 16, 32], strides = [1, 1, 1]} : vector<18x18x32xf32> to vector<16x16x32xf32>
    %39 = vector.shape_cast %38 : vector<16x16x32xf32> to vector<256x32xf32>
    %40 = vector.extract_strided_slice %2 {offsets = [2, 0, 0, 0], sizes = [1, 1, 32, 64], strides = [1, 1, 1, 1]} : vector<3x3x32x64xf32> to vector<1x1x32x64xf32>
    %41 = vector.shape_cast %40 : vector<1x1x32x64xf32> to vector<32x64xf32>
    %cst_12 = arith.constant dense<0.000000e+00> : vector<256x64xf32>
    %42 = tpu.matmul %39, %41, %cst_12 {dimension_numbers = #tpu.dot_dimension_numbers<[1], [0], [0], [1], [0, 0, 1, 1], [], []>} : vector<256x32xf32>, vector<32x64xf32>, vector<256x64xf32> -> vector<256x64xf32>
    %43 = arith.addf %37, %42 : vector<256x64xf32>
    %44 = vector.extract_strided_slice %1 {offsets = [2, 1, 0], sizes = [16, 16, 32], strides = [1, 1, 1]} : vector<18x18x32xf32> to vector<16x16x32xf32>
    %45 = vector.shape_cast %44 : vector<16x16x32xf32> to vector<256x32xf32>
    %46 = vector.extract_strided_slice %2 {offsets = [2, 1, 0, 0], sizes = [1, 1, 32, 64], strides = [1, 1, 1, 1]} : vector<3x3x32x64xf32> to vector<1x1x32x64xf32>
    %47 = vector.shape_cast %46 : vector<1x1x32x64xf32> to vector<32x64xf32>
    %cst_13 = arith.constant dense<0.000000e+00> : vector<256x64xf32>
    %48 = tpu.matmul %45, %47, %cst_13 {dimension_numbers = #tpu.dot_dimension_numbers<[1], [0], [0], [1], [0, 0, 1, 1], [], []>} : vector<256x32xf32>, vector<32x64xf32>, vector<256x64xf32> -> vector<256x64xf32>
    %49 = arith.addf %43, %48 : vector<256x64xf32>
    %50 = vector.extract_strided_slice %1 {offsets = [2, 2, 0], sizes = [16, 16, 32], strides = [1, 1, 1]} : vector<18x18x32xf32> to vector<16x16x32xf32>
    %51 = vector.shape_cast %50 : vector<16x16x32xf32> to vector<256x32xf32>
    %52 = vector.extract_strided_slice %2 {offsets = [2, 2, 0, 0], sizes = [1, 1, 32, 64], strides = [1, 1, 1, 1]} : vector<3x3x32x64xf32> to vector<1x1x32x64xf32>
    %53 = vector.shape_cast %52 : vector<1x1x32x64xf32> to vector<32x64xf32>
    %cst_14 = arith.constant dense<0.000000e+00> : vector<256x64xf32>
    %54 = tpu.matmul %51, %53, %cst_14 {dimension_numbers = #tpu.dot_dimension_numbers<[1], [0], [0], [1], [0, 0, 1, 1], [], []>} : vector<256x32xf32>, vector<32x64xf32>, vector<256x64xf32> -> vector<256x64xf32>
    %55 = arith.addf %49, %54 : vector<256x64xf32>
    %c0_15 = arith.constant 0 : index
    %c0_16 = arith.constant 0 : index
    %56 = vector.load %arg3[%c0_15, %c0_16] : memref<1x64xf32, #tpu.memory_space<vmem>>, vector<1x64xf32>
    %57 = vector.broadcast %56 : vector<1x64xf32> to vector<256x64xf32>
    %58 = arith.mulf %55, %57 : vector<256x64xf32>
    %c0_17 = arith.constant 0 : index
    %c0_18 = arith.constant 0 : index
    %59 = vector.load %arg4[%c0_17, %c0_18] : memref<1x64xf32, #tpu.memory_space<vmem>>, vector<1x64xf32>
    %60 = vector.broadcast %59 : vector<1x64xf32> to vector<256x64xf32>
    %61 = arith.addf %58, %60 : vector<256x64xf32>
    %cst_19 = arith.constant 0.000000e+00 : f32
    %62 = vector.broadcast %cst_19 : f32 to vector<256x64xf32>
    %63 = arith.maximumf %61, %62 : vector<256x64xf32>
    %cst_20 = arith.constant 0.000000e+00 : f32
    %64 = vector.broadcast %cst_20 : f32 to vector<18x18x64xf32>
    %c0_21 = arith.constant 0 : index
    %c0_22 = arith.constant 0 : index
    %c0_23 = arith.constant 0 : index
    %65 = vector.load %arg12[%c0_21, %c0_22, %c0_23] : memref<18x18x64xf32, #tpu.memory_space<vmem>>, vector<18x18x64xf32>
    tpu.vector_store %arg12[%c0_21, %c0_22, %c0_23], %64 {strides = array<i32>} : memref<18x18x64xf32, #tpu.memory_space<vmem>>, vector<18x18x64xf32>,
    %66 = vector.shape_cast %63 : vector<256x64xf32> to vector<16x16x64xf32>
    %c1 = arith.constant 1 : index
    %c1_24 = arith.constant 1 : index
    %c0_25 = arith.constant 0 : index
    %67 = vector.load %arg12[%c1, %c1_24, %c0_25] : memref<18x18x64xf32, #tpu.memory_space<vmem>>, vector<16x16x64xf32>
    tpu.vector_store %arg12[%c1, %c1_24, %c0_25], %66 {strides = array<i32>} : memref<18x18x64xf32, #tpu.memory_space<vmem>>, vector<16x16x64xf32>,
    %c0_26 = arith.constant 0 : index
    %c0_27 = arith.constant 0 : index
    %c0_28 = arith.constant 0 : index
    %68 = vector.load %arg12[%c0_26, %c0_27, %c0_28] : memref<18x18x64xf32, #tpu.memory_space<vmem>>, vector<18x18x64xf32>
    %c0_29 = arith.constant 0 : index
    %c0_30 = arith.constant 0 : index
    %c0_31 = arith.constant 0 : index
    %c0_32 = arith.constant 0 : index
    %69 = vector.load %arg5[%c0_29, %c0_30, %c0_31, %c0_32] : memref<3x3x64x64xf32, #tpu.memory_space<vmem>>, vector<3x3x64x64xf32>
    %70 = vector.extract_strided_slice %68 {offsets = [0, 0, 0], sizes = [16, 16, 64], strides = [1, 1, 1]} : vector<18x18x64xf32> to vector<16x16x64xf32>
    %71 = vector.shape_cast %70 : vector<16x16x64xf32> to vector<256x64xf32>
    %72 = vector.extract_strided_slice %69 {offsets = [0, 0, 0, 0], sizes = [1, 1, 64, 64], strides = [1, 1, 1, 1]} : vector<3x3x64x64xf32> to vector<1x1x64x64xf32>
    %73 = vector.shape_cast %72 : vector<1x1x64x64xf32> to vector<64x64xf32>
    %cst_33 = arith.constant dense<0.000000e+00> : vector<256x64xf32>
    %74 = tpu.matmul %71, %73, %cst_33 {dimension_numbers = #tpu.dot_dimension_numbers<[1], [0], [0], [1], [0, 0, 1, 1], [], []>} : vector<256x64xf32>, vector<64x64xf32>, vector<256x64xf32> -> vector<256x64xf32>
    %75 = vector.extract_strided_slice %68 {offsets = [0, 1, 0], sizes = [16, 16, 64], strides = [1, 1, 1]} : vector<18x18x64xf32> to vector<16x16x64xf32>
    %76 = vector.shape_cast %75 : vector<16x16x64xf32> to vector<256x64xf32>
    %77 = vector.extract_strided_slice %69 {offsets = [0, 1, 0, 0], sizes = [1, 1, 64, 64], strides = [1, 1, 1, 1]} : vector<3x3x64x64xf32> to vector<1x1x64x64xf32>
    %78 = vector.shape_cast %77 : vector<1x1x64x64xf32> to vector<64x64xf32>
    %cst_34 = arith.constant dense<0.000000e+00> : vector<256x64xf32>
    %79 = tpu.matmul %76, %78, %cst_34 {dimension_numbers = #tpu.dot_dimension_numbers<[1], [0], [0], [1], [0, 0, 1, 1], [], []>} : vector<256x64xf32>, vector<64x64xf32>, vector<256x64xf32> -> vector<256x64xf32>
    %80 = arith.addf %74, %79 : vector<256x64xf32>
    %81 = vector.extract_strided_slice %68 {offsets = [0, 2, 0], sizes = [16, 16, 64], strides = [1, 1, 1]} : vector<18x18x64xf32> to vector<16x16x64xf32>
    %82 = vector.shape_cast %81 : vector<16x16x64xf32> to vector<256x64xf32>
    %83 = vector.extract_strided_slice %69 {offsets = [0, 2, 0, 0], sizes = [1, 1, 64, 64], strides = [1, 1, 1, 1]} : vector<3x3x64x64xf32> to vector<1x1x64x64xf32>
    %84 = vector.shape_cast %83 : vector<1x1x64x64xf32> to vector<64x64xf32>
    %cst_35 = arith.constant dense<0.000000e+00> : vector<256x64xf32>
    %85 = tpu.matmul %82, %84, %cst_35 {dimension_numbers = #tpu.dot_dimension_numbers<[1], [0], [0], [1], [0, 0, 1, 1], [], []>} : vector<256x64xf32>, vector<64x64xf32>, vector<256x64xf32> -> vector<256x64xf32>
    %86 = arith.addf %80, %85 : vector<256x64xf32>
    %87 = vector.extract_strided_slice %68 {offsets = [1, 0, 0], sizes = [16, 16, 64], strides = [1, 1, 1]} : vector<18x18x64xf32> to vector<16x16x64xf32>
    %88 = vector.shape_cast %87 : vector<16x16x64xf32> to vector<256x64xf32>
    %89 = vector.extract_strided_slice %69 {offsets = [1, 0, 0, 0], sizes = [1, 1, 64, 64], strides = [1, 1, 1, 1]} : vector<3x3x64x64xf32> to vector<1x1x64x64xf32>
    %90 = vector.shape_cast %89 : vector<1x1x64x64xf32> to vector<64x64xf32>
    %cst_36 = arith.constant dense<0.000000e+00> : vector<256x64xf32>
    %91 = tpu.matmul %88, %90, %cst_36 {dimension_numbers = #tpu.dot_dimension_numbers<[1], [0], [0], [1], [0, 0, 1, 1], [], []>} : vector<256x64xf32>, vector<64x64xf32>, vector<256x64xf32> -> vector<256x64xf32>
    %92 = arith.addf %86, %91 : vector<256x64xf32>
    %93 = vector.extract_strided_slice %68 {offsets = [1, 1, 0], sizes = [16, 16, 64], strides = [1, 1, 1]} : vector<18x18x64xf32> to vector<16x16x64xf32>
    %94 = vector.shape_cast %93 : vector<16x16x64xf32> to vector<256x64xf32>
    %95 = vector.extract_strided_slice %69 {offsets = [1, 1, 0, 0], sizes = [1, 1, 64, 64], strides = [1, 1, 1, 1]} : vector<3x3x64x64xf32> to vector<1x1x64x64xf32>
    %96 = vector.shape_cast %95 : vector<1x1x64x64xf32> to vector<64x64xf32>
    %cst_37 = arith.constant dense<0.000000e+00> : vector<256x64xf32>
    %97 = tpu.matmul %94, %96, %cst_37 {dimension_numbers = #tpu.dot_dimension_numbers<[1], [0], [0], [1], [0, 0, 1, 1], [], []>} : vector<256x64xf32>, vector<64x64xf32>, vector<256x64xf32> -> vector<256x64xf32>
    %98 = arith.addf %92, %97 : vector<256x64xf32>
    %99 = vector.extract_strided_slice %68 {offsets = [1, 2, 0], sizes = [16, 16, 64], strides = [1, 1, 1]} : vector<18x18x64xf32> to vector<16x16x64xf32>
    %100 = vector.shape_cast %99 : vector<16x16x64xf32> to vector<256x64xf32>
    %101 = vector.extract_strided_slice %69 {offsets = [1, 2, 0, 0], sizes = [1, 1, 64, 64], strides = [1, 1, 1, 1]} : vector<3x3x64x64xf32> to vector<1x1x64x64xf32>
    %102 = vector.shape_cast %101 : vector<1x1x64x64xf32> to vector<64x64xf32>
    %cst_38 = arith.constant dense<0.000000e+00> : vector<256x64xf32>
    %103 = tpu.matmul %100, %102, %cst_38 {dimension_numbers = #tpu.dot_dimension_numbers<[1], [0], [0], [1], [0, 0, 1, 1], [], []>} : vector<256x64xf32>, vector<64x64xf32>, vector<256x64xf32> -> vector<256x64xf32>
    %104 = arith.addf %98, %103 : vector<256x64xf32>
    %105 = vector.extract_strided_slice %68 {offsets = [2, 0, 0], sizes = [16, 16, 64], strides = [1, 1, 1]} : vector<18x18x64xf32> to vector<16x16x64xf32>
    %106 = vector.shape_cast %105 : vector<16x16x64xf32> to vector<256x64xf32>
    %107 = vector.extract_strided_slice %69 {offsets = [2, 0, 0, 0], sizes = [1, 1, 64, 64], strides = [1, 1, 1, 1]} : vector<3x3x64x64xf32> to vector<1x1x64x64xf32>
    %108 = vector.shape_cast %107 : vector<1x1x64x64xf32> to vector<64x64xf32>
    %cst_39 = arith.constant dense<0.000000e+00> : vector<256x64xf32>
    %109 = tpu.matmul %106, %108, %cst_39 {dimension_numbers = #tpu.dot_dimension_numbers<[1], [0], [0], [1], [0, 0, 1, 1], [], []>} : vector<256x64xf32>, vector<64x64xf32>, vector<256x64xf32> -> vector<256x64xf32>
    %110 = arith.addf %104, %109 : vector<256x64xf32>
    %111 = vector.extract_strided_slice %68 {offsets = [2, 1, 0], sizes = [16, 16, 64], strides = [1, 1, 1]} : vector<18x18x64xf32> to vector<16x16x64xf32>
    %112 = vector.shape_cast %111 : vector<16x16x64xf32> to vector<256x64xf32>
    %113 = vector.extract_strided_slice %69 {offsets = [2, 1, 0, 0], sizes = [1, 1, 64, 64], strides = [1, 1, 1, 1]} : vector<3x3x64x64xf32> to vector<1x1x64x64xf32>
    %114 = vector.shape_cast %113 : vector<1x1x64x64xf32> to vector<64x64xf32>
    %cst_40 = arith.constant dense<0.000000e+00> : vector<256x64xf32>
    %115 = tpu.matmul %112, %114, %cst_40 {dimension_numbers = #tpu.dot_dimension_numbers<[1], [0], [0], [1], [0, 0, 1, 1], [], []>} : vector<256x64xf32>, vector<64x64xf32>, vector<256x64xf32> -> vector<256x64xf32>
    %116 = arith.addf %110, %115 : vector<256x64xf32>
    %117 = vector.extract_strided_slice %68 {offsets = [2, 2, 0], sizes = [16, 16, 64], strides = [1, 1, 1]} : vector<18x18x64xf32> to vector<16x16x64xf32>
    %118 = vector.shape_cast %117 : vector<16x16x64xf32> to vector<256x64xf32>
    %119 = vector.extract_strided_slice %69 {offsets = [2, 2, 0, 0], sizes = [1, 1, 64, 64], strides = [1, 1, 1, 1]} : vector<3x3x64x64xf32> to vector<1x1x64x64xf32>
    %120 = vector.shape_cast %119 : vector<1x1x64x64xf32> to vector<64x64xf32>
    %cst_41 = arith.constant dense<0.000000e+00> : vector<256x64xf32>
    %121 = tpu.matmul %118, %120, %cst_41 {dimension_numbers = #tpu.dot_dimension_numbers<[1], [0], [0], [1], [0, 0, 1, 1], [], []>} : vector<256x64xf32>, vector<64x64xf32>, vector<256x64xf32> -> vector<256x64xf32>
    %122 = arith.addf %116, %121 : vector<256x64xf32>
    %c0_42 = arith.constant 0 : index
    %c0_43 = arith.constant 0 : index
    %123 = vector.load %arg6[%c0_42, %c0_43] : memref<1x64xf32, #tpu.memory_space<vmem>>, vector<1x64xf32>
    %124 = vector.broadcast %123 : vector<1x64xf32> to vector<256x64xf32>
    %125 = arith.mulf %122, %124 : vector<256x64xf32>
    %c0_44 = arith.constant 0 : index
    %c0_45 = arith.constant 0 : index
    %126 = vector.load %arg7[%c0_44, %c0_45] : memref<1x64xf32, #tpu.memory_space<vmem>>, vector<1x64xf32>
    %127 = vector.broadcast %126 : vector<1x64xf32> to vector<256x64xf32>
    %128 = arith.addf %125, %127 : vector<256x64xf32>
    %129 = vector.extract_strided_slice %1 {offsets = [1, 1, 0], sizes = [16, 16, 32], strides = [1, 1, 1]} : vector<18x18x32xf32> to vector<16x16x32xf32>
    %130 = vector.shape_cast %129 : vector<16x16x32xf32> to vector<256x32xf32>
    %c0_46 = arith.constant 0 : index
    %c0_47 = arith.constant 0 : index
    %131 = vector.load %arg8[%c0_46, %c0_47] : memref<32x64xf32, #tpu.memory_space<vmem>>, vector<32x64xf32>
    %cst_48 = arith.constant dense<0.000000e+00> : vector<256x64xf32>
    %132 = tpu.matmul %130, %131, %cst_48 {dimension_numbers = #tpu.dot_dimension_numbers<[1], [0], [0], [1], [0, 0, 1, 1], [], []>} : vector<256x32xf32>, vector<32x64xf32>, vector<256x64xf32> -> vector<256x64xf32>
    %c0_49 = arith.constant 0 : index
    %c0_50 = arith.constant 0 : index
    %133 = vector.load %arg9[%c0_49, %c0_50] : memref<1x64xf32, #tpu.memory_space<vmem>>, vector<1x64xf32>
    %134 = vector.broadcast %133 : vector<1x64xf32> to vector<256x64xf32>
    %135 = arith.mulf %132, %134 : vector<256x64xf32>
    %c0_51 = arith.constant 0 : index
    %c0_52 = arith.constant 0 : index
    %136 = vector.load %arg10[%c0_51, %c0_52] : memref<1x64xf32, #tpu.memory_space<vmem>>, vector<1x64xf32>
    %137 = vector.broadcast %136 : vector<1x64xf32> to vector<256x64xf32>
    %138 = arith.addf %135, %137 : vector<256x64xf32>
    %139 = arith.addf %128, %138 : vector<256x64xf32>
    %cst_53 = arith.constant 0.000000e+00 : f32
    %140 = vector.broadcast %cst_53 : f32 to vector<256x64xf32>
    %141 = arith.maximumf %139, %140 : vector<256x64xf32>
    %142 = vector.shape_cast %141 : vector<256x64xf32> to vector<1x16x16x64xf32>
    %c0_54 = arith.constant 0 : index
    %c0_55 = arith.constant 0 : index
    %c0_56 = arith.constant 0 : index
    %c0_57 = arith.constant 0 : index
    %143 = vector.load %arg11[%c0_54, %c0_55, %c0_56, %c0_57] : memref<1x16x16x64xf32, #tpu.memory_space<vmem>>, vector<1x16x16x64xf32>
    tpu.vector_store %arg11[%c0_54, %c0_55, %c0_56, %c0_57], %142 {strides = array<i32>} : memref<1x16x16x64xf32, #tpu.memory_space<vmem>>, vector<1x16x16x64xf32>,
    return
  }
  func.func @transform_0(%arg0: i32) -> (i32, i32, i32, i32) {
    %c0_i32 = arith.constant 0 : i32
    %c0_i32_0 = arith.constant 0 : i32
    %c0_i32_1 = arith.constant 0 : i32
    %c0_i32_2 = arith.constant 0 : i32
    return %arg0, %c0_i32, %c0_i32_0, %c0_i32_1 : i32, i32, i32, i32
  }
  func.func @transform_1(%arg0: i32) -> (i32, i32, i32, i32) {
    %c0_i32 = arith.constant 0 : i32
    %c0_i32_0 = arith.constant 0 : i32
    %c0_i32_1 = arith.constant 0 : i32
    %c0_i32_2 = arith.constant 0 : i32
    %c0_i32_3 = arith.constant 0 : i32
    return %c0_i32, %c0_i32_0, %c0_i32_1, %c0_i32_2 : i32, i32, i32, i32
  }
  func.func @transform_2(%arg0: i32) -> (i32, i32) {
    %c0_i32 = arith.constant 0 : i32
    %c0_i32_0 = arith.constant 0 : i32
    %c0_i32_1 = arith.constant 0 : i32
    return %c0_i32, %c0_i32_0 : i32, i32
  }
  func.func @transform_3(%arg0: i32) -> (i32, i32) {
    %c0_i32 = arith.constant 0 : i32
    %c0_i32_0 = arith.constant 0 : i32
    %c0_i32_1 = arith.constant 0 : i32
    return %c0_i32, %c0_i32_0 : i32, i32
  }
  func.func @transform_4(%arg0: i32) -> (i32, i32, i32, i32) {
    %c0_i32 = arith.constant 0 : i32
    %c0_i32_0 = arith.constant 0 : i32
    %c0_i32_1 = arith.constant 0 : i32
    %c0_i32_2 = arith.constant 0 : i32
    %c0_i32_3 = arith.constant 0 : i32
    return %c0_i32, %c0_i32_0, %c0_i32_1, %c0_i32_2 : i32, i32, i32, i32
  }
  func.func @transform_5(%arg0: i32) -> (i32, i32) {
    %c0_i32 = arith.constant 0 : i32
    %c0_i32_0 = arith.constant 0 : i32
    %c0_i32_1 = arith.constant 0 : i32
    return %c0_i32, %c0_i32_0 : i32, i32
  }
  func.func @transform_6(%arg0: i32) -> (i32, i32) {
    %c0_i32 = arith.constant 0 : i32
    %c0_i32_0 = arith.constant 0 : i32
    %c0_i32_1 = arith.constant 0 : i32
    return %c0_i32, %c0_i32_0 : i32, i32
  }
  func.func @transform_7(%arg0: i32) -> (i32, i32) {
    %c0_i32 = arith.constant 0 : i32
    %c0_i32_0 = arith.constant 0 : i32
    %c0_i32_1 = arith.constant 0 : i32
    return %c0_i32, %c0_i32_0 : i32, i32
  }
  func.func @transform_8(%arg0: i32) -> (i32, i32) {
    %c0_i32 = arith.constant 0 : i32
    %c0_i32_0 = arith.constant 0 : i32
    %c0_i32_1 = arith.constant 0 : i32
    return %c0_i32, %c0_i32_0 : i32, i32
  }
  func.func @transform_9(%arg0: i32) -> (i32, i32) {
    %c0_i32 = arith.constant 0 : i32
    %c0_i32_0 = arith.constant 0 : i32
    %c0_i32_1 = arith.constant 0 : i32
    return %c0_i32, %c0_i32_0 : i32, i32
  }
  func.func @transform_10(%arg0: i32) -> (i32, i32, i32, i32) {
    %c0_i32 = arith.constant 0 : i32
    %c0_i32_0 = arith.constant 0 : i32
    %c0_i32_1 = arith.constant 0 : i32
    %c0_i32_2 = arith.constant 0 : i32
    return %arg0, %c0_i32, %c0_i32_0, %c0_i32_1 : i32, i32, i32, i32
  }
}

</mosaic_0001>

<llo_original>
// kernel: tpu_custom_call.1
$region0: #{tpu_custom_call.1}
  #allocation0 [shape = 'u32[]', space=smem, size = 0x4, offset = 0x4, fixed_abs, tag = 'smem constant byte address 0x4 - core index']
  #allocation1 [shape = 'u32[144,128]{1,0:T(1,128)}', space=vmem, size = 0x12000, scoped, tag = 'internal scratch']
  #allocation2 [shape = 'f32[18,18,64]{2,1,0:T(8,128)}', space=vmem, size = 0x36000, scoped, tag = 'scratch operand']
  %s0 = inlined_call_operand.vmem [shape: f32[2,18,18,32], index: 0, kind: input, shape index: {}]
  %s1 = inlined_call_operand.vmem [shape: f32[3,3,32,64], index: 1, kind: input, shape index: {}]
  %s2 = inlined_call_operand.vmem [shape: f32[1,64], index: 2, kind: input, shape index: {}]
  %s3 = inlined_call_operand.vmem [shape: f32[1,64], index: 3, kind: input, shape index: {}]
  %s4 = inlined_call_operand.vmem [shape: f32[3,3,64,64], index: 4, kind: input, shape index: {}]
  %s5 = inlined_call_operand.vmem [shape: f32[1,64], index: 5, kind: input, shape index: {}]
  %s6 = inlined_call_operand.vmem [shape: f32[1,64], index: 6, kind: input, shape index: {}]
  %s7 = inlined_call_operand.vmem [shape: f32[32,64], index: 7, kind: input, shape index: {}]
  %s8 = inlined_call_operand.vmem [shape: f32[1,64], index: 8, kind: input, shape index: {}]
  %s9 = inlined_call_operand.vmem [shape: f32[1,64], index: 9, kind: input, shape index: {}]
  %s10 = inlined_call_operand.hbm [shape: f32[2,16,16,64], index: 10, kind: output, shape index: {}]
  %s11 = sld [smem:[#allocation0]]
  $region73: #{tpu_custom_call.1} parent=0
    _
  %s13 = ssub.s32 1, %s11
  %s14 = scalar_select 0, %s13, %s11
  $region1: #{tpu_custom_call.1} parent=0
    #allocation3 [shape = 'u8[262144]{0}', space=vmem, size = 0x40000, scoped, tag = 'output window, operand 0']
    #allocation4 [shape = 's32[2]{0}', space=sflag, size = 0x8, scoped, tag = 'scoped memory for tpu_custom_call.1']
    %15 = vsyncpa [#allocation4], 0
    %s16 = scalar_lea.sflag [#allocation4], 1
    %17 = vsyncpa %s16, 0
    loop: start=0, step=1, limit=4
    $region2: #{tpu_custom_call.1} parent=1 // loop_pre_header
      _
    $region3: #{tpu_custom_call.1} parent=1 // loop_header
      %s19 = sphi 0, %s23
      %p20 = scmp.ge.s32.totalorder %s19, 4
      %s29 = sphi 0, %s31
      %s32 = sphi 0, %s29
      %s33 = sphi 0, %s32
      %s49 = sphi 0, %s33
      %s53 = sphi 0, %s53
      %s55 = sphi 0, %s53
      %s56 = sphi 0, %s55
      %s70 = sphi 0, %s56
      %s74 = sphi 0, %s74
      %s76 = sphi 0, %s74
      %s77 = sphi 0, %s76
      %s91 = sphi 0, %s77
      %s95 = sphi 0, %s95
      %s97 = sphi 0, %s95
      %s98 = sphi 0, %s97
      %s112 = sphi 0, %s98
      %s116 = sphi 0, %s116
      %s118 = sphi 0, %s116
      %s119 = sphi 0, %s118
      %s133 = sphi 0, %s119
      %s137 = sphi 0, %s137
      %s139 = sphi 0, %s137
      %s140 = sphi 0, %s139
      %s154 = sphi 0, %s140
      %s158 = sphi 0, %s158
      %s160 = sphi 0, %s158
      %s161 = sphi 0, %s160
      %s175 = sphi 0, %s161
      %s179 = sphi 0, %s179
      %s181 = sphi 0, %s179
      %s182 = sphi 0, %s181
      %s196 = sphi 0, %s182
      %s200 = sphi 0, %s200
      %s202 = sphi 0, %s200
      %s203 = sphi 0, %s202
      %s217 = sphi 0, %s203
      %s221 = sphi 0, %s221
      %s223 = sphi 0, %s221
      %s224 = sphi 0, %s223
      %s238 = sphi 0, %s224
      %s244 = sphi 0, %s246
      %s247 = sphi 0, %s244
      %s248 = sphi 0, %s247
      %s264 = sphi 0, %s248
    $region4: #{tpu_custom_call.1} parent=1 // loop_header_branch
      %22 = sbr.rel (%p20) target = $region8
    $region5: #{tpu_custom_call.1} parent=1 // loop_body
      %s24 = ssub.s32 %s19, 1
      %s25 = ssub.s32 %s19, 2
      %s26 = sadd.s32 %s19, 1
      %s27 = ssub.s32 %s19, %s26
      %p28 = scmp.eq.s32.totalorder %s27, 0
      %s30 = sadd.s32 %s29, 1
      %s31 = scalar_select %p28, %s29, %s30
      %p34 = pneg %p28
      %p35 = scmp.eq.s32.totalorder %s19, 1
      %p36 = por %p34, %p35
      %p37 = scmp.ne.s32.totalorder %s29, %s32
      %p38 = scmp.eq.s32.totalorder %s19, 0
      %p39 = por %p37, %p38
      %p40 = scmp.ne.s32.totalorder %s29, %s32
      %p41 = scmp.eq.s32.totalorder %s24, 1
      %p42 = por %p40, %p41
      %p43 = scmp.ne.s32.totalorder %s32, %s33
      %p44 = scmp.eq.s32.totalorder %s24, 0
      %p45 = por %p43, %p44
      %p46 = scmp.ne.s32.totalorder %s32, %s33
      %p47 = scmp.eq.s32.totalorder %s25, 1
      %p48 = por %p46, %p47
      %p50 = scmp.ne.s32.totalorder %s33, %s49
      %p51 = scmp.eq.s32.totalorder %s25, 0
      %p52 = por %p50, %p51
      %s54 = sadd.s32 %s53, 1
      %p57 = scmp.eq.s32.totalorder %s19, 1
      %p58 = scmp.ne.s32.totalorder %s53, %s55
      %p59 = scmp.eq.s32.totalorder %s19, 0
      %p60 = por %p58, %p59
      %p61 = scmp.ne.s32.totalorder %s53, %s55
      %p62 = scmp.eq.s32.totalorder %s24, 1
      %p63 = por %p61, %p62
      %p64 = scmp.ne.s32.totalorder %s55, %s56
      %p65 = scmp.eq.s32.totalorder %s24, 0
      %p66 = por %p64, %p65
      %p67 = scmp.ne.s32.totalorder %s55, %s56
      %p68 = scmp.eq.s32.totalorder %s25, 1
      %p69 = por %p67, %p68
      %p71 = scmp.ne.s32.totalorder %s56, %s70
      %p72 = scmp.eq.s32.totalorder %s25, 0
      %p73 = por %p71, %p72
      %s75 = sadd.s32 %s74, 1
      %p78 = scmp.eq.s32.totalorder %s19, 1
      %p79 = scmp.ne.s32.totalorder %s74, %s76
      %p80 = scmp.eq.s32.totalorder %s19, 0
      %p81 = por %p79, %p80
      %p82 = scmp.ne.s32.totalorder %s74, %s76
      %p83 = scmp.eq.s32.totalorder %s24, 1
      %p84 = por %p82, %p83
      %p85 = scmp.ne.s32.totalorder %s76, %s77
      %p86 = scmp.eq.s32.totalorder %s24, 0
      %p87 = por %p85, %p86
      %p88 = scmp.ne.s32.totalorder %s76, %s77
      %p89 = scmp.eq.s32.totalorder %s25, 1
      %p90 = por %p88, %p89
      %p92 = scmp.ne.s32.totalorder %s77, %s91
      %p93 = scmp.eq.s32.totalorder %s25, 0
      %p94 = por %p92, %p93
      %s96 = sadd.s32 %s95, 1
      %p99 = scmp.eq.s32.totalorder %s19, 1
      %p100 = scmp.ne.s32.totalorder %s95, %s97
      %p101 = scmp.eq.s32.totalorder %s19, 0
      %p102 = por %p100, %p101
      %p103 = scmp.ne.s32.totalorder %s95, %s97
      %p104 = scmp.eq.s32.totalorder %s24, 1
      %p105 = por %p103, %p104
      %p106 = scmp.ne.s32.totalorder %s97, %s98
      %p107 = scmp.eq.s32.totalorder %s24, 0
      %p108 = por %p106, %p107
      %p109 = scmp.ne.s32.totalorder %s97, %s98
      %p110 = scmp.eq.s32.totalorder %s25, 1
      %p111 = por %p109, %p110
      %p113 = scmp.ne.s32.totalorder %s98, %s112
      %p114 = scmp.eq.s32.totalorder %s25, 0
      %p115 = por %p113, %p114
      %s117 = sadd.s32 %s116, 1
      %p120 = scmp.eq.s32.totalorder %s19, 1
      %p121 = scmp.ne.s32.totalorder %s116, %s118
      %p122 = scmp.eq.s32.totalorder %s19, 0
      %p123 = por %p121, %p122
      %p124 = scmp.ne.s32.totalorder %s116, %s118
      %p125 = scmp.eq.s32.totalorder %s24, 1
      %p126 = por %p124, %p125
      %p127 = scmp.ne.s32.totalorder %s118, %s119
      %p128 = scmp.eq.s32.totalorder %s24, 0
      %p129 = por %p127, %p128
      %p130 = scmp.ne.s32.totalorder %s118, %s119
      %p131 = scmp.eq.s32.totalorder %s25, 1
      %p132 = por %p130, %p131
      %p134 = scmp.ne.s32.totalorder %s119, %s133
      %p135 = scmp.eq.s32.totalorder %s25, 0
      %p136 = por %p134, %p135
      %s138 = sadd.s32 %s137, 1
      %p141 = scmp.eq.s32.totalorder %s19, 1
      %p142 = scmp.ne.s32.totalorder %s137, %s139
      %p143 = scmp.eq.s32.totalorder %s19, 0
      %p144 = por %p142, %p143
      %p145 = scmp.ne.s32.totalorder %s137, %s139
      %p146 = scmp.eq.s32.totalorder %s24, 1
      %p147 = por %p145, %p146
      %p148 = scmp.ne.s32.totalorder %s139, %s140
      %p149 = scmp.eq.s32.totalorder %s24, 0
      %p150 = por %p148, %p149
      %p151 = scmp.ne.s32.totalorder %s139, %s140
      %p152 = scmp.eq.s32.totalorder %s25, 1
      %p153 = por %p151, %p152
      %p155 = scmp.ne.s32.totalorder %s140, %s154
      %p156 = scmp.eq.s32.totalorder %s25, 0
      %p157 = por %p155, %p156
      %s159 = sadd.s32 %s158, 1
      %p162 = scmp.eq.s32.totalorder %s19, 1
      %p163 = scmp.ne.s32.totalorder %s158, %s160
      %p164 = scmp.eq.s32.totalorder %s19, 0
      %p165 = por %p163, %p164
      %p166 = scmp.ne.s32.totalorder %s158, %s160
      %p167 = scmp.eq.s32.totalorder %s24, 1
      %p168 = por %p166, %p167
      %p169 = scmp.ne.s32.totalorder %s160, %s161
      %p170 = scmp.eq.s32.totalorder %s24, 0
      %p171 = por %p169, %p170
      %p172 = scmp.ne.s32.totalorder %s160, %s161
      %p173 = scmp.eq.s32.totalorder %s25, 1
      %p174 = por %p172, %p173
      %p176 = scmp.ne.s32.totalorder %s161, %s175
      %p177 = scmp.eq.s32.totalorder %s25, 0
      %p178 = por %p176, %p177
      %s180 = sadd.s32 %s179, 1
      %p183 = scmp.eq.s32.totalorder %s19, 1
      %p184 = scmp.ne.s32.totalorder %s179, %s181
      %p185 = scmp.eq.s32.totalorder %s19, 0
      %p186 = por %p184, %p185
      %p187 = scmp.ne.s32.totalorder %s179, %s181
      %p188 = scmp.eq.s32.totalorder %s24, 1
      %p189 = por %p187, %p188
      %p190 = scmp.ne.s32.totalorder %s181, %s182
      %p191 = scmp.eq.s32.totalorder %s24, 0
      %p192 = por %p190, %p191
      %p193 = scmp.ne.s32.totalorder %s181, %s182
      %p194 = scmp.eq.s32.totalorder %s25, 1
      %p195 = por %p193, %p194
      %p197 = scmp.ne.s32.totalorder %s182, %s196
      %p198 = scmp.eq.s32.totalorder %s25, 0
      %p199 = por %p197, %p198
      %s201 = sadd.s32 %s200, 1
      %p204 = scmp.eq.s32.totalorder %s19, 1
      %p205 = scmp.ne.s32.totalorder %s200, %s202
      %p206 = scmp.eq.s32.totalorder %s19, 0
      %p207 = por %p205, %p206
      %p208 = scmp.ne.s32.totalorder %s200, %s202
      %p209 = scmp.eq.s32.totalorder %s24, 1
      %p210 = por %p208, %p209
      %p211 = scmp.ne.s32.totalorder %s202, %s203
      %p212 = scmp.eq.s32.totalorder %s24, 0
      %p213 = por %p211, %p212
      %p214 = scmp.ne.s32.totalorder %s202, %s203
      %p215 = scmp.eq.s32.totalorder %s25, 1
      %p216 = por %p214, %p215
      %p218 = scmp.ne.s32.totalorder %s203, %s217
      %p219 = scmp.eq.s32.totalorder %s25, 0
      %p220 = por %p218, %p219
      %s222 = sadd.s32 %s221, 1
      %p225 = scmp.eq.s32.totalorder %s19, 1
      %p226 = scmp.ne.s32.totalorder %s221, %s223
      %p227 = scmp.eq.s32.totalorder %s19, 0
      %p228 = por %p226, %p227
      %p229 = scmp.ne.s32.totalorder %s221, %s223
      %p230 = scmp.eq.s32.totalorder %s24, 1
      %p231 = por %p229, %p230
      %p232 = scmp.ne.s32.totalorder %s223, %s224
      %p233 = scmp.eq.s32.totalorder %s24, 0
      %p234 = por %p232, %p233
      %p235 = scmp.ne.s32.totalorder %s223, %s224
      %p236 = scmp.eq.s32.totalorder %s25, 1
      %p237 = por %p235, %p236
      %p239 = scmp.ne.s32.totalorder %s224, %s238
      %p240 = scmp.eq.s32.totalorder %s25, 0
      %p241 = por %p239, %p240
      %s242 = ssub.s32 %s19, %s26
      %p243 = scmp.eq.s32.totalorder %s242, 0
      %s245 = sadd.s32 %s244, 1
      %s246 = scalar_select %p243, %s244, %s245
      %p249 = pneg %p243
      %p250 = scmp.eq.s32.totalorder %s19, 1
      %p251 = por %p249, %p250
      %p252 = scmp.ne.s32.totalorder %s244, %s247
      %p253 = scmp.eq.s32.totalorder %s19, 0
      %p254 = por %p252, %p253
      %p255 = scmp.ne.s32.totalorder %s244, %s247
      %p256 = scmp.eq.s32.totalorder %s24, 1
      %p257 = por %p255, %p256
      %p258 = scmp.ne.s32.totalorder %s247, %s248
      %p259 = scmp.eq.s32.totalorder %s24, 0
      %p260 = por %p258, %p259
      %p261 = scmp.ne.s32.totalorder %s247, %s248
      %p262 = scmp.eq.s32.totalorder %s25, 1
      %p263 = por %p261, %p262
      %p265 = scmp.ne.s32.totalorder %s248, %s264
      %p266 = scmp.eq.s32.totalorder %s25, 0
      %p267 = por %p265, %p266
      %p268 = scmp.le.s32.totalorder 1, %s19
      %p269 = scmp.lt.s32.totalorder %s19, 3
      %p270 = pnand %p268, %p269
      %p271 = pneg %p270
      // Predicated region
      $region9: #{tpu_custom_call.1} parent=5 // pred_check
        _
      $region10: #{tpu_custom_call.1} parent=5 // pred_check_branch
        %273 = sbr.rel (%p270) target = $region12
      $region11: #{tpu_custom_call.1} parent=5 // pred_region
        %s274 = ssub.s32 %s19, 1
        // Predicated region
        $region13: #{tpu_custom_call.1} parent=11 // pred_check
          %p275 = pneg %p66
        $region14: #{tpu_custom_call.1} parent=11 // pred_check_branch
          %277 = sbr.rel (%p275) target = $region16
        $region15: #{tpu_custom_call.1} parent=11 // pred_region
          _
        $region16: #{tpu_custom_call.1} parent=11 // pred_fallthru
          _
        // Predicated region
        $region17: #{tpu_custom_call.1} parent=11 // pred_check
          %p278 = pneg %p87
        $region18: #{tpu_custom_call.1} parent=11 // pred_check_branch
          %280 = sbr.rel (%p278) target = $region20
        $region19: #{tpu_custom_call.1} parent=11 // pred_region
          _
        $region20: #{tpu_custom_call.1} parent=11 // pred_fallthru
          _
        // Predicated region
        $region21: #{tpu_custom_call.1} parent=11 // pred_check
          %p281 = pneg %p108
        $region22: #{tpu_custom_call.1} parent=11 // pred_check_branch
          %283 = sbr.rel (%p281) target = $region24
        $region23: #{tpu_custom_call.1} parent=11 // pred_region
          _
        $region24: #{tpu_custom_call.1} parent=11 // pred_fallthru
          _
        // Predicated region
        $region25: #{tpu_custom_call.1} parent=11 // pred_check
          %p284 = pneg %p129
        $region26: #{tpu_custom_call.1} parent=11 // pred_check_branch
          %286 = sbr.rel (%p284) target = $region28
        $region27: #{tpu_custom_call.1} parent=11 // pred_region
          _
        $region28: #{tpu_custom_call.1} parent=11 // pred_fallthru
          _
        // Predicated region
        $region29: #{tpu_custom_call.1} parent=11 // pred_check
          %p287 = pneg %p150
        $region30: #{tpu_custom_call.1} parent=11 // pred_check_branch
          %289 = sbr.rel (%p287) target = $region32
        $region31: #{tpu_custom_call.1} parent=11 // pred_region
          _
        $region32: #{tpu_custom_call.1} parent=11 // pred_fallthru
          _
        // Predicated region
        $region33: #{tpu_custom_call.1} parent=11 // pred_check
          %p290 = pneg %p171
        $region34: #{tpu_custom_call.1} parent=11 // pred_check_branch
          %292 = sbr.rel (%p290) target = $region36
        $region35: #{tpu_custom_call.1} parent=11 // pred_region
          _
        $region36: #{tpu_custom_call.1} parent=11 // pred_fallthru
          _
        // Predicated region
        $region37: #{tpu_custom_call.1} parent=11 // pred_check
          %p293 = pneg %p192
        $region38: #{tpu_custom_call.1} parent=11 // pred_check_branch
          %295 = sbr.rel (%p293) target = $region40
        $region39: #{tpu_custom_call.1} parent=11 // pred_region
          _
        $region40: #{tpu_custom_call.1} parent=11 // pred_fallthru
          _
        // Predicated region
        $region41: #{tpu_custom_call.1} parent=11 // pred_check
          %p296 = pneg %p213
        $region42: #{tpu_custom_call.1} parent=11 // pred_check_branch
          %298 = sbr.rel (%p296) target = $region44
        $region43: #{tpu_custom_call.1} parent=11 // pred_region
          _
        $region44: #{tpu_custom_call.1} parent=11 // pred_fallthru
          _
        // Predicated region
        $region45: #{tpu_custom_call.1} parent=11 // pred_check
          %p299 = pneg %p234
        $region46: #{tpu_custom_call.1} parent=11 // pred_check_branch
          %301 = sbr.rel (%p299) target = $region48
        $region47: #{tpu_custom_call.1} parent=11 // pred_region
          _
        $region48: #{tpu_custom_call.1} parent=11 // pred_fallthru
          _
      $region12: #{tpu_custom_call.1} parent=5 // pred_fallthru
        _
      %p302 = scmp.lt.s32.totalorder %s19, 2
      // Predicated region
      $region49: #{tpu_custom_call.1} parent=5 // pred_check
        %p303 = pneg %p302
      $region50: #{tpu_custom_call.1} parent=5 // pred_check_branch
        %305 = sbr.rel (%p303) target = $region52
      $region51: #{tpu_custom_call.1} parent=5 // pred_region
        // Predicated region
        $region53: #{tpu_custom_call.1} parent=51 // pred_check
          %p306 = pneg %p39
        $region54: #{tpu_custom_call.1} parent=51 // pred_check_branch
          %308 = sbr.rel (%p306) target = $region56
        $region55: #{tpu_custom_call.1} parent=51 // pred_region
          %p309 = scmp.lt.s32.totalorder %s19, 1
          %s310 = scalar_select %p309, %s19, 1
          %s311 = smul.addr %s310, 54
          %s312 = smul.addr %s311, 8
          %s313 = scalar_lea.vmem %s0, %s312
        $region56: #{tpu_custom_call.1} parent=51 // pred_fallthru
          _
      $region52: #{tpu_custom_call.1} parent=5 // pred_fallthru
        _
      %p314 = scmp.le.s32.totalorder 1, %s19
      %p315 = scmp.lt.s32.totalorder %s19, 3
      %p316 = pnand %p314, %p315
      %p317 = pneg %p316
      // Predicated region
      $region57: #{tpu_custom_call.1} parent=5 // pred_check
        _
      $region58: #{tpu_custom_call.1} parent=5 // pred_check_branch
        %319 = sbr.rel (%p316) target = $region60
      $region59: #{tpu_custom_call.1} parent=5 // pred_region
        %s320 = ssub.s32 %s19, 1
        %p321 = scmp.lt.s32.totalorder %s24, 1
        %s322 = scalar_select %p321, %s24, 1
        %s323 = smul.addr %s322, 54
        %s324 = smul.addr %s323, 8
        %s325 = scalar_lea.vmem %s0, %s324
        %p326 = pneg %p45
        %p327 = pneg %p42
        %p328 = pneg %p66
        %p329 = pneg %p63
        %p330 = pneg %p87
        %p331 = pneg %p84
        %p332 = pneg %p108
        %p333 = pneg %p105
        %p334 = pneg %p129
        %p335 = pneg %p126
        %p336 = pneg %p150
        %p337 = pneg %p147
        %p338 = pneg %p171
        %p339 = pneg %p168
        %p340 = pneg %p192
        %p341 = pneg %p189
        %p342 = pneg %p213
        %p343 = pneg %p210
        %p344 = pneg %p234
        %p345 = pneg %p231
        %p346 = pneg %p260
        %p347 = pneg %p257
        %s348 = sand.u32 %s247, 1
        %s349 = scalar_lea.sflag [#allocation4], %s348
        %s350 = sand.u32 %s247, 1
        %s351 = smul.addr %s350, 256
        %s352 = scalar_lea.vmem [#allocation3], %s351
        %p353 = scmp.lt.s32.totalorder %s24, 1
        %s354 = scalar_select %p353, %s24, 1
        %s355 = smul.addr %s354, 54
        %s356 = smul.addr %s355, 8
        %s357 = scalar_lea.vmem %s0, %s356
        %v358 = vld [vmem:[%s357] sm:$0xff]
        %v359 = vld [vmem:[%s357 + $0x8] sm:$0xff]
        %v360 = vld [vmem:[%s357 + $0x10] sm:$0x3]
        %v361 = vld [vmem:[%s357 + $0x18] sm:$0xff]
        %v362 = vld [vmem:[%s357 + $0x20] sm:$0xff]
        %v363 = vld [vmem:[%s357 + $0x28] sm:$0x3]
        %v364 = vld [vmem:[%s357 + $0x30] sm:$0xff]
        %v365 = vld [vmem:[%s357 + $0x38] sm:$0xff]
        %v366 = vld [vmem:[%s357 + $0x40] sm:$0x3]
        %v367 = vld [vmem:[%s357 + $0x48] sm:$0xff]
        %v368 = vld [vmem:[%s357 + $0x50] sm:$0xff]
        %v369 = vld [vmem:[%s357 + $0x58] sm:$0x3]
        %v370 = vld [vmem:[%s357 + $0x60] sm:$0xff]
        %v371 = vld [vmem:[%s357 + $0x68] sm:$0xff]
        %v372 = vld [vmem:[%s357 + $0x70] sm:$0x3]
        %v373 = vld [vmem:[%s357 + $0x78] sm:$0xff]
        %v374 = vld [vmem:[%s357 + $0x80] sm:$0xff]
        %v375 = vld [vmem:[%s357 + $0x88] sm:$0x3]
        %v376 = vld [vmem:[%s357 + $0x90] sm:$0xff]
        %v377 = vld [vmem:[%s357 + $0x98] sm:$0xff]
        %v378 = vld [vmem:[%s357 + $0xa0] sm:$0x3]
        %v379 = vld [vmem:[%s357 + $0xa8] sm:$0xff]
        %v380 = vld [vmem:[%s357 + $0xb0] sm:$0xff]
        %v381 = vld [vmem:[%s357 + $0xb8] sm:$0x3]
        %v382 = vld [vmem:[%s357 + $0xc0] sm:$0xff]
        %v383 = vld [vmem:[%s357 + $0xc8] sm:$0xff]
        %v384 = vld [vmem:[%s357 + $0xd0] sm:$0x3]
        %v385 = vld [vmem:[%s357 + $0xd8] sm:$0xff]
        %v386 = vld [vmem:[%s357 + $0xe0] sm:$0xff]
        %v387 = vld [vmem:[%s357 + $0xe8] sm:$0x3]
        %v388 = vld [vmem:[%s357 + $0xf0] sm:$0xff]
        %v389 = vld [vmem:[%s357 + $0xf8] sm:$0xff]
        %v390 = vld [vmem:[%s357 + $0x100] sm:$0x3]
        %v391 = vld [vmem:[%s357 + $0x108] sm:$0xff]
        %v392 = vld [vmem:[%s357 + $0x110] sm:$0xff]
        %v393 = vld [vmem:[%s357 + $0x118] sm:$0x3]
        %v394 = vld [vmem:[%s357 + $0x120] sm:$0xff]
        %v395 = vld [vmem:[%s357 + $0x128] sm:$0xff]
        %v396 = vld [vmem:[%s357 + $0x130] sm:$0x3]
        %v397 = vld [vmem:[%s357 + $0x138] sm:$0xff]
        %v398 = vld [vmem:[%s357 + $0x140] sm:$0xff]
        %v399 = vld [vmem:[%s357 + $0x148] sm:$0x3]
        %v400 = vld [vmem:[%s357 + $0x150] sm:$0xff]
        %v401 = vld [vmem:[%s357 + $0x158] sm:$0xff]
        %v402 = vld [vmem:[%s357 + $0x160] sm:$0x3]
        %v403 = vld [vmem:[%s357 + $0x168] sm:$0xff]
        %v404 = vld [vmem:[%s357 + $0x170] sm:$0xff]
        %v405 = vld [vmem:[%s357 + $0x178] sm:$0x3]
        %v406 = vld [vmem:[%s357 + $0x180] sm:$0xff]
        %v407 = vld [vmem:[%s357 + $0x188] sm:$0xff]
        %v408 = vld [vmem:[%s357 + $0x190] sm:$0x3]
        %v409 = vld [vmem:[%s357 + $0x198] sm:$0xff]
        %v410 = vld [vmem:[%s357 + $0x1a0] sm:$0xff]
        %v411 = vld [vmem:[%s357 + $0x1a8] sm:$0x3]
        %v412 = vld [vmem:[%s1] sm:$0xff]
        %v413 = vld [vmem:[%s1 + $0x8] sm:$0xff]
        %v414 = vld [vmem:[%s1 + $0x10] sm:$0xff]
        %v415 = vld [vmem:[%s1 + $0x18] sm:$0xff]
        %v416 = vld [vmem:[%s1 + $0x20] sm:$0xff]
        %v417 = vld [vmem:[%s1 + $0x28] sm:$0xff]
        %v418 = vld [vmem:[%s1 + $0x30] sm:$0xff]
        %v419 = vld [vmem:[%s1 + $0x38] sm:$0xff]
        %v420 = vld [vmem:[%s1 + $0x40] sm:$0xff]
        %v421 = vld [vmem:[%s1 + $0x48] sm:$0xff]
        %v422 = vld [vmem:[%s1 + $0x50] sm:$0xff]
        %v423 = vld [vmem:[%s1 + $0x58] sm:$0xff]
        %v424 = vld [vmem:[%s1 + $0x60] sm:$0xff]
        %v425 = vld [vmem:[%s1 + $0x68] sm:$0xff]
        %v426 = vld [vmem:[%s1 + $0x70] sm:$0xff]
        %v427 = vld [vmem:[%s1 + $0x78] sm:$0xff]
        %v428 = vld [vmem:[%s1 + $0x80] sm:$0xff]
        %v429 = vld [vmem:[%s1 + $0x88] sm:$0xff]
        %v430 = vld [vmem:[%s1 + $0x90] sm:$0xff]
        %v431 = vld [vmem:[%s1 + $0x98] sm:$0xff]
        %v432 = vld [vmem:[%s1 + $0xa0] sm:$0xff]
        %v433 = vld [vmem:[%s1 + $0xa8] sm:$0xff]
        %v434 = vld [vmem:[%s1 + $0xb0] sm:$0xff]
        %v435 = vld [vmem:[%s1 + $0xb8] sm:$0xff]
        %v436 = vld [vmem:[%s1 + $0xc0] sm:$0xff]
        %v437 = vld [vmem:[%s1 + $0xc8] sm:$0xff]
        %v438 = vld [vmem:[%s1 + $0xd0] sm:$0xff]
        %v439 = vld [vmem:[%s1 + $0xd8] sm:$0xff]
        %v440 = vld [vmem:[%s1 + $0xe0] sm:$0xff]
        %v441 = vld [vmem:[%s1 + $0xe8] sm:$0xff]
        %v442 = vld [vmem:[%s1 + $0xf0] sm:$0xff]
        %v443 = vld [vmem:[%s1 + $0xf8] sm:$0xff]
        %v444 = vld [vmem:[%s1 + $0x100] sm:$0xff]
        %v445 = vld [vmem:[%s1 + $0x108] sm:$0xff]
        %v446 = vld [vmem:[%s1 + $0x110] sm:$0xff]
        %v447 = vld [vmem:[%s1 + $0x118] sm:$0xff]
        %vm496 = vcmask 1046528
        %v497 = vrot.slane %v358, 1
        %v498 = vrot.slane %v359, 1
        %v499 = vsel %vm496, %v497, %v498
        %v500 = vrot.slane %v360, 1
        %v501 = vsel %vm496, %v498, %v500
        %v502 = vrot.slane %v361, 1
        %v503 = vrot.slane %v362, 1
        %v504 = vsel %vm496, %v502, %v503
        %v505 = vrot.slane %v363, 1
        %v506 = vsel %vm496, %v503, %v505
        %v507 = vrot.slane %v364, 1
        %v508 = vrot.slane %v365, 1
        %v509 = vsel %vm496, %v507, %v508
        %v510 = vrot.slane %v366, 1
        %v511 = vsel %vm496, %v508, %v510
        %v512 = vrot.slane %v367, 1
        %v513 = vrot.slane %v368, 1
        %v514 = vsel %vm496, %v512, %v513
        %v515 = vrot.slane %v369, 1
        %v516 = vsel %vm496, %v513, %v515
        %v517 = vrot.slane %v370, 1
        %v518 = vrot.slane %v371, 1
        %v519 = vsel %vm496, %v517, %v518
        %v520 = vrot.slane %v372, 1
        %v521 = vsel %vm496, %v518, %v520
        %v522 = vrot.slane %v373, 1
        %v523 = vrot.slane %v374, 1
        %v524 = vsel %vm496, %v522, %v523
        %v525 = vrot.slane %v375, 1
        %v526 = vsel %vm496, %v523, %v525
        %v527 = vrot.slane %v376, 1
        %v528 = vrot.slane %v377, 1
        %v529 = vsel %vm496, %v527, %v528
        %v530 = vrot.slane %v378, 1
        %v531 = vsel %vm496, %v528, %v530
        %v532 = vrot.slane %v379, 1
        %v533 = vrot.slane %v380, 1
        %v534 = vsel %vm496, %v532, %v533
        %v535 = vrot.slane %v381, 1
        %v536 = vsel %vm496, %v533, %v535
        %v537 = vrot.slane %v382, 1
        %v538 = vrot.slane %v383, 1
        %v539 = vsel %vm496, %v537, %v538
        %v540 = vrot.slane %v384, 1
        %v541 = vsel %vm496, %v538, %v540
        %v542 = vrot.slane %v385, 1
        %v543 = vrot.slane %v386, 1
        %v544 = vsel %vm496, %v542, %v543
        %v545 = vrot.slane %v387, 1
        %v546 = vsel %vm496, %v543, %v545
        %v547 = vrot.slane %v388, 1
        %v548 = vrot.slane %v389, 1
        %v549 = vsel %vm496, %v547, %v548
        %v550 = vrot.slane %v390, 1
        %v551 = vsel %vm496, %v548, %v550
        %v552 = vrot.slane %v391, 1
        %v553 = vrot.slane %v392, 1
        %v554 = vsel %vm496, %v552, %v553
        %v555 = vrot.slane %v393, 1
        %v556 = vsel %vm496, %v553, %v555
        %v557 = vrot.slane %v394, 1
        %v558 = vrot.slane %v395, 1
        %v559 = vsel %vm496, %v557, %v558
        %v560 = vrot.slane %v396, 1
        %v561 = vsel %vm496, %v558, %v560
        %v562 = vrot.slane %v397, 1
        %v563 = vrot.slane %v398, 1
        %v564 = vsel %vm496, %v562, %v563
        %v565 = vrot.slane %v399, 1
        %v566 = vsel %vm496, %v563, %v565
        %v567 = vrot.slane %v400, 1
        %v568 = vrot.slane %v401, 1
        %v569 = vsel %vm496, %v567, %v568
        %v570 = vrot.slane %v402, 1
        %v571 = vsel %vm496, %v568, %v570
        %v572 = vrot.slane %v403, 1
        %v573 = vrot.slane %v404, 1
        %v574 = vsel %vm496, %v572, %v573
        %v575 = vrot.slane %v405, 1
        %v576 = vsel %vm496, %v573, %v575
        %vm577 = vcmask 261120
        %v578 = vsel %vm577, %v499, 0
        %v580 = vsel %vm577, %v501, 0
        %v582 = vsel %vm577, %v504, 0
        %v584 = vsel %vm577, %v506, 0
        %v586 = vsel %vm577, %v509, 0
        %v588 = vsel %vm577, %v511, 0
        %v590 = vsel %vm577, %v514, 0
        %v592 = vsel %vm577, %v516, 0
        %v594 = vsel %vm577, %v519, 0
        %v596 = vsel %vm577, %v521, 0
        %v598 = vsel %vm577, %v524, 0
        %v600 = vsel %vm577, %v526, 0
        %v602 = vsel %vm577, %v529, 0
        %v604 = vsel %vm577, %v531, 0
        %v606 = vsel %vm577, %v534, 0
        %v608 = vsel %vm577, %v536, 0
        %v610 = vsel %vm577, %v539, 0
        %v612 = vsel %vm577, %v541, 0
        %v614 = vsel %vm577, %v544, 0
        %v616 = vsel %vm577, %v546, 0
        %v618 = vsel %vm577, %v549, 0
        %v620 = vsel %vm577, %v551, 0
        %v622 = vsel %vm577, %v554, 0
        %v624 = vsel %vm577, %v556, 0
        %v626 = vsel %vm577, %v559, 0
        %v628 = vsel %vm577, %v561, 0
        %v630 = vsel %vm577, %v564, 0
        %v632 = vsel %vm577, %v566, 0
        %v634 = vsel %vm577, %v569, 0
        %v636 = vsel %vm577, %v571, 0
        %v638 = vsel %vm577, %v574, 0
        %v640 = vsel %vm577, %v576, 0
        %642 = vmatprep.subr.mxu0 0.0
        %643 = vmatpush1.msra.mxu0 0.0
        %644 = vmatprep.subr.mxu0 0.0
        %645 = vmatpush1.msra.mxu0 0.0
        %646 = vmatprep.subr.mxu0 0.0
        %647 = vmatpush1.msra.mxu0 0.0
        %648 = vmatprep.subr.mxu0 0.0
        %649 = vmatpush1.msra.mxu0 0.0
        %650 = vmatprep.subr.mxu0 0.0
        %651 = vmatpush1.msra.mxu0 0.0
        %652 = vmatprep.subr.mxu0 0.0
        %653 = vmatpush1.msra.mxu0 0.0
        %654 = vmatprep.subr.mxu0 0.0
        %655 = vmatpush1.msra.mxu0 0.0
        %656 = vmatprep.subr.mxu0 0.0
        %657 = vmatpush1.msra.mxu0 0.0
        %658 = vmatprep.subr.mxu0 0.0
        %659 = vmatpush1.msra.mxu0 0.0
        %660 = vmatprep.subr.mxu0 0.0
        %661 = vmatpush1.msra.mxu0 0.0
        %662 = vmatprep.subr.mxu0 0.0
        %663 = vmatpush1.msra.mxu0 0.0
        %664 = vmatprep.subr.mxu0 0.0
        %665 = vmatpush1.msra.mxu0 0.0
        %666 = vmatprep.subr.mxu0 0.0
        %667 = vmatpush1.msra.mxu0 %v419
        %668 = vmatprep.subr.mxu0 0.0
        %669 = vmatpush1.msra.mxu0 %v418
        %670 = vmatprep.subr.mxu0 0.0
        %671 = vmatpush1.msra.mxu0 %v417
        %672 = vmatprep.subr.mxu0 0.0
        %673 = vmatpush1.msra.mxu0 %v416
        %674 = vmatprep.subr.mxu0 0.0
        %675 = vmatpush2.msra.mxu0 0.0
        %676 = vmatprep.subr.mxu0 0.0
        %677 = vmatpush2.msra.mxu0 0.0
        %678 = vmatprep.subr.mxu0 0.0
        %679 = vmatpush2.msra.mxu0 0.0
        %680 = vmatprep.subr.mxu0 0.0
        %681 = vmatpush2.msra.mxu0 0.0
        %682 = vmatprep.subr.mxu0 0.0
        %683 = vmatpush2.msra.mxu0 0.0
        %684 = vmatprep.subr.mxu0 0.0
        %685 = vmatpush2.msra.mxu0 0.0
        %686 = vmatprep.subr.mxu0 0.0
        %687 = vmatpush2.msra.mxu0 0.0
        %688 = vmatprep.subr.mxu0 0.0
        %689 = vmatpush2.msra.mxu0 0.0
        %690 = vmatprep.subr.mxu0 0.0
        %691 = vmatpush2.msra.mxu0 0.0
        %692 = vmatprep.subr.mxu0 0.0
        %693 = vmatpush2.msra.mxu0 0.0
        %694 = vmatprep.subr.mxu0 0.0
        %695 = vmatpush2.msra.mxu0 0.0
        %696 = vmatprep.subr.mxu0 0.0
        %697 = vmatpush2.msra.mxu0 0.0
        %698 = vmatprep.subr.mxu0 0.0
        %699 = vmatpush2.msra.mxu0 0.0
        %700 = vmatprep.subr.mxu0 0.0
        %701 = vmatpush2.msra.mxu0 0.0
        %702 = vmatprep.subr.mxu0 0.0
        %703 = vmatpush2.msra.mxu0 0.0
        %704 = vmatprep.subr.mxu0 0.0
        %705 = vmatpush2.msra.mxu0 0.0
        %706 = vmatprep.mubr.f32.mxu0 0.0
        %707 = vmatmul.mubr.f32.gmra.mxu0 %v578
        %v708 = vpop.f32.mrf.mxu0
        %v709 = vadd.f32 0.0, %v708
        %v710 = vpop.f32.mrf.mxu0
        %711 = vmatprep.mubr.f32.mxu0 0.0
        %712 = vmatmul.mubr.f32.gmra.mxu0 %v580
        %v713 = vpop.f32.mrf.mxu0
        %v714 = vadd.f32 0.0, %v713
        %v715 = vpop.f32.mrf.mxu0
        %716 = vmatprep.mubr.f32.mxu0 0.0
        %717 = vmatmul.mubr.f32.gmra.mxu0 %v582
        %v718 = vpop.f32.mrf.mxu0
        %v719 = vadd.f32 0.0, %v718
        %v720 = vpop.f32.mrf.mxu0
        %721 = vmatprep.mubr.f32.mxu0 0.0
        %722 = vmatmul.mubr.f32.gmra.mxu0 %v584
        %v723 = vpop.f32.mrf.mxu0
        %v724 = vadd.f32 0.0, %v723
        %v725 = vpop.f32.mrf.mxu0
        %726 = vmatprep.mubr.f32.mxu0 0.0
        %727 = vmatmul.mubr.f32.gmra.mxu0 %v586
        %v728 = vpop.f32.mrf.mxu0
        %v729 = vadd.f32 0.0, %v728
        %v730 = vpop.f32.mrf.mxu0
        %731 = vmatprep.mubr.f32.mxu0 0.0
        %732 = vmatmul.mubr.f32.gmra.mxu0 %v588
        %v733 = vpop.f32.mrf.mxu0
        %v734 = vadd.f32 0.0, %v733
        %v735 = vpop.f32.mrf.mxu0
        %736 = vmatprep.mubr.f32.mxu0 0.0
        %737 = vmatmul.mubr.f32.gmra.mxu0 %v590
        %v738 = vpop.f32.mrf.mxu0
        %v739 = vadd.f32 0.0, %v738
        %v740 = vpop.f32.mrf.mxu0
        %741 = vmatprep.mubr.f32.mxu0 0.0
        %742 = vmatmul.mubr.f32.gmra.mxu0 %v592
        %v743 = vpop.f32.mrf.mxu0
        %v744 = vadd.f32 0.0, %v743
        %v745 = vpop.f32.mrf.mxu0
        %746 = vmatprep.mubr.f32.mxu0 0.0
        %747 = vmatmul.mubr.f32.gmra.mxu0 %v594
        %v748 = vpop.f32.mrf.mxu0
        %v749 = vadd.f32 0.0, %v748
        %v750 = vpop.f32.mrf.mxu0
        %751 = vmatprep.mubr.f32.mxu0 0.0
        %752 = vmatmul.mubr.f32.gmra.mxu0 %v596
        %v753 = vpop.f32.mrf.mxu0
        %v754 = vadd.f32 0.0, %v753
        %v755 = vpop.f32.mrf.mxu0
        %756 = vmatprep.mubr.f32.mxu0 0.0
        %757 = vmatmul.mubr.f32.gmra.mxu0 %v598
        %v758 = vpop.f32.mrf.mxu0
        %v759 = vadd.f32 0.0, %v758
        %v760 = vpop.f32.mrf.mxu0
        %761 = vmatprep.mubr.f32.mxu0 0.0
        %762 = vmatmul.mubr.f32.gmra.mxu0 %v600
        %v763 = vpop.f32.mrf.mxu0
        %v764 = vadd.f32 0.0, %v763
        %v765 = vpop.f32.mrf.mxu0
        %766 = vmatprep.mubr.f32.mxu0 0.0
        %767 = vmatmul.mubr.f32.gmra.mxu0 %v602
        %v768 = vpop.f32.mrf.mxu0
        %v769 = vadd.f32 0.0, %v768
        %v770 = vpop.f32.mrf.mxu0
        %771 = vmatprep.mubr.f32.mxu0 0.0
        %772 = vmatmul.mubr.f32.gmra.mxu0 %v604
        %v773 = vpop.f32.mrf.mxu0
        %v774 = vadd.f32 0.0, %v773
        %v775 = vpop.f32.mrf.mxu0
        %776 = vmatprep.mubr.f32.mxu0 0.0
        %777 = vmatmul.mubr.f32.gmra.mxu0 %v606
        %v778 = vpop.f32.mrf.mxu0
        %v779 = vadd.f32 0.0, %v778
        %v780 = vpop.f32.mrf.mxu0
        %781 = vmatprep.mubr.f32.mxu0 0.0
        %782 = vmatmul.mubr.f32.gmra.mxu0 %v608
        %v783 = vpop.f32.mrf.mxu0
        %v784 = vadd.f32 0.0, %v783
        %v785 = vpop.f32.mrf.mxu0
        %786 = vmatprep.mubr.f32.mxu0 0.0
        %787 = vmatmul.mubr.f32.gmra.mxu0 %v610
        %v788 = vpop.f32.mrf.mxu0
        %v789 = vadd.f32 0.0, %v788
        %v790 = vpop.f32.mrf.mxu0
        %791 = vmatprep.mubr.f32.mxu0 0.0
        %792 = vmatmul.mubr.f32.gmra.mxu0 %v612
        %v793 = vpop.f32.mrf.mxu0
        %v794 = vadd.f32 0.0, %v793
        %v795 = vpop.f32.mrf.mxu0
        %796 = vmatprep.mubr.f32.mxu0 0.0
        %797 = vmatmul.mubr.f32.gmra.mxu0 %v614
        %v798 = vpop.f32.mrf.mxu0
        %v799 = vadd.f32 0.0, %v798
        %v800 = vpop.f32.mrf.mxu0
        %801 = vmatprep.mubr.f32.mxu0 0.0
        %802 = vmatmul.mubr.f32.gmra.mxu0 %v616
        %v803 = vpop.f32.mrf.mxu0
        %v804 = vadd.f32 0.0, %v803
        %v805 = vpop.f32.mrf.mxu0
        %806 = vmatprep.mubr.f32.mxu0 0.0
        %807 = vmatmul.mubr.f32.gmra.mxu0 %v618
        %v808 = vpop.f32.mrf.mxu0
        %v809 = vadd.f32 0.0, %v808
        %v810 = vpop.f32.mrf.mxu0
        %811 = vmatprep.mubr.f32.mxu0 0.0
        %812 = vmatmul.mubr.f32.gmra.mxu0 %v620
        %v813 = vpop.f32.mrf.mxu0
        %v814 = vadd.f32 0.0, %v813
        %v815 = vpop.f32.mrf.mxu0
        %816 = vmatprep.mubr.f32.mxu0 0.0
        %817 = vmatmul.mubr.f32.gmra.mxu0 %v622
        %v818 = vpop.f32.mrf.mxu0
        %v819 = vadd.f32 0.0, %v818
        %v820 = vpop.f32.mrf.mxu0
        %821 = vmatprep.mubr.f32.mxu0 0.0
        %822 = vmatmul.mubr.f32.gmra.mxu0 %v624
        %v823 = vpop.f32.mrf.mxu0
        %v824 = vadd.f32 0.0, %v823
        %v825 = vpop.f32.mrf.mxu0
        %826 = vmatprep.mubr.f32.mxu0 0.0
        %827 = vmatmul.mubr.f32.gmra.mxu0 %v626
        %v828 = vpop.f32.mrf.mxu0
        %v829 = vadd.f32 0.0, %v828
        %v830 = vpop.f32.mrf.mxu0
        %831 = vmatprep.mubr.f32.mxu0 0.0
        %832 = vmatmul.mubr.f32.gmra.mxu0 %v628
        %v833 = vpop.f32.mrf.mxu0
        %v834 = vadd.f32 0.0, %v833
        %v835 = vpop.f32.mrf.mxu0
        %836 = vmatprep.mubr.f32.mxu0 0.0
        %837 = vmatmul.mubr.f32.gmra.mxu0 %v630
        %v838 = vpop.f32.mrf.mxu0
        %v839 = vadd.f32 0.0, %v838
        %v840 = vpop.f32.mrf.mxu0
        %841 = vmatprep.mubr.f32.mxu0 0.0
        %842 = vmatmul.mubr.f32.gmra.mxu0 %v632
        %v843 = vpop.f32.mrf.mxu0
        %v844 = vadd.f32 0.0, %v843
        %v845 = vpop.f32.mrf.mxu0
        %846 = vmatprep.mubr.f32.mxu0 0.0
        %847 = vmatmul.mubr.f32.gmra.mxu0 %v634
        %v848 = vpop.f32.mrf.mxu0
        %v849 = vadd.f32 0.0, %v848
        %v850 = vpop.f32.mrf.mxu0
        %851 = vmatprep.mubr.f32.mxu0 0.0
        %852 = vmatmul.mubr.f32.gmra.mxu0 %v636
        %v853 = vpop.f32.mrf.mxu0
        %v854 = vadd.f32 0.0, %v853
        %v855 = vpop.f32.mrf.mxu0
        %856 = vmatprep.mubr.f32.mxu0 0.0
        %857 = vmatmul.mubr.f32.gmra.mxu0 %v638
        %v858 = vpop.f32.mrf.mxu0
        %v859 = vadd.f32 0.0, %v858
        %v860 = vpop.f32.mrf.mxu0
        %861 = vmatprep.mubr.f32.mxu0 0.0
        %862 = vmatmul.mubr.f32.gmra.mxu0 %v640
        %v863 = vpop.f32.mrf.mxu0
        %v864 = vadd.f32 0.0, %v863
        %v865 = vpop.f32.mrf.mxu0
        %866 = vdwg.mxu0
        %v867 = vsel %vm577, %v358, 0
        %v869 = vsel %vm577, %v359, 0
        %v871 = vsel %vm577, %v361, 0
        %v873 = vsel %vm577, %v362, 0
        %v875 = vsel %vm577, %v364, 0
        %v877 = vsel %vm577, %v365, 0
        %v879 = vsel %vm577, %v367, 0
        %v881 = vsel %vm577, %v368, 0
        %v883 = vsel %vm577, %v370, 0
        %v885 = vsel %vm577, %v371, 0
        %v887 = vsel %vm577, %v373, 0
        %v889 = vsel %vm577, %v374, 0
        %v891 = vsel %vm577, %v376, 0
        %v893 = vsel %vm577, %v377, 0
        %v895 = vsel %vm577, %v379, 0
        %v897 = vsel %vm577, %v380, 0
        %v899 = vsel %vm577, %v382, 0
        %v901 = vsel %vm577, %v383, 0
        %v903 = vsel %vm577, %v385, 0
        %v905 = vsel %vm577, %v386, 0
        %v907 = vsel %vm577, %v388, 0
        %v909 = vsel %vm577, %v389, 0
        %v911 = vsel %vm577, %v391, 0
        %v913 = vsel %vm577, %v392, 0
        %v915 = vsel %vm577, %v394, 0
        %v917 = vsel %vm577, %v395, 0
        %v919 = vsel %vm577, %v397, 0
        %v921 = vsel %vm577, %v398, 0
        %v923 = vsel %vm577, %v400, 0
        %v925 = vsel %vm577, %v401, 0
        %v927 = vsel %vm577, %v403, 0
        %v929 = vsel %vm577, %v404, 0
        %931 = vmatprep.subr.mxu0 0.0
        %932 = vmatpush1.msra.mxu0 0.0
        %933 = vmatprep.subr.mxu0 0.0
        %934 = vmatpush1.msra.mxu0 0.0
        %935 = vmatprep.subr.mxu0 0.0
        %936 = vmatpush1.msra.mxu0 0.0
        %937 = vmatprep.subr.mxu0 0.0
        %938 = vmatpush1.msra.mxu0 0.0
        %939 = vmatprep.subr.mxu0 0.0
        %940 = vmatpush1.msra.mxu0 0.0
        %941 = vmatprep.subr.mxu0 0.0
        %942 = vmatpush1.msra.mxu0 0.0
        %943 = vmatprep.subr.mxu0 0.0
        %944 = vmatpush1.msra.mxu0 0.0
        %945 = vmatprep.subr.mxu0 0.0
        %946 = vmatpush1.msra.mxu0 0.0
        %947 = vmatprep.subr.mxu0 0.0
        %948 = vmatpush1.msra.mxu0 0.0
        %949 = vmatprep.subr.mxu0 0.0
        %950 = vmatpush1.msra.mxu0 0.0
        %951 = vmatprep.subr.mxu0 0.0
        %952 = vmatpush1.msra.mxu0 0.0
        %953 = vmatprep.subr.mxu0 0.0
        %954 = vmatpush1.msra.mxu0 0.0
        %955 = vmatprep.subr.mxu0 0.0
        %956 = vmatpush1.msra.mxu0 %v415
        %957 = vmatprep.subr.mxu0 0.0
        %958 = vmatpush1.msra.mxu0 %v414
        %959 = vmatprep.subr.mxu0 0.0
        %960 = vmatpush1.msra.mxu0 %v413
        %961 = vmatprep.subr.mxu0 0.0
        %962 = vmatpush1.msra.mxu0 %v412
        %963 = vmatprep.subr.mxu0 0.0
        %964 = vmatpush2.msra.mxu0 0.0
        %965 = vmatprep.subr.mxu0 0.0
        %966 = vmatpush2.msra.mxu0 0.0
        %967 = vmatprep.subr.mxu0 0.0
        %968 = vmatpush2.msra.mxu0 0.0
        %969 = vmatprep.subr.mxu0 0.0
        %970 = vmatpush2.msra.mxu0 0.0
        %971 = vmatprep.subr.mxu0 0.0
        %972 = vmatpush2.msra.mxu0 0.0
        %973 = vmatprep.subr.mxu0 0.0
        %974 = vmatpush2.msra.mxu0 0.0
        %975 = vmatprep.subr.mxu0 0.0
        %976 = vmatpush2.msra.mxu0 0.0
        %977 = vmatprep.subr.mxu0 0.0
        %978 = vmatpush2.msra.mxu0 0.0
        %979 = vmatprep.subr.mxu0 0.0
        %980 = vmatpush2.msra.mxu0 0.0
        %981 = vmatprep.subr.mxu0 0.0
        %982 = vmatpush2.msra.mxu0 0.0
        %983 = vmatprep.subr.mxu0 0.0
        %984 = vmatpush2.msra.mxu0 0.0
        %985 = vmatprep.subr.mxu0 0.0
        %986 = vmatpush2.msra.mxu0 0.0
        %987 = vmatprep.subr.mxu0 0.0
        %988 = vmatpush2.msra.mxu0 0.0
        %989 = vmatprep.subr.mxu0 0.0
        %990 = vmatpush2.msra.mxu0 0.0
        %991 = vmatprep.subr.mxu0 0.0
        %992 = vmatpush2.msra.mxu0 0.0
        %993 = vmatprep.subr.mxu0 0.0
        %994 = vmatpush2.msra.mxu0 0.0
        %995 = vmatprep.mubr.f32.mxu0 0.0
        %996 = vmatmul.mubr.f32.gmra.mxu0 %v867
        %v997 = vpop.f32.mrf.mxu0
        %v998 = vadd.f32 %v709, %v997
        %v999 = vpop.f32.mrf.mxu0
        %1000 = vmatprep.mubr.f32.mxu0 0.0
        %1001 = vmatmul.mubr.f32.gmra.mxu0 %v869
        %v1002 = vpop.f32.mrf.mxu0
        %v1003 = vadd.f32 %v714, %v1002
        %v1004 = vpop.f32.mrf.mxu0
        %1005 = vmatprep.mubr.f32.mxu0 0.0
        %1006 = vmatmul.mubr.f32.gmra.mxu0 %v871
        %v1007 = vpop.f32.mrf.mxu0
        %v1008 = vadd.f32 %v719, %v1007
        %v1009 = vpop.f32.mrf.mxu0
        %1010 = vmatprep.mubr.f32.mxu0 0.0
        %1011 = vmatmul.mubr.f32.gmra.mxu0 %v873
        %v1012 = vpop.f32.mrf.mxu0
        %v1013 = vadd.f32 %v724, %v1012
        %v1014 = vpop.f32.mrf.mxu0
        %1015 = vmatprep.mubr.f32.mxu0 0.0
        %1016 = vmatmul.mubr.f32.gmra.mxu0 %v875
        %v1017 = vpop.f32.mrf.mxu0
        %v1018 = vadd.f32 %v729, %v1017
        %v1019 = vpop.f32.mrf.mxu0
        %1020 = vmatprep.mubr.f32.mxu0 0.0
        %1021 = vmatmul.mubr.f32.gmra.mxu0 %v877
        %v1022 = vpop.f32.mrf.mxu0
        %v1023 = vadd.f32 %v734, %v1022
        %v1024 = vpop.f32.mrf.mxu0
        %1025 = vmatprep.mubr.f32.mxu0 0.0
        %1026 = vmatmul.mubr.f32.gmra.mxu0 %v879
        %v1027 = vpop.f32.mrf.mxu0
        %v1028 = vadd.f32 %v739, %v1027
        %v1029 = vpop.f32.mrf.mxu0
        %1030 = vmatprep.mubr.f32.mxu0 0.0
        %1031 = vmatmul.mubr.f32.gmra.mxu0 %v881
        %v1032 = vpop.f32.mrf.mxu0
        %v1033 = vadd.f32 %v744, %v1032
        %v1034 = vpop.f32.mrf.mxu0
        %1035 = vmatprep.mubr.f32.mxu0 0.0
        %1036 = vmatmul.mubr.f32.gmra.mxu0 %v883
        %v1037 = vpop.f32.mrf.mxu0
        %v1038 = vadd.f32 %v749, %v1037
        %v1039 = vpop.f32.mrf.mxu0
        %1040 = vmatprep.mubr.f32.mxu0 0.0
        %1041 = vmatmul.mubr.f32.gmra.mxu0 %v885
        %v1042 = vpop.f32.mrf.mxu0
        %v1043 = vadd.f32 %v754, %v1042
        %v1044 = vpop.f32.mrf.mxu0
        %1045 = vmatprep.mubr.f32.mxu0 0.0
        %1046 = vmatmul.mubr.f32.gmra.mxu0 %v887
        %v1047 = vpop.f32.mrf.mxu0
        %v1048 = vadd.f32 %v759, %v1047
        %v1049 = vpop.f32.mrf.mxu0
        %1050 = vmatprep.mubr.f32.mxu0 0.0
        %1051 = vmatmul.mubr.f32.gmra.mxu0 %v889
        %v1052 = vpop.f32.mrf.mxu0
        %v1053 = vadd.f32 %v764, %v1052
        %v1054 = vpop.f32.mrf.mxu0
        %1055 = vmatprep.mubr.f32.mxu0 0.0
        %1056 = vmatmul.mubr.f32.gmra.mxu0 %v891
        %v1057 = vpop.f32.mrf.mxu0
        %v1058 = vadd.f32 %v769, %v1057
        %v1059 = vpop.f32.mrf.mxu0
        %1060 = vmatprep.mubr.f32.mxu0 0.0
        %1061 = vmatmul.mubr.f32.gmra.mxu0 %v893
        %v1062 = vpop.f32.mrf.mxu0
        %v1063 = vadd.f32 %v774, %v1062
        %v1064 = vpop.f32.mrf.mxu0
        %1065 = vmatprep.mubr.f32.mxu0 0.0
        %1066 = vmatmul.mubr.f32.gmra.mxu0 %v895
        %v1067 = vpop.f32.mrf.mxu0
        %v1068 = vadd.f32 %v779, %v1067
        %v1069 = vpop.f32.mrf.mxu0
        %1070 = vmatprep.mubr.f32.mxu0 0.0
        %1071 = vmatmul.mubr.f32.gmra.mxu0 %v897
        %v1072 = vpop.f32.mrf.mxu0
        %v1073 = vadd.f32 %v784, %v1072
        %v1074 = vpop.f32.mrf.mxu0
        %1075 = vmatprep.mubr.f32.mxu0 0.0
        %1076 = vmatmul.mubr.f32.gmra.mxu0 %v899
        %v1077 = vpop.f32.mrf.mxu0
        %v1078 = vadd.f32 %v789, %v1077
        %v1079 = vpop.f32.mrf.mxu0
        %1080 = vmatprep.mubr.f32.mxu0 0.0
        %1081 = vmatmul.mubr.f32.gmra.mxu0 %v901
        %v1082 = vpop.f32.mrf.mxu0
        %v1083 = vadd.f32 %v794, %v1082
        %v1084 = vpop.f32.mrf.mxu0
        %1085 = vmatprep.mubr.f32.mxu0 0.0
        %1086 = vmatmul.mubr.f32.gmra.mxu0 %v903
        %v1087 = vpop.f32.mrf.mxu0
        %v1088 = vadd.f32 %v799, %v1087
        %v1089 = vpop.f32.mrf.mxu0
        %1090 = vmatprep.mubr.f32.mxu0 0.0
        %1091 = vmatmul.mubr.f32.gmra.mxu0 %v905
        %v1092 = vpop.f32.mrf.mxu0
        %v1093 = vadd.f32 %v804, %v1092
        %v1094 = vpop.f32.mrf.mxu0
        %1095 = vmatprep.mubr.f32.mxu0 0.0
        %1096 = vmatmul.mubr.f32.gmra.mxu0 %v907
        %v1097 = vpop.f32.mrf.mxu0
        %v1098 = vadd.f32 %v809, %v1097
        %v1099 = vpop.f32.mrf.mxu0
        %1100 = vmatprep.mubr.f32.mxu0 0.0
        %1101 = vmatmul.mubr.f32.gmra.mxu0 %v909
        %v1102 = vpop.f32.mrf.mxu0
        %v1103 = vadd.f32 %v814, %v1102
        %v1104 = vpop.f32.mrf.mxu0
        %1105 = vmatprep.mubr.f32.mxu0 0.0
        %1106 = vmatmul.mubr.f32.gmra.mxu0 %v911
        %v1107 = vpop.f32.mrf.mxu0
        %v1108 = vadd.f32 %v819, %v1107
        %v1109 = vpop.f32.mrf.mxu0
        %1110 = vmatprep.mubr.f32.mxu0 0.0
        %1111 = vmatmul.mubr.f32.gmra.mxu0 %v913
        %v1112 = vpop.f32.mrf.mxu0
        %v1113 = vadd.f32 %v824, %v1112
        %v1114 = vpop.f32.mrf.mxu0
        %1115 = vmatprep.mubr.f32.mxu0 0.0
        %1116 = vmatmul.mubr.f32.gmra.mxu0 %v915
        %v1117 = vpop.f32.mrf.mxu0
        %v1118 = vadd.f32 %v829, %v1117
        %v1119 = vpop.f32.mrf.mxu0
        %1120 = vmatprep.mubr.f32.mxu0 0.0
        %1121 = vmatmul.mubr.f32.gmra.mxu0 %v917
        %v1122 = vpop.f32.mrf.mxu0
        %v1123 = vadd.f32 %v834, %v1122
        %v1124 = vpop.f32.mrf.mxu0
        %1125 = vmatprep.mubr.f32.mxu0 0.0
        %1126 = vmatmul.mubr.f32.gmra.mxu0 %v919
        %v1127 = vpop.f32.mrf.mxu0
        %v1128 = vadd.f32 %v839, %v1127
        %v1129 = vpop.f32.mrf.mxu0
        %1130 = vmatprep.mubr.f32.mxu0 0.0
        %1131 = vmatmul.mubr.f32.gmra.mxu0 %v921
        %v1132 = vpop.f32.mrf.mxu0
        %v1133 = vadd.f32 %v844, %v1132
        %v1134 = vpop.f32.mrf.mxu0
        %1135 = vmatprep.mubr.f32.mxu0 0.0
        %1136 = vmatmul.mubr.f32.gmra.mxu0 %v923
        %v1137 = vpop.f32.mrf.mxu0
        %v1138 = vadd.f32 %v849, %v1137
        %v1139 = vpop.f32.mrf.mxu0
        %1140 = vmatprep.mubr.f32.mxu0 0.0
        %1141 = vmatmul.mubr.f32.gmra.mxu0 %v925
        %v1142 = vpop.f32.mrf.mxu0
        %v1143 = vadd.f32 %v854, %v1142
        %v1144 = vpop.f32.mrf.mxu0
        %1145 = vmatprep.mubr.f32.mxu0 0.0
        %1146 = vmatmul.mubr.f32.gmra.mxu0 %v927
        %v1147 = vpop.f32.mrf.mxu0
        %v1148 = vadd.f32 %v859, %v1147
        %v1149 = vpop.f32.mrf.mxu0
        %1150 = vmatprep.mubr.f32.mxu0 0.0
        %1151 = vmatmul.mubr.f32.gmra.mxu0 %v929
        %v1152 = vpop.f32.mrf.mxu0
        %v1153 = vadd.f32 %v864, %v1152
        %v1154 = vpop.f32.mrf.mxu0
        %1155 = vdwg.mxu0
        %vm1156 = vcmask 1045504
        %v1157 = vrot.slane %v358, 2
        %v1158 = vrot.slane %v359, 2
        %v1159 = vsel %vm1156, %v1157, %v1158
        %v1160 = vrot.slane %v360, 2
        %v1161 = vsel %vm1156, %v1158, %v1160
        %v1162 = vrot.slane %v361, 2
        %v1163 = vrot.slane %v362, 2
        %v1164 = vsel %vm1156, %v1162, %v1163
        %v1165 = vrot.slane %v363, 2
        %v1166 = vsel %vm1156, %v1163, %v1165
        %v1167 = vrot.slane %v364, 2
        %v1168 = vrot.slane %v365, 2
        %v1169 = vsel %vm1156, %v1167, %v1168
        %v1170 = vrot.slane %v366, 2
        %v1171 = vsel %vm1156, %v1168, %v1170
        %v1172 = vrot.slane %v367, 2
        %v1173 = vrot.slane %v368, 2
        %v1174 = vsel %vm1156, %v1172, %v1173
        %v1175 = vrot.slane %v369, 2
        %v1176 = vsel %vm1156, %v1173, %v1175
        %v1177 = vrot.slane %v370, 2
        %v1178 = vrot.slane %v371, 2
        %v1179 = vsel %vm1156, %v1177, %v1178
        %v1180 = vrot.slane %v372, 2
        %v1181 = vsel %vm1156, %v1178, %v1180
        %v1182 = vrot.slane %v373, 2
        %v1183 = vrot.slane %v374, 2
        %v1184 = vsel %vm1156, %v1182, %v1183
        %v1185 = vrot.slane %v375, 2
        %v1186 = vsel %vm1156, %v1183, %v1185
        %v1187 = vrot.slane %v376, 2
        %v1188 = vrot.slane %v377, 2
        %v1189 = vsel %vm1156, %v1187, %v1188
        %v1190 = vrot.slane %v378, 2
        %v1191 = vsel %vm1156, %v1188, %v1190
        %v1192 = vrot.slane %v379, 2
        %v1193 = vrot.slane %v380, 2
        %v1194 = vsel %vm1156, %v1192, %v1193
        %v1195 = vrot.slane %v381, 2
        %v1196 = vsel %vm1156, %v1193, %v1195
        %v1197 = vrot.slane %v382, 2
        %v1198 = vrot.slane %v383, 2
        %v1199 = vsel %vm1156, %v1197, %v1198
        %v1200 = vrot.slane %v384, 2
        %v1201 = vsel %vm1156, %v1198, %v1200
        %v1202 = vrot.slane %v385, 2
        %v1203 = vrot.slane %v386, 2
        %v1204 = vsel %vm1156, %v1202, %v1203
        %v1205 = vrot.slane %v387, 2
        %v1206 = vsel %vm1156, %v1203, %v1205
        %v1207 = vrot.slane %v388, 2
        %v1208 = vrot.slane %v389, 2
        %v1209 = vsel %vm1156, %v1207, %v1208
        %v1210 = vrot.slane %v390, 2
        %v1211 = vsel %vm1156, %v1208, %v1210
        %v1212 = vrot.slane %v391, 2
        %v1213 = vrot.slane %v392, 2
        %v1214 = vsel %vm1156, %v1212, %v1213
        %v1215 = vrot.slane %v393, 2
        %v1216 = vsel %vm1156, %v1213, %v1215
        %v1217 = vrot.slane %v394, 2
        %v1218 = vrot.slane %v395, 2
        %v1219 = vsel %vm1156, %v1217, %v1218
        %v1220 = vrot.slane %v396, 2
        %v1221 = vsel %vm1156, %v1218, %v1220
        %v1222 = vrot.slane %v397, 2
        %v1223 = vrot.slane %v398, 2
        %v1224 = vsel %vm1156, %v1222, %v1223
        %v1225 = vrot.slane %v399, 2
        %v1226 = vsel %vm1156, %v1223, %v1225
        %v1227 = vrot.slane %v400, 2
        %v1228 = vrot.slane %v401, 2
        %v1229 = vsel %vm1156, %v1227, %v1228
        %v1230 = vrot.slane %v402, 2
        %v1231 = vsel %vm1156, %v1228, %v1230
        %v1232 = vrot.slane %v403, 2
        %v1233 = vrot.slane %v404, 2
        %v1234 = vsel %vm1156, %v1232, %v1233
        %v1235 = vrot.slane %v405, 2
        %v1236 = vsel %vm1156, %v1233, %v1235
        %v1237 = vsel %vm577, %v1159, 0
        %v1239 = vsel %vm577, %v1161, 0
        %v1241 = vsel %vm577, %v1164, 0
        %v1243 = vsel %vm577, %v1166, 0
        %v1245 = vsel %vm577, %v1169, 0
        %v1247 = vsel %vm577, %v1171, 0
        %v1249 = vsel %vm577, %v1174, 0
        %v1251 = vsel %vm577, %v1176, 0
        %v1253 = vsel %vm577, %v1179, 0
        %v1255 = vsel %vm577, %v1181, 0
        %v1257 = vsel %vm577, %v1184, 0
        %v1259 = vsel %vm577, %v1186, 0
        %v1261 = vsel %vm577, %v1189, 0
        %v1263 = vsel %vm577, %v1191, 0
        %v1265 = vsel %vm577, %v1194, 0
        %v1267 = vsel %vm577, %v1196, 0
        %v1269 = vsel %vm577, %v1199, 0
        %v1271 = vsel %vm577, %v1201, 0
        %v1273 = vsel %vm577, %v1204, 0
        %v1275 = vsel %vm577, %v1206, 0
        %v1277 = vsel %vm577, %v1209, 0
        %v1279 = vsel %vm577, %v1211, 0
        %v1281 = vsel %vm577, %v1214, 0
        %v1283 = vsel %vm577, %v1216, 0
        %v1285 = vsel %vm577, %v1219, 0
        %v1287 = vsel %vm577, %v1221, 0
        %v1289 = vsel %vm577, %v1224, 0
        %v1291 = vsel %vm577, %v1226, 0
        %v1293 = vsel %vm577, %v1229, 0
        %v1295 = vsel %vm577, %v1231, 0
        %v1297 = vsel %vm577, %v1234, 0
        %v1299 = vsel %vm577, %v1236, 0
        %1301 = vmatprep.subr.mxu0 0.0
        %1302 = vmatpush1.msra.mxu0 0.0
        %1303 = vmatprep.subr.mxu0 0.0
        %1304 = vmatpush1.msra.mxu0 0.0
        %1305 = vmatprep.subr.mxu0 0.0
        %1306 = vmatpush1.msra.mxu0 0.0
        %1307 = vmatprep.subr.mxu0 0.0
        %1308 = vmatpush1.msra.mxu0 0.0
        %1309 = vmatprep.subr.mxu0 0.0
        %1310 = vmatpush1.msra.mxu0 0.0
        %1311 = vmatprep.subr.mxu0 0.0
        %1312 = vmatpush1.msra.mxu0 0.0
        %1313 = vmatprep.subr.mxu0 0.0
        %1314 = vmatpush1.msra.mxu0 0.0
        %1315 = vmatprep.subr.mxu0 0.0
        %1316 = vmatpush1.msra.mxu0 0.0
        %1317 = vmatprep.subr.mxu0 0.0
        %1318 = vmatpush1.msra.mxu0 0.0
        %1319 = vmatprep.subr.mxu0 0.0
        %1320 = vmatpush1.msra.mxu0 0.0
        %1321 = vmatprep.subr.mxu0 0.0
        %1322 = vmatpush1.msra.mxu0 0.0
        %1323 = vmatprep.subr.mxu0 0.0
        %1324 = vmatpush1.msra.mxu0 0.0
        %1325 = vmatprep.subr.mxu0 0.0
        %1326 = vmatpush1.msra.mxu0 %v423
        %1327 = vmatprep.subr.mxu0 0.0
        %1328 = vmatpush1.msra.mxu0 %v422
        %1329 = vmatprep.subr.mxu0 0.0
        %1330 = vmatpush1.msra.mxu0 %v421
        %1331 = vmatprep.subr.mxu0 0.0
        %1332 = vmatpush1.msra.mxu0 %v420
        %1333 = vmatprep.subr.mxu0 0.0
        %1334 = vmatpush2.msra.mxu0 0.0
        %1335 = vmatprep.subr.mxu0 0.0
        %1336 = vmatpush2.msra.mxu0 0.0
        %1337 = vmatprep.subr.mxu0 0.0
        %1338 = vmatpush2.msra.mxu0 0.0
        %1339 = vmatprep.subr.mxu0 0.0
        %1340 = vmatpush2.msra.mxu0 0.0
        %1341 = vmatprep.subr.mxu0 0.0
        %1342 = vmatpush2.msra.mxu0 0.0
        %1343 = vmatprep.subr.mxu0 0.0
        %1344 = vmatpush2.msra.mxu0 0.0
        %1345 = vmatprep.subr.mxu0 0.0
        %1346 = vmatpush2.msra.mxu0 0.0
        %1347 = vmatprep.subr.mxu0 0.0
        %1348 = vmatpush2.msra.mxu0 0.0
        %1349 = vmatprep.subr.mxu0 0.0
        %1350 = vmatpush2.msra.mxu0 0.0
        %1351 = vmatprep.subr.mxu0 0.0
        %1352 = vmatpush2.msra.mxu0 0.0
        %1353 = vmatprep.subr.mxu0 0.0
        %1354 = vmatpush2.msra.mxu0 0.0
        %1355 = vmatprep.subr.mxu0 0.0
        %1356 = vmatpush2.msra.mxu0 0.0
        %1357 = vmatprep.subr.mxu0 0.0
        %1358 = vmatpush2.msra.mxu0 0.0
        %1359 = vmatprep.subr.mxu0 0.0
        %1360 = vmatpush2.msra.mxu0 0.0
        %1361 = vmatprep.subr.mxu0 0.0
        %1362 = vmatpush2.msra.mxu0 0.0
        %1363 = vmatprep.subr.mxu0 0.0
        %1364 = vmatpush2.msra.mxu0 0.0
        %1365 = vmatprep.mubr.f32.mxu0 0.0
        %1366 = vmatmul.mubr.f32.gmra.mxu0 %v1237
        %v1367 = vpop.f32.mrf.mxu0
        %v1368 = vadd.f32 0.0, %v1367
        %v1369 = vpop.f32.mrf.mxu0
        %1370 = vmatprep.mubr.f32.mxu0 0.0
        %1371 = vmatmul.mubr.f32.gmra.mxu0 %v1239
        %v1372 = vpop.f32.mrf.mxu0
        %v1373 = vadd.f32 0.0, %v1372
        %v1374 = vpop.f32.mrf.mxu0
        %1375 = vmatprep.mubr.f32.mxu0 0.0
        %1376 = vmatmul.mubr.f32.gmra.mxu0 %v1241
        %v1377 = vpop.f32.mrf.mxu0
        %v1378 = vadd.f32 0.0, %v1377
        %v1379 = vpop.f32.mrf.mxu0
        %1380 = vmatprep.mubr.f32.mxu0 0.0
        %1381 = vmatmul.mubr.f32.gmra.mxu0 %v1243
        %v1382 = vpop.f32.mrf.mxu0
        %v1383 = vadd.f32 0.0, %v1382
        %v1384 = vpop.f32.mrf.mxu0
        %1385 = vmatprep.mubr.f32.mxu0 0.0
        %1386 = vmatmul.mubr.f32.gmra.mxu0 %v1245
        %v1387 = vpop.f32.mrf.mxu0
        %v1388 = vadd.f32 0.0, %v1387
        %v1389 = vpop.f32.mrf.mxu0
        %1390 = vmatprep.mubr.f32.mxu0 0.0
        %1391 = vmatmul.mubr.f32.gmra.mxu0 %v1247
        %v1392 = vpop.f32.mrf.mxu0
        %v1393 = vadd.f32 0.0, %v1392
        %v1394 = vpop.f32.mrf.mxu0
        %1395 = vmatprep.mubr.f32.mxu0 0.0
        %1396 = vmatmul.mubr.f32.gmra.mxu0 %v1249
        %v1397 = vpop.f32.mrf.mxu0
        %v1398 = vadd.f32 0.0, %v1397
        %v1399 = vpop.f32.mrf.mxu0
        %1400 = vmatprep.mubr.f32.mxu0 0.0
        %1401 = vmatmul.mubr.f32.gmra.mxu0 %v1251
        %v1402 = vpop.f32.mrf.mxu0
        %v1403 = vadd.f32 0.0, %v1402
        %v1404 = vpop.f32.mrf.mxu0
        %1405 = vmatprep.mubr.f32.mxu0 0.0
        %1406 = vmatmul.mubr.f32.gmra.mxu0 %v1253
        %v1407 = vpop.f32.mrf.mxu0
        %v1408 = vadd.f32 0.0, %v1407
        %v1409 = vpop.f32.mrf.mxu0
        %1410 = vmatprep.mubr.f32.mxu0 0.0
        %1411 = vmatmul.mubr.f32.gmra.mxu0 %v1255
        %v1412 = vpop.f32.mrf.mxu0
        %v1413 = vadd.f32 0.0, %v1412
        %v1414 = vpop.f32.mrf.mxu0
        %1415 = vmatprep.mubr.f32.mxu0 0.0
        %1416 = vmatmul.mubr.f32.gmra.mxu0 %v1257
        %v1417 = vpop.f32.mrf.mxu0
        %v1418 = vadd.f32 0.0, %v1417
        %v1419 = vpop.f32.mrf.mxu0
        %1420 = vmatprep.mubr.f32.mxu0 0.0
        %1421 = vmatmul.mubr.f32.gmra.mxu0 %v1259
        %v1422 = vpop.f32.mrf.mxu0
        %v1423 = vadd.f32 0.0, %v1422
        %v1424 = vpop.f32.mrf.mxu0
        %1425 = vmatprep.mubr.f32.mxu0 0.0
        %1426 = vmatmul.mubr.f32.gmra.mxu0 %v1261
        %v1427 = vpop.f32.mrf.mxu0
        %v1428 = vadd.f32 0.0, %v1427
        %v1429 = vpop.f32.mrf.mxu0
        %1430 = vmatprep.mubr.f32.mxu0 0.0
        %1431 = vmatmul.mubr.f32.gmra.mxu0 %v1263
        %v1432 = vpop.f32.mrf.mxu0
        %v1433 = vadd.f32 0.0, %v1432
        %v1434 = vpop.f32.mrf.mxu0
        %1435 = vmatprep.mubr.f32.mxu0 0.0
        %1436 = vmatmul.mubr.f32.gmra.mxu0 %v1265
        %v1437 = vpop.f32.mrf.mxu0
        %v1438 = vadd.f32 0.0, %v1437
        %v1439 = vpop.f32.mrf.mxu0
        %1440 = vmatprep.mubr.f32.mxu0 0.0
        %1441 = vmatmul.mubr.f32.gmra.mxu0 %v1267
        %v1442 = vpop.f32.mrf.mxu0
        %v1443 = vadd.f32 0.0, %v1442
        %v1444 = vpop.f32.mrf.mxu0
        %1445 = vmatprep.mubr.f32.mxu0 0.0
        %1446 = vmatmul.mubr.f32.gmra.mxu0 %v1269
        %v1447 = vpop.f32.mrf.mxu0
        %v1448 = vadd.f32 0.0, %v1447
        %v1449 = vpop.f32.mrf.mxu0
        %1450 = vmatprep.mubr.f32.mxu0 0.0
        %1451 = vmatmul.mubr.f32.gmra.mxu0 %v1271
        %v1452 = vpop.f32.mrf.mxu0
        %v1453 = vadd.f32 0.0, %v1452
        %v1454 = vpop.f32.mrf.mxu0
        %1455 = vmatprep.mubr.f32.mxu0 0.0
        %1456 = vmatmul.mubr.f32.gmra.mxu0 %v1273
        %v1457 = vpop.f32.mrf.mxu0
        %v1458 = vadd.f32 0.0, %v1457
        %v1459 = vpop.f32.mrf.mxu0
        %1460 = vmatprep.mubr.f32.mxu0 0.0
        %1461 = vmatmul.mubr.f32.gmra.mxu0 %v1275
        %v1462 = vpop.f32.mrf.mxu0
        %v1463 = vadd.f32 0.0, %v1462
        %v1464 = vpop.f32.mrf.mxu0
        %1465 = vmatprep.mubr.f32.mxu0 0.0
        %1466 = vmatmul.mubr.f32.gmra.mxu0 %v1277
        %v1467 = vpop.f32.mrf.mxu0
        %v1468 = vadd.f32 0.0, %v1467
        %v1469 = vpop.f32.mrf.mxu0
        %1470 = vmatprep.mubr.f32.mxu0 0.0
        %1471 = vmatmul.mubr.f32.gmra.mxu0 %v1279
        %v1472 = vpop.f32.mrf.mxu0
        %v1473 = vadd.f32 0.0, %v1472
        %v1474 = vpop.f32.mrf.mxu0
        %1475 = vmatprep.mubr.f32.mxu0 0.0
        %1476 = vmatmul.mubr.f32.gmra.mxu0 %v1281
        %v1477 = vpop.f32.mrf.mxu0
        %v1478 = vadd.f32 0.0, %v1477
        %v1479 = vpop.f32.mrf.mxu0
        %1480 = vmatprep.mubr.f32.mxu0 0.0
        %1481 = vmatmul.mubr.f32.gmra.mxu0 %v1283
        %v1482 = vpop.f32.mrf.mxu0
        %v1483 = vadd.f32 0.0, %v1482
        %v1484 = vpop.f32.mrf.mxu0
        %1485 = vmatprep.mubr.f32.mxu0 0.0
        %1486 = vmatmul.mubr.f32.gmra.mxu0 %v1285
        %v1487 = vpop.f32.mrf.mxu0
        %v1488 = vadd.f32 0.0, %v1487
        %v1489 = vpop.f32.mrf.mxu0
        %1490 = vmatprep.mubr.f32.mxu0 0.0
        %1491 = vmatmul.mubr.f32.gmra.mxu0 %v1287
        %v1492 = vpop.f32.mrf.mxu0
        %v1493 = vadd.f32 0.0, %v1492
        %v1494 = vpop.f32.mrf.mxu0
        %1495 = vmatprep.mubr.f32.mxu0 0.0
        %1496 = vmatmul.mubr.f32.gmra.mxu0 %v1289
        %v1497 = vpop.f32.mrf.mxu0
        %v1498 = vadd.f32 0.0, %v1497
        %v1499 = vpop.f32.mrf.mxu0
        %1500 = vmatprep.mubr.f32.mxu0 0.0
        %1501 = vmatmul.mubr.f32.gmra.mxu0 %v1291
        %v1502 = vpop.f32.mrf.mxu0
        %v1503 = vadd.f32 0.0, %v1502
        %v1504 = vpop.f32.mrf.mxu0
        %1505 = vmatprep.mubr.f32.mxu0 0.0
        %1506 = vmatmul.mubr.f32.gmra.mxu0 %v1293
        %v1507 = vpop.f32.mrf.mxu0
        %v1508 = vadd.f32 0.0, %v1507
        %v1509 = vpop.f32.mrf.mxu0
        %1510 = vmatprep.mubr.f32.mxu0 0.0
        %1511 = vmatmul.mubr.f32.gmra.mxu0 %v1295
        %v1512 = vpop.f32.mrf.mxu0
        %v1513 = vadd.f32 0.0, %v1512
        %v1514 = vpop.f32.mrf.mxu0
        %1515 = vmatprep.mubr.f32.mxu0 0.0
        %1516 = vmatmul.mubr.f32.gmra.mxu0 %v1297
        %v1517 = vpop.f32.mrf.mxu0
        %v1518 = vadd.f32 0.0, %v1517
        %v1519 = vpop.f32.mrf.mxu0
        %1520 = vmatprep.mubr.f32.mxu0 0.0
        %1521 = vmatmul.mubr.f32.gmra.mxu0 %v1299
        %v1522 = vpop.f32.mrf.mxu0
        %v1523 = vadd.f32 0.0, %v1522
        %v1524 = vpop.f32.mrf.mxu0
        %1525 = vdwg.mxu0
        %v1526 = vadd.f32 %v998, %v1368
        %v1527 = vadd.f32 %v1003, %v1373
        %v1528 = vadd.f32 %v1008, %v1378
        %v1529 = vadd.f32 %v1013, %v1383
        %v1530 = vadd.f32 %v1018, %v1388
        %v1531 = vadd.f32 %v1023, %v1393
        %v1532 = vadd.f32 %v1028, %v1398
        %v1533 = vadd.f32 %v1033, %v1403
        %v1534 = vadd.f32 %v1038, %v1408
        %v1535 = vadd.f32 %v1043, %v1413
        %v1536 = vadd.f32 %v1048, %v1418
        %v1537 = vadd.f32 %v1053, %v1423
        %v1538 = vadd.f32 %v1058, %v1428
        %v1539 = vadd.f32 %v1063, %v1433
        %v1540 = vadd.f32 %v1068, %v1438
        %v1541 = vadd.f32 %v1073, %v1443
        %v1542 = vadd.f32 %v1078, %v1448
        %v1543 = vadd.f32 %v1083, %v1453
        %v1544 = vadd.f32 %v1088, %v1458
        %v1545 = vadd.f32 %v1093, %v1463
        %v1546 = vadd.f32 %v1098, %v1468
        %v1547 = vadd.f32 %v1103, %v1473
        %v1548 = vadd.f32 %v1108, %v1478
        %v1549 = vadd.f32 %v1113, %v1483
        %v1550 = vadd.f32 %v1118, %v1488
        %v1551 = vadd.f32 %v1123, %v1493
        %v1552 = vadd.f32 %v1128, %v1498
        %v1553 = vadd.f32 %v1133, %v1503
        %v1554 = vadd.f32 %v1138, %v1508
        %v1555 = vadd.f32 %v1143, %v1513
        %v1556 = vadd.f32 %v1148, %v1518
        %v1557 = vadd.f32 %v1153, %v1523
        %v1559 = vsel %vm577, %v406, 0
        %v1562 = vsel %vm577, %v407, 0
        %1564 = vmatprep.subr.mxu0 0.0
        %1565 = vmatpush1.msra.mxu0 0.0
        %1566 = vmatprep.subr.mxu0 0.0
        %1567 = vmatpush1.msra.mxu0 0.0
        %1568 = vmatprep.subr.mxu0 0.0
        %1569 = vmatpush1.msra.mxu0 0.0
        %1570 = vmatprep.subr.mxu0 0.0
        %1571 = vmatpush1.msra.mxu0 0.0
        %1572 = vmatprep.subr.mxu0 0.0
        %1573 = vmatpush1.msra.mxu0 0.0
        %1574 = vmatprep.subr.mxu0 0.0
        %1575 = vmatpush1.msra.mxu0 0.0
        %1576 = vmatprep.subr.mxu0 0.0
        %1577 = vmatpush1.msra.mxu0 0.0
        %1578 = vmatprep.subr.mxu0 0.0
        %1579 = vmatpush1.msra.mxu0 0.0
        %1580 = vmatprep.subr.mxu0 0.0
        %1581 = vmatpush1.msra.mxu0 0.0
        %1582 = vmatprep.subr.mxu0 0.0
        %1583 = vmatpush1.msra.mxu0 0.0
        %1584 = vmatprep.subr.mxu0 0.0
        %1585 = vmatpush1.msra.mxu0 0.0
        %1586 = vmatprep.subr.mxu0 0.0
        %1587 = vmatpush1.msra.mxu0 0.0
        %1588 = vmatprep.subr.mxu0 0.0
        %1589 = vmatpush1.msra.mxu0 %v427
        %1590 = vmatprep.subr.mxu0 0.0
        %1591 = vmatpush1.msra.mxu0 %v426
        %1592 = vmatprep.subr.mxu0 0.0
        %1593 = vmatpush1.msra.mxu0 %v425
        %1594 = vmatprep.subr.mxu0 0.0
        %1595 = vmatpush1.msra.mxu0 %v424
        %1596 = vmatprep.subr.mxu0 0.0
        %1597 = vmatpush2.msra.mxu0 0.0
        %1598 = vmatprep.subr.mxu0 0.0
        %1599 = vmatpush2.msra.mxu0 0.0
        %1600 = vmatprep.subr.mxu0 0.0
        %1601 = vmatpush2.msra.mxu0 0.0
        %1602 = vmatprep.subr.mxu0 0.0
        %1603 = vmatpush2.msra.mxu0 0.0
        %1604 = vmatprep.subr.mxu0 0.0
        %1605 = vmatpush2.msra.mxu0 0.0
        %1606 = vmatprep.subr.mxu0 0.0
        %1607 = vmatpush2.msra.mxu0 0.0
        %1608 = vmatprep.subr.mxu0 0.0
        %1609 = vmatpush2.msra.mxu0 0.0
        %1610 = vmatprep.subr.mxu0 0.0
        %1611 = vmatpush2.msra.mxu0 0.0
        %1612 = vmatprep.subr.mxu0 0.0
        %1613 = vmatpush2.msra.mxu0 0.0
        %1614 = vmatprep.subr.mxu0 0.0
        %1615 = vmatpush2.msra.mxu0 0.0
        %1616 = vmatprep.subr.mxu0 0.0
        %1617 = vmatpush2.msra.mxu0 0.0
        %1618 = vmatprep.subr.mxu0 0.0
        %1619 = vmatpush2.msra.mxu0 0.0
        %1620 = vmatprep.subr.mxu0 0.0
        %1621 = vmatpush2.msra.mxu0 0.0
        %1622 = vmatprep.subr.mxu0 0.0
        %1623 = vmatpush2.msra.mxu0 0.0
        %1624 = vmatprep.subr.mxu0 0.0
        %1625 = vmatpush2.msra.mxu0 0.0
        %1626 = vmatprep.subr.mxu0 0.0
        %1627 = vmatpush2.msra.mxu0 0.0
        %1628 = vmatprep.mubr.f32.mxu0 0.0
        %1629 = vmatmul.mubr.f32.gmra.mxu0 %v871
        %v1630 = vpop.f32.mrf.mxu0
        %v1631 = vadd.f32 0.0, %v1630
        %v1632 = vpop.f32.mrf.mxu0
        %1633 = vmatprep.mubr.f32.mxu0 0.0
        %1634 = vmatmul.mubr.f32.gmra.mxu0 %v873
        %v1635 = vpop.f32.mrf.mxu0
        %v1636 = vadd.f32 0.0, %v1635
        %v1637 = vpop.f32.mrf.mxu0
        %1638 = vmatprep.mubr.f32.mxu0 0.0
        %1639 = vmatmul.mubr.f32.gmra.mxu0 %v875
        %v1640 = vpop.f32.mrf.mxu0
        %v1641 = vadd.f32 0.0, %v1640
        %v1642 = vpop.f32.mrf.mxu0
        %1643 = vmatprep.mubr.f32.mxu0 0.0
        %1644 = vmatmul.mubr.f32.gmra.mxu0 %v877
        %v1645 = vpop.f32.mrf.mxu0
        %v1646 = vadd.f32 0.0, %v1645
        %v1647 = vpop.f32.mrf.mxu0
        %1648 = vmatprep.mubr.f32.mxu0 0.0
        %1649 = vmatmul.mubr.f32.gmra.mxu0 %v879
        %v1650 = vpop.f32.mrf.mxu0
        %v1651 = vadd.f32 0.0, %v1650
        %v1652 = vpop.f32.mrf.mxu0
        %1653 = vmatprep.mubr.f32.mxu0 0.0
        %1654 = vmatmul.mubr.f32.gmra.mxu0 %v881
        %v1655 = vpop.f32.mrf.mxu0
        %v1656 = vadd.f32 0.0, %v1655
        %v1657 = vpop.f32.mrf.mxu0
        %1658 = vmatprep.mubr.f32.mxu0 0.0
        %1659 = vmatmul.mubr.f32.gmra.mxu0 %v883
        %v1660 = vpop.f32.mrf.mxu0
        %v1661 = vadd.f32 0.0, %v1660
        %v1662 = vpop.f32.mrf.mxu0
        %1663 = vmatprep.mubr.f32.mxu0 0.0
        %1664 = vmatmul.mubr.f32.gmra.mxu0 %v885
        %v1665 = vpop.f32.mrf.mxu0
        %v1666 = vadd.f32 0.0, %v1665
        %v1667 = vpop.f32.mrf.mxu0
        %1668 = vmatprep.mubr.f32.mxu0 0.0
        %1669 = vmatmul.mubr.f32.gmra.mxu0 %v887
        %v1670 = vpop.f32.mrf.mxu0
        %v1671 = vadd.f32 0.0, %v1670
        %v1672 = vpop.f32.mrf.mxu0
        %1673 = vmatprep.mubr.f32.mxu0 0.0
        %1674 = vmatmul.mubr.f32.gmra.mxu0 %v889
        %v1675 = vpop.f32.mrf.mxu0
        %v1676 = vadd.f32 0.0, %v1675
        %v1677 = vpop.f32.mrf.mxu0
        %1678 = vmatprep.mubr.f32.mxu0 0.0
        %1679 = vmatmul.mubr.f32.gmra.mxu0 %v891
        %v1680 = vpop.f32.mrf.mxu0
        %v1681 = vadd.f32 0.0, %v1680
        %v1682 = vpop.f32.mrf.mxu0
        %1683 = vmatprep.mubr.f32.mxu0 0.0
        %1684 = vmatmul.mubr.f32.gmra.mxu0 %v893
        %v1685 = vpop.f32.mrf.mxu0
        %v1686 = vadd.f32 0.0, %v1685
        %v1687 = vpop.f32.mrf.mxu0
        %1688 = vmatprep.mubr.f32.mxu0 0.0
        %1689 = vmatmul.mubr.f32.gmra.mxu0 %v895
        %v1690 = vpop.f32.mrf.mxu0
        %v1691 = vadd.f32 0.0, %v1690
        %v1692 = vpop.f32.mrf.mxu0
        %1693 = vmatprep.mubr.f32.mxu0 0.0
        %1694 = vmatmul.mubr.f32.gmra.mxu0 %v897
        %v1695 = vpop.f32.mrf.mxu0
        %v1696 = vadd.f32 0.0, %v1695
        %v1697 = vpop.f32.mrf.mxu0
        %1698 = vmatprep.mubr.f32.mxu0 0.0
        %1699 = vmatmul.mubr.f32.gmra.mxu0 %v899
        %v1700 = vpop.f32.mrf.mxu0
        %v1701 = vadd.f32 0.0, %v1700
        %v1702 = vpop.f32.mrf.mxu0
        %1703 = vmatprep.mubr.f32.mxu0 0.0
        %1704 = vmatmul.mubr.f32.gmra.mxu0 %v901
        %v1705 = vpop.f32.mrf.mxu0
        %v1706 = vadd.f32 0.0, %v1705
        %v1707 = vpop.f32.mrf.mxu0
        %1708 = vmatprep.mubr.f32.mxu0 0.0
        %1709 = vmatmul.mubr.f32.gmra.mxu0 %v903
        %v1710 = vpop.f32.mrf.mxu0
        %v1711 = vadd.f32 0.0, %v1710
        %v1712 = vpop.f32.mrf.mxu0
        %1713 = vmatprep.mubr.f32.mxu0 0.0
        %1714 = vmatmul.mubr.f32.gmra.mxu0 %v905
        %v1715 = vpop.f32.mrf.mxu0
        %v1716 = vadd.f32 0.0, %v1715
        %v1717 = vpop.f32.mrf.mxu0
        %1718 = vmatprep.mubr.f32.mxu0 0.0
        %1719 = vmatmul.mubr.f32.gmra.mxu0 %v907
        %v1720 = vpop.f32.mrf.mxu0
        %v1721 = vadd.f32 0.0, %v1720
        %v1722 = vpop.f32.mrf.mxu0
        %1723 = vmatprep.mubr.f32.mxu0 0.0
        %1724 = vmatmul.mubr.f32.gmra.mxu0 %v909
        %v1725 = vpop.f32.mrf.mxu0
        %v1726 = vadd.f32 0.0, %v1725
        %v1727 = vpop.f32.mrf.mxu0
        %1728 = vmatprep.mubr.f32.mxu0 0.0
        %1729 = vmatmul.mubr.f32.gmra.mxu0 %v911
        %v1730 = vpop.f32.mrf.mxu0
        %v1731 = vadd.f32 0.0, %v1730
        %v1732 = vpop.f32.mrf.mxu0
        %1733 = vmatprep.mubr.f32.mxu0 0.0
        %1734 = vmatmul.mubr.f32.gmra.mxu0 %v913
        %v1735 = vpop.f32.mrf.mxu0
        %v1736 = vadd.f32 0.0, %v1735
        %v1737 = vpop.f32.mrf.mxu0
        %1738 = vmatprep.mubr.f32.mxu0 0.0
        %1739 = vmatmul.mubr.f32.gmra.mxu0 %v915
        %v1740 = vpop.f32.mrf.mxu0
        %v1741 = vadd.f32 0.0, %v1740
        %v1742 = vpop.f32.mrf.mxu0
        %1743 = vmatprep.mubr.f32.mxu0 0.0
        %1744 = vmatmul.mubr.f32.gmra.mxu0 %v917
        %v1745 = vpop.f32.mrf.mxu0
        %v1746 = vadd.f32 0.0, %v1745
        %v1747 = vpop.f32.mrf.mxu0
        %1748 = vmatprep.mubr.f32.mxu0 0.0
        %1749 = vmatmul.mubr.f32.gmra.mxu0 %v919
        %v1750 = vpop.f32.mrf.mxu0
        %v1751 = vadd.f32 0.0, %v1750
        %v1752 = vpop.f32.mrf.mxu0
        %1753 = vmatprep.mubr.f32.mxu0 0.0
        %1754 = vmatmul.mubr.f32.gmra.mxu0 %v921
        %v1755 = vpop.f32.mrf.mxu0
        %v1756 = vadd.f32 0.0, %v1755
        %v1757 = vpop.f32.mrf.mxu0
        %1758 = vmatprep.mubr.f32.mxu0 0.0
        %1759 = vmatmul.mubr.f32.gmra.mxu0 %v923
        %v1760 = vpop.f32.mrf.mxu0
        %v1761 = vadd.f32 0.0, %v1760
        %v1762 = vpop.f32.mrf.mxu0
        %1763 = vmatprep.mubr.f32.mxu0 0.0
        %1764 = vmatmul.mubr.f32.gmra.mxu0 %v925
        %v1765 = vpop.f32.mrf.mxu0
        %v1766 = vadd.f32 0.0, %v1765
        %v1767 = vpop.f32.mrf.mxu0
        %1768 = vmatprep.mubr.f32.mxu0 0.0
        %1769 = vmatmul.mubr.f32.gmra.mxu0 %v927
        %v1770 = vpop.f32.mrf.mxu0
        %v1771 = vadd.f32 0.0, %v1770
        %v1772 = vpop.f32.mrf.mxu0
        %1773 = vmatprep.mubr.f32.mxu0 0.0
        %1774 = vmatmul.mubr.f32.gmra.mxu0 %v929
        %v1775 = vpop.f32.mrf.mxu0
        %v1776 = vadd.f32 0.0, %v1775
        %v1777 = vpop.f32.mrf.mxu0
        %1778 = vmatprep.mubr.f32.mxu0 0.0
        %1779 = vmatmul.mubr.f32.gmra.mxu0 %v1559
        %v1780 = vpop.f32.mrf.mxu0
        %v1781 = vadd.f32 0.0, %v1780
        %v1782 = vpop.f32.mrf.mxu0
        %1783 = vmatprep.mubr.f32.mxu0 0.0
        %1784 = vmatmul.mubr.f32.gmra.mxu0 %v1562
        %v1785 = vpop.f32.mrf.mxu0
        %v1786 = vadd.f32 0.0, %v1785
        %v1787 = vpop.f32.mrf.mxu0
        %1788 = vdwg.mxu0
        %v1789 = vadd.f32 %v1526, %v1631
        %v1790 = vadd.f32 %v1527, %v1636
        %v1791 = vadd.f32 %v1528, %v1641
        %v1792 = vadd.f32 %v1529, %v1646
        %v1793 = vadd.f32 %v1530, %v1651
        %v1794 = vadd.f32 %v1531, %v1656
        %v1795 = vadd.f32 %v1532, %v1661
        %v1796 = vadd.f32 %v1533, %v1666
        %v1797 = vadd.f32 %v1534, %v1671
        %v1798 = vadd.f32 %v1535, %v1676
        %v1799 = vadd.f32 %v1536, %v1681
        %v1800 = vadd.f32 %v1537, %v1686
        %v1801 = vadd.f32 %v1538, %v1691
        %v1802 = vadd.f32 %v1539, %v1696
        %v1803 = vadd.f32 %v1540, %v1701
        %v1804 = vadd.f32 %v1541, %v1706
        %v1805 = vadd.f32 %v1542, %v1711
        %v1806 = vadd.f32 %v1543, %v1716
        %v1807 = vadd.f32 %v1544, %v1721
        %v1808 = vadd.f32 %v1545, %v1726
        %v1809 = vadd.f32 %v1546, %v1731
        %v1810 = vadd.f32 %v1547, %v1736
        %v1811 = vadd.f32 %v1548, %v1741
        %v1812 = vadd.f32 %v1549, %v1746
        %v1813 = vadd.f32 %v1550, %v1751
        %v1814 = vadd.f32 %v1551, %v1756
        %v1815 = vadd.f32 %v1552, %v1761
        %v1816 = vadd.f32 %v1553, %v1766
        %v1817 = vadd.f32 %v1554, %v1771
        %v1818 = vadd.f32 %v1555, %v1776
        %v1819 = vadd.f32 %v1556, %v1781
        %v1820 = vadd.f32 %v1557, %v1786
        %v1822 = vrot.slane %v406, 1
        %v1823 = vrot.slane %v407, 1
        %v1824 = vsel %vm496, %v1822, %v1823
        %v1825 = vrot.slane %v408, 1
        %v1826 = vsel %vm496, %v1823, %v1825
        %v1827 = vsel %vm577, %v1824, 0
        %v1829 = vsel %vm577, %v1826, 0
        %1831 = vmatprep.subr.mxu0 0.0
        %1832 = vmatpush1.msra.mxu0 0.0
        %1833 = vmatprep.subr.mxu0 0.0
        %1834 = vmatpush1.msra.mxu0 0.0
        %1835 = vmatprep.subr.mxu0 0.0
        %1836 = vmatpush1.msra.mxu0 0.0
        %1837 = vmatprep.subr.mxu0 0.0
        %1838 = vmatpush1.msra.mxu0 0.0
        %1839 = vmatprep.subr.mxu0 0.0
        %1840 = vmatpush1.msra.mxu0 0.0
        %1841 = vmatprep.subr.mxu0 0.0
        %1842 = vmatpush1.msra.mxu0 0.0
        %1843 = vmatprep.subr.mxu0 0.0
        %1844 = vmatpush1.msra.mxu0 0.0
        %1845 = vmatprep.subr.mxu0 0.0
        %1846 = vmatpush1.msra.mxu0 0.0
        %1847 = vmatprep.subr.mxu0 0.0
        %1848 = vmatpush1.msra.mxu0 0.0
        %1849 = vmatprep.subr.mxu0 0.0
        %1850 = vmatpush1.msra.mxu0 0.0
        %1851 = vmatprep.subr.mxu0 0.0
        %1852 = vmatpush1.msra.mxu0 0.0
        %1853 = vmatprep.subr.mxu0 0.0
        %1854 = vmatpush1.msra.mxu0 0.0
        %1855 = vmatprep.subr.mxu0 0.0
        %1856 = vmatpush1.msra.mxu0 %v431
        %1857 = vmatprep.subr.mxu0 0.0
        %1858 = vmatpush1.msra.mxu0 %v430
        %1859 = vmatprep.subr.mxu0 0.0
        %1860 = vmatpush1.msra.mxu0 %v429
        %1861 = vmatprep.subr.mxu0 0.0
        %1862 = vmatpush1.msra.mxu0 %v428
        %1863 = vmatprep.subr.mxu0 0.0
        %1864 = vmatpush2.msra.mxu0 0.0
        %1865 = vmatprep.subr.mxu0 0.0
        %1866 = vmatpush2.msra.mxu0 0.0
        %1867 = vmatprep.subr.mxu0 0.0
        %1868 = vmatpush2.msra.mxu0 0.0
        %1869 = vmatprep.subr.mxu0 0.0
        %1870 = vmatpush2.msra.mxu0 0.0
        %1871 = vmatprep.subr.mxu0 0.0
        %1872 = vmatpush2.msra.mxu0 0.0
        %1873 = vmatprep.subr.mxu0 0.0
        %1874 = vmatpush2.msra.mxu0 0.0
        %1875 = vmatprep.subr.mxu0 0.0
        %1876 = vmatpush2.msra.mxu0 0.0
        %1877 = vmatprep.subr.mxu0 0.0
        %1878 = vmatpush2.msra.mxu0 0.0
        %1879 = vmatprep.subr.mxu0 0.0
        %1880 = vmatpush2.msra.mxu0 0.0
        %1881 = vmatprep.subr.mxu0 0.0
        %1882 = vmatpush2.msra.mxu0 0.0
        %1883 = vmatprep.subr.mxu0 0.0
        %1884 = vmatpush2.msra.mxu0 0.0
        %1885 = vmatprep.subr.mxu0 0.0
        %1886 = vmatpush2.msra.mxu0 0.0
        %1887 = vmatprep.subr.mxu0 0.0
        %1888 = vmatpush2.msra.mxu0 0.0
        %1889 = vmatprep.subr.mxu0 0.0
        %1890 = vmatpush2.msra.mxu0 0.0
        %1891 = vmatprep.subr.mxu0 0.0
        %1892 = vmatpush2.msra.mxu0 0.0
        %1893 = vmatprep.subr.mxu0 0.0
        %1894 = vmatpush2.msra.mxu0 0.0
        %1895 = vmatprep.mubr.f32.mxu0 0.0
        %1896 = vmatmul.mubr.f32.gmra.mxu0 %v582
        %v1897 = vpop.f32.mrf.mxu0
        %v1898 = vadd.f32 0.0, %v1897
        %v1899 = vpop.f32.mrf.mxu0
        %1900 = vmatprep.mubr.f32.mxu0 0.0
        %1901 = vmatmul.mubr.f32.gmra.mxu0 %v584
        %v1902 = vpop.f32.mrf.mxu0
        %v1903 = vadd.f32 0.0, %v1902
        %v1904 = vpop.f32.mrf.mxu0
        %1905 = vmatprep.mubr.f32.mxu0 0.0
        %1906 = vmatmul.mubr.f32.gmra.mxu0 %v586
        %v1907 = vpop.f32.mrf.mxu0
        %v1908 = vadd.f32 0.0, %v1907
        %v1909 = vpop.f32.mrf.mxu0
        %1910 = vmatprep.mubr.f32.mxu0 0.0
        %1911 = vmatmul.mubr.f32.gmra.mxu0 %v588
        %v1912 = vpop.f32.mrf.mxu0
        %v1913 = vadd.f32 0.0, %v1912
        %v1914 = vpop.f32.mrf.mxu0
        %1915 = vmatprep.mubr.f32.mxu0 0.0
        %1916 = vmatmul.mubr.f32.gmra.mxu0 %v590
        %v1917 = vpop.f32.mrf.mxu0
        %v1918 = vadd.f32 0.0, %v1917
        %v1919 = vpop.f32.mrf.mxu0
        %1920 = vmatprep.mubr.f32.mxu0 0.0
        %1921 = vmatmul.mubr.f32.gmra.mxu0 %v592
        %v1922 = vpop.f32.mrf.mxu0
        %v1923 = vadd.f32 0.0, %v1922
        %v1924 = vpop.f32.mrf.mxu0
        %1925 = vmatprep.mubr.f32.mxu0 0.0
        %1926 = vmatmul.mubr.f32.gmra.mxu0 %v594
        %v1927 = vpop.f32.mrf.mxu0
        %v1928 = vadd.f32 0.0, %v1927
        %v1929 = vpop.f32.mrf.mxu0
        %1930 = vmatprep.mubr.f32.mxu0 0.0
        %1931 = vmatmul.mubr.f32.gmra.mxu0 %v596
        %v1932 = vpop.f32.mrf.mxu0
        %v1933 = vadd.f32 0.0, %v1932
        %v1934 = vpop.f32.mrf.mxu0
        %1935 = vmatprep.mubr.f32.mxu0 0.0
        %1936 = vmatmul.mubr.f32.gmra.mxu0 %v598
        %v1937 = vpop.f32.mrf.mxu0
        %v1938 = vadd.f32 0.0, %v1937
        %v1939 = vpop.f32.mrf.mxu0
        %1940 = vmatprep.mubr.f32.mxu0 0.0
        %1941 = vmatmul.mubr.f32.gmra.mxu0 %v600
        %v1942 = vpop.f32.mrf.mxu0
        %v1943 = vadd.f32 0.0, %v1942
        %v1944 = vpop.f32.mrf.mxu0
        %1945 = vmatprep.mubr.f32.mxu0 0.0
        %1946 = vmatmul.mubr.f32.gmra.mxu0 %v602
        %v1947 = vpop.f32.mrf.mxu0
        %v1948 = vadd.f32 0.0, %v1947
        %v1949 = vpop.f32.mrf.mxu0
        %1950 = vmatprep.mubr.f32.mxu0 0.0
        %1951 = vmatmul.mubr.f32.gmra.mxu0 %v604
        %v1952 = vpop.f32.mrf.mxu0
        %v1953 = vadd.f32 0.0, %v1952
        %v1954 = vpop.f32.mrf.mxu0
        %1955 = vmatprep.mubr.f32.mxu0 0.0
        %1956 = vmatmul.mubr.f32.gmra.mxu0 %v606
        %v1957 = vpop.f32.mrf.mxu0
        %v1958 = vadd.f32 0.0, %v1957
        %v1959 = vpop.f32.mrf.mxu0
        %1960 = vmatprep.mubr.f32.mxu0 0.0
        %1961 = vmatmul.mubr.f32.gmra.mxu0 %v608
        %v1962 = vpop.f32.mrf.mxu0
        %v1963 = vadd.f32 0.0, %v1962
        %v1964 = vpop.f32.mrf.mxu0
        %1965 = vmatprep.mubr.f32.mxu0 0.0
        %1966 = vmatmul.mubr.f32.gmra.mxu0 %v610
        %v1967 = vpop.f32.mrf.mxu0
        %v1968 = vadd.f32 0.0, %v1967
        %v1969 = vpop.f32.mrf.mxu0
        %1970 = vmatprep.mubr.f32.mxu0 0.0
        %1971 = vmatmul.mubr.f32.gmra.mxu0 %v612
        %v1972 = vpop.f32.mrf.mxu0
        %v1973 = vadd.f32 0.0, %v1972
        %v1974 = vpop.f32.mrf.mxu0
        %1975 = vmatprep.mubr.f32.mxu0 0.0
        %1976 = vmatmul.mubr.f32.gmra.mxu0 %v614
        %v1977 = vpop.f32.mrf.mxu0
        %v1978 = vadd.f32 0.0, %v1977
        %v1979 = vpop.f32.mrf.mxu0
        %1980 = vmatprep.mubr.f32.mxu0 0.0
        %1981 = vmatmul.mubr.f32.gmra.mxu0 %v616
        %v1982 = vpop.f32.mrf.mxu0
        %v1983 = vadd.f32 0.0, %v1982
        %v1984 = vpop.f32.mrf.mxu0
        %1985 = vmatprep.mubr.f32.mxu0 0.0
        %1986 = vmatmul.mubr.f32.gmra.mxu0 %v618
        %v1987 = vpop.f32.mrf.mxu0
        %v1988 = vadd.f32 0.0, %v1987
        %v1989 = vpop.f32.mrf.mxu0
        %1990 = vmatprep.mubr.f32.mxu0 0.0
        %1991 = vmatmul.mubr.f32.gmra.mxu0 %v620
        %v1992 = vpop.f32.mrf.mxu0
        %v1993 = vadd.f32 0.0, %v1992
        %v1994 = vpop.f32.mrf.mxu0
        %1995 = vmatprep.mubr.f32.mxu0 0.0
        %1996 = vmatmul.mubr.f32.gmra.mxu0 %v622
        %v1997 = vpop.f32.mrf.mxu0
        %v1998 = vadd.f32 0.0, %v1997
        %v1999 = vpop.f32.mrf.mxu0
        %2000 = vmatprep.mubr.f32.mxu0 0.0
        %2001 = vmatmul.mubr.f32.gmra.mxu0 %v624
        %v2002 = vpop.f32.mrf.mxu0
        %v2003 = vadd.f32 0.0, %v2002
        %v2004 = vpop.f32.mrf.mxu0
        %2005 = vmatprep.mubr.f32.mxu0 0.0
        %2006 = vmatmul.mubr.f32.gmra.mxu0 %v626
        %v2007 = vpop.f32.mrf.mxu0
        %v2008 = vadd.f32 0.0, %v2007
        %v2009 = vpop.f32.mrf.mxu0
        %2010 = vmatprep.mubr.f32.mxu0 0.0
        %2011 = vmatmul.mubr.f32.gmra.mxu0 %v628
        %v2012 = vpop.f32.mrf.mxu0
        %v2013 = vadd.f32 0.0, %v2012
        %v2014 = vpop.f32.mrf.mxu0
        %2015 = vmatprep.mubr.f32.mxu0 0.0
        %2016 = vmatmul.mubr.f32.gmra.mxu0 %v630
        %v2017 = vpop.f32.mrf.mxu0
        %v2018 = vadd.f32 0.0, %v2017
        %v2019 = vpop.f32.mrf.mxu0
        %2020 = vmatprep.mubr.f32.mxu0 0.0
        %2021 = vmatmul.mubr.f32.gmra.mxu0 %v632
        %v2022 = vpop.f32.mrf.mxu0
        %v2023 = vadd.f32 0.0, %v2022
        %v2024 = vpop.f32.mrf.mxu0
        %2025 = vmatprep.mubr.f32.mxu0 0.0
        %2026 = vmatmul.mubr.f32.gmra.mxu0 %v634
        %v2027 = vpop.f32.mrf.mxu0
        %v2028 = vadd.f32 0.0, %v2027
        %v2029 = vpop.f32.mrf.mxu0
        %2030 = vmatprep.mubr.f32.mxu0 0.0
        %2031 = vmatmul.mubr.f32.gmra.mxu0 %v636
        %v2032 = vpop.f32.mrf.mxu0
        %v2033 = vadd.f32 0.0, %v2032
        %v2034 = vpop.f32.mrf.mxu0
        %2035 = vmatprep.mubr.f32.mxu0 0.0
        %2036 = vmatmul.mubr.f32.gmra.mxu0 %v638
        %v2037 = vpop.f32.mrf.mxu0
        %v2038 = vadd.f32 0.0, %v2037
        %v2039 = vpop.f32.mrf.mxu0
        %2040 = vmatprep.mubr.f32.mxu0 0.0
        %2041 = vmatmul.mubr.f32.gmra.mxu0 %v640
        %v2042 = vpop.f32.mrf.mxu0
        %v2043 = vadd.f32 0.0, %v2042
        %v2044 = vpop.f32.mrf.mxu0
        %2045 = vmatprep.mubr.f32.mxu0 0.0
        %2046 = vmatmul.mubr.f32.gmra.mxu0 %v1827
        %v2047 = vpop.f32.mrf.mxu0
        %v2048 = vadd.f32 0.0, %v2047
        %v2049 = vpop.f32.mrf.mxu0
        %2050 = vmatprep.mubr.f32.mxu0 0.0
        %2051 = vmatmul.mubr.f32.gmra.mxu0 %v1829
        %v2052 = vpop.f32.mrf.mxu0
        %v2053 = vadd.f32 0.0, %v2052
        %v2054 = vpop.f32.mrf.mxu0
        %2055 = vdwg.mxu0
        %v2056 = vadd.f32 %v1789, %v1898
        %v2057 = vadd.f32 %v1790, %v1903
        %v2058 = vadd.f32 %v1791, %v1908
        %v2059 = vadd.f32 %v1792, %v1913
        %v2060 = vadd.f32 %v1793, %v1918
        %v2061 = vadd.f32 %v1794, %v1923
        %v2062 = vadd.f32 %v1795, %v1928
        %v2063 = vadd.f32 %v1796, %v1933
        %v2064 = vadd.f32 %v1797, %v1938
        %v2065 = vadd.f32 %v1798, %v1943
        %v2066 = vadd.f32 %v1799, %v1948
        %v2067 = vadd.f32 %v1800, %v1953
        %v2068 = vadd.f32 %v1801, %v1958
        %v2069 = vadd.f32 %v1802, %v1963
        %v2070 = vadd.f32 %v1803, %v1968
        %v2071 = vadd.f32 %v1804, %v1973
        %v2072 = vadd.f32 %v1805, %v1978
        %v2073 = vadd.f32 %v1806, %v1983
        %v2074 = vadd.f32 %v1807, %v1988
        %v2075 = vadd.f32 %v1808, %v1993
        %v2076 = vadd.f32 %v1809, %v1998
        %v2077 = vadd.f32 %v1810, %v2003
        %v2078 = vadd.f32 %v1811, %v2008
        %v2079 = vadd.f32 %v1812, %v2013
        %v2080 = vadd.f32 %v1813, %v2018
        %v2081 = vadd.f32 %v1814, %v2023
        %v2082 = vadd.f32 %v1815, %v2028
        %v2083 = vadd.f32 %v1816, %v2033
        %v2084 = vadd.f32 %v1817, %v2038
        %v2085 = vadd.f32 %v1818, %v2043
        %v2086 = vadd.f32 %v1819, %v2048
        %v2087 = vadd.f32 %v1820, %v2053
        %v2088 = vrot.slane %v406, 2
        %v2089 = vrot.slane %v407, 2
        %v2090 = vsel %vm1156, %v2088, %v2089
        %v2091 = vrot.slane %v408, 2
        %v2092 = vsel %vm1156, %v2089, %v2091
        %v2093 = vsel %vm577, %v2090, 0
        %v2095 = vsel %vm577, %v2092, 0
        %2097 = vmatprep.subr.mxu0 0.0
        %2098 = vmatpush1.msra.mxu0 0.0
        %2099 = vmatprep.subr.mxu0 0.0
        %2100 = vmatpush1.msra.mxu0 0.0
        %2101 = vmatprep.subr.mxu0 0.0
        %2102 = vmatpush1.msra.mxu0 0.0
        %2103 = vmatprep.subr.mxu0 0.0
        %2104 = vmatpush1.msra.mxu0 0.0
        %2105 = vmatprep.subr.mxu0 0.0
        %2106 = vmatpush1.msra.mxu0 0.0
        %2107 = vmatprep.subr.mxu0 0.0
        %2108 = vmatpush1.msra.mxu0 0.0
        %2109 = vmatprep.subr.mxu0 0.0
        %2110 = vmatpush1.msra.mxu0 0.0
        %2111 = vmatprep.subr.mxu0 0.0
        %2112 = vmatpush1.msra.mxu0 0.0
        %2113 = vmatprep.subr.mxu0 0.0
        %2114 = vmatpush1.msra.mxu0 0.0
        %2115 = vmatprep.subr.mxu0 0.0
        %2116 = vmatpush1.msra.mxu0 0.0
        %2117 = vmatprep.subr.mxu0 0.0
        %2118 = vmatpush1.msra.mxu0 0.0
        %2119 = vmatprep.subr.mxu0 0.0
        %2120 = vmatpush1.msra.mxu0 0.0
        %2121 = vmatprep.subr.mxu0 0.0
        %2122 = vmatpush1.msra.mxu0 %v435
        %2123 = vmatprep.subr.mxu0 0.0
        %2124 = vmatpush1.msra.mxu0 %v434
        %2125 = vmatprep.subr.mxu0 0.0
        %2126 = vmatpush1.msra.mxu0 %v433
        %2127 = vmatprep.subr.mxu0 0.0
        %2128 = vmatpush1.msra.mxu0 %v432
        %2129 = vmatprep.subr.mxu0 0.0
        %2130 = vmatpush2.msra.mxu0 0.0
        %2131 = vmatprep.subr.mxu0 0.0
        %2132 = vmatpush2.msra.mxu0 0.0
        %2133 = vmatprep.subr.mxu0 0.0
        %2134 = vmatpush2.msra.mxu0 0.0
        %2135 = vmatprep.subr.mxu0 0.0
        %2136 = vmatpush2.msra.mxu0 0.0
        %2137 = vmatprep.subr.mxu0 0.0
        %2138 = vmatpush2.msra.mxu0 0.0
        %2139 = vmatprep.subr.mxu0 0.0
        %2140 = vmatpush2.msra.mxu0 0.0
        %2141 = vmatprep.subr.mxu0 0.0
        %2142 = vmatpush2.msra.mxu0 0.0
        %2143 = vmatprep.subr.mxu0 0.0
        %2144 = vmatpush2.msra.mxu0 0.0
        %2145 = vmatprep.subr.mxu0 0.0
        %2146 = vmatpush2.msra.mxu0 0.0
        %2147 = vmatprep.subr.mxu0 0.0
        %2148 = vmatpush2.msra.mxu0 0.0
        %2149 = vmatprep.subr.mxu0 0.0
        %2150 = vmatpush2.msra.mxu0 0.0
        %2151 = vmatprep.subr.mxu0 0.0
        %2152 = vmatpush2.msra.mxu0 0.0
        %2153 = vmatprep.subr.mxu0 0.0
        %2154 = vmatpush2.msra.mxu0 0.0
        %2155 = vmatprep.subr.mxu0 0.0
        %2156 = vmatpush2.msra.mxu0 0.0
        %2157 = vmatprep.subr.mxu0 0.0
        %2158 = vmatpush2.msra.mxu0 0.0
        %2159 = vmatprep.subr.mxu0 0.0
        %2160 = vmatpush2.msra.mxu0 0.0
        %2161 = vmatprep.mubr.f32.mxu0 0.0
        %2162 = vmatmul.mubr.f32.gmra.mxu0 %v1241
        %v2163 = vpop.f32.mrf.mxu0
        %v2164 = vadd.f32 0.0, %v2163
        %v2165 = vpop.f32.mrf.mxu0
        %2166 = vmatprep.mubr.f32.mxu0 0.0
        %2167 = vmatmul.mubr.f32.gmra.mxu0 %v1243
        %v2168 = vpop.f32.mrf.mxu0
        %v2169 = vadd.f32 0.0, %v2168
        %v2170 = vpop.f32.mrf.mxu0
        %2171 = vmatprep.mubr.f32.mxu0 0.0
        %2172 = vmatmul.mubr.f32.gmra.mxu0 %v1245
        %v2173 = vpop.f32.mrf.mxu0
        %v2174 = vadd.f32 0.0, %v2173
        %v2175 = vpop.f32.mrf.mxu0
        %2176 = vmatprep.mubr.f32.mxu0 0.0
        %2177 = vmatmul.mubr.f32.gmra.mxu0 %v1247
        %v2178 = vpop.f32.mrf.mxu0
        %v2179 = vadd.f32 0.0, %v2178
        %v2180 = vpop.f32.mrf.mxu0
        %2181 = vmatprep.mubr.f32.mxu0 0.0
        %2182 = vmatmul.mubr.f32.gmra.mxu0 %v1249
        %v2183 = vpop.f32.mrf.mxu0
        %v2184 = vadd.f32 0.0, %v2183
        %v2185 = vpop.f32.mrf.mxu0
        %2186 = vmatprep.mubr.f32.mxu0 0.0
        %2187 = vmatmul.mubr.f32.gmra.mxu0 %v1251
        %v2188 = vpop.f32.mrf.mxu0
        %v2189 = vadd.f32 0.0, %v2188
        %v2190 = vpop.f32.mrf.mxu0
        %2191 = vmatprep.mubr.f32.mxu0 0.0
        %2192 = vmatmul.mubr.f32.gmra.mxu0 %v1253
        %v2193 = vpop.f32.mrf.mxu0
        %v2194 = vadd.f32 0.0, %v2193
        %v2195 = vpop.f32.mrf.mxu0
        %2196 = vmatprep.mubr.f32.mxu0 0.0
        %2197 = vmatmul.mubr.f32.gmra.mxu0 %v1255
        %v2198 = vpop.f32.mrf.mxu0
        %v2199 = vadd.f32 0.0, %v2198
        %v2200 = vpop.f32.mrf.mxu0
        %2201 = vmatprep.mubr.f32.mxu0 0.0
        %2202 = vmatmul.mubr.f32.gmra.mxu0 %v1257
        %v2203 = vpop.f32.mrf.mxu0
        %v2204 = vadd.f32 0.0, %v2203
        %v2205 = vpop.f32.mrf.mxu0
        %2206 = vmatprep.mubr.f32.mxu0 0.0
        %2207 = vmatmul.mubr.f32.gmra.mxu0 %v1259
        %v2208 = vpop.f32.mrf.mxu0
        %v2209 = vadd.f32 0.0, %v2208
        %v2210 = vpop.f32.mrf.mxu0
        %2211 = vmatprep.mubr.f32.mxu0 0.0
        %2212 = vmatmul.mubr.f32.gmra.mxu0 %v1261
        %v2213 = vpop.f32.mrf.mxu0
        %v2214 = vadd.f32 0.0, %v2213
        %v2215 = vpop.f32.mrf.mxu0
        %2216 = vmatprep.mubr.f32.mxu0 0.0
        %2217 = vmatmul.mubr.f32.gmra.mxu0 %v1263
        %v2218 = vpop.f32.mrf.mxu0
        %v2219 = vadd.f32 0.0, %v2218
        %v2220 = vpop.f32.mrf.mxu0
        %2221 = vmatprep.mubr.f32.mxu0 0.0
        %2222 = vmatmul.mubr.f32.gmra.mxu0 %v1265
        %v2223 = vpop.f32.mrf.mxu0
        %v2224 = vadd.f32 0.0, %v2223
        %v2225 = vpop.f32.mrf.mxu0
        %2226 = vmatprep.mubr.f32.mxu0 0.0
        %2227 = vmatmul.mubr.f32.gmra.mxu0 %v1267
        %v2228 = vpop.f32.mrf.mxu0
        %v2229 = vadd.f32 0.0, %v2228
        %v2230 = vpop.f32.mrf.mxu0
        %2231 = vmatprep.mubr.f32.mxu0 0.0
        %2232 = vmatmul.mubr.f32.gmra.mxu0 %v1269
        %v2233 = vpop.f32.mrf.mxu0
        %v2234 = vadd.f32 0.0, %v2233
        %v2235 = vpop.f32.mrf.mxu0
        %2236 = vmatprep.mubr.f32.mxu0 0.0
        %2237 = vmatmul.mubr.f32.gmra.mxu0 %v1271
        %v2238 = vpop.f32.mrf.mxu0
        %v2239 = vadd.f32 0.0, %v2238
        %v2240 = vpop.f32.mrf.mxu0
        %2241 = vmatprep.mubr.f32.mxu0 0.0
        %2242 = vmatmul.mubr.f32.gmra.mxu0 %v1273
        %v2243 = vpop.f32.mrf.mxu0
        %v2244 = vadd.f32 0.0, %v2243
        %v2245 = vpop.f32.mrf.mxu0
        %2246 = vmatprep.mubr.f32.mxu0 0.0
        %2247 = vmatmul.mubr.f32.gmra.mxu0 %v1275
        %v2248 = vpop.f32.mrf.mxu0
        %v2249 = vadd.f32 0.0, %v2248
        %v2250 = vpop.f32.mrf.mxu0
        %2251 = vmatprep.mubr.f32.mxu0 0.0
        %2252 = vmatmul.mubr.f32.gmra.mxu0 %v1277
        %v2253 = vpop.f32.mrf.mxu0
        %v2254 = vadd.f32 0.0, %v2253
        %v2255 = vpop.f32.mrf.mxu0
        %2256 = vmatprep.mubr.f32.mxu0 0.0
        %2257 = vmatmul.mubr.f32.gmra.mxu0 %v1279
        %v2258 = vpop.f32.mrf.mxu0
        %v2259 = vadd.f32 0.0, %v2258
        %v2260 = vpop.f32.mrf.mxu0
        %2261 = vmatprep.mubr.f32.mxu0 0.0
        %2262 = vmatmul.mubr.f32.gmra.mxu0 %v1281
        %v2263 = vpop.f32.mrf.mxu0
        %v2264 = vadd.f32 0.0, %v2263
        %v2265 = vpop.f32.mrf.mxu0
        %2266 = vmatprep.mubr.f32.mxu0 0.0
        %2267 = vmatmul.mubr.f32.gmra.mxu0 %v1283
        %v2268 = vpop.f32.mrf.mxu0
        %v2269 = vadd.f32 0.0, %v2268
        %v2270 = vpop.f32.mrf.mxu0
        %2271 = vmatprep.mubr.f32.mxu0 0.0
        %2272 = vmatmul.mubr.f32.gmra.mxu0 %v1285
        %v2273 = vpop.f32.mrf.mxu0
        %v2274 = vadd.f32 0.0, %v2273
        %v2275 = vpop.f32.mrf.mxu0
        %2276 = vmatprep.mubr.f32.mxu0 0.0
        %2277 = vmatmul.mubr.f32.gmra.mxu0 %v1287
        %v2278 = vpop.f32.mrf.mxu0
        %v2279 = vadd.f32 0.0, %v2278
        %v2280 = vpop.f32.mrf.mxu0
        %2281 = vmatprep.mubr.f32.mxu0 0.0
        %2282 = vmatmul.mubr.f32.gmra.mxu0 %v1289
        %v2283 = vpop.f32.mrf.mxu0
        %v2284 = vadd.f32 0.0, %v2283
        %v2285 = vpop.f32.mrf.mxu0
        %2286 = vmatprep.mubr.f32.mxu0 0.0
        %2287 = vmatmul.mubr.f32.gmra.mxu0 %v1291
        %v2288 = vpop.f32.mrf.mxu0
        %v2289 = vadd.f32 0.0, %v2288
        %v2290 = vpop.f32.mrf.mxu0
        %2291 = vmatprep.mubr.f32.mxu0 0.0
        %2292 = vmatmul.mubr.f32.gmra.mxu0 %v1293
        %v2293 = vpop.f32.mrf.mxu0
        %v2294 = vadd.f32 0.0, %v2293
        %v2295 = vpop.f32.mrf.mxu0
        %2296 = vmatprep.mubr.f32.mxu0 0.0
        %2297 = vmatmul.mubr.f32.gmra.mxu0 %v1295
        %v2298 = vpop.f32.mrf.mxu0
        %v2299 = vadd.f32 0.0, %v2298
        %v2300 = vpop.f32.mrf.mxu0
        %2301 = vmatprep.mubr.f32.mxu0 0.0
        %2302 = vmatmul.mubr.f32.gmra.mxu0 %v1297
        %v2303 = vpop.f32.mrf.mxu0
        %v2304 = vadd.f32 0.0, %v2303
        %v2305 = vpop.f32.mrf.mxu0
        %2306 = vmatprep.mubr.f32.mxu0 0.0
        %2307 = vmatmul.mubr.f32.gmra.mxu0 %v1299
        %v2308 = vpop.f32.mrf.mxu0
        %v2309 = vadd.f32 0.0, %v2308
        %v2310 = vpop.f32.mrf.mxu0
        %2311 = vmatprep.mubr.f32.mxu0 0.0
        %2312 = vmatmul.mubr.f32.gmra.mxu0 %v2093
        %v2313 = vpop.f32.mrf.mxu0
        %v2314 = vadd.f32 0.0, %v2313
        %v2315 = vpop.f32.mrf.mxu0
        %2316 = vmatprep.mubr.f32.mxu0 0.0
        %2317 = vmatmul.mubr.f32.gmra.mxu0 %v2095
        %v2318 = vpop.f32.mrf.mxu0
        %v2319 = vadd.f32 0.0, %v2318
        %v2320 = vpop.f32.mrf.mxu0
        %2321 = vdwg.mxu0
        %v2322 = vadd.f32 %v2056, %v2164
        %v2323 = vadd.f32 %v2057, %v2169
        %v2324 = vadd.f32 %v2058, %v2174
        %v2325 = vadd.f32 %v2059, %v2179
        %v2326 = vadd.f32 %v2060, %v2184
        %v2327 = vadd.f32 %v2061, %v2189
        %v2328 = vadd.f32 %v2062, %v2194
        %v2329 = vadd.f32 %v2063, %v2199
        %v2330 = vadd.f32 %v2064, %v2204
        %v2331 = vadd.f32 %v2065, %v2209
        %v2332 = vadd.f32 %v2066, %v2214
        %v2333 = vadd.f32 %v2067, %v2219
        %v2334 = vadd.f32 %v2068, %v2224
        %v2335 = vadd.f32 %v2069, %v2229
        %v2336 = vadd.f32 %v2070, %v2234
        %v2337 = vadd.f32 %v2071, %v2239
        %v2338 = vadd.f32 %v2072, %v2244
        %v2339 = vadd.f32 %v2073, %v2249
        %v2340 = vadd.f32 %v2074, %v2254
        %v2341 = vadd.f32 %v2075, %v2259
        %v2342 = vadd.f32 %v2076, %v2264
        %v2343 = vadd.f32 %v2077, %v2269
        %v2344 = vadd.f32 %v2078, %v2274
        %v2345 = vadd.f32 %v2079, %v2279
        %v2346 = vadd.f32 %v2080, %v2284
        %v2347 = vadd.f32 %v2081, %v2289
        %v2348 = vadd.f32 %v2082, %v2294
        %v2349 = vadd.f32 %v2083, %v2299
        %v2350 = vadd.f32 %v2084, %v2304
        %v2351 = vadd.f32 %v2085, %v2309
        %v2352 = vadd.f32 %v2086, %v2314
        %v2353 = vadd.f32 %v2087, %v2319
        %v2355 = vsel %vm577, %v409, 0
        %v2358 = vsel %vm577, %v410, 0
        %2360 = vmatprep.subr.mxu0 0.0
        %2361 = vmatpush1.msra.mxu0 0.0
        %2362 = vmatprep.subr.mxu0 0.0
        %2363 = vmatpush1.msra.mxu0 0.0
        %2364 = vmatprep.subr.mxu0 0.0
        %2365 = vmatpush1.msra.mxu0 0.0
        %2366 = vmatprep.subr.mxu0 0.0
        %2367 = vmatpush1.msra.mxu0 0.0
        %2368 = vmatprep.subr.mxu0 0.0
        %2369 = vmatpush1.msra.mxu0 0.0
        %2370 = vmatprep.subr.mxu0 0.0
        %2371 = vmatpush1.msra.mxu0 0.0
        %2372 = vmatprep.subr.mxu0 0.0
        %2373 = vmatpush1.msra.mxu0 0.0
        %2374 = vmatprep.subr.mxu0 0.0
        %2375 = vmatpush1.msra.mxu0 0.0
        %2376 = vmatprep.subr.mxu0 0.0
        %2377 = vmatpush1.msra.mxu0 0.0
        %2378 = vmatprep.subr.mxu0 0.0
        %2379 = vmatpush1.msra.mxu0 0.0
        %2380 = vmatprep.subr.mxu0 0.0
        %2381 = vmatpush1.msra.mxu0 0.0
        %2382 = vmatprep.subr.mxu0 0.0
        %2383 = vmatpush1.msra.mxu0 0.0
        %2384 = vmatprep.subr.mxu0 0.0
        %2385 = vmatpush1.msra.mxu0 %v439
        %2386 = vmatprep.subr.mxu0 0.0
        %2387 = vmatpush1.msra.mxu0 %v438
        %2388 = vmatprep.subr.mxu0 0.0
        %2389 = vmatpush1.msra.mxu0 %v437
        %2390 = vmatprep.subr.mxu0 0.0
        %2391 = vmatpush1.msra.mxu0 %v436
        %2392 = vmatprep.subr.mxu0 0.0
        %2393 = vmatpush2.msra.mxu0 0.0
        %2394 = vmatprep.subr.mxu0 0.0
        %2395 = vmatpush2.msra.mxu0 0.0
        %2396 = vmatprep.subr.mxu0 0.0
        %2397 = vmatpush2.msra.mxu0 0.0
        %2398 = vmatprep.subr.mxu0 0.0
        %2399 = vmatpush2.msra.mxu0 0.0
        %2400 = vmatprep.subr.mxu0 0.0
        %2401 = vmatpush2.msra.mxu0 0.0
        %2402 = vmatprep.subr.mxu0 0.0
        %2403 = vmatpush2.msra.mxu0 0.0
        %2404 = vmatprep.subr.mxu0 0.0
        %2405 = vmatpush2.msra.mxu0 0.0
        %2406 = vmatprep.subr.mxu0 0.0
        %2407 = vmatpush2.msra.mxu0 0.0
        %2408 = vmatprep.subr.mxu0 0.0
        %2409 = vmatpush2.msra.mxu0 0.0
        %2410 = vmatprep.subr.mxu0 0.0
        %2411 = vmatpush2.msra.mxu0 0.0
        %2412 = vmatprep.subr.mxu0 0.0
        %2413 = vmatpush2.msra.mxu0 0.0
        %2414 = vmatprep.subr.mxu0 0.0
        %2415 = vmatpush2.msra.mxu0 0.0
        %2416 = vmatprep.subr.mxu0 0.0
        %2417 = vmatpush2.msra.mxu0 0.0
        %2418 = vmatprep.subr.mxu0 0.0
        %2419 = vmatpush2.msra.mxu0 0.0
        %2420 = vmatprep.subr.mxu0 0.0
        %2421 = vmatpush2.msra.mxu0 0.0
        %2422 = vmatprep.subr.mxu0 0.0
        %2423 = vmatpush2.msra.mxu0 0.0
        %2424 = vmatprep.mubr.f32.mxu0 0.0
        %2425 = vmatmul.mubr.f32.gmra.mxu0 %v875
        %v2426 = vpop.f32.mrf.mxu0
        %v2427 = vadd.f32 0.0, %v2426
        %v2428 = vpop.f32.mrf.mxu0
        %2429 = vmatprep.mubr.f32.mxu0 0.0
        %2430 = vmatmul.mubr.f32.gmra.mxu0 %v877
        %v2431 = vpop.f32.mrf.mxu0
        %v2432 = vadd.f32 0.0, %v2431
        %v2433 = vpop.f32.mrf.mxu0
        %2434 = vmatprep.mubr.f32.mxu0 0.0
        %2435 = vmatmul.mubr.f32.gmra.mxu0 %v879
        %v2436 = vpop.f32.mrf.mxu0
        %v2437 = vadd.f32 0.0, %v2436
        %v2438 = vpop.f32.mrf.mxu0
        %2439 = vmatprep.mubr.f32.mxu0 0.0
        %2440 = vmatmul.mubr.f32.gmra.mxu0 %v881
        %v2441 = vpop.f32.mrf.mxu0
        %v2442 = vadd.f32 0.0, %v2441
        %v2443 = vpop.f32.mrf.mxu0
        %2444 = vmatprep.mubr.f32.mxu0 0.0
        %2445 = vmatmul.mubr.f32.gmra.mxu0 %v883
        %v2446 = vpop.f32.mrf.mxu0
        %v2447 = vadd.f32 0.0, %v2446
        %v2448 = vpop.f32.mrf.mxu0
        %2449 = vmatprep.mubr.f32.mxu0 0.0
        %2450 = vmatmul.mubr.f32.gmra.mxu0 %v885
        %v2451 = vpop.f32.mrf.mxu0
        %v2452 = vadd.f32 0.0, %v2451
        %v2453 = vpop.f32.mrf.mxu0
        %2454 = vmatprep.mubr.f32.mxu0 0.0
        %2455 = vmatmul.mubr.f32.gmra.mxu0 %v887
        %v2456 = vpop.f32.mrf.mxu0
        %v2457 = vadd.f32 0.0, %v2456
        %v2458 = vpop.f32.mrf.mxu0
        %2459 = vmatprep.mubr.f32.mxu0 0.0
        %2460 = vmatmul.mubr.f32.gmra.mxu0 %v889
        %v2461 = vpop.f32.mrf.mxu0
        %v2462 = vadd.f32 0.0, %v2461
        %v2463 = vpop.f32.mrf.mxu0
        %2464 = vmatprep.mubr.f32.mxu0 0.0
        %2465 = vmatmul.mubr.f32.gmra.mxu0 %v891
        %v2466 = vpop.f32.mrf.mxu0
        %v2467 = vadd.f32 0.0, %v2466
        %v2468 = vpop.f32.mrf.mxu0
        %2469 = vmatprep.mubr.f32.mxu0 0.0
        %2470 = vmatmul.mubr.f32.gmra.mxu0 %v893
        %v2471 = vpop.f32.mrf.mxu0
        %v2472 = vadd.f32 0.0, %v2471
        %v2473 = vpop.f32.mrf.mxu0
        %2474 = vmatprep.mubr.f32.mxu0 0.0
        %2475 = vmatmul.mubr.f32.gmra.mxu0 %v895
        %v2476 = vpop.f32.mrf.mxu0
        %v2477 = vadd.f32 0.0, %v2476
        %v2478 = vpop.f32.mrf.mxu0
        %2479 = vmatprep.mubr.f32.mxu0 0.0
        %2480 = vmatmul.mubr.f32.gmra.mxu0 %v897
        %v2481 = vpop.f32.mrf.mxu0
        %v2482 = vadd.f32 0.0, %v2481
        %v2483 = vpop.f32.mrf.mxu0
        %2484 = vmatprep.mubr.f32.mxu0 0.0
        %2485 = vmatmul.mubr.f32.gmra.mxu0 %v899
        %v2486 = vpop.f32.mrf.mxu0
        %v2487 = vadd.f32 0.0, %v2486
        %v2488 = vpop.f32.mrf.mxu0
        %2489 = vmatprep.mubr.f32.mxu0 0.0
        %2490 = vmatmul.mubr.f32.gmra.mxu0 %v901
        %v2491 = vpop.f32.mrf.mxu0
        %v2492 = vadd.f32 0.0, %v2491
        %v2493 = vpop.f32.mrf.mxu0
        %2494 = vmatprep.mubr.f32.mxu0 0.0
        %2495 = vmatmul.mubr.f32.gmra.mxu0 %v903
        %v2496 = vpop.f32.mrf.mxu0
        %v2497 = vadd.f32 0.0, %v2496
        %v2498 = vpop.f32.mrf.mxu0
        %2499 = vmatprep.mubr.f32.mxu0 0.0
        %2500 = vmatmul.mubr.f32.gmra.mxu0 %v905
        %v2501 = vpop.f32.mrf.mxu0
        %v2502 = vadd.f32 0.0, %v2501
        %v2503 = vpop.f32.mrf.mxu0
        %2504 = vmatprep.mubr.f32.mxu0 0.0
        %2505 = vmatmul.mubr.f32.gmra.mxu0 %v907
        %v2506 = vpop.f32.mrf.mxu0
        %v2507 = vadd.f32 0.0, %v2506
        %v2508 = vpop.f32.mrf.mxu0
        %2509 = vmatprep.mubr.f32.mxu0 0.0
        %2510 = vmatmul.mubr.f32.gmra.mxu0 %v909
        %v2511 = vpop.f32.mrf.mxu0
        %v2512 = vadd.f32 0.0, %v2511
        %v2513 = vpop.f32.mrf.mxu0
        %2514 = vmatprep.mubr.f32.mxu0 0.0
        %2515 = vmatmul.mubr.f32.gmra.mxu0 %v911
        %v2516 = vpop.f32.mrf.mxu0
        %v2517 = vadd.f32 0.0, %v2516
        %v2518 = vpop.f32.mrf.mxu0
        %2519 = vmatprep.mubr.f32.mxu0 0.0
        %2520 = vmatmul.mubr.f32.gmra.mxu0 %v913
        %v2521 = vpop.f32.mrf.mxu0
        %v2522 = vadd.f32 0.0, %v2521
        %v2523 = vpop.f32.mrf.mxu0
        %2524 = vmatprep.mubr.f32.mxu0 0.0
        %2525 = vmatmul.mubr.f32.gmra.mxu0 %v915
        %v2526 = vpop.f32.mrf.mxu0
        %v2527 = vadd.f32 0.0, %v2526
        %v2528 = vpop.f32.mrf.mxu0
        %2529 = vmatprep.mubr.f32.mxu0 0.0
        %2530 = vmatmul.mubr.f32.gmra.mxu0 %v917
        %v2531 = vpop.f32.mrf.mxu0
        %v2532 = vadd.f32 0.0, %v2531
        %v2533 = vpop.f32.mrf.mxu0
        %2534 = vmatprep.mubr.f32.mxu0 0.0
        %2535 = vmatmul.mubr.f32.gmra.mxu0 %v919
        %v2536 = vpop.f32.mrf.mxu0
        %v2537 = vadd.f32 0.0, %v2536
        %v2538 = vpop.f32.mrf.mxu0
        %2539 = vmatprep.mubr.f32.mxu0 0.0
        %2540 = vmatmul.mubr.f32.gmra.mxu0 %v921
        %v2541 = vpop.f32.mrf.mxu0
        %v2542 = vadd.f32 0.0, %v2541
        %v2543 = vpop.f32.mrf.mxu0
        %2544 = vmatprep.mubr.f32.mxu0 0.0
        %2545 = vmatmul.mubr.f32.gmra.mxu0 %v923
        %v2546 = vpop.f32.mrf.mxu0
        %v2547 = vadd.f32 0.0, %v2546
        %v2548 = vpop.f32.mrf.mxu0
        %2549 = vmatprep.mubr.f32.mxu0 0.0
        %2550 = vmatmul.mubr.f32.gmra.mxu0 %v925
        %v2551 = vpop.f32.mrf.mxu0
        %v2552 = vadd.f32 0.0, %v2551
        %v2553 = vpop.f32.mrf.mxu0
        %2554 = vmatprep.mubr.f32.mxu0 0.0
        %2555 = vmatmul.mubr.f32.gmra.mxu0 %v927
        %v2556 = vpop.f32.mrf.mxu0
        %v2557 = vadd.f32 0.0, %v2556
        %v2558 = vpop.f32.mrf.mxu0
        %2559 = vmatprep.mubr.f32.mxu0 0.0
        %2560 = vmatmul.mubr.f32.gmra.mxu0 %v929
        %v2561 = vpop.f32.mrf.mxu0
        %v2562 = vadd.f32 0.0, %v2561
        %v2563 = vpop.f32.mrf.mxu0
        %2564 = vmatprep.mubr.f32.mxu0 0.0
        %2565 = vmatmul.mubr.f32.gmra.mxu0 %v1559
        %v2566 = vpop.f32.mrf.mxu0
        %v2567 = vadd.f32 0.0, %v2566
        %v2568 = vpop.f32.mrf.mxu0
        %2569 = vmatprep.mubr.f32.mxu0 0.0
        %2570 = vmatmul.mubr.f32.gmra.mxu0 %v1562
        %v2571 = vpop.f32.mrf.mxu0
        %v2572 = vadd.f32 0.0, %v2571
        %v2573 = vpop.f32.mrf.mxu0
        %2574 = vmatprep.mubr.f32.mxu0 0.0
        %2575 = vmatmul.mubr.f32.gmra.mxu0 %v2355
        %v2576 = vpop.f32.mrf.mxu0
        %v2577 = vadd.f32 0.0, %v2576
        %v2578 = vpop.f32.mrf.mxu0
        %2579 = vmatprep.mubr.f32.mxu0 0.0
        %2580 = vmatmul.mubr.f32.gmra.mxu0 %v2358
        %v2581 = vpop.f32.mrf.mxu0
        %v2582 = vadd.f32 0.0, %v2581
        %v2583 = vpop.f32.mrf.mxu0
        %2584 = vdwg.mxu0
        %v2585 = vadd.f32 %v2322, %v2427
        %v2586 = vadd.f32 %v2323, %v2432
        %v2587 = vadd.f32 %v2324, %v2437
        %v2588 = vadd.f32 %v2325, %v2442
        %v2589 = vadd.f32 %v2326, %v2447
        %v2590 = vadd.f32 %v2327, %v2452
        %v2591 = vadd.f32 %v2328, %v2457
        %v2592 = vadd.f32 %v2329, %v2462
        %v2593 = vadd.f32 %v2330, %v2467
        %v2594 = vadd.f32 %v2331, %v2472
        %v2595 = vadd.f32 %v2332, %v2477
        %v2596 = vadd.f32 %v2333, %v2482
        %v2597 = vadd.f32 %v2334, %v2487
        %v2598 = vadd.f32 %v2335, %v2492
        %v2599 = vadd.f32 %v2336, %v2497
        %v2600 = vadd.f32 %v2337, %v2502
        %v2601 = vadd.f32 %v2338, %v2507
        %v2602 = vadd.f32 %v2339, %v2512
        %v2603 = vadd.f32 %v2340, %v2517
        %v2604 = vadd.f32 %v2341, %v2522
        %v2605 = vadd.f32 %v2342, %v2527
        %v2606 = vadd.f32 %v2343, %v2532
        %v2607 = vadd.f32 %v2344, %v2537
        %v2608 = vadd.f32 %v2345, %v2542
        %v2609 = vadd.f32 %v2346, %v2547
        %v2610 = vadd.f32 %v2347, %v2552
        %v2611 = vadd.f32 %v2348, %v2557
        %v2612 = vadd.f32 %v2349, %v2562
        %v2613 = vadd.f32 %v2350, %v2567
        %v2614 = vadd.f32 %v2351, %v2572
        %v2615 = vadd.f32 %v2352, %v2577
        %v2616 = vadd.f32 %v2353, %v2582
        %v2618 = vrot.slane %v409, 1
        %v2619 = vrot.slane %v410, 1
        %v2620 = vsel %vm496, %v2618, %v2619
        %v2621 = vrot.slane %v411, 1
        %v2622 = vsel %vm496, %v2619, %v2621
        %v2623 = vsel %vm577, %v2620, 0
        %v2625 = vsel %vm577, %v2622, 0
        %2627 = vmatprep.subr.mxu0 0.0
        %2628 = vmatpush1.msra.mxu0 0.0
        %2629 = vmatprep.subr.mxu0 0.0
        %2630 = vmatpush1.msra.mxu0 0.0
        %2631 = vmatprep.subr.mxu0 0.0
        %2632 = vmatpush1.msra.mxu0 0.0
        %2633 = vmatprep.subr.mxu0 0.0
        %2634 = vmatpush1.msra.mxu0 0.0
        %2635 = vmatprep.subr.mxu0 0.0
        %2636 = vmatpush1.msra.mxu0 0.0
        %2637 = vmatprep.subr.mxu0 0.0
        %2638 = vmatpush1.msra.mxu0 0.0
        %2639 = vmatprep.subr.mxu0 0.0
        %2640 = vmatpush1.msra.mxu0 0.0
        %2641 = vmatprep.subr.mxu0 0.0
        %2642 = vmatpush1.msra.mxu0 0.0
        %2643 = vmatprep.subr.mxu0 0.0
        %2644 = vmatpush1.msra.mxu0 0.0
        %2645 = vmatprep.subr.mxu0 0.0
        %2646 = vmatpush1.msra.mxu0 0.0
        %2647 = vmatprep.subr.mxu0 0.0
        %2648 = vmatpush1.msra.mxu0 0.0
        %2649 = vmatprep.subr.mxu0 0.0
        %2650 = vmatpush1.msra.mxu0 0.0
        %2651 = vmatprep.subr.mxu0 0.0
        %2652 = vmatpush1.msra.mxu0 %v443
        %2653 = vmatprep.subr.mxu0 0.0
        %2654 = vmatpush1.msra.mxu0 %v442
        %2655 = vmatprep.subr.mxu0 0.0
        %2656 = vmatpush1.msra.mxu0 %v441
        %2657 = vmatprep.subr.mxu0 0.0
        %2658 = vmatpush1.msra.mxu0 %v440
        %2659 = vmatprep.subr.mxu0 0.0
        %2660 = vmatpush2.msra.mxu0 0.0
        %2661 = vmatprep.subr.mxu0 0.0
        %2662 = vmatpush2.msra.mxu0 0.0
        %2663 = vmatprep.subr.mxu0 0.0
        %2664 = vmatpush2.msra.mxu0 0.0
        %2665 = vmatprep.subr.mxu0 0.0
        %2666 = vmatpush2.msra.mxu0 0.0
        %2667 = vmatprep.subr.mxu0 0.0
        %2668 = vmatpush2.msra.mxu0 0.0
        %2669 = vmatprep.subr.mxu0 0.0
        %2670 = vmatpush2.msra.mxu0 0.0
        %2671 = vmatprep.subr.mxu0 0.0
        %2672 = vmatpush2.msra.mxu0 0.0
        %2673 = vmatprep.subr.mxu0 0.0
        %2674 = vmatpush2.msra.mxu0 0.0
        %2675 = vmatprep.subr.mxu0 0.0
        %2676 = vmatpush2.msra.mxu0 0.0
        %2677 = vmatprep.subr.mxu0 0.0
        %2678 = vmatpush2.msra.mxu0 0.0
        %2679 = vmatprep.subr.mxu0 0.0
        %2680 = vmatpush2.msra.mxu0 0.0
        %2681 = vmatprep.subr.mxu0 0.0
        %2682 = vmatpush2.msra.mxu0 0.0
        %2683 = vmatprep.subr.mxu0 0.0
        %2684 = vmatpush2.msra.mxu0 0.0
        %2685 = vmatprep.subr.mxu0 0.0
        %2686 = vmatpush2.msra.mxu0 0.0
        %2687 = vmatprep.subr.mxu0 0.0
        %2688 = vmatpush2.msra.mxu0 0.0
        %2689 = vmatprep.subr.mxu0 0.0
        %2690 = vmatpush2.msra.mxu0 0.0
        %2691 = vmatprep.mubr.f32.mxu0 0.0
        %2692 = vmatmul.mubr.f32.gmra.mxu0 %v586
        %v2693 = vpop.f32.mrf.mxu0
        %v2694 = vadd.f32 0.0, %v2693
        %v2695 = vpop.f32.mrf.mxu0
        %2696 = vmatprep.mubr.f32.mxu0 0.0
        %2697 = vmatmul.mubr.f32.gmra.mxu0 %v588
        %v2698 = vpop.f32.mrf.mxu0
        %v2699 = vadd.f32 0.0, %v2698
        %v2700 = vpop.f32.mrf.mxu0
        %2701 = vmatprep.mubr.f32.mxu0 0.0
        %2702 = vmatmul.mubr.f32.gmra.mxu0 %v590
        %v2703 = vpop.f32.mrf.mxu0
        %v2704 = vadd.f32 0.0, %v2703
        %v2705 = vpop.f32.mrf.mxu0
        %2706 = vmatprep.mubr.f32.mxu0 0.0
        %2707 = vmatmul.mubr.f32.gmra.mxu0 %v592
        %v2708 = vpop.f32.mrf.mxu0
        %v2709 = vadd.f32 0.0, %v2708
        %v2710 = vpop.f32.mrf.mxu0
        %2711 = vmatprep.mubr.f32.mxu0 0.0
        %2712 = vmatmul.mubr.f32.gmra.mxu0 %v594
        %v2713 = vpop.f32.mrf.mxu0
        %v2714 = vadd.f32 0.0, %v2713
        %v2715 = vpop.f32.mrf.mxu0
        %2716 = vmatprep.mubr.f32.mxu0 0.0
        %2717 = vmatmul.mubr.f32.gmra.mxu0 %v596
        %v2718 = vpop.f32.mrf.mxu0
        %v2719 = vadd.f32 0.0, %v2718
        %v2720 = vpop.f32.mrf.mxu0
        %2721 = vmatprep.mubr.f32.mxu0 0.0
        %2722 = vmatmul.mubr.f32.gmra.mxu0 %v598
        %v2723 = vpop.f32.mrf.mxu0
        %v2724 = vadd.f32 0.0, %v2723
        %v2725 = vpop.f32.mrf.mxu0
        %2726 = vmatprep.mubr.f32.mxu0 0.0
        %2727 = vmatmul.mubr.f32.gmra.mxu0 %v600
        %v2728 = vpop.f32.mrf.mxu0
        %v2729 = vadd.f32 0.0, %v2728
        %v2730 = vpop.f32.mrf.mxu0
        %2731 = vmatprep.mubr.f32.mxu0 0.0
        %2732 = vmatmul.mubr.f32.gmra.mxu0 %v602
        %v2733 = vpop.f32.mrf.mxu0
        %v2734 = vadd.f32 0.0, %v2733
        %v2735 = vpop.f32.mrf.mxu0
        %2736 = vmatprep.mubr.f32.mxu0 0.0
        %2737 = vmatmul.mubr.f32.gmra.mxu0 %v604
        %v2738 = vpop.f32.mrf.mxu0
        %v2739 = vadd.f32 0.0, %v2738
        %v2740 = vpop.f32.mrf.mxu0
        %2741 = vmatprep.mubr.f32.mxu0 0.0
        %2742 = vmatmul.mubr.f32.gmra.mxu0 %v606
        %v2743 = vpop.f32.mrf.mxu0
        %v2744 = vadd.f32 0.0, %v2743
        %v2745 = vpop.f32.mrf.mxu0
        %2746 = vmatprep.mubr.f32.mxu0 0.0
        %2747 = vmatmul.mubr.f32.gmra.mxu0 %v608
        %v2748 = vpop.f32.mrf.mxu0
        %v2749 = vadd.f32 0.0, %v2748
        %v2750 = vpop.f32.mrf.mxu0
        %2751 = vmatprep.mubr.f32.mxu0 0.0
        %2752 = vmatmul.mubr.f32.gmra.mxu0 %v610
        %v2753 = vpop.f32.mrf.mxu0
        %v2754 = vadd.f32 0.0, %v2753
        %v2755 = vpop.f32.mrf.mxu0
        %2756 = vmatprep.mubr.f32.mxu0 0.0
        %2757 = vmatmul.mubr.f32.gmra.mxu0 %v612
        %v2758 = vpop.f32.mrf.mxu0
        %v2759 = vadd.f32 0.0, %v2758
        %v2760 = vpop.f32.mrf.mxu0
        %2761 = vmatprep.mubr.f32.mxu0 0.0
        %2762 = vmatmul.mubr.f32.gmra.mxu0 %v614
        %v2763 = vpop.f32.mrf.mxu0
        %v2764 = vadd.f32 0.0, %v2763
        %v2765 = vpop.f32.mrf.mxu0
        %2766 = vmatprep.mubr.f32.mxu0 0.0
        %2767 = vmatmul.mubr.f32.gmra.mxu0 %v616
        %v2768 = vpop.f32.mrf.mxu0
        %v2769 = vadd.f32 0.0, %v2768
        %v2770 = vpop.f32.mrf.mxu0
        %2771 = vmatprep.mubr.f32.mxu0 0.0
        %2772 = vmatmul.mubr.f32.gmra.mxu0 %v618
        %v2773 = vpop.f32.mrf.mxu0
        %v2774 = vadd.f32 0.0, %v2773
        %v2775 = vpop.f32.mrf.mxu0
        %2776 = vmatprep.mubr.f32.mxu0 0.0
        %2777 = vmatmul.mubr.f32.gmra.mxu0 %v620
        %v2778 = vpop.f32.mrf.mxu0
        %v2779 = vadd.f32 0.0, %v2778
        %v2780 = vpop.f32.mrf.mxu0
        %2781 = vmatprep.mubr.f32.mxu0 0.0
        %2782 = vmatmul.mubr.f32.gmra.mxu0 %v622
        %v2783 = vpop.f32.mrf.mxu0
        %v2784 = vadd.f32 0.0, %v2783
        %v2785 = vpop.f32.mrf.mxu0
        %2786 = vmatprep.mubr.f32.mxu0 0.0
        %2787 = vmatmul.mubr.f32.gmra.mxu0 %v624
        %v2788 = vpop.f32.mrf.mxu0
        %v2789 = vadd.f32 0.0, %v2788
        %v2790 = vpop.f32.mrf.mxu0
        %2791 = vmatprep.mubr.f32.mxu0 0.0
        %2792 = vmatmul.mubr.f32.gmra.mxu0 %v626
        %v2793 = vpop.f32.mrf.mxu0
        %v2794 = vadd.f32 0.0, %v2793
        %v2795 = vpop.f32.mrf.mxu0
        %2796 = vmatprep.mubr.f32.mxu0 0.0
        %2797 = vmatmul.mubr.f32.gmra.mxu0 %v628
        %v2798 = vpop.f32.mrf.mxu0
        %v2799 = vadd.f32 0.0, %v2798
        %v2800 = vpop.f32.mrf.mxu0
        %2801 = vmatprep.mubr.f32.mxu0 0.0
        %2802 = vmatmul.mubr.f32.gmra.mxu0 %v630
        %v2803 = vpop.f32.mrf.mxu0
        %v2804 = vadd.f32 0.0, %v2803
        %v2805 = vpop.f32.mrf.mxu0
        %2806 = vmatprep.mubr.f32.mxu0 0.0
        %2807 = vmatmul.mubr.f32.gmra.mxu0 %v632
        %v2808 = vpop.f32.mrf.mxu0
        %v2809 = vadd.f32 0.0, %v2808
        %v2810 = vpop.f32.mrf.mxu0
        %2811 = vmatprep.mubr.f32.mxu0 0.0
        %2812 = vmatmul.mubr.f32.gmra.mxu0 %v634
        %v2813 = vpop.f32.mrf.mxu0
        %v2814 = vadd.f32 0.0, %v2813
        %v2815 = vpop.f32.mrf.mxu0
        %2816 = vmatprep.mubr.f32.mxu0 0.0
        %2817 = vmatmul.mubr.f32.gmra.mxu0 %v636
        %v2818 = vpop.f32.mrf.mxu0
        %v2819 = vadd.f32 0.0, %v2818
        %v2820 = vpop.f32.mrf.mxu0
        %2821 = vmatprep.mubr.f32.mxu0 0.0
        %2822 = vmatmul.mubr.f32.gmra.mxu0 %v638
        %v2823 = vpop.f32.mrf.mxu0
        %v2824 = vadd.f32 0.0, %v2823
        %v2825 = vpop.f32.mrf.mxu0
        %2826 = vmatprep.mubr.f32.mxu0 0.0
        %2827 = vmatmul.mubr.f32.gmra.mxu0 %v640
        %v2828 = vpop.f32.mrf.mxu0
        %v2829 = vadd.f32 0.0, %v2828
        %v2830 = vpop.f32.mrf.mxu0
        %2831 = vmatprep.mubr.f32.mxu0 0.0
        %2832 = vmatmul.mubr.f32.gmra.mxu0 %v1827
        %v2833 = vpop.f32.mrf.mxu0
        %v2834 = vadd.f32 0.0, %v2833
        %v2835 = vpop.f32.mrf.mxu0
        %2836 = vmatprep.mubr.f32.mxu0 0.0
        %2837 = vmatmul.mubr.f32.gmra.mxu0 %v1829
        %v2838 = vpop.f32.mrf.mxu0
        %v2839 = vadd.f32 0.0, %v2838
        %v2840 = vpop.f32.mrf.mxu0
        %2841 = vmatprep.mubr.f32.mxu0 0.0
        %2842 = vmatmul.mubr.f32.gmra.mxu0 %v2623
        %v2843 = vpop.f32.mrf.mxu0
        %v2844 = vadd.f32 0.0, %v2843
        %v2845 = vpop.f32.mrf.mxu0
        %2846 = vmatprep.mubr.f32.mxu0 0.0
        %2847 = vmatmul.mubr.f32.gmra.mxu0 %v2625
        %v2848 = vpop.f32.mrf.mxu0
        %v2849 = vadd.f32 0.0, %v2848
        %v2850 = vpop.f32.mrf.mxu0
        %2851 = vdwg.mxu0
        %v2852 = vadd.f32 %v2585, %v2694
        %v2853 = vadd.f32 %v2586, %v2699
        %v2854 = vadd.f32 %v2587, %v2704
        %v2855 = vadd.f32 %v2588, %v2709
        %v2856 = vadd.f32 %v2589, %v2714
        %v2857 = vadd.f32 %v2590, %v2719
        %v2858 = vadd.f32 %v2591, %v2724
        %v2859 = vadd.f32 %v2592, %v2729
        %v2860 = vadd.f32 %v2593, %v2734
        %v2861 = vadd.f32 %v2594, %v2739
        %v2862 = vadd.f32 %v2595, %v2744
        %v2863 = vadd.f32 %v2596, %v2749
        %v2864 = vadd.f32 %v2597, %v2754
        %v2865 = vadd.f32 %v2598, %v2759
        %v2866 = vadd.f32 %v2599, %v2764
        %v2867 = vadd.f32 %v2600, %v2769
        %v2868 = vadd.f32 %v2601, %v2774
        %v2869 = vadd.f32 %v2602, %v2779
        %v2870 = vadd.f32 %v2603, %v2784
        %v2871 = vadd.f32 %v2604, %v2789
        %v2872 = vadd.f32 %v2605, %v2794
        %v2873 = vadd.f32 %v2606, %v2799
        %v2874 = vadd.f32 %v2607, %v2804
        %v2875 = vadd.f32 %v2608, %v2809
        %v2876 = vadd.f32 %v2609, %v2814
        %v2877 = vadd.f32 %v2610, %v2819
        %v2878 = vadd.f32 %v2611, %v2824
        %v2879 = vadd.f32 %v2612, %v2829
        %v2880 = vadd.f32 %v2613, %v2834
        %v2881 = vadd.f32 %v2614, %v2839
        %v2882 = vadd.f32 %v2615, %v2844
        %v2883 = vadd.f32 %v2616, %v2849
        %v2884 = vrot.slane %v409, 2
        %v2885 = vrot.slane %v410, 2
        %v2886 = vsel %vm1156, %v2884, %v2885
        %v2887 = vrot.slane %v411, 2
        %v2888 = vsel %vm1156, %v2885, %v2887
        %v2889 = vsel %vm577, %v2886, 0
        %v2891 = vsel %vm577, %v2888, 0
        %2893 = vmatprep.subr.mxu0 0.0
        %2894 = vmatpush1.msra.mxu0 0.0
        %2895 = vmatprep.subr.mxu0 0.0
        %2896 = vmatpush1.msra.mxu0 0.0
        %2897 = vmatprep.subr.mxu0 0.0
        %2898 = vmatpush1.msra.mxu0 0.0
        %2899 = vmatprep.subr.mxu0 0.0
        %2900 = vmatpush1.msra.mxu0 0.0
        %2901 = vmatprep.subr.mxu0 0.0
        %2902 = vmatpush1.msra.mxu0 0.0
        %2903 = vmatprep.subr.mxu0 0.0
        %2904 = vmatpush1.msra.mxu0 0.0
        %2905 = vmatprep.subr.mxu0 0.0
        %2906 = vmatpush1.msra.mxu0 0.0
        %2907 = vmatprep.subr.mxu0 0.0
        %2908 = vmatpush1.msra.mxu0 0.0
        %2909 = vmatprep.subr.mxu0 0.0
        %2910 = vmatpush1.msra.mxu0 0.0
        %2911 = vmatprep.subr.mxu0 0.0
        %2912 = vmatpush1.msra.mxu0 0.0
        %2913 = vmatprep.subr.mxu0 0.0
        %2914 = vmatpush1.msra.mxu0 0.0
        %2915 = vmatprep.subr.mxu0 0.0
        %2916 = vmatpush1.msra.mxu0 0.0
        %2917 = vmatprep.subr.mxu0 0.0
        %2918 = vmatpush1.msra.mxu0 %v447
        %2919 = vmatprep.subr.mxu0 0.0
        %2920 = vmatpush1.msra.mxu0 %v446
        %2921 = vmatprep.subr.mxu0 0.0
        %2922 = vmatpush1.msra.mxu0 %v445
        %2923 = vmatprep.subr.mxu0 0.0
        %2924 = vmatpush1.msra.mxu0 %v444
        %2925 = vmatprep.subr.mxu0 0.0
        %2926 = vmatpush2.msra.mxu0 0.0
        %2927 = vmatprep.subr.mxu0 0.0
        %2928 = vmatpush2.msra.mxu0 0.0
        %2929 = vmatprep.subr.mxu0 0.0
        %2930 = vmatpush2.msra.mxu0 0.0
        %2931 = vmatprep.subr.mxu0 0.0
        %2932 = vmatpush2.msra.mxu0 0.0
        %2933 = vmatprep.subr.mxu0 0.0
        %2934 = vmatpush2.msra.mxu0 0.0
        %2935 = vmatprep.subr.mxu0 0.0
        %2936 = vmatpush2.msra.mxu0 0.0
        %2937 = vmatprep.subr.mxu0 0.0
        %2938 = vmatpush2.msra.mxu0 0.0
        %2939 = vmatprep.subr.mxu0 0.0
        %2940 = vmatpush2.msra.mxu0 0.0
        %2941 = vmatprep.subr.mxu0 0.0
        %2942 = vmatpush2.msra.mxu0 0.0
        %2943 = vmatprep.subr.mxu0 0.0
        %2944 = vmatpush2.msra.mxu0 0.0
        %2945 = vmatprep.subr.mxu0 0.0
        %2946 = vmatpush2.msra.mxu0 0.0
        %2947 = vmatprep.subr.mxu0 0.0
        %2948 = vmatpush2.msra.mxu0 0.0
        %2949 = vmatprep.subr.mxu0 0.0
        %2950 = vmatpush2.msra.mxu0 0.0
        %2951 = vmatprep.subr.mxu0 0.0
        %2952 = vmatpush2.msra.mxu0 0.0
        %2953 = vmatprep.subr.mxu0 0.0
        %2954 = vmatpush2.msra.mxu0 0.0
        %2955 = vmatprep.subr.mxu0 0.0
        %2956 = vmatpush2.msra.mxu0 0.0
        %2957 = vmatprep.mubr.f32.mxu0 0.0
        %2958 = vmatmul.mubr.f32.gmra.mxu0 %v1245
        %v2959 = vpop.f32.mrf.mxu0
        %v2960 = vadd.f32 0.0, %v2959
        %v2961 = vpop.f32.mrf.mxu0
        %2962 = vmatprep.mubr.f32.mxu0 0.0
        %2963 = vmatmul.mubr.f32.gmra.mxu0 %v1247
        %v2964 = vpop.f32.mrf.mxu0
        %v2965 = vadd.f32 0.0, %v2964
        %v2966 = vpop.f32.mrf.mxu0
        %2967 = vmatprep.mubr.f32.mxu0 0.0
        %2968 = vmatmul.mubr.f32.gmra.mxu0 %v1249
        %v2969 = vpop.f32.mrf.mxu0
        %v2970 = vadd.f32 0.0, %v2969
        %v2971 = vpop.f32.mrf.mxu0
        %2972 = vmatprep.mubr.f32.mxu0 0.0
        %2973 = vmatmul.mubr.f32.gmra.mxu0 %v1251
        %v2974 = vpop.f32.mrf.mxu0
        %v2975 = vadd.f32 0.0, %v2974
        %v2976 = vpop.f32.mrf.mxu0
        %2977 = vmatprep.mubr.f32.mxu0 0.0
        %2978 = vmatmul.mubr.f32.gmra.mxu0 %v1253
        %v2979 = vpop.f32.mrf.mxu0
        %v2980 = vadd.f32 0.0, %v2979
        %v2981 = vpop.f32.mrf.mxu0
        %2982 = vmatprep.mubr.f32.mxu0 0.0
        %2983 = vmatmul.mubr.f32.gmra.mxu0 %v1255
        %v2984 = vpop.f32.mrf.mxu0
        %v2985 = vadd.f32 0.0, %v2984
        %v2986 = vpop.f32.mrf.mxu0
        %2987 = vmatprep.mubr.f32.mxu0 0.0
        %2988 = vmatmul.mubr.f32.gmra.mxu0 %v1257
        %v2989 = vpop.f32.mrf.mxu0
        %v2990 = vadd.f32 0.0, %v2989
        %v2991 = vpop.f32.mrf.mxu0
        %2992 = vmatprep.mubr.f32.mxu0 0.0
        %2993 = vmatmul.mubr.f32.gmra.mxu0 %v1259
        %v2994 = vpop.f32.mrf.mxu0
        %v2995 = vadd.f32 0.0, %v2994
        %v2996 = vpop.f32.mrf.mxu0
        %2997 = vmatprep.mubr.f32.mxu0 0.0
        %2998 = vmatmul.mubr.f32.gmra.mxu0 %v1261
        %v2999 = vpop.f32.mrf.mxu0
        %v3000 = vadd.f32 0.0, %v2999
        %v3001 = vpop.f32.mrf.mxu0
        %3002 = vmatprep.mubr.f32.mxu0 0.0
        %3003 = vmatmul.mubr.f32.gmra.mxu0 %v1263
        %v3004 = vpop.f32.mrf.mxu0
        %v3005 = vadd.f32 0.0, %v3004
        %v3006 = vpop.f32.mrf.mxu0
        %3007 = vmatprep.mubr.f32.mxu0 0.0
        %3008 = vmatmul.mubr.f32.gmra.mxu0 %v1265
        %v3009 = vpop.f32.mrf.mxu0
        %v3010 = vadd.f32 0.0, %v3009
        %v3011 = vpop.f32.mrf.mxu0
        %3012 = vmatprep.mubr.f32.mxu0 0.0
        %3013 = vmatmul.mubr.f32.gmra.mxu0 %v1267
        %v3014 = vpop.f32.mrf.mxu0
        %v3015 = vadd.f32 0.0, %v3014
        %v3016 = vpop.f32.mrf.mxu0
        %3017 = vmatprep.mubr.f32.mxu0 0.0
        %3018 = vmatmul.mubr.f32.gmra.mxu0 %v1269
        %v3019 = vpop.f32.mrf.mxu0
        %v3020 = vadd.f32 0.0, %v3019
        %v3021 = vpop.f32.mrf.mxu0
        %3022 = vmatprep.mubr.f32.mxu0 0.0
        %3023 = vmatmul.mubr.f32.gmra.mxu0 %v1271
        %v3024 = vpop.f32.mrf.mxu0
        %v3025 = vadd.f32 0.0, %v3024
        %v3026 = vpop.f32.mrf.mxu0
        %3027 = vmatprep.mubr.f32.mxu0 0.0
        %3028 = vmatmul.mubr.f32.gmra.mxu0 %v1273
        %v3029 = vpop.f32.mrf.mxu0
        %v3030 = vadd.f32 0.0, %v3029
        %v3031 = vpop.f32.mrf.mxu0
        %3032 = vmatprep.mubr.f32.mxu0 0.0
        %3033 = vmatmul.mubr.f32.gmra.mxu0 %v1275
        %v3034 = vpop.f32.mrf.mxu0
        %v3035 = vadd.f32 0.0, %v3034
        %v3036 = vpop.f32.mrf.mxu0
        %3037 = vmatprep.mubr.f32.mxu0 0.0
        %3038 = vmatmul.mubr.f32.gmra.mxu0 %v1277
        %v3039 = vpop.f32.mrf.mxu0
        %v3040 = vadd.f32 0.0, %v3039
        %v3041 = vpop.f32.mrf.mxu0
        %3042 = vmatprep.mubr.f32.mxu0 0.0
        %3043 = vmatmul.mubr.f32.gmra.mxu0 %v1279
        %v3044 = vpop.f32.mrf.mxu0
        %v3045 = vadd.f32 0.0, %v3044
        %v3046 = vpop.f32.mrf.mxu0
        %3047 = vmatprep.mubr.f32.mxu0 0.0
        %3048 = vmatmul.mubr.f32.gmra.mxu0 %v1281
        %v3049 = vpop.f32.mrf.mxu0
        %v3050 = vadd.f32 0.0, %v3049
        %v3051 = vpop.f32.mrf.mxu0
        %3052 = vmatprep.mubr.f32.mxu0 0.0
        %3053 = vmatmul.mubr.f32.gmra.mxu0 %v1283
        %v3054 = vpop.f32.mrf.mxu0
        %v3055 = vadd.f32 0.0, %v3054
        %v3056 = vpop.f32.mrf.mxu0
        %3057 = vmatprep.mubr.f32.mxu0 0.0
        %3058 = vmatmul.mubr.f32.gmra.mxu0 %v1285
        %v3059 = vpop.f32.mrf.mxu0
        %v3060 = vadd.f32 0.0, %v3059
        %v3061 = vpop.f32.mrf.mxu0
        %3062 = vmatprep.mubr.f32.mxu0 0.0
        %3063 = vmatmul.mubr.f32.gmra.mxu0 %v1287
        %v3064 = vpop.f32.mrf.mxu0
        %v3065 = vadd.f32 0.0, %v3064
        %v3066 = vpop.f32.mrf.mxu0
        %3067 = vmatprep.mubr.f32.mxu0 0.0
        %3068 = vmatmul.mubr.f32.gmra.mxu0 %v1289
        %v3069 = vpop.f32.mrf.mxu0
        %v3070 = vadd.f32 0.0, %v3069
        %v3071 = vpop.f32.mrf.mxu0
        %3072 = vmatprep.mubr.f32.mxu0 0.0
        %3073 = vmatmul.mubr.f32.gmra.mxu0 %v1291
        %v3074 = vpop.f32.mrf.mxu0
        %v3075 = vadd.f32 0.0, %v3074
        %v3076 = vpop.f32.mrf.mxu0
        %3077 = vmatprep.mubr.f32.mxu0 0.0
        %3078 = vmatmul.mubr.f32.gmra.mxu0 %v1293
        %v3079 = vpop.f32.mrf.mxu0
        %v3080 = vadd.f32 0.0, %v3079
        %v3081 = vpop.f32.mrf.mxu0
        %3082 = vmatprep.mubr.f32.mxu0 0.0
        %3083 = vmatmul.mubr.f32.gmra.mxu0 %v1295
        %v3084 = vpop.f32.mrf.mxu0
        %v3085 = vadd.f32 0.0, %v3084
        %v3086 = vpop.f32.mrf.mxu0
        %3087 = vmatprep.mubr.f32.mxu0 0.0
        %3088 = vmatmul.mubr.f32.gmra.mxu0 %v1297
        %v3089 = vpop.f32.mrf.mxu0
        %v3090 = vadd.f32 0.0, %v3089
        %v3091 = vpop.f32.mrf.mxu0
        %3092 = vmatprep.mubr.f32.mxu0 0.0
        %3093 = vmatmul.mubr.f32.gmra.mxu0 %v1299
        %v3094 = vpop.f32.mrf.mxu0
        %v3095 = vadd.f32 0.0, %v3094
        %v3096 = vpop.f32.mrf.mxu0
        %3097 = vmatprep.mubr.f32.mxu0 0.0
        %3098 = vmatmul.mubr.f32.gmra.mxu0 %v2093
        %v3099 = vpop.f32.mrf.mxu0
        %v3100 = vadd.f32 0.0, %v3099
        %v3101 = vpop.f32.mrf.mxu0
        %3102 = vmatprep.mubr.f32.mxu0 0.0
        %3103 = vmatmul.mubr.f32.gmra.mxu0 %v2095
        %v3104 = vpop.f32.mrf.mxu0
        %v3105 = vadd.f32 0.0, %v3104
        %v3106 = vpop.f32.mrf.mxu0
        %3107 = vmatprep.mubr.f32.mxu0 0.0
        %3108 = vmatmul.mubr.f32.gmra.mxu0 %v2889
        %v3109 = vpop.f32.mrf.mxu0
        %v3110 = vadd.f32 0.0, %v3109
        %v3111 = vpop.f32.mrf.mxu0
        %3112 = vmatprep.mubr.f32.mxu0 0.0
        %3113 = vmatmul.mubr.f32.gmra.mxu0 %v2891
        %v3114 = vpop.f32.mrf.mxu0
        %v3115 = vadd.f32 0.0, %v3114
        %v3116 = vpop.f32.mrf.mxu0
        %3117 = vdwg.mxu0
        %v3118 = vadd.f32 %v2852, %v2960
        %v3119 = vadd.f32 %v2853, %v2965
        %v3120 = vadd.f32 %v2854, %v2970
        %v3121 = vadd.f32 %v2855, %v2975
        %v3122 = vadd.f32 %v2856, %v2980
        %v3123 = vadd.f32 %v2857, %v2985
        %v3124 = vadd.f32 %v2858, %v2990
        %v3125 = vadd.f32 %v2859, %v2995
        %v3126 = vadd.f32 %v2860, %v3000
        %v3127 = vadd.f32 %v2861, %v3005
        %v3128 = vadd.f32 %v2862, %v3010
        %v3129 = vadd.f32 %v2863, %v3015
        %v3130 = vadd.f32 %v2864, %v3020
        %v3131 = vadd.f32 %v2865, %v3025
        %v3132 = vadd.f32 %v2866, %v3030
        %v3133 = vadd.f32 %v2867, %v3035
        %v3134 = vadd.f32 %v2868, %v3040
        %v3135 = vadd.f32 %v2869, %v3045
        %v3136 = vadd.f32 %v2870, %v3050
        %v3137 = vadd.f32 %v2871, %v3055
        %v3138 = vadd.f32 %v2872, %v3060
        %v3139 = vadd.f32 %v2873, %v3065
        %v3140 = vadd.f32 %v2874, %v3070
        %v3141 = vadd.f32 %v2875, %v3075
        %v3142 = vadd.f32 %v2876, %v3080
        %v3143 = vadd.f32 %v2877, %v3085
        %v3144 = vadd.f32 %v2878, %v3090
        %v3145 = vadd.f32 %v2879, %v3095
        %v3146 = vadd.f32 %v2880, %v3100
        %v3147 = vadd.f32 %v2881, %v3105
        %v3148 = vadd.f32 %v2882, %v3110
        %v3149 = vadd.f32 %v2883, %v3115
        %v3150 = vld [vmem:[%s2] sm:$0x1]
        %v3152 = vlaneseq
        %v3153 = vshrl.u32 %v3152, 7
        %v3154 = vsub.s32 0, %v3153
        %v3155 = vrot.slane %v3150, %v3154
        %v3157 = vmul.f32 %v3118, %v3155
        %v3158 = vmul.f32 %v3119, %v3155
        %v3159 = vmul.f32 %v3120, %v3155
        %v3160 = vmul.f32 %v3121, %v3155
        %v3161 = vmul.f32 %v3122, %v3155
        %v3162 = vmul.f32 %v3123, %v3155
        %v3163 = vmul.f32 %v3124, %v3155
        %v3164 = vmul.f32 %v3125, %v3155
        %v3165 = vmul.f32 %v3126, %v3155
        %v3166 = vmul.f32 %v3127, %v3155
        %v3167 = vmul.f32 %v3128, %v3155
        %v3168 = vmul.f32 %v3129, %v3155
        %v3169 = vmul.f32 %v3130, %v3155
        %v3170 = vmul.f32 %v3131, %v3155
        %v3171 = vmul.f32 %v3132, %v3155
        %v3172 = vmul.f32 %v3133, %v3155
        %v3173 = vmul.f32 %v3134, %v3155
        %v3174 = vmul.f32 %v3135, %v3155
        %v3175 = vmul.f32 %v3136, %v3155
        %v3176 = vmul.f32 %v3137, %v3155
        %v3177 = vmul.f32 %v3138, %v3155
        %v3178 = vmul.f32 %v3139, %v3155
        %v3179 = vmul.f32 %v3140, %v3155
        %v3180 = vmul.f32 %v3141, %v3155
        %v3181 = vmul.f32 %v3142, %v3155
        %v3182 = vmul.f32 %v3143, %v3155
        %v3183 = vmul.f32 %v3144, %v3155
        %v3184 = vmul.f32 %v3145, %v3155
        %v3185 = vmul.f32 %v3146, %v3155
        %v3186 = vmul.f32 %v3147, %v3155
        %v3187 = vmul.f32 %v3148, %v3155
        %v3188 = vmul.f32 %v3149, %v3155
        %v3189 = vld [vmem:[%s3] sm:$0x1]
        %v3191 = vlaneseq
        %v3192 = vshrl.u32 %v3191, 7
        %v3193 = vsub.s32 0, %v3192
        %v3194 = vrot.slane %v3189, %v3193
        %v3196 = vadd.f32 %v3157, %v3194
        %v3197 = vadd.f32 %v3158, %v3194
        %v3198 = vadd.f32 %v3159, %v3194
        %v3199 = vadd.f32 %v3160, %v3194
        %v3200 = vadd.f32 %v3161, %v3194
        %v3201 = vadd.f32 %v3162, %v3194
        %v3202 = vadd.f32 %v3163, %v3194
        %v3203 = vadd.f32 %v3164, %v3194
        %v3204 = vadd.f32 %v3165, %v3194
        %v3205 = vadd.f32 %v3166, %v3194
        %v3206 = vadd.f32 %v3167, %v3194
        %v3207 = vadd.f32 %v3168, %v3194
        %v3208 = vadd.f32 %v3169, %v3194
        %v3209 = vadd.f32 %v3170, %v3194
        %v3210 = vadd.f32 %v3171, %v3194
        %v3211 = vadd.f32 %v3172, %v3194
        %v3212 = vadd.f32 %v3173, %v3194
        %v3213 = vadd.f32 %v3174, %v3194
        %v3214 = vadd.f32 %v3175, %v3194
        %v3215 = vadd.f32 %v3176, %v3194
        %v3216 = vadd.f32 %v3177, %v3194
        %v3217 = vadd.f32 %v3178, %v3194
        %v3218 = vadd.f32 %v3179, %v3194
        %v3219 = vadd.f32 %v3180, %v3194
        %v3220 = vadd.f32 %v3181, %v3194
        %v3221 = vadd.f32 %v3182, %v3194
        %v3222 = vadd.f32 %v3183, %v3194
        %v3223 = vadd.f32 %v3184, %v3194
        %v3224 = vadd.f32 %v3185, %v3194
        %v3225 = vadd.f32 %v3186, %v3194
        %v3226 = vadd.f32 %v3187, %v3194
        %v3227 = vadd.f32 %v3188, %v3194
        %v3228 = vmax.f32 %v3196, 0.0
        %v3229 = vmax.f32 %v3197, 0.0
        %v3230 = vmax.f32 %v3198, 0.0
        %v3231 = vmax.f32 %v3199, 0.0
        %v3232 = vmax.f32 %v3200, 0.0
        %v3233 = vmax.f32 %v3201, 0.0
        %v3234 = vmax.f32 %v3202, 0.0
        %v3235 = vmax.f32 %v3203, 0.0
        %v3236 = vmax.f32 %v3204, 0.0
        %v3237 = vmax.f32 %v3205, 0.0
        %v3238 = vmax.f32 %v3206, 0.0
        %v3239 = vmax.f32 %v3207, 0.0
        %v3240 = vmax.f32 %v3208, 0.0
        %v3241 = vmax.f32 %v3209, 0.0
        %v3242 = vmax.f32 %v3210, 0.0
        %v3243 = vmax.f32 %v3211, 0.0
        %v3244 = vmax.f32 %v3212, 0.0
        %v3245 = vmax.f32 %v3213, 0.0
        %v3246 = vmax.f32 %v3214, 0.0
        %v3247 = vmax.f32 %v3215, 0.0
        %v3248 = vmax.f32 %v3216, 0.0
        %v3249 = vmax.f32 %v3217, 0.0
        %v3250 = vmax.f32 %v3218, 0.0
        %v3251 = vmax.f32 %v3219, 0.0
        %v3252 = vmax.f32 %v3220, 0.0
        %v3253 = vmax.f32 %v3221, 0.0
        %v3254 = vmax.f32 %v3222, 0.0
        %v3255 = vmax.f32 %v3223, 0.0
        %v3256 = vmax.f32 %v3224, 0.0
        %v3257 = vmax.f32 %v3225, 0.0
        %v3258 = vmax.f32 %v3226, 0.0
        %v3259 = vmax.f32 %v3227, 0.0
        %vm3260 = vcmask 523264
        %3261 = vst.msk [vmem:[#allocation2] sm:$0xff] %vm3260, 0.0
        %3262 = vst.msk [vmem:[#allocation2 + $0x8] sm:$0xff] %vm3260, 0.0
        %vm3263 = vcmask 517120
        %3264 = vst.msk [vmem:[#allocation2 + $0x10] sm:$0x3] %vm3263, 0.0
        %3265 = vst.msk [vmem:[#allocation2 + $0x18] sm:$0xff] %vm3260, 0.0
        %3266 = vst.msk [vmem:[#allocation2 + $0x20] sm:$0xff] %vm3260, 0.0
        %3267 = vst.msk [vmem:[#allocation2 + $0x28] sm:$0x3] %vm3263, 0.0
        %3268 = vst.msk [vmem:[#allocation2 + $0x30] sm:$0xff] %vm3260, 0.0
        %3269 = vst.msk [vmem:[#allocation2 + $0x38] sm:$0xff] %vm3260, 0.0
        %3270 = vst.msk [vmem:[#allocation2 + $0x40] sm:$0x3] %vm3263, 0.0
        %3271 = vst.msk [vmem:[#allocation2 + $0x48] sm:$0xff] %vm3260, 0.0
        %3272 = vst.msk [vmem:[#allocation2 + $0x50] sm:$0xff] %vm3260, 0.0
        %3273 = vst.msk [vmem:[#allocation2 + $0x58] sm:$0x3] %vm3263, 0.0
        %3274 = vst.msk [vmem:[#allocation2 + $0x60] sm:$0xff] %vm3260, 0.0
        %3275 = vst.msk [vmem:[#allocation2 + $0x68] sm:$0xff] %vm3260, 0.0
        %3276 = vst.msk [vmem:[#allocation2 + $0x70] sm:$0x3] %vm3263, 0.0
        %3277 = vst.msk [vmem:[#allocation2 + $0x78] sm:$0xff] %vm3260, 0.0
        %3278 = vst.msk [vmem:[#allocation2 + $0x80] sm:$0xff] %vm3260, 0.0
        %3279 = vst.msk [vmem:[#allocation2 + $0x88] sm:$0x3] %vm3263, 0.0
        %3280 = vst.msk [vmem:[#allocation2 + $0x90] sm:$0xff] %vm3260, 0.0
        %3281 = vst.msk [vmem:[#allocation2 + $0x98] sm:$0xff] %vm3260, 0.0
        %3282 = vst.msk [vmem:[#allocation2 + $0xa0] sm:$0x3] %vm3263, 0.0
        %3283 = vst.msk [vmem:[#allocation2 + $0xa8] sm:$0xff] %vm3260, 0.0
        %3284 = vst.msk [vmem:[#allocation2 + $0xb0] sm:$0xff] %vm3260, 0.0
        %3285 = vst.msk [vmem:[#allocation2 + $0xb8] sm:$0x3] %vm3263, 0.0
        %3286 = vst.msk [vmem:[#allocation2 + $0xc0] sm:$0xff] %vm3260, 0.0
        %3287 = vst.msk [vmem:[#allocation2 + $0xc8] sm:$0xff] %vm3260, 0.0
        %3288 = vst.msk [vmem:[#allocation2 + $0xd0] sm:$0x3] %vm3263, 0.0
        %3289 = vst.msk [vmem:[#allocation2 + $0xd8] sm:$0xff] %vm3260, 0.0
        %3290 = vst.msk [vmem:[#allocation2 + $0xe0] sm:$0xff] %vm3260, 0.0
        %3291 = vst.msk [vmem:[#allocation2 + $0xe8] sm:$0x3] %vm3263, 0.0
        %3292 = vst.msk [vmem:[#allocation2 + $0xf0] sm:$0xff] %vm3260, 0.0
        %3293 = vst.msk [vmem:[#allocation2 + $0xf8] sm:$0xff] %vm3260, 0.0
        %3294 = vst.msk [vmem:[#allocation2 + $0x100] sm:$0x3] %vm3263, 0.0
        %3295 = vst.msk [vmem:[#allocation2 + $0x108] sm:$0xff] %vm3260, 0.0
        %3296 = vst.msk [vmem:[#allocation2 + $0x110] sm:$0xff] %vm3260, 0.0
        %3297 = vst.msk [vmem:[#allocation2 + $0x118] sm:$0x3] %vm3263, 0.0
        %3298 = vst.msk [vmem:[#allocation2 + $0x120] sm:$0xff] %vm3260, 0.0
        %3299 = vst.msk [vmem:[#allocation2 + $0x128] sm:$0xff] %vm3260, 0.0
        %3300 = vst.msk [vmem:[#allocation2 + $0x130] sm:$0x3] %vm3263, 0.0
        %3301 = vst.msk [vmem:[#allocation2 + $0x138] sm:$0xff] %vm3260, 0.0
        %3302 = vst.msk [vmem:[#allocation2 + $0x140] sm:$0xff] %vm3260, 0.0
        %3303 = vst.msk [vmem:[#allocation2 + $0x148] sm:$0x3] %vm3263, 0.0
        %3304 = vst.msk [vmem:[#allocation2 + $0x150] sm:$0xff] %vm3260, 0.0
        %3305 = vst.msk [vmem:[#allocation2 + $0x158] sm:$0xff] %vm3260, 0.0
        %3306 = vst.msk [vmem:[#allocation2 + $0x160] sm:$0x3] %vm3263, 0.0
        %3307 = vst.msk [vmem:[#allocation2 + $0x168] sm:$0xff] %vm3260, 0.0
        %3308 = vst.msk [vmem:[#allocation2 + $0x170] sm:$0xff] %vm3260, 0.0
        %3309 = vst.msk [vmem:[#allocation2 + $0x178] sm:$0x3] %vm3263, 0.0
        %3310 = vst.msk [vmem:[#allocation2 + $0x180] sm:$0xff] %vm3260, 0.0
        %3311 = vst.msk [vmem:[#allocation2 + $0x188] sm:$0xff] %vm3260, 0.0
        %3312 = vst.msk [vmem:[#allocation2 + $0x190] sm:$0x3] %vm3263, 0.0
        %3313 = vst.msk [vmem:[#allocation2 + $0x198] sm:$0xff] %vm3260, 0.0
        %3314 = vst.msk [vmem:[#allocation2 + $0x1a0] sm:$0xff] %vm3260, 0.0
        %3315 = vst.msk [vmem:[#allocation2 + $0x1a8] sm:$0x3] %vm3263, 0.0
        %s3316 = scalar_lea.vmem [#allocation2], 24
        %3317 = vst.msk [vmem:[%s3316 + $0x1] sm:$0xff] %vm3260, %v3228
        %3318 = vst.msk [vmem:[%s3316 + $0x9] sm:$0xff] %vm3260, %v3229
        %3319 = vst.msk [vmem:[%s3316 + $0x19] sm:$0xff] %vm3260, %v3230
        %3320 = vst.msk [vmem:[%s3316 + $0x21] sm:$0xff] %vm3260, %v3231
        %3321 = vst.msk [vmem:[%s3316 + $0x31] sm:$0xff] %vm3260, %v3232
        %3322 = vst.msk [vmem:[%s3316 + $0x39] sm:$0xff] %vm3260, %v3233
        %3323 = vst.msk [vmem:[%s3316 + $0x49] sm:$0xff] %vm3260, %v3234
        %3324 = vst.msk [vmem:[%s3316 + $0x51] sm:$0xff] %vm3260, %v3235
        %3325 = vst.msk [vmem:[%s3316 + $0x61] sm:$0xff] %vm3260, %v3236
        %3326 = vst.msk [vmem:[%s3316 + $0x69] sm:$0xff] %vm3260, %v3237
        %3327 = vst.msk [vmem:[%s3316 + $0x79] sm:$0xff] %vm3260, %v3238
        %3328 = vst.msk [vmem:[%s3316 + $0x81] sm:$0xff] %vm3260, %v3239
        %3329 = vst.msk [vmem:[%s3316 + $0x91] sm:$0xff] %vm3260, %v3240
        %3330 = vst.msk [vmem:[%s3316 + $0x99] sm:$0xff] %vm3260, %v3241
        %3331 = vst.msk [vmem:[%s3316 + $0xa9] sm:$0xff] %vm3260, %v3242
        %3332 = vst.msk [vmem:[%s3316 + $0xb1] sm:$0xff] %vm3260, %v3243
        %3333 = vst.msk [vmem:[%s3316 + $0xc1] sm:$0xff] %vm3260, %v3244
        %3334 = vst.msk [vmem:[%s3316 + $0xc9] sm:$0xff] %vm3260, %v3245
        %3335 = vst.msk [vmem:[%s3316 + $0xd9] sm:$0xff] %vm3260, %v3246
        %3336 = vst.msk [vmem:[%s3316 + $0xe1] sm:$0xff] %vm3260, %v3247
        %3337 = vst.msk [vmem:[%s3316 + $0xf1] sm:$0xff] %vm3260, %v3248
        %3338 = vst.msk [vmem:[%s3316 + $0xf9] sm:$0xff] %vm3260, %v3249
        %3339 = vst.msk [vmem:[%s3316 + $0x109] sm:$0xff] %vm3260, %v3250
        %3340 = vst.msk [vmem:[%s3316 + $0x111] sm:$0xff] %vm3260, %v3251
        %3341 = vst.msk [vmem:[%s3316 + $0x121] sm:$0xff] %vm3260, %v3252
        %3342 = vst.msk [vmem:[%s3316 + $0x129] sm:$0xff] %vm3260, %v3253
        %3343 = vst.msk [vmem:[%s3316 + $0x139] sm:$0xff] %vm3260, %v3254
        %3344 = vst.msk [vmem:[%s3316 + $0x141] sm:$0xff] %vm3260, %v3255
        %3345 = vst.msk [vmem:[%s3316 + $0x151] sm:$0xff] %vm3260, %v3256
        %3346 = vst.msk [vmem:[%s3316 + $0x159] sm:$0xff] %vm3260, %v3257
        %3347 = vst.msk [vmem:[%s3316 + $0x169] sm:$0xff] %vm3260, %v3258
        %3348 = vst.msk [vmem:[%s3316 + $0x171] sm:$0xff] %vm3260, %v3259
        %v3349 = vld [vmem:[#allocation2] sm:$0xff]
        %v3350 = vld [vmem:[#allocation2 + $0x8] sm:$0xff]
        %v3351 = vld [vmem:[#allocation2 + $0x10] sm:$0x3]
        %v3352 = vld [vmem:[#allocation2 + $0x18] sm:$0xff]
        %v3353 = vld [vmem:[#allocation2 + $0x20] sm:$0xff]
        %v3354 = vld [vmem:[#allocation2 + $0x28] sm:$0x3]
        %v3355 = vld [vmem:[#allocation2 + $0x30] sm:$0xff]
        %v3356 = vld [vmem:[#allocation2 + $0x38] sm:$0xff]
        %v3357 = vld [vmem:[#allocation2 + $0x40] sm:$0x3]
        %v3358 = vld [vmem:[#allocation2 + $0x48] sm:$0xff]
        %v3359 = vld [vmem:[#allocation2 + $0x50] sm:$0xff]
        %v3360 = vld [vmem:[#allocation2 + $0x58] sm:$0x3]
        %v3361 = vld [vmem:[#allocation2 + $0x60] sm:$0xff]
        %v3362 = vld [vmem:[#allocation2 + $0x68] sm:$0xff]
        %v3363 = vld [vmem:[#allocation2 + $0x70] sm:$0x3]
        %v3364 = vld [vmem:[#allocation2 + $0x78] sm:$0xff]
        %v3365 = vld [vmem:[#allocation2 + $0x80] sm:$0xff]
        %v3366 = vld [vmem:[#allocation2 + $0x88] sm:$0x3]
        %v3367 = vld [vmem:[#allocation2 + $0x90] sm:$0xff]
        %v3368 = vld [vmem:[#allocation2 + $0x98] sm:$0xff]
        %v3369 = vld [vmem:[#allocation2 + $0xa0] sm:$0x3]
        %v3370 = vld [vmem:[#allocation2 + $0xa8] sm:$0xff]
        %v3371 = vld [vmem:[#allocation2 + $0xb0] sm:$0xff]
        %v3372 = vld [vmem:[#allocation2 + $0xb8] sm:$0x3]
        %v3373 = vld [vmem:[#allocation2 + $0xc0] sm:$0xff]
        %v3374 = vld [vmem:[#allocation2 + $0xc8] sm:$0xff]
        %v3375 = vld [vmem:[#allocation2 + $0xd0] sm:$0x3]
        %v3376 = vld [vmem:[#allocation2 + $0xd8] sm:$0xff]
        %v3377 = vld [vmem:[#allocation2 + $0xe0] sm:$0xff]
        %v3378 = vld [vmem:[#allocation2 + $0xe8] sm:$0x3]
        %v3379 = vld [vmem:[#allocation2 + $0xf0] sm:$0xff]
        %v3380 = vld [vmem:[#allocation2 + $0xf8] sm:$0xff]
        %v3381 = vld [vmem:[#allocation2 + $0x100] sm:$0x3]
        %v3382 = vld [vmem:[#allocation2 + $0x108] sm:$0xff]
        %v3383 = vld [vmem:[#allocation2 + $0x110] sm:$0xff]
        %v3384 = vld [vmem:[#allocation2 + $0x118] sm:$0x3]
        %v3385 = vld [vmem:[#allocation2 + $0x120] sm:$0xff]
        %v3386 = vld [vmem:[#allocation2 + $0x128] sm:$0xff]
        %v3387 = vld [vmem:[#allocation2 + $0x130] sm:$0x3]
        %v3388 = vld [vmem:[#allocation2 + $0x138] sm:$0xff]
        %v3389 = vld [vmem:[#allocation2 + $0x140] sm:$0xff]
        %v3390 = vld [vmem:[#allocation2 + $0x148] sm:$0x3]
        %v3391 = vld [vmem:[#allocation2 + $0x150] sm:$0xff]
        %v3392 = vld [vmem:[#allocation2 + $0x158] sm:$0xff]
        %v3393 = vld [vmem:[#allocation2 + $0x160] sm:$0x3]
        %v3394 = vld [vmem:[#allocation2 + $0x168] sm:$0xff]
        %v3395 = vld [vmem:[#allocation2 + $0x170] sm:$0xff]
        %v3396 = vld [vmem:[#allocation2 + $0x178] sm:$0x3]
        %v3397 = vld [vmem:[#allocation2 + $0x180] sm:$0xff]
        %v3398 = vld [vmem:[#allocation2 + $0x188] sm:$0xff]
        %v3399 = vld [vmem:[#allocation2 + $0x190] sm:$0x3]
        %v3400 = vld [vmem:[#allocation2 + $0x198] sm:$0xff]
        %v3401 = vld [vmem:[#allocation2 + $0x1a0] sm:$0xff]
        %v3402 = vld [vmem:[#allocation2 + $0x1a8] sm:$0x3]
        %v3403 = vld [vmem:[%s4] sm:$0xff]
        %v3404 = vld [vmem:[%s4 + $0x8] sm:$0xff]
        %v3405 = vld [vmem:[%s4 + $0x10] sm:$0xff]
        %v3406 = vld [vmem:[%s4 + $0x18] sm:$0xff]
        %v3407 = vld [vmem:[%s4 + $0x20] sm:$0xff]
        %v3408 = vld [vmem:[%s4 + $0x28] sm:$0xff]
        %v3409 = vld [vmem:[%s4 + $0x30] sm:$0xff]
        %v3410 = vld [vmem:[%s4 + $0x38] sm:$0xff]
        %v3411 = vld [vmem:[%s4 + $0x40] sm:$0xff]
        %v3412 = vld [vmem:[%s4 + $0x48] sm:$0xff]
        %v3413 = vld [vmem:[%s4 + $0x50] sm:$0xff]
        %v3414 = vld [vmem:[%s4 + $0x58] sm:$0xff]
        %v3415 = vld [vmem:[%s4 + $0x60] sm:$0xff]
        %v3416 = vld [vmem:[%s4 + $0x68] sm:$0xff]
        %v3417 = vld [vmem:[%s4 + $0x70] sm:$0xff]
        %v3418 = vld [vmem:[%s4 + $0x78] sm:$0xff]
        %v3419 = vld [vmem:[%s4 + $0x80] sm:$0xff]
        %v3420 = vld [vmem:[%s4 + $0x88] sm:$0xff]
        %v3421 = vld [vmem:[%s4 + $0x90] sm:$0xff]
        %v3422 = vld [vmem:[%s4 + $0x98] sm:$0xff]
        %v3423 = vld [vmem:[%s4 + $0xa0] sm:$0xff]
        %v3424 = vld [vmem:[%s4 + $0xa8] sm:$0xff]
        %v3425 = vld [vmem:[%s4 + $0xb0] sm:$0xff]
        %v3426 = vld [vmem:[%s4 + $0xb8] sm:$0xff]
        %v3427 = vld [vmem:[%s4 + $0xc0] sm:$0xff]
        %v3428 = vld [vmem:[%s4 + $0xc8] sm:$0xff]
        %v3429 = vld [vmem:[%s4 + $0xd0] sm:$0xff]
        %v3430 = vld [vmem:[%s4 + $0xd8] sm:$0xff]
        %v3431 = vld [vmem:[%s4 + $0xe0] sm:$0xff]
        %v3432 = vld [vmem:[%s4 + $0xe8] sm:$0xff]
        %v3433 = vld [vmem:[%s4 + $0xf0] sm:$0xff]
        %v3434 = vld [vmem:[%s4 + $0xf8] sm:$0xff]
        %v3435 = vld [vmem:[%s4 + $0x100] sm:$0xff]
        %v3436 = vld [vmem:[%s4 + $0x108] sm:$0xff]
        %v3437 = vld [vmem:[%s4 + $0x110] sm:$0xff]
        %v3438 = vld [vmem:[%s4 + $0x118] sm:$0xff]
        %v3439 = vld [vmem:[%s4 + $0x120] sm:$0xff]
        %v3440 = vld [vmem:[%s4 + $0x128] sm:$0xff]
        %v3441 = vld [vmem:[%s4 + $0x130] sm:$0xff]
        %v3442 = vld [vmem:[%s4 + $0x138] sm:$0xff]
        %v3443 = vld [vmem:[%s4 + $0x140] sm:$0xff]
        %v3444 = vld [vmem:[%s4 + $0x148] sm:$0xff]
        %v3445 = vld [vmem:[%s4 + $0x150] sm:$0xff]
        %v3446 = vld [vmem:[%s4 + $0x158] sm:$0xff]
        %v3447 = vld [vmem:[%s4 + $0x160] sm:$0xff]
        %v3448 = vld [vmem:[%s4 + $0x168] sm:$0xff]
        %v3449 = vld [vmem:[%s4 + $0x170] sm:$0xff]
        %v3450 = vld [vmem:[%s4 + $0x178] sm:$0xff]
        %v3451 = vld [vmem:[%s4 + $0x180] sm:$0xff]
        %v3452 = vld [vmem:[%s4 + $0x188] sm:$0xff]
        %v3453 = vld [vmem:[%s4 + $0x190] sm:$0xff]
        %v3454 = vld [vmem:[%s4 + $0x198] sm:$0xff]
        %v3455 = vld [vmem:[%s4 + $0x1a0] sm:$0xff]
        %v3456 = vld [vmem:[%s4 + $0x1a8] sm:$0xff]
        %v3457 = vld [vmem:[%s4 + $0x1b0] sm:$0xff]
        %v3458 = vld [vmem:[%s4 + $0x1b8] sm:$0xff]
        %v3459 = vld [vmem:[%s4 + $0x1c0] sm:$0xff]
        %v3460 = vld [vmem:[%s4 + $0x1c8] sm:$0xff]
        %v3461 = vld [vmem:[%s4 + $0x1d0] sm:$0xff]
        %v3462 = vld [vmem:[%s4 + $0x1d8] sm:$0xff]
        %v3463 = vld [vmem:[%s4 + $0x1e0] sm:$0xff]
        %v3464 = vld [vmem:[%s4 + $0x1e8] sm:$0xff]
        %v3465 = vld [vmem:[%s4 + $0x1f0] sm:$0xff]
        %v3466 = vld [vmem:[%s4 + $0x1f8] sm:$0xff]
        %v3467 = vld [vmem:[%s4 + $0x200] sm:$0xff]
        %v3468 = vld [vmem:[%s4 + $0x208] sm:$0xff]
        %v3469 = vld [vmem:[%s4 + $0x210] sm:$0xff]
        %v3470 = vld [vmem:[%s4 + $0x218] sm:$0xff]
        %v3471 = vld [vmem:[%s4 + $0x220] sm:$0xff]
        %v3472 = vld [vmem:[%s4 + $0x228] sm:$0xff]
        %v3473 = vld [vmem:[%s4 + $0x230] sm:$0xff]
        %v3474 = vld [vmem:[%s4 + $0x238] sm:$0xff]
        %v3523 = vrot.slane %v3349, 1
        %v3524 = vrot.slane %v3350, 1
        %v3525 = vsel %vm496, %v3523, %v3524
        %v3526 = vrot.slane %v3351, 1
        %v3527 = vsel %vm496, %v3524, %v3526
        %v3528 = vrot.slane %v3352, 1
        %v3529 = vrot.slane %v3353, 1
        %v3530 = vsel %vm496, %v3528, %v3529
        %v3531 = vrot.slane %v3354, 1
        %v3532 = vsel %vm496, %v3529, %v3531
        %v3533 = vrot.slane %v3355, 1
        %v3534 = vrot.slane %v3356, 1
        %v3535 = vsel %vm496, %v3533, %v3534
        %v3536 = vrot.slane %v3357, 1
        %v3537 = vsel %vm496, %v3534, %v3536
        %v3538 = vrot.slane %v3358, 1
        %v3539 = vrot.slane %v3359, 1
        %v3540 = vsel %vm496, %v3538, %v3539
        %v3541 = vrot.slane %v3360, 1
        %v3542 = vsel %vm496, %v3539, %v3541
        %v3543 = vrot.slane %v3361, 1
        %v3544 = vrot.slane %v3362, 1
        %v3545 = vsel %vm496, %v3543, %v3544
        %v3546 = vrot.slane %v3363, 1
        %v3547 = vsel %vm496, %v3544, %v3546
        %v3548 = vrot.slane %v3364, 1
        %v3549 = vrot.slane %v3365, 1
        %v3550 = vsel %vm496, %v3548, %v3549
        %v3551 = vrot.slane %v3366, 1
        %v3552 = vsel %vm496, %v3549, %v3551
        %v3553 = vrot.slane %v3367, 1
        %v3554 = vrot.slane %v3368, 1
        %v3555 = vsel %vm496, %v3553, %v3554
        %v3556 = vrot.slane %v3369, 1
        %v3557 = vsel %vm496, %v3554, %v3556
        %v3558 = vrot.slane %v3370, 1
        %v3559 = vrot.slane %v3371, 1
        %v3560 = vsel %vm496, %v3558, %v3559
        %v3561 = vrot.slane %v3372, 1
        %v3562 = vsel %vm496, %v3559, %v3561
        %v3563 = vrot.slane %v3373, 1
        %v3564 = vrot.slane %v3374, 1
        %v3565 = vsel %vm496, %v3563, %v3564
        %v3566 = vrot.slane %v3375, 1
        %v3567 = vsel %vm496, %v3564, %v3566
        %v3568 = vrot.slane %v3376, 1
        %v3569 = vrot.slane %v3377, 1
        %v3570 = vsel %vm496, %v3568, %v3569
        %v3571 = vrot.slane %v3378, 1
        %v3572 = vsel %vm496, %v3569, %v3571
        %v3573 = vrot.slane %v3379, 1
        %v3574 = vrot.slane %v3380, 1
        %v3575 = vsel %vm496, %v3573, %v3574
        %v3576 = vrot.slane %v3381, 1
        %v3577 = vsel %vm496, %v3574, %v3576
        %v3578 = vrot.slane %v3382, 1
        %v3579 = vrot.slane %v3383, 1
        %v3580 = vsel %vm496, %v3578, %v3579
        %v3581 = vrot.slane %v3384, 1
        %v3582 = vsel %vm496, %v3579, %v3581
        %v3583 = vrot.slane %v3385, 1
        %v3584 = vrot.slane %v3386, 1
        %v3585 = vsel %vm496, %v3583, %v3584
        %v3586 = vrot.slane %v3387, 1
        %v3587 = vsel %vm496, %v3584, %v3586
        %v3588 = vrot.slane %v3388, 1
        %v3589 = vrot.slane %v3389, 1
        %v3590 = vsel %vm496, %v3588, %v3589
        %v3591 = vrot.slane %v3390, 1
        %v3592 = vsel %vm496, %v3589, %v3591
        %v3593 = vrot.slane %v3391, 1
        %v3594 = vrot.slane %v3392, 1
        %v3595 = vsel %vm496, %v3593, %v3594
        %v3596 = vrot.slane %v3393, 1
        %v3597 = vsel %vm496, %v3594, %v3596
        %v3598 = vrot.slane %v3394, 1
        %v3599 = vrot.slane %v3395, 1
        %v3600 = vsel %vm496, %v3598, %v3599
        %v3601 = vrot.slane %v3396, 1
        %v3602 = vsel %vm496, %v3599, %v3601
        %v3603 = vsel %vm3260, %v3525, 0
        %v3605 = vsel %vm3260, %v3527, 0
        %v3607 = vsel %vm3260, %v3530, 0
        %v3609 = vsel %vm3260, %v3532, 0
        %v3611 = vsel %vm3260, %v3535, 0
        %v3613 = vsel %vm3260, %v3537, 0
        %v3615 = vsel %vm3260, %v3540, 0
        %v3617 = vsel %vm3260, %v3542, 0
        %v3619 = vsel %vm3260, %v3545, 0
        %v3621 = vsel %vm3260, %v3547, 0
        %v3623 = vsel %vm3260, %v3550, 0
        %v3625 = vsel %vm3260, %v3552, 0
        %v3627 = vsel %vm3260, %v3555, 0
        %v3629 = vsel %vm3260, %v3557, 0
        %v3631 = vsel %vm3260, %v3560, 0
        %v3633 = vsel %vm3260, %v3562, 0
        %v3635 = vsel %vm3260, %v3565, 0
        %v3637 = vsel %vm3260, %v3567, 0
        %v3639 = vsel %vm3260, %v3570, 0
        %v3641 = vsel %vm3260, %v3572, 0
        %v3643 = vsel %vm3260, %v3575, 0
        %v3645 = vsel %vm3260, %v3577, 0
        %v3647 = vsel %vm3260, %v3580, 0
        %v3649 = vsel %vm3260, %v3582, 0
        %v3651 = vsel %vm3260, %v3585, 0
        %v3653 = vsel %vm3260, %v3587, 0
        %v3655 = vsel %vm3260, %v3590, 0
        %v3657 = vsel %vm3260, %v3592, 0
        %v3659 = vsel %vm3260, %v3595, 0
        %v3661 = vsel %vm3260, %v3597, 0
        %v3663 = vsel %vm3260, %v3600, 0
        %v3665 = vsel %vm3260, %v3602, 0
        %3667 = vmatprep.subr.mxu0 0.0
        %3668 = vmatpush1.msra.mxu0 0.0
        %3669 = vmatprep.subr.mxu0 0.0
        %3670 = vmatpush1.msra.mxu0 0.0
        %3671 = vmatprep.subr.mxu0 0.0
        %3672 = vmatpush1.msra.mxu0 0.0
        %3673 = vmatprep.subr.mxu0 0.0
        %3674 = vmatpush1.msra.mxu0 0.0
        %3675 = vmatprep.subr.mxu0 0.0
        %3676 = vmatpush1.msra.mxu0 0.0
        %3677 = vmatprep.subr.mxu0 0.0
        %3678 = vmatpush1.msra.mxu0 0.0
        %3679 = vmatprep.subr.mxu0 0.0
        %3680 = vmatpush1.msra.mxu0 0.0
        %3681 = vmatprep.subr.mxu0 0.0
        %3682 = vmatpush1.msra.mxu0 0.0
        %3683 = vmatprep.subr.mxu0 0.0
        %3684 = vmatpush1.msra.mxu0 %v3418
        %3685 = vmatprep.subr.mxu0 0.0
        %3686 = vmatpush1.msra.mxu0 %v3417
        %3687 = vmatprep.subr.mxu0 0.0
        %3688 = vmatpush1.msra.mxu0 %v3416
        %3689 = vmatprep.subr.mxu0 0.0
        %3690 = vmatpush1.msra.mxu0 %v3415
        %3691 = vmatprep.subr.mxu0 0.0
        %3692 = vmatpush1.msra.mxu0 %v3414
        %3693 = vmatprep.subr.mxu0 0.0
        %3694 = vmatpush1.msra.mxu0 %v3413
        %3695 = vmatprep.subr.mxu0 0.0
        %3696 = vmatpush1.msra.mxu0 %v3412
        %3697 = vmatprep.subr.mxu0 0.0
        %3698 = vmatpush1.msra.mxu0 %v3411
        %3699 = vmatprep.subr.mxu0 0.0
        %3700 = vmatpush2.msra.mxu0 0.0
        %3701 = vmatprep.subr.mxu0 0.0
        %3702 = vmatpush2.msra.mxu0 0.0
        %3703 = vmatprep.subr.mxu0 0.0
        %3704 = vmatpush2.msra.mxu0 0.0
        %3705 = vmatprep.subr.mxu0 0.0
        %3706 = vmatpush2.msra.mxu0 0.0
        %3707 = vmatprep.subr.mxu0 0.0
        %3708 = vmatpush2.msra.mxu0 0.0
        %3709 = vmatprep.subr.mxu0 0.0
        %3710 = vmatpush2.msra.mxu0 0.0
        %3711 = vmatprep.subr.mxu0 0.0
        %3712 = vmatpush2.msra.mxu0 0.0
        %3713 = vmatprep.subr.mxu0 0.0
        %3714 = vmatpush2.msra.mxu0 0.0
        %3715 = vmatprep.subr.mxu0 0.0
        %3716 = vmatpush2.msra.mxu0 0.0
        %3717 = vmatprep.subr.mxu0 0.0
        %3718 = vmatpush2.msra.mxu0 0.0
        %3719 = vmatprep.subr.mxu0 0.0
        %3720 = vmatpush2.msra.mxu0 0.0
        %3721 = vmatprep.subr.mxu0 0.0
        %3722 = vmatpush2.msra.mxu0 0.0
        %3723 = vmatprep.subr.mxu0 0.0
        %3724 = vmatpush2.msra.mxu0 0.0
        %3725 = vmatprep.subr.mxu0 0.0
        %3726 = vmatpush2.msra.mxu0 0.0
        %3727 = vmatprep.subr.mxu0 0.0
        %3728 = vmatpush2.msra.mxu0 0.0
        %3729 = vmatprep.subr.mxu0 0.0
        %3730 = vmatpush2.msra.mxu0 0.0
        %3731 = vmatprep.mubr.f32.mxu0 0.0
        %3732 = vmatmul.mubr.f32.gmra.mxu0 %v3603
        %v3733 = vpop.f32.mrf.mxu0
        %v3734 = vadd.f32 0.0, %v3733
        %v3735 = vpop.f32.mrf.mxu0
        %3736 = vmatprep.mubr.f32.mxu0 0.0
        %3737 = vmatmul.mubr.f32.gmra.mxu0 %v3605
        %v3738 = vpop.f32.mrf.mxu0
        %v3739 = vadd.f32 0.0, %v3738
        %v3740 = vpop.f32.mrf.mxu0
        %3741 = vmatprep.mubr.f32.mxu0 0.0
        %3742 = vmatmul.mubr.f32.gmra.mxu0 %v3607
        %v3743 = vpop.f32.mrf.mxu0
        %v3744 = vadd.f32 0.0, %v3743
        %v3745 = vpop.f32.mrf.mxu0
        %3746 = vmatprep.mubr.f32.mxu0 0.0
        %3747 = vmatmul.mubr.f32.gmra.mxu0 %v3609
        %v3748 = vpop.f32.mrf.mxu0
        %v3749 = vadd.f32 0.0, %v3748
        %v3750 = vpop.f32.mrf.mxu0
        %3751 = vmatprep.mubr.f32.mxu0 0.0
        %3752 = vmatmul.mubr.f32.gmra.mxu0 %v3611
        %v3753 = vpop.f32.mrf.mxu0
        %v3754 = vadd.f32 0.0, %v3753
        %v3755 = vpop.f32.mrf.mxu0
        %3756 = vmatprep.mubr.f32.mxu0 0.0
        %3757 = vmatmul.mubr.f32.gmra.mxu0 %v3613
        %v3758 = vpop.f32.mrf.mxu0
        %v3759 = vadd.f32 0.0, %v3758
        %v3760 = vpop.f32.mrf.mxu0
        %3761 = vmatprep.mubr.f32.mxu0 0.0
        %3762 = vmatmul.mubr.f32.gmra.mxu0 %v3615
        %v3763 = vpop.f32.mrf.mxu0
        %v3764 = vadd.f32 0.0, %v3763
        %v3765 = vpop.f32.mrf.mxu0
        %3766 = vmatprep.mubr.f32.mxu0 0.0
        %3767 = vmatmul.mubr.f32.gmra.mxu0 %v3617
        %v3768 = vpop.f32.mrf.mxu0
        %v3769 = vadd.f32 0.0, %v3768
        %v3770 = vpop.f32.mrf.mxu0
        %3771 = vmatprep.mubr.f32.mxu0 0.0
        %3772 = vmatmul.mubr.f32.gmra.mxu0 %v3619
        %v3773 = vpop.f32.mrf.mxu0
        %v3774 = vadd.f32 0.0, %v3773
        %v3775 = vpop.f32.mrf.mxu0
        %3776 = vmatprep.mubr.f32.mxu0 0.0
        %3777 = vmatmul.mubr.f32.gmra.mxu0 %v3621
        %v3778 = vpop.f32.mrf.mxu0
        %v3779 = vadd.f32 0.0, %v3778
        %v3780 = vpop.f32.mrf.mxu0
        %3781 = vmatprep.mubr.f32.mxu0 0.0
        %3782 = vmatmul.mubr.f32.gmra.mxu0 %v3623
        %v3783 = vpop.f32.mrf.mxu0
        %v3784 = vadd.f32 0.0, %v3783
        %v3785 = vpop.f32.mrf.mxu0
        %3786 = vmatprep.mubr.f32.mxu0 0.0
        %3787 = vmatmul.mubr.f32.gmra.mxu0 %v3625
        %v3788 = vpop.f32.mrf.mxu0
        %v3789 = vadd.f32 0.0, %v3788
        %v3790 = vpop.f32.mrf.mxu0
        %3791 = vmatprep.mubr.f32.mxu0 0.0
        %3792 = vmatmul.mubr.f32.gmra.mxu0 %v3627
        %v3793 = vpop.f32.mrf.mxu0
        %v3794 = vadd.f32 0.0, %v3793
        %v3795 = vpop.f32.mrf.mxu0
        %3796 = vmatprep.mubr.f32.mxu0 0.0
        %3797 = vmatmul.mubr.f32.gmra.mxu0 %v3629
        %v3798 = vpop.f32.mrf.mxu0
        %v3799 = vadd.f32 0.0, %v3798
        %v3800 = vpop.f32.mrf.mxu0
        %3801 = vmatprep.mubr.f32.mxu0 0.0
        %3802 = vmatmul.mubr.f32.gmra.mxu0 %v3631
        %v3803 = vpop.f32.mrf.mxu0
        %v3804 = vadd.f32 0.0, %v3803
        %v3805 = vpop.f32.mrf.mxu0
        %3806 = vmatprep.mubr.f32.mxu0 0.0
        %3807 = vmatmul.mubr.f32.gmra.mxu0 %v3633
        %v3808 = vpop.f32.mrf.mxu0
        %v3809 = vadd.f32 0.0, %v3808
        %v3810 = vpop.f32.mrf.mxu0
        %3811 = vmatprep.mubr.f32.mxu0 0.0
        %3812 = vmatmul.mubr.f32.gmra.mxu0 %v3635
        %v3813 = vpop.f32.mrf.mxu0
        %v3814 = vadd.f32 0.0, %v3813
        %v3815 = vpop.f32.mrf.mxu0
        %3816 = vmatprep.mubr.f32.mxu0 0.0
        %3817 = vmatmul.mubr.f32.gmra.mxu0 %v3637
        %v3818 = vpop.f32.mrf.mxu0
        %v3819 = vadd.f32 0.0, %v3818
        %v3820 = vpop.f32.mrf.mxu0
        %3821 = vmatprep.mubr.f32.mxu0 0.0
        %3822 = vmatmul.mubr.f32.gmra.mxu0 %v3639
        %v3823 = vpop.f32.mrf.mxu0
        %v3824 = vadd.f32 0.0, %v3823
        %v3825 = vpop.f32.mrf.mxu0
        %3826 = vmatprep.mubr.f32.mxu0 0.0
        %3827 = vmatmul.mubr.f32.gmra.mxu0 %v3641
        %v3828 = vpop.f32.mrf.mxu0
        %v3829 = vadd.f32 0.0, %v3828
        %v3830 = vpop.f32.mrf.mxu0
        %3831 = vmatprep.mubr.f32.mxu0 0.0
        %3832 = vmatmul.mubr.f32.gmra.mxu0 %v3643
        %v3833 = vpop.f32.mrf.mxu0
        %v3834 = vadd.f32 0.0, %v3833
        %v3835 = vpop.f32.mrf.mxu0
        %3836 = vmatprep.mubr.f32.mxu0 0.0
        %3837 = vmatmul.mubr.f32.gmra.mxu0 %v3645
        %v3838 = vpop.f32.mrf.mxu0
        %v3839 = vadd.f32 0.0, %v3838
        %v3840 = vpop.f32.mrf.mxu0
        %3841 = vmatprep.mubr.f32.mxu0 0.0
        %3842 = vmatmul.mubr.f32.gmra.mxu0 %v3647
        %v3843 = vpop.f32.mrf.mxu0
        %v3844 = vadd.f32 0.0, %v3843
        %v3845 = vpop.f32.mrf.mxu0
        %3846 = vmatprep.mubr.f32.mxu0 0.0
        %3847 = vmatmul.mubr.f32.gmra.mxu0 %v3649
        %v3848 = vpop.f32.mrf.mxu0
        %v3849 = vadd.f32 0.0, %v3848
        %v3850 = vpop.f32.mrf.mxu0
        %3851 = vmatprep.mubr.f32.mxu0 0.0
        %3852 = vmatmul.mubr.f32.gmra.mxu0 %v3651
        %v3853 = vpop.f32.mrf.mxu0
        %v3854 = vadd.f32 0.0, %v3853
        %v3855 = vpop.f32.mrf.mxu0
        %3856 = vmatprep.mubr.f32.mxu0 0.0
        %3857 = vmatmul.mubr.f32.gmra.mxu0 %v3653
        %v3858 = vpop.f32.mrf.mxu0
        %v3859 = vadd.f32 0.0, %v3858
        %v3860 = vpop.f32.mrf.mxu0
        %3861 = vmatprep.mubr.f32.mxu0 0.0
        %3862 = vmatmul.mubr.f32.gmra.mxu0 %v3655
        %v3863 = vpop.f32.mrf.mxu0
        %v3864 = vadd.f32 0.0, %v3863
        %v3865 = vpop.f32.mrf.mxu0
        %3866 = vmatprep.mubr.f32.mxu0 0.0
        %3867 = vmatmul.mubr.f32.gmra.mxu0 %v3657
        %v3868 = vpop.f32.mrf.mxu0
        %v3869 = vadd.f32 0.0, %v3868
        %v3870 = vpop.f32.mrf.mxu0
        %3871 = vmatprep.mubr.f32.mxu0 0.0
        %3872 = vmatmul.mubr.f32.gmra.mxu0 %v3659
        %v3873 = vpop.f32.mrf.mxu0
        %v3874 = vadd.f32 0.0, %v3873
        %v3875 = vpop.f32.mrf.mxu0
        %3876 = vmatprep.mubr.f32.mxu0 0.0
        %3877 = vmatmul.mubr.f32.gmra.mxu0 %v3661
        %v3878 = vpop.f32.mrf.mxu0
        %v3879 = vadd.f32 0.0, %v3878
        %v3880 = vpop.f32.mrf.mxu0
        %3881 = vmatprep.mubr.f32.mxu0 0.0
        %3882 = vmatmul.mubr.f32.gmra.mxu0 %v3663
        %v3883 = vpop.f32.mrf.mxu0
        %v3884 = vadd.f32 0.0, %v3883
        %v3885 = vpop.f32.mrf.mxu0
        %3886 = vmatprep.mubr.f32.mxu0 0.0
        %3887 = vmatmul.mubr.f32.gmra.mxu0 %v3665
        %v3888 = vpop.f32.mrf.mxu0
        %v3889 = vadd.f32 0.0, %v3888
        %v3890 = vpop.f32.mrf.mxu0
        %3891 = vdwg.mxu0
        %v3892 = vsel %vm3260, %v3349, 0
        %v3894 = vsel %vm3260, %v3350, 0
        %v3896 = vsel %vm3260, %v3352, 0
        %v3898 = vsel %vm3260, %v3353, 0
        %v3900 = vsel %vm3260, %v3355, 0
        %v3902 = vsel %vm3260, %v3356, 0
        %v3904 = vsel %vm3260, %v3358, 0
        %v3906 = vsel %vm3260, %v3359, 0
        %v3908 = vsel %vm3260, %v3361, 0
        %v3910 = vsel %vm3260, %v3362, 0
        %v3912 = vsel %vm3260, %v3364, 0
        %v3914 = vsel %vm3260, %v3365, 0
        %v3916 = vsel %vm3260, %v3367, 0
        %v3918 = vsel %vm3260, %v3368, 0
        %v3920 = vsel %vm3260, %v3370, 0
        %v3922 = vsel %vm3260, %v3371, 0
        %v3924 = vsel %vm3260, %v3373, 0
        %v3926 = vsel %vm3260, %v3374, 0
        %v3928 = vsel %vm3260, %v3376, 0
        %v3930 = vsel %vm3260, %v3377, 0
        %v3932 = vsel %vm3260, %v3379, 0
        %v3934 = vsel %vm3260, %v3380, 0
        %v3936 = vsel %vm3260, %v3382, 0
        %v3938 = vsel %vm3260, %v3383, 0
        %v3940 = vsel %vm3260, %v3385, 0
        %v3942 = vsel %vm3260, %v3386, 0
        %v3944 = vsel %vm3260, %v3388, 0
        %v3946 = vsel %vm3260, %v3389, 0
        %v3948 = vsel %vm3260, %v3391, 0
        %v3950 = vsel %vm3260, %v3392, 0
        %v3952 = vsel %vm3260, %v3394, 0
        %v3954 = vsel %vm3260, %v3395, 0
        %3956 = vmatprep.subr.mxu0 0.0
        %3957 = vmatpush1.msra.mxu0 0.0
        %3958 = vmatprep.subr.mxu0 0.0
        %3959 = vmatpush1.msra.mxu0 0.0
        %3960 = vmatprep.subr.mxu0 0.0
        %3961 = vmatpush1.msra.mxu0 0.0
        %3962 = vmatprep.subr.mxu0 0.0
        %3963 = vmatpush1.msra.mxu0 0.0
        %3964 = vmatprep.subr.mxu0 0.0
        %3965 = vmatpush1.msra.mxu0 0.0
        %3966 = vmatprep.subr.mxu0 0.0
        %3967 = vmatpush1.msra.mxu0 0.0
        %3968 = vmatprep.subr.mxu0 0.0
        %3969 = vmatpush1.msra.mxu0 0.0
        %3970 = vmatprep.subr.mxu0 0.0
        %3971 = vmatpush1.msra.mxu0 0.0
        %3972 = vmatprep.subr.mxu0 0.0
        %3973 = vmatpush1.msra.mxu0 %v3410
        %3974 = vmatprep.subr.mxu0 0.0
        %3975 = vmatpush1.msra.mxu0 %v3409
        %3976 = vmatprep.subr.mxu0 0.0
        %3977 = vmatpush1.msra.mxu0 %v3408
        %3978 = vmatprep.subr.mxu0 0.0
        %3979 = vmatpush1.msra.mxu0 %v3407
        %3980 = vmatprep.subr.mxu0 0.0
        %3981 = vmatpush1.msra.mxu0 %v3406
        %3982 = vmatprep.subr.mxu0 0.0
        %3983 = vmatpush1.msra.mxu0 %v3405
        %3984 = vmatprep.subr.mxu0 0.0
        %3985 = vmatpush1.msra.mxu0 %v3404
        %3986 = vmatprep.subr.mxu0 0.0
        %3987 = vmatpush1.msra.mxu0 %v3403
        %3988 = vmatprep.subr.mxu0 0.0
        %3989 = vmatpush2.msra.mxu0 0.0
        %3990 = vmatprep.subr.mxu0 0.0
        %3991 = vmatpush2.msra.mxu0 0.0
        %3992 = vmatprep.subr.mxu0 0.0
        %3993 = vmatpush2.msra.mxu0 0.0
        %3994 = vmatprep.subr.mxu0 0.0
        %3995 = vmatpush2.msra.mxu0 0.0
        %3996 = vmatprep.subr.mxu0 0.0
        %3997 = vmatpush2.msra.mxu0 0.0
        %3998 = vmatprep.subr.mxu0 0.0
        %3999 = vmatpush2.msra.mxu0 0.0
        %4000 = vmatprep.subr.mxu0 0.0
        %4001 = vmatpush2.msra.mxu0 0.0
        %4002 = vmatprep.subr.mxu0 0.0
        %4003 = vmatpush2.msra.mxu0 0.0
        %4004 = vmatprep.subr.mxu0 0.0
        %4005 = vmatpush2.msra.mxu0 0.0
        %4006 = vmatprep.subr.mxu0 0.0
        %4007 = vmatpush2.msra.mxu0 0.0
        %4008 = vmatprep.subr.mxu0 0.0
        %4009 = vmatpush2.msra.mxu0 0.0
        %4010 = vmatprep.subr.mxu0 0.0
        %4011 = vmatpush2.msra.mxu0 0.0
        %4012 = vmatprep.subr.mxu0 0.0
        %4013 = vmatpush2.msra.mxu0 0.0
        %4014 = vmatprep.subr.mxu0 0.0
        %4015 = vmatpush2.msra.mxu0 0.0
        %4016 = vmatprep.subr.mxu0 0.0
        %4017 = vmatpush2.msra.mxu0 0.0
        %4018 = vmatprep.subr.mxu0 0.0
        %4019 = vmatpush2.msra.mxu0 0.0
        %4020 = vmatprep.mubr.f32.mxu0 0.0
        %4021 = vmatmul.mubr.f32.gmra.mxu0 %v3892
        %v4022 = vpop.f32.mrf.mxu0
        %v4023 = vadd.f32 %v3734, %v4022
        %v4024 = vpop.f32.mrf.mxu0
        %4025 = vmatprep.mubr.f32.mxu0 0.0
        %4026 = vmatmul.mubr.f32.gmra.mxu0 %v3894
        %v4027 = vpop.f32.mrf.mxu0
        %v4028 = vadd.f32 %v3739, %v4027
        %v4029 = vpop.f32.mrf.mxu0
        %4030 = vmatprep.mubr.f32.mxu0 0.0
        %4031 = vmatmul.mubr.f32.gmra.mxu0 %v3896
        %v4032 = vpop.f32.mrf.mxu0
        %v4033 = vadd.f32 %v3744, %v4032
        %v4034 = vpop.f32.mrf.mxu0
        %4035 = vmatprep.mubr.f32.mxu0 0.0
        %4036 = vmatmul.mubr.f32.gmra.mxu0 %v3898
        %v4037 = vpop.f32.mrf.mxu0
        %v4038 = vadd.f32 %v3749, %v4037
        %v4039 = vpop.f32.mrf.mxu0
        %4040 = vmatprep.mubr.f32.mxu0 0.0
        %4041 = vmatmul.mubr.f32.gmra.mxu0 %v3900
        %v4042 = vpop.f32.mrf.mxu0
        %v4043 = vadd.f32 %v3754, %v4042
        %v4044 = vpop.f32.mrf.mxu0
        %4045 = vmatprep.mubr.f32.mxu0 0.0
        %4046 = vmatmul.mubr.f32.gmra.mxu0 %v3902
        %v4047 = vpop.f32.mrf.mxu0
        %v4048 = vadd.f32 %v3759, %v4047
        %v4049 = vpop.f32.mrf.mxu0
        %4050 = vmatprep.mubr.f32.mxu0 0.0
        %4051 = vmatmul.mubr.f32.gmra.mxu0 %v3904
        %v4052 = vpop.f32.mrf.mxu0
        %v4053 = vadd.f32 %v3764, %v4052
        %v4054 = vpop.f32.mrf.mxu0
        %4055 = vmatprep.mubr.f32.mxu0 0.0
        %4056 = vmatmul.mubr.f32.gmra.mxu0 %v3906
        %v4057 = vpop.f32.mrf.mxu0
        %v4058 = vadd.f32 %v3769, %v4057
        %v4059 = vpop.f32.mrf.mxu0
        %4060 = vmatprep.mubr.f32.mxu0 0.0
        %4061 = vmatmul.mubr.f32.gmra.mxu0 %v3908
        %v4062 = vpop.f32.mrf.mxu0
        %v4063 = vadd.f32 %v3774, %v4062
        %v4064 = vpop.f32.mrf.mxu0
        %4065 = vmatprep.mubr.f32.mxu0 0.0
        %4066 = vmatmul.mubr.f32.gmra.mxu0 %v3910
        %v4067 = vpop.f32.mrf.mxu0
        %v4068 = vadd.f32 %v3779, %v4067
        %v4069 = vpop.f32.mrf.mxu0
        %4070 = vmatprep.mubr.f32.mxu0 0.0
        %4071 = vmatmul.mubr.f32.gmra.mxu0 %v3912
        %v4072 = vpop.f32.mrf.mxu0
        %v4073 = vadd.f32 %v3784, %v4072
        %v4074 = vpop.f32.mrf.mxu0
        %4075 = vmatprep.mubr.f32.mxu0 0.0
        %4076 = vmatmul.mubr.f32.gmra.mxu0 %v3914
        %v4077 = vpop.f32.mrf.mxu0
        %v4078 = vadd.f32 %v3789, %v4077
        %v4079 = vpop.f32.mrf.mxu0
        %4080 = vmatprep.mubr.f32.mxu0 0.0
        %4081 = vmatmul.mubr.f32.gmra.mxu0 %v3916
        %v4082 = vpop.f32.mrf.mxu0
        %v4083 = vadd.f32 %v3794, %v4082
        %v4084 = vpop.f32.mrf.mxu0
        %4085 = vmatprep.mubr.f32.mxu0 0.0
        %4086 = vmatmul.mubr.f32.gmra.mxu0 %v3918
        %v4087 = vpop.f32.mrf.mxu0
        %v4088 = vadd.f32 %v3799, %v4087
        %v4089 = vpop.f32.mrf.mxu0
        %4090 = vmatprep.mubr.f32.mxu0 0.0
        %4091 = vmatmul.mubr.f32.gmra.mxu0 %v3920
        %v4092 = vpop.f32.mrf.mxu0
        %v4093 = vadd.f32 %v3804, %v4092
        %v4094 = vpop.f32.mrf.mxu0
        %4095 = vmatprep.mubr.f32.mxu0 0.0
        %4096 = vmatmul.mubr.f32.gmra.mxu0 %v3922
        %v4097 = vpop.f32.mrf.mxu0
        %v4098 = vadd.f32 %v3809, %v4097
        %v4099 = vpop.f32.mrf.mxu0
        %4100 = vmatprep.mubr.f32.mxu0 0.0
        %4101 = vmatmul.mubr.f32.gmra.mxu0 %v3924
        %v4102 = vpop.f32.mrf.mxu0
        %v4103 = vadd.f32 %v3814, %v4102
        %v4104 = vpop.f32.mrf.mxu0
        %4105 = vmatprep.mubr.f32.mxu0 0.0
        %4106 = vmatmul.mubr.f32.gmra.mxu0 %v3926
        %v4107 = vpop.f32.mrf.mxu0
        %v4108 = vadd.f32 %v3819, %v4107
        %v4109 = vpop.f32.mrf.mxu0
        %4110 = vmatprep.mubr.f32.mxu0 0.0
        %4111 = vmatmul.mubr.f32.gmra.mxu0 %v3928
        %v4112 = vpop.f32.mrf.mxu0
        %v4113 = vadd.f32 %v3824, %v4112
        %v4114 = vpop.f32.mrf.mxu0
        %4115 = vmatprep.mubr.f32.mxu0 0.0
        %4116 = vmatmul.mubr.f32.gmra.mxu0 %v3930
        %v4117 = vpop.f32.mrf.mxu0
        %v4118 = vadd.f32 %v3829, %v4117
        %v4119 = vpop.f32.mrf.mxu0
        %4120 = vmatprep.mubr.f32.mxu0 0.0
        %4121 = vmatmul.mubr.f32.gmra.mxu0 %v3932
        %v4122 = vpop.f32.mrf.mxu0
        %v4123 = vadd.f32 %v3834, %v4122
        %v4124 = vpop.f32.mrf.mxu0
        %4125 = vmatprep.mubr.f32.mxu0 0.0
        %4126 = vmatmul.mubr.f32.gmra.mxu0 %v3934
        %v4127 = vpop.f32.mrf.mxu0
        %v4128 = vadd.f32 %v3839, %v4127
        %v4129 = vpop.f32.mrf.mxu0
        %4130 = vmatprep.mubr.f32.mxu0 0.0
        %4131 = vmatmul.mubr.f32.gmra.mxu0 %v3936
        %v4132 = vpop.f32.mrf.mxu0
        %v4133 = vadd.f32 %v3844, %v4132
        %v4134 = vpop.f32.mrf.mxu0
        %4135 = vmatprep.mubr.f32.mxu0 0.0
        %4136 = vmatmul.mubr.f32.gmra.mxu0 %v3938
        %v4137 = vpop.f32.mrf.mxu0
        %v4138 = vadd.f32 %v3849, %v4137
        %v4139 = vpop.f32.mrf.mxu0
        %4140 = vmatprep.mubr.f32.mxu0 0.0
        %4141 = vmatmul.mubr.f32.gmra.mxu0 %v3940
        %v4142 = vpop.f32.mrf.mxu0
        %v4143 = vadd.f32 %v3854, %v4142
        %v4144 = vpop.f32.mrf.mxu0
        %4145 = vmatprep.mubr.f32.mxu0 0.0
        %4146 = vmatmul.mubr.f32.gmra.mxu0 %v3942
        %v4147 = vpop.f32.mrf.mxu0
        %v4148 = vadd.f32 %v3859, %v4147
        %v4149 = vpop.f32.mrf.mxu0
        %4150 = vmatprep.mubr.f32.mxu0 0.0
        %4151 = vmatmul.mubr.f32.gmra.mxu0 %v3944
        %v4152 = vpop.f32.mrf.mxu0
        %v4153 = vadd.f32 %v3864, %v4152
        %v4154 = vpop.f32.mrf.mxu0
        %4155 = vmatprep.mubr.f32.mxu0 0.0
        %4156 = vmatmul.mubr.f32.gmra.mxu0 %v3946
        %v4157 = vpop.f32.mrf.mxu0
        %v4158 = vadd.f32 %v3869, %v4157
        %v4159 = vpop.f32.mrf.mxu0
        %4160 = vmatprep.mubr.f32.mxu0 0.0
        %4161 = vmatmul.mubr.f32.gmra.mxu0 %v3948
        %v4162 = vpop.f32.mrf.mxu0
        %v4163 = vadd.f32 %v3874, %v4162
        %v4164 = vpop.f32.mrf.mxu0
        %4165 = vmatprep.mubr.f32.mxu0 0.0
        %4166 = vmatmul.mubr.f32.gmra.mxu0 %v3950
        %v4167 = vpop.f32.mrf.mxu0
        %v4168 = vadd.f32 %v3879, %v4167
        %v4169 = vpop.f32.mrf.mxu0
        %4170 = vmatprep.mubr.f32.mxu0 0.0
        %4171 = vmatmul.mubr.f32.gmra.mxu0 %v3952
        %v4172 = vpop.f32.mrf.mxu0
        %v4173 = vadd.f32 %v3884, %v4172
        %v4174 = vpop.f32.mrf.mxu0
        %4175 = vmatprep.mubr.f32.mxu0 0.0
        %4176 = vmatmul.mubr.f32.gmra.mxu0 %v3954
        %v4177 = vpop.f32.mrf.mxu0
        %v4178 = vadd.f32 %v3889, %v4177
        %v4179 = vpop.f32.mrf.mxu0
        %4180 = vdwg.mxu0
        %v4181 = vrot.slane %v3349, 2
        %v4182 = vrot.slane %v3350, 2
        %v4183 = vsel %vm1156, %v4181, %v4182
        %v4184 = vrot.slane %v3351, 2
        %v4185 = vsel %vm1156, %v4182, %v4184
        %v4186 = vrot.slane %v3352, 2
        %v4187 = vrot.slane %v3353, 2
        %v4188 = vsel %vm1156, %v4186, %v4187
        %v4189 = vrot.slane %v3354, 2
        %v4190 = vsel %vm1156, %v4187, %v4189
        %v4191 = vrot.slane %v3355, 2
        %v4192 = vrot.slane %v3356, 2
        %v4193 = vsel %vm1156, %v4191, %v4192
        %v4194 = vrot.slane %v3357, 2
        %v4195 = vsel %vm1156, %v4192, %v4194
        %v4196 = vrot.slane %v3358, 2
        %v4197 = vrot.slane %v3359, 2
        %v4198 = vsel %vm1156, %v4196, %v4197
        %v4199 = vrot.slane %v3360, 2
        %v4200 = vsel %vm1156, %v4197, %v4199
        %v4201 = vrot.slane %v3361, 2
        %v4202 = vrot.slane %v3362, 2
        %v4203 = vsel %vm1156, %v4201, %v4202
        %v4204 = vrot.slane %v3363, 2
        %v4205 = vsel %vm1156, %v4202, %v4204
        %v4206 = vrot.slane %v3364, 2
        %v4207 = vrot.slane %v3365, 2
        %v4208 = vsel %vm1156, %v4206, %v4207
        %v4209 = vrot.slane %v3366, 2
        %v4210 = vsel %vm1156, %v4207, %v4209
        %v4211 = vrot.slane %v3367, 2
        %v4212 = vrot.slane %v3368, 2
        %v4213 = vsel %vm1156, %v4211, %v4212
        %v4214 = vrot.slane %v3369, 2
        %v4215 = vsel %vm1156, %v4212, %v4214
        %v4216 = vrot.slane %v3370, 2
        %v4217 = vrot.slane %v3371, 2
        %v4218 = vsel %vm1156, %v4216, %v4217
        %v4219 = vrot.slane %v3372, 2
        %v4220 = vsel %vm1156, %v4217, %v4219
        %v4221 = vrot.slane %v3373, 2
        %v4222 = vrot.slane %v3374, 2
        %v4223 = vsel %vm1156, %v4221, %v4222
        %v4224 = vrot.slane %v3375, 2
        %v4225 = vsel %vm1156, %v4222, %v4224
        %v4226 = vrot.slane %v3376, 2
        %v4227 = vrot.slane %v3377, 2
        %v4228 = vsel %vm1156, %v4226, %v4227
        %v4229 = vrot.slane %v3378, 2
        %v4230 = vsel %vm1156, %v4227, %v4229
        %v4231 = vrot.slane %v3379, 2
        %v4232 = vrot.slane %v3380, 2
        %v4233 = vsel %vm1156, %v4231, %v4232
        %v4234 = vrot.slane %v3381, 2
        %v4235 = vsel %vm1156, %v4232, %v4234
        %v4236 = vrot.slane %v3382, 2
        %v4237 = vrot.slane %v3383, 2
        %v4238 = vsel %vm1156, %v4236, %v4237
        %v4239 = vrot.slane %v3384, 2
        %v4240 = vsel %vm1156, %v4237, %v4239
        %v4241 = vrot.slane %v3385, 2
        %v4242 = vrot.slane %v3386, 2
        %v4243 = vsel %vm1156, %v4241, %v4242
        %v4244 = vrot.slane %v3387, 2
        %v4245 = vsel %vm1156, %v4242, %v4244
        %v4246 = vrot.slane %v3388, 2
        %v4247 = vrot.slane %v3389, 2
        %v4248 = vsel %vm1156, %v4246, %v4247
        %v4249 = vrot.slane %v3390, 2
        %v4250 = vsel %vm1156, %v4247, %v4249
        %v4251 = vrot.slane %v3391, 2
        %v4252 = vrot.slane %v3392, 2
        %v4253 = vsel %vm1156, %v4251, %v4252
        %v4254 = vrot.slane %v3393, 2
        %v4255 = vsel %vm1156, %v4252, %v4254
        %v4256 = vrot.slane %v3394, 2
        %v4257 = vrot.slane %v3395, 2
        %v4258 = vsel %vm1156, %v4256, %v4257
        %v4259 = vrot.slane %v3396, 2
        %v4260 = vsel %vm1156, %v4257, %v4259
        %v4261 = vsel %vm3260, %v4183, 0
        %v4263 = vsel %vm3260, %v4185, 0
        %v4265 = vsel %vm3260, %v4188, 0
        %v4267 = vsel %vm3260, %v4190, 0
        %v4269 = vsel %vm3260, %v4193, 0
        %v4271 = vsel %vm3260, %v4195, 0
        %v4273 = vsel %vm3260, %v4198, 0
        %v4275 = vsel %vm3260, %v4200, 0
        %v4277 = vsel %vm3260, %v4203, 0
        %v4279 = vsel %vm3260, %v4205, 0
        %v4281 = vsel %vm3260, %v4208, 0
        %v4283 = vsel %vm3260, %v4210, 0
        %v4285 = vsel %vm3260, %v4213, 0
        %v4287 = vsel %vm3260, %v4215, 0
        %v4289 = vsel %vm3260, %v4218, 0
        %v4291 = vsel %vm3260, %v4220, 0
        %v4293 = vsel %vm3260, %v4223, 0
        %v4295 = vsel %vm3260, %v4225, 0
        %v4297 = vsel %vm3260, %v4228, 0
        %v4299 = vsel %vm3260, %v4230, 0
        %v4301 = vsel %vm3260, %v4233, 0
        %v4303 = vsel %vm3260, %v4235, 0
        %v4305 = vsel %vm3260, %v4238, 0
        %v4307 = vsel %vm3260, %v4240, 0
        %v4309 = vsel %vm3260, %v4243, 0
        %v4311 = vsel %vm3260, %v4245, 0
        %v4313 = vsel %vm3260, %v4248, 0
        %v4315 = vsel %vm3260, %v4250, 0
        %v4317 = vsel %vm3260, %v4253, 0
        %v4319 = vsel %vm3260, %v4255, 0
        %v4321 = vsel %vm3260, %v4258, 0
        %v4323 = vsel %vm3260, %v4260, 0
        %4325 = vmatprep.subr.mxu0 0.0
        %4326 = vmatpush1.msra.mxu0 0.0
        %4327 = vmatprep.subr.mxu0 0.0
        %4328 = vmatpush1.msra.mxu0 0.0
        %4329 = vmatprep.subr.mxu0 0.0
        %4330 = vmatpush1.msra.mxu0 0.0
        %4331 = vmatprep.subr.mxu0 0.0
        %4332 = vmatpush1.msra.mxu0 0.0
        %4333 = vmatprep.subr.mxu0 0.0
        %4334 = vmatpush1.msra.mxu0 0.0
        %4335 = vmatprep.subr.mxu0 0.0
        %4336 = vmatpush1.msra.mxu0 0.0
        %4337 = vmatprep.subr.mxu0 0.0
        %4338 = vmatpush1.msra.mxu0 0.0
        %4339 = vmatprep.subr.mxu0 0.0
        %4340 = vmatpush1.msra.mxu0 0.0
        %4341 = vmatprep.subr.mxu0 0.0
        %4342 = vmatpush1.msra.mxu0 %v3426
        %4343 = vmatprep.subr.mxu0 0.0
        %4344 = vmatpush1.msra.mxu0 %v3425
        %4345 = vmatprep.subr.mxu0 0.0
        %4346 = vmatpush1.msra.mxu0 %v3424
        %4347 = vmatprep.subr.mxu0 0.0
        %4348 = vmatpush1.msra.mxu0 %v3423
        %4349 = vmatprep.subr.mxu0 0.0
        %4350 = vmatpush1.msra.mxu0 %v3422
        %4351 = vmatprep.subr.mxu0 0.0
        %4352 = vmatpush1.msra.mxu0 %v3421
        %4353 = vmatprep.subr.mxu0 0.0
        %4354 = vmatpush1.msra.mxu0 %v3420
        %4355 = vmatprep.subr.mxu0 0.0
        %4356 = vmatpush1.msra.mxu0 %v3419
        %4357 = vmatprep.subr.mxu0 0.0
        %4358 = vmatpush2.msra.mxu0 0.0
        %4359 = vmatprep.subr.mxu0 0.0
        %4360 = vmatpush2.msra.mxu0 0.0
        %4361 = vmatprep.subr.mxu0 0.0
        %4362 = vmatpush2.msra.mxu0 0.0
        %4363 = vmatprep.subr.mxu0 0.0
        %4364 = vmatpush2.msra.mxu0 0.0
        %4365 = vmatprep.subr.mxu0 0.0
        %4366 = vmatpush2.msra.mxu0 0.0
        %4367 = vmatprep.subr.mxu0 0.0
        %4368 = vmatpush2.msra.mxu0 0.0
        %4369 = vmatprep.subr.mxu0 0.0
        %4370 = vmatpush2.msra.mxu0 0.0
        %4371 = vmatprep.subr.mxu0 0.0
        %4372 = vmatpush2.msra.mxu0 0.0
        %4373 = vmatprep.subr.mxu0 0.0
        %4374 = vmatpush2.msra.mxu0 0.0
        %4375 = vmatprep.subr.mxu0 0.0
        %4376 = vmatpush2.msra.mxu0 0.0
        %4377 = vmatprep.subr.mxu0 0.0
        %4378 = vmatpush2.msra.mxu0 0.0
        %4379 = vmatprep.subr.mxu0 0.0
        %4380 = vmatpush2.msra.mxu0 0.0
        %4381 = vmatprep.subr.mxu0 0.0
        %4382 = vmatpush2.msra.mxu0 0.0
        %4383 = vmatprep.subr.mxu0 0.0
        %4384 = vmatpush2.msra.mxu0 0.0
        %4385 = vmatprep.subr.mxu0 0.0
        %4386 = vmatpush2.msra.mxu0 0.0
        %4387 = vmatprep.subr.mxu0 0.0
        %4388 = vmatpush2.msra.mxu0 0.0
        %4389 = vmatprep.mubr.f32.mxu0 0.0
        %4390 = vmatmul.mubr.f32.gmra.mxu0 %v4261
        %v4391 = vpop.f32.mrf.mxu0
        %v4392 = vadd.f32 0.0, %v4391
        %v4393 = vpop.f32.mrf.mxu0
        %4394 = vmatprep.mubr.f32.mxu0 0.0
        %4395 = vmatmul.mubr.f32.gmra.mxu0 %v4263
        %v4396 = vpop.f32.mrf.mxu0
        %v4397 = vadd.f32 0.0, %v4396
        %v4398 = vpop.f32.mrf.mxu0
        %4399 = vmatprep.mubr.f32.mxu0 0.0
        %4400 = vmatmul.mubr.f32.gmra.mxu0 %v4265
        %v4401 = vpop.f32.mrf.mxu0
        %v4402 = vadd.f32 0.0, %v4401
        %v4403 = vpop.f32.mrf.mxu0
        %4404 = vmatprep.mubr.f32.mxu0 0.0
        %4405 = vmatmul.mubr.f32.gmra.mxu0 %v4267
        %v4406 = vpop.f32.mrf.mxu0
        %v4407 = vadd.f32 0.0, %v4406
        %v4408 = vpop.f32.mrf.mxu0
        %4409 = vmatprep.mubr.f32.mxu0 0.0
        %4410 = vmatmul.mubr.f32.gmra.mxu0 %v4269
        %v4411 = vpop.f32.mrf.mxu0
        %v4412 = vadd.f32 0.0, %v4411
        %v4413 = vpop.f32.mrf.mxu0
        %4414 = vmatprep.mubr.f32.mxu0 0.0
        %4415 = vmatmul.mubr.f32.gmra.mxu0 %v4271
        %v4416 = vpop.f32.mrf.mxu0
        %v4417 = vadd.f32 0.0, %v4416
        %v4418 = vpop.f32.mrf.mxu0
        %4419 = vmatprep.mubr.f32.mxu0 0.0
        %4420 = vmatmul.mubr.f32.gmra.mxu0 %v4273
        %v4421 = vpop.f32.mrf.mxu0
        %v4422 = vadd.f32 0.0, %v4421
        %v4423 = vpop.f32.mrf.mxu0
        %4424 = vmatprep.mubr.f32.mxu0 0.0
        %4425 = vmatmul.mubr.f32.gmra.mxu0 %v4275
        %v4426 = vpop.f32.mrf.mxu0
        %v4427 = vadd.f32 0.0, %v4426
        %v4428 = vpop.f32.mrf.mxu0
        %4429 = vmatprep.mubr.f32.mxu0 0.0
        %4430 = vmatmul.mubr.f32.gmra.mxu0 %v4277
        %v4431 = vpop.f32.mrf.mxu0
        %v4432 = vadd.f32 0.0, %v4431
        %v4433 = vpop.f32.mrf.mxu0
        %4434 = vmatprep.mubr.f32.mxu0 0.0
        %4435 = vmatmul.mubr.f32.gmra.mxu0 %v4279
        %v4436 = vpop.f32.mrf.mxu0
        %v4437 = vadd.f32 0.0, %v4436
        %v4438 = vpop.f32.mrf.mxu0
        %4439 = vmatprep.mubr.f32.mxu0 0.0
        %4440 = vmatmul.mubr.f32.gmra.mxu0 %v4281
        %v4441 = vpop.f32.mrf.mxu0
        %v4442 = vadd.f32 0.0, %v4441
        %v4443 = vpop.f32.mrf.mxu0
        %4444 = vmatprep.mubr.f32.mxu0 0.0
        %4445 = vmatmul.mubr.f32.gmra.mxu0 %v4283
        %v4446 = vpop.f32.mrf.mxu0
        %v4447 = vadd.f32 0.0, %v4446
        %v4448 = vpop.f32.mrf.mxu0
        %4449 = vmatprep.mubr.f32.mxu0 0.0
        %4450 = vmatmul.mubr.f32.gmra.mxu0 %v4285
        %v4451 = vpop.f32.mrf.mxu0
        %v4452 = vadd.f32 0.0, %v4451
        %v4453 = vpop.f32.mrf.mxu0
        %4454 = vmatprep.mubr.f32.mxu0 0.0
        %4455 = vmatmul.mubr.f32.gmra.mxu0 %v4287
        %v4456 = vpop.f32.mrf.mxu0
        %v4457 = vadd.f32 0.0, %v4456
        %v4458 = vpop.f32.mrf.mxu0
        %4459 = vmatprep.mubr.f32.mxu0 0.0
        %4460 = vmatmul.mubr.f32.gmra.mxu0 %v4289
        %v4461 = vpop.f32.mrf.mxu0
        %v4462 = vadd.f32 0.0, %v4461
        %v4463 = vpop.f32.mrf.mxu0
        %4464 = vmatprep.mubr.f32.mxu0 0.0
        %4465 = vmatmul.mubr.f32.gmra.mxu0 %v4291
        %v4466 = vpop.f32.mrf.mxu0
        %v4467 = vadd.f32 0.0, %v4466
        %v4468 = vpop.f32.mrf.mxu0
        %4469 = vmatprep.mubr.f32.mxu0 0.0
        %4470 = vmatmul.mubr.f32.gmra.mxu0 %v4293
        %v4471 = vpop.f32.mrf.mxu0
        %v4472 = vadd.f32 0.0, %v4471
        %v4473 = vpop.f32.mrf.mxu0
        %4474 = vmatprep.mubr.f32.mxu0 0.0
        %4475 = vmatmul.mubr.f32.gmra.mxu0 %v4295
        %v4476 = vpop.f32.mrf.mxu0
        %v4477 = vadd.f32 0.0, %v4476
        %v4478 = vpop.f32.mrf.mxu0
        %4479 = vmatprep.mubr.f32.mxu0 0.0
        %4480 = vmatmul.mubr.f32.gmra.mxu0 %v4297
        %v4481 = vpop.f32.mrf.mxu0
        %v4482 = vadd.f32 0.0, %v4481
        %v4483 = vpop.f32.mrf.mxu0
        %4484 = vmatprep.mubr.f32.mxu0 0.0
        %4485 = vmatmul.mubr.f32.gmra.mxu0 %v4299
        %v4486 = vpop.f32.mrf.mxu0
        %v4487 = vadd.f32 0.0, %v4486
        %v4488 = vpop.f32.mrf.mxu0
        %4489 = vmatprep.mubr.f32.mxu0 0.0
        %4490 = vmatmul.mubr.f32.gmra.mxu0 %v4301
        %v4491 = vpop.f32.mrf.mxu0
        %v4492 = vadd.f32 0.0, %v4491
        %v4493 = vpop.f32.mrf.mxu0
        %4494 = vmatprep.mubr.f32.mxu0 0.0
        %4495 = vmatmul.mubr.f32.gmra.mxu0 %v4303
        %v4496 = vpop.f32.mrf.mxu0
        %v4497 = vadd.f32 0.0, %v4496
        %v4498 = vpop.f32.mrf.mxu0
        %4499 = vmatprep.mubr.f32.mxu0 0.0
        %4500 = vmatmul.mubr.f32.gmra.mxu0 %v4305
        %v4501 = vpop.f32.mrf.mxu0
        %v4502 = vadd.f32 0.0, %v4501
        %v4503 = vpop.f32.mrf.mxu0
        %4504 = vmatprep.mubr.f32.mxu0 0.0
        %4505 = vmatmul.mubr.f32.gmra.mxu0 %v4307
        %v4506 = vpop.f32.mrf.mxu0
        %v4507 = vadd.f32 0.0, %v4506
        %v4508 = vpop.f32.mrf.mxu0
        %4509 = vmatprep.mubr.f32.mxu0 0.0
        %4510 = vmatmul.mubr.f32.gmra.mxu0 %v4309
        %v4511 = vpop.f32.mrf.mxu0
        %v4512 = vadd.f32 0.0, %v4511
        %v4513 = vpop.f32.mrf.mxu0
        %4514 = vmatprep.mubr.f32.mxu0 0.0
        %4515 = vmatmul.mubr.f32.gmra.mxu0 %v4311
        %v4516 = vpop.f32.mrf.mxu0
        %v4517 = vadd.f32 0.0, %v4516
        %v4518 = vpop.f32.mrf.mxu0
        %4519 = vmatprep.mubr.f32.mxu0 0.0
        %4520 = vmatmul.mubr.f32.gmra.mxu0 %v4313
        %v4521 = vpop.f32.mrf.mxu0
        %v4522 = vadd.f32 0.0, %v4521
        %v4523 = vpop.f32.mrf.mxu0
        %4524 = vmatprep.mubr.f32.mxu0 0.0
        %4525 = vmatmul.mubr.f32.gmra.mxu0 %v4315
        %v4526 = vpop.f32.mrf.mxu0
        %v4527 = vadd.f32 0.0, %v4526
        %v4528 = vpop.f32.mrf.mxu0
        %4529 = vmatprep.mubr.f32.mxu0 0.0
        %4530 = vmatmul.mubr.f32.gmra.mxu0 %v4317
        %v4531 = vpop.f32.mrf.mxu0
        %v4532 = vadd.f32 0.0, %v4531
        %v4533 = vpop.f32.mrf.mxu0
        %4534 = vmatprep.mubr.f32.mxu0 0.0
        %4535 = vmatmul.mubr.f32.gmra.mxu0 %v4319
        %v4536 = vpop.f32.mrf.mxu0
        %v4537 = vadd.f32 0.0, %v4536
        %v4538 = vpop.f32.mrf.mxu0
        %4539 = vmatprep.mubr.f32.mxu0 0.0
        %4540 = vmatmul.mubr.f32.gmra.mxu0 %v4321
        %v4541 = vpop.f32.mrf.mxu0
        %v4542 = vadd.f32 0.0, %v4541
        %v4543 = vpop.f32.mrf.mxu0
        %4544 = vmatprep.mubr.f32.mxu0 0.0
        %4545 = vmatmul.mubr.f32.gmra.mxu0 %v4323
        %v4546 = vpop.f32.mrf.mxu0
        %v4547 = vadd.f32 0.0, %v4546
        %v4548 = vpop.f32.mrf.mxu0
        %4549 = vdwg.mxu0
        %v4550 = vadd.f32 %v4023, %v4392
        %v4551 = vadd.f32 %v4028, %v4397
        %v4552 = vadd.f32 %v4033, %v4402
        %v4553 = vadd.f32 %v4038, %v4407
        %v4554 = vadd.f32 %v4043, %v4412
        %v4555 = vadd.f32 %v4048, %v4417
        %v4556 = vadd.f32 %v4053, %v4422
        %v4557 = vadd.f32 %v4058, %v4427
        %v4558 = vadd.f32 %v4063, %v4432
        %v4559 = vadd.f32 %v4068, %v4437
        %v4560 = vadd.f32 %v4073, %v4442
        %v4561 = vadd.f32 %v4078, %v4447
        %v4562 = vadd.f32 %v4083, %v4452
        %v4563 = vadd.f32 %v4088, %v4457
        %v4564 = vadd.f32 %v4093, %v4462
        %v4565 = vadd.f32 %v4098, %v4467
        %v4566 = vadd.f32 %v4103, %v4472
        %v4567 = vadd.f32 %v4108, %v4477
        %v4568 = vadd.f32 %v4113, %v4482
        %v4569 = vadd.f32 %v4118, %v4487
        %v4570 = vadd.f32 %v4123, %v4492
        %v4571 = vadd.f32 %v4128, %v4497
        %v4572 = vadd.f32 %v4133, %v4502
        %v4573 = vadd.f32 %v4138, %v4507
        %v4574 = vadd.f32 %v4143, %v4512
        %v4575 = vadd.f32 %v4148, %v4517
        %v4576 = vadd.f32 %v4153, %v4522
        %v4577 = vadd.f32 %v4158, %v4527
        %v4578 = vadd.f32 %v4163, %v4532
        %v4579 = vadd.f32 %v4168, %v4537
        %v4580 = vadd.f32 %v4173, %v4542
        %v4581 = vadd.f32 %v4178, %v4547
        %v4583 = vsel %vm3260, %v3397, 0
        %v4586 = vsel %vm3260, %v3398, 0
        %4588 = vmatprep.subr.mxu0 0.0
        %4589 = vmatpush1.msra.mxu0 0.0
        %4590 = vmatprep.subr.mxu0 0.0
        %4591 = vmatpush1.msra.mxu0 0.0
        %4592 = vmatprep.subr.mxu0 0.0
        %4593 = vmatpush1.msra.mxu0 0.0
        %4594 = vmatprep.subr.mxu0 0.0
        %4595 = vmatpush1.msra.mxu0 0.0
        %4596 = vmatprep.subr.mxu0 0.0
        %4597 = vmatpush1.msra.mxu0 0.0
        %4598 = vmatprep.subr.mxu0 0.0
        %4599 = vmatpush1.msra.mxu0 0.0
        %4600 = vmatprep.subr.mxu0 0.0
        %4601 = vmatpush1.msra.mxu0 0.0
        %4602 = vmatprep.subr.mxu0 0.0
        %4603 = vmatpush1.msra.mxu0 0.0
        %4604 = vmatprep.subr.mxu0 0.0
        %4605 = vmatpush1.msra.mxu0 %v3434
        %4606 = vmatprep.subr.mxu0 0.0
        %4607 = vmatpush1.msra.mxu0 %v3433
        %4608 = vmatprep.subr.mxu0 0.0
        %4609 = vmatpush1.msra.mxu0 %v3432
        %4610 = vmatprep.subr.mxu0 0.0
        %4611 = vmatpush1.msra.mxu0 %v3431
        %4612 = vmatprep.subr.mxu0 0.0
        %4613 = vmatpush1.msra.mxu0 %v3430
        %4614 = vmatprep.subr.mxu0 0.0
        %4615 = vmatpush1.msra.mxu0 %v3429
        %4616 = vmatprep.subr.mxu0 0.0
        %4617 = vmatpush1.msra.mxu0 %v3428
        %4618 = vmatprep.subr.mxu0 0.0
        %4619 = vmatpush1.msra.mxu0 %v3427
        %4620 = vmatprep.subr.mxu0 0.0
        %4621 = vmatpush2.msra.mxu0 0.0
        %4622 = vmatprep.subr.mxu0 0.0
        %4623 = vmatpush2.msra.mxu0 0.0
        %4624 = vmatprep.subr.mxu0 0.0
        %4625 = vmatpush2.msra.mxu0 0.0
        %4626 = vmatprep.subr.mxu0 0.0
        %4627 = vmatpush2.msra.mxu0 0.0
        %4628 = vmatprep.subr.mxu0 0.0
        %4629 = vmatpush2.msra.mxu0 0.0
        %4630 = vmatprep.subr.mxu0 0.0
        %4631 = vmatpush2.msra.mxu0 0.0
        %4632 = vmatprep.subr.mxu0 0.0
        %4633 = vmatpush2.msra.mxu0 0.0
        %4634 = vmatprep.subr.mxu0 0.0
        %4635 = vmatpush2.msra.mxu0 0.0
        %4636 = vmatprep.subr.mxu0 0.0
        %4637 = vmatpush2.msra.mxu0 0.0
        %4638 = vmatprep.subr.mxu0 0.0
        %4639 = vmatpush2.msra.mxu0 0.0
        %4640 = vmatprep.subr.mxu0 0.0
        %4641 = vmatpush2.msra.mxu0 0.0
        %4642 = vmatprep.subr.mxu0 0.0
        %4643 = vmatpush2.msra.mxu0 0.0
        %4644 = vmatprep.subr.mxu0 0.0
        %4645 = vmatpush2.msra.mxu0 0.0
        %4646 = vmatprep.subr.mxu0 0.0
        %4647 = vmatpush2.msra.mxu0 0.0
        %4648 = vmatprep.subr.mxu0 0.0
        %4649 = vmatpush2.msra.mxu0 0.0
        %4650 = vmatprep.subr.mxu0 0.0
        %4651 = vmatpush2.msra.mxu0 0.0
        %4652 = vmatprep.mubr.f32.mxu0 0.0
        %4653 = vmatmul.mubr.f32.gmra.mxu0 %v3896
        %v4654 = vpop.f32.mrf.mxu0
        %v4655 = vadd.f32 0.0, %v4654
        %v4656 = vpop.f32.mrf.mxu0
        %4657 = vmatprep.mubr.f32.mxu0 0.0
        %4658 = vmatmul.mubr.f32.gmra.mxu0 %v3898
        %v4659 = vpop.f32.mrf.mxu0
        %v4660 = vadd.f32 0.0, %v4659
        %v4661 = vpop.f32.mrf.mxu0
        %4662 = vmatprep.mubr.f32.mxu0 0.0
        %4663 = vmatmul.mubr.f32.gmra.mxu0 %v3900
        %v4664 = vpop.f32.mrf.mxu0
        %v4665 = vadd.f32 0.0, %v4664
        %v4666 = vpop.f32.mrf.mxu0
        %4667 = vmatprep.mubr.f32.mxu0 0.0
        %4668 = vmatmul.mubr.f32.gmra.mxu0 %v3902
        %v4669 = vpop.f32.mrf.mxu0
        %v4670 = vadd.f32 0.0, %v4669
        %v4671 = vpop.f32.mrf.mxu0
        %4672 = vmatprep.mubr.f32.mxu0 0.0
        %4673 = vmatmul.mubr.f32.gmra.mxu0 %v3904
        %v4674 = vpop.f32.mrf.mxu0
        %v4675 = vadd.f32 0.0, %v4674
        %v4676 = vpop.f32.mrf.mxu0
        %4677 = vmatprep.mubr.f32.mxu0 0.0
        %4678 = vmatmul.mubr.f32.gmra.mxu0 %v3906
        %v4679 = vpop.f32.mrf.mxu0
        %v4680 = vadd.f32 0.0, %v4679
        %v4681 = vpop.f32.mrf.mxu0
        %4682 = vmatprep.mubr.f32.mxu0 0.0
        %4683 = vmatmul.mubr.f32.gmra.mxu0 %v3908
        %v4684 = vpop.f32.mrf.mxu0
        %v4685 = vadd.f32 0.0, %v4684
        %v4686 = vpop.f32.mrf.mxu0
        %4687 = vmatprep.mubr.f32.mxu0 0.0
        %4688 = vmatmul.mubr.f32.gmra.mxu0 %v3910
        %v4689 = vpop.f32.mrf.mxu0
        %v4690 = vadd.f32 0.0, %v4689
        %v4691 = vpop.f32.mrf.mxu0
        %4692 = vmatprep.mubr.f32.mxu0 0.0
        %4693 = vmatmul.mubr.f32.gmra.mxu0 %v3912
        %v4694 = vpop.f32.mrf.mxu0
        %v4695 = vadd.f32 0.0, %v4694
        %v4696 = vpop.f32.mrf.mxu0
        %4697 = vmatprep.mubr.f32.mxu0 0.0
        %4698 = vmatmul.mubr.f32.gmra.mxu0 %v3914
        %v4699 = vpop.f32.mrf.mxu0
        %v4700 = vadd.f32 0.0, %v4699
        %v4701 = vpop.f32.mrf.mxu0
        %4702 = vmatprep.mubr.f32.mxu0 0.0
        %4703 = vmatmul.mubr.f32.gmra.mxu0 %v3916
        %v4704 = vpop.f32.mrf.mxu0
        %v4705 = vadd.f32 0.0, %v4704
        %v4706 = vpop.f32.mrf.mxu0
        %4707 = vmatprep.mubr.f32.mxu0 0.0
        %4708 = vmatmul.mubr.f32.gmra.mxu0 %v3918
        %v4709 = vpop.f32.mrf.mxu0
        %v4710 = vadd.f32 0.0, %v4709
        %v4711 = vpop.f32.mrf.mxu0
        %4712 = vmatprep.mubr.f32.mxu0 0.0
        %4713 = vmatmul.mubr.f32.gmra.mxu0 %v3920
        %v4714 = vpop.f32.mrf.mxu0
        %v4715 = vadd.f32 0.0, %v4714
        %v4716 = vpop.f32.mrf.mxu0
        %4717 = vmatprep.mubr.f32.mxu0 0.0
        %4718 = vmatmul.mubr.f32.gmra.mxu0 %v3922
        %v4719 = vpop.f32.mrf.mxu0
        %v4720 = vadd.f32 0.0, %v4719
        %v4721 = vpop.f32.mrf.mxu0
        %4722 = vmatprep.mubr.f32.mxu0 0.0
        %4723 = vmatmul.mubr.f32.gmra.mxu0 %v3924
        %v4724 = vpop.f32.mrf.mxu0
        %v4725 = vadd.f32 0.0, %v4724
        %v4726 = vpop.f32.mrf.mxu0
        %4727 = vmatprep.mubr.f32.mxu0 0.0
        %4728 = vmatmul.mubr.f32.gmra.mxu0 %v3926
        %v4729 = vpop.f32.mrf.mxu0
        %v4730 = vadd.f32 0.0, %v4729
        %v4731 = vpop.f32.mrf.mxu0
        %4732 = vmatprep.mubr.f32.mxu0 0.0
        %4733 = vmatmul.mubr.f32.gmra.mxu0 %v3928
        %v4734 = vpop.f32.mrf.mxu0
        %v4735 = vadd.f32 0.0, %v4734
        %v4736 = vpop.f32.mrf.mxu0
        %4737 = vmatprep.mubr.f32.mxu0 0.0
        %4738 = vmatmul.mubr.f32.gmra.mxu0 %v3930
        %v4739 = vpop.f32.mrf.mxu0
        %v4740 = vadd.f32 0.0, %v4739
        %v4741 = vpop.f32.mrf.mxu0
        %4742 = vmatprep.mubr.f32.mxu0 0.0
        %4743 = vmatmul.mubr.f32.gmra.mxu0 %v3932
        %v4744 = vpop.f32.mrf.mxu0
        %v4745 = vadd.f32 0.0, %v4744
        %v4746 = vpop.f32.mrf.mxu0
        %4747 = vmatprep.mubr.f32.mxu0 0.0
        %4748 = vmatmul.mubr.f32.gmra.mxu0 %v3934
        %v4749 = vpop.f32.mrf.mxu0
        %v4750 = vadd.f32 0.0, %v4749
        %v4751 = vpop.f32.mrf.mxu0
        %4752 = vmatprep.mubr.f32.mxu0 0.0
        %4753 = vmatmul.mubr.f32.gmra.mxu0 %v3936
        %v4754 = vpop.f32.mrf.mxu0
        %v4755 = vadd.f32 0.0, %v4754
        %v4756 = vpop.f32.mrf.mxu0
        %4757 = vmatprep.mubr.f32.mxu0 0.0
        %4758 = vmatmul.mubr.f32.gmra.mxu0 %v3938
        %v4759 = vpop.f32.mrf.mxu0
        %v4760 = vadd.f32 0.0, %v4759
        %v4761 = vpop.f32.mrf.mxu0
        %4762 = vmatprep.mubr.f32.mxu0 0.0
        %4763 = vmatmul.mubr.f32.gmra.mxu0 %v3940
        %v4764 = vpop.f32.mrf.mxu0
        %v4765 = vadd.f32 0.0, %v4764
        %v4766 = vpop.f32.mrf.mxu0
        %4767 = vmatprep.mubr.f32.mxu0 0.0
        %4768 = vmatmul.mubr.f32.gmra.mxu0 %v3942
        %v4769 = vpop.f32.mrf.mxu0
        %v4770 = vadd.f32 0.0, %v4769
        %v4771 = vpop.f32.mrf.mxu0
        %4772 = vmatprep.mubr.f32.mxu0 0.0
        %4773 = vmatmul.mubr.f32.gmra.mxu0 %v3944
        %v4774 = vpop.f32.mrf.mxu0
        %v4775 = vadd.f32 0.0, %v4774
        %v4776 = vpop.f32.mrf.mxu0
        %4777 = vmatprep.mubr.f32.mxu0 0.0
        %4778 = vmatmul.mubr.f32.gmra.mxu0 %v3946
        %v4779 = vpop.f32.mrf.mxu0
        %v4780 = vadd.f32 0.0, %v4779
        %v4781 = vpop.f32.mrf.mxu0
        %4782 = vmatprep.mubr.f32.mxu0 0.0
        %4783 = vmatmul.mubr.f32.gmra.mxu0 %v3948
        %v4784 = vpop.f32.mrf.mxu0
        %v4785 = vadd.f32 0.0, %v4784
        %v4786 = vpop.f32.mrf.mxu0
        %4787 = vmatprep.mubr.f32.mxu0 0.0
        %4788 = vmatmul.mubr.f32.gmra.mxu0 %v3950
        %v4789 = vpop.f32.mrf.mxu0
        %v4790 = vadd.f32 0.0, %v4789
        %v4791 = vpop.f32.mrf.mxu0
        %4792 = vmatprep.mubr.f32.mxu0 0.0
        %4793 = vmatmul.mubr.f32.gmra.mxu0 %v3952
        %v4794 = vpop.f32.mrf.mxu0
        %v4795 = vadd.f32 0.0, %v4794
        %v4796 = vpop.f32.mrf.mxu0
        %4797 = vmatprep.mubr.f32.mxu0 0.0
        %4798 = vmatmul.mubr.f32.gmra.mxu0 %v3954
        %v4799 = vpop.f32.mrf.mxu0
        %v4800 = vadd.f32 0.0, %v4799
        %v4801 = vpop.f32.mrf.mxu0
        %4802 = vmatprep.mubr.f32.mxu0 0.0
        %4803 = vmatmul.mubr.f32.gmra.mxu0 %v4583
        %v4804 = vpop.f32.mrf.mxu0
        %v4805 = vadd.f32 0.0, %v4804
        %v4806 = vpop.f32.mrf.mxu0
        %4807 = vmatprep.mubr.f32.mxu0 0.0
        %4808 = vmatmul.mubr.f32.gmra.mxu0 %v4586
        %v4809 = vpop.f32.mrf.mxu0
        %v4810 = vadd.f32 0.0, %v4809
        %v4811 = vpop.f32.mrf.mxu0
        %4812 = vdwg.mxu0
        %v4813 = vadd.f32 %v4550, %v4655
        %v4814 = vadd.f32 %v4551, %v4660
        %v4815 = vadd.f32 %v4552, %v4665
        %v4816 = vadd.f32 %v4553, %v4670
        %v4817 = vadd.f32 %v4554, %v4675
        %v4818 = vadd.f32 %v4555, %v4680
        %v4819 = vadd.f32 %v4556, %v4685
        %v4820 = vadd.f32 %v4557, %v4690
        %v4821 = vadd.f32 %v4558, %v4695
        %v4822 = vadd.f32 %v4559, %v4700
        %v4823 = vadd.f32 %v4560, %v4705
        %v4824 = vadd.f32 %v4561, %v4710
        %v4825 = vadd.f32 %v4562, %v4715
        %v4826 = vadd.f32 %v4563, %v4720
        %v4827 = vadd.f32 %v4564, %v4725
        %v4828 = vadd.f32 %v4565, %v4730
        %v4829 = vadd.f32 %v4566, %v4735
        %v4830 = vadd.f32 %v4567, %v4740
        %v4831 = vadd.f32 %v4568, %v4745
        %v4832 = vadd.f32 %v4569, %v4750
        %v4833 = vadd.f32 %v4570, %v4755
        %v4834 = vadd.f32 %v4571, %v4760
        %v4835 = vadd.f32 %v4572, %v4765
        %v4836 = vadd.f32 %v4573, %v4770
        %v4837 = vadd.f32 %v4574, %v4775
        %v4838 = vadd.f32 %v4575, %v4780
        %v4839 = vadd.f32 %v4576, %v4785
        %v4840 = vadd.f32 %v4577, %v4790
        %v4841 = vadd.f32 %v4578, %v4795
        %v4842 = vadd.f32 %v4579, %v4800
        %v4843 = vadd.f32 %v4580, %v4805
        %v4844 = vadd.f32 %v4581, %v4810
        %v4846 = vrot.slane %v3397, 1
        %v4847 = vrot.slane %v3398, 1
        %v4848 = vsel %vm496, %v4846, %v4847
        %v4849 = vrot.slane %v3399, 1
        %v4850 = vsel %vm496, %v4847, %v4849
        %v4851 = vsel %vm3260, %v4848, 0
        %v4853 = vsel %vm3260, %v4850, 0
        %4855 = vmatprep.subr.mxu0 0.0
        %4856 = vmatpush1.msra.mxu0 0.0
        %4857 = vmatprep.subr.mxu0 0.0
        %4858 = vmatpush1.msra.mxu0 0.0
        %4859 = vmatprep.subr.mxu0 0.0
        %4860 = vmatpush1.msra.mxu0 0.0
        %4861 = vmatprep.subr.mxu0 0.0
        %4862 = vmatpush1.msra.mxu0 0.0
        %4863 = vmatprep.subr.mxu0 0.0
        %4864 = vmatpush1.msra.mxu0 0.0
        %4865 = vmatprep.subr.mxu0 0.0
        %4866 = vmatpush1.msra.mxu0 0.0
        %4867 = vmatprep.subr.mxu0 0.0
        %4868 = vmatpush1.msra.mxu0 0.0
        %4869 = vmatprep.subr.mxu0 0.0
        %4870 = vmatpush1.msra.mxu0 0.0
        %4871 = vmatprep.subr.mxu0 0.0
        %4872 = vmatpush1.msra.mxu0 %v3442
        %4873 = vmatprep.subr.mxu0 0.0
        %4874 = vmatpush1.msra.mxu0 %v3441
        %4875 = vmatprep.subr.mxu0 0.0
        %4876 = vmatpush1.msra.mxu0 %v3440
        %4877 = vmatprep.subr.mxu0 0.0
        %4878 = vmatpush1.msra.mxu0 %v3439
        %4879 = vmatprep.subr.mxu0 0.0
        %4880 = vmatpush1.msra.mxu0 %v3438
        %4881 = vmatprep.subr.mxu0 0.0
        %4882 = vmatpush1.msra.mxu0 %v3437
        %4883 = vmatprep.subr.mxu0 0.0
        %4884 = vmatpush1.msra.mxu0 %v3436
        %4885 = vmatprep.subr.mxu0 0.0
        %4886 = vmatpush1.msra.mxu0 %v3435
        %4887 = vmatprep.subr.mxu0 0.0
        %4888 = vmatpush2.msra.mxu0 0.0
        %4889 = vmatprep.subr.mxu0 0.0
        %4890 = vmatpush2.msra.mxu0 0.0
        %4891 = vmatprep.subr.mxu0 0.0
        %4892 = vmatpush2.msra.mxu0 0.0
        %4893 = vmatprep.subr.mxu0 0.0
        %4894 = vmatpush2.msra.mxu0 0.0
        %4895 = vmatprep.subr.mxu0 0.0
        %4896 = vmatpush2.msra.mxu0 0.0
        %4897 = vmatprep.subr.mxu0 0.0
        %4898 = vmatpush2.msra.mxu0 0.0
        %4899 = vmatprep.subr.mxu0 0.0
        %4900 = vmatpush2.msra.mxu0 0.0
        %4901 = vmatprep.subr.mxu0 0.0
        %4902 = vmatpush2.msra.mxu0 0.0
        %4903 = vmatprep.subr.mxu0 0.0
        %4904 = vmatpush2.msra.mxu0 0.0
        %4905 = vmatprep.subr.mxu0 0.0
        %4906 = vmatpush2.msra.mxu0 0.0
        %4907 = vmatprep.subr.mxu0 0.0
        %4908 = vmatpush2.msra.mxu0 0.0
        %4909 = vmatprep.subr.mxu0 0.0
        %4910 = vmatpush2.msra.mxu0 0.0
        %4911 = vmatprep.subr.mxu0 0.0
        %4912 = vmatpush2.msra.mxu0 0.0
        %4913 = vmatprep.subr.mxu0 0.0
        %4914 = vmatpush2.msra.mxu0 0.0
        %4915 = vmatprep.subr.mxu0 0.0
        %4916 = vmatpush2.msra.mxu0 0.0
        %4917 = vmatprep.subr.mxu0 0.0
        %4918 = vmatpush2.msra.mxu0 0.0
        %4919 = vmatprep.mubr.f32.mxu0 0.0
        %4920 = vmatmul.mubr.f32.gmra.mxu0 %v3607
        %v4921 = vpop.f32.mrf.mxu0
        %v4922 = vadd.f32 0.0, %v4921
        %v4923 = vpop.f32.mrf.mxu0
        %4924 = vmatprep.mubr.f32.mxu0 0.0
        %4925 = vmatmul.mubr.f32.gmra.mxu0 %v3609
        %v4926 = vpop.f32.mrf.mxu0
        %v4927 = vadd.f32 0.0, %v4926
        %v4928 = vpop.f32.mrf.mxu0
        %4929 = vmatprep.mubr.f32.mxu0 0.0
        %4930 = vmatmul.mubr.f32.gmra.mxu0 %v3611
        %v4931 = vpop.f32.mrf.mxu0
        %v4932 = vadd.f32 0.0, %v4931
        %v4933 = vpop.f32.mrf.mxu0
        %4934 = vmatprep.mubr.f32.mxu0 0.0
        %4935 = vmatmul.mubr.f32.gmra.mxu0 %v3613
        %v4936 = vpop.f32.mrf.mxu0
        %v4937 = vadd.f32 0.0, %v4936
        %v4938 = vpop.f32.mrf.mxu0
        %4939 = vmatprep.mubr.f32.mxu0 0.0
        %4940 = vmatmul.mubr.f32.gmra.mxu0 %v3615
        %v4941 = vpop.f32.mrf.mxu0
        %v4942 = vadd.f32 0.0, %v4941
        %v4943 = vpop.f32.mrf.mxu0
        %4944 = vmatprep.mubr.f32.mxu0 0.0
        %4945 = vmatmul.mubr.f32.gmra.mxu0 %v3617
        %v4946 = vpop.f32.mrf.mxu0
        %v4947 = vadd.f32 0.0, %v4946
        %v4948 = vpop.f32.mrf.mxu0
        %4949 = vmatprep.mubr.f32.mxu0 0.0
        %4950 = vmatmul.mubr.f32.gmra.mxu0 %v3619
        %v4951 = vpop.f32.mrf.mxu0
        %v4952 = vadd.f32 0.0, %v4951
        %v4953 = vpop.f32.mrf.mxu0
        %4954 = vmatprep.mubr.f32.mxu0 0.0
        %4955 = vmatmul.mubr.f32.gmra.mxu0 %v3621
        %v4956 = vpop.f32.mrf.mxu0
        %v4957 = vadd.f32 0.0, %v4956
        %v4958 = vpop.f32.mrf.mxu0
        %4959 = vmatprep.mubr.f32.mxu0 0.0
        %4960 = vmatmul.mubr.f32.gmra.mxu0 %v3623
        %v4961 = vpop.f32.mrf.mxu0
        %v4962 = vadd.f32 0.0, %v4961
        %v4963 = vpop.f32.mrf.mxu0
        %4964 = vmatprep.mubr.f32.mxu0 0.0
        %4965 = vmatmul.mubr.f32.gmra.mxu0 %v3625
        %v4966 = vpop.f32.mrf.mxu0
        %v4967 = vadd.f32 0.0, %v4966
        %v4968 = vpop.f32.mrf.mxu0
        %4969 = vmatprep.mubr.f32.mxu0 0.0
        %4970 = vmatmul.mubr.f32.gmra.mxu0 %v3627
        %v4971 = vpop.f32.mrf.mxu0
        %v4972 = vadd.f32 0.0, %v4971
        %v4973 = vpop.f32.mrf.mxu0
        %4974 = vmatprep.mubr.f32.mxu0 0.0
        %4975 = vmatmul.mubr.f32.gmra.mxu0 %v3629
        %v4976 = vpop.f32.mrf.mxu0
        %v4977 = vadd.f32 0.0, %v4976
        %v4978 = vpop.f32.mrf.mxu0
        %4979 = vmatprep.mubr.f32.mxu0 0.0
        %4980 = vmatmul.mubr.f32.gmra.mxu0 %v3631
        %v4981 = vpop.f32.mrf.mxu0
        %v4982 = vadd.f32 0.0, %v4981
        %v4983 = vpop.f32.mrf.mxu0
        %4984 = vmatprep.mubr.f32.mxu0 0.0
        %4985 = vmatmul.mubr.f32.gmra.mxu0 %v3633
        %v4986 = vpop.f32.mrf.mxu0
        %v4987 = vadd.f32 0.0, %v4986
        %v4988 = vpop.f32.mrf.mxu0
        %4989 = vmatprep.mubr.f32.mxu0 0.0
        %4990 = vmatmul.mubr.f32.gmra.mxu0 %v3635
        %v4991 = vpop.f32.mrf.mxu0
        %v4992 = vadd.f32 0.0, %v4991
        %v4993 = vpop.f32.mrf.mxu0
        %4994 = vmatprep.mubr.f32.mxu0 0.0
        %4995 = vmatmul.mubr.f32.gmra.mxu0 %v3637
        %v4996 = vpop.f32.mrf.mxu0
        %v4997 = vadd.f32 0.0, %v4996
        %v4998 = vpop.f32.mrf.mxu0
        %4999 = vmatprep.mubr.f32.mxu0 0.0
        %5000 = vmatmul.mubr.f32.gmra.mxu0 %v3639
        %v5001 = vpop.f32.mrf.mxu0
        %v5002 = vadd.f32 0.0, %v5001
        %v5003 = vpop.f32.mrf.mxu0
        %5004 = vmatprep.mubr.f32.mxu0 0.0
        %5005 = vmatmul.mubr.f32.gmra.mxu0 %v3641
        %v5006 = vpop.f32.mrf.mxu0
        %v5007 = vadd.f32 0.0, %v5006
        %v5008 = vpop.f32.mrf.mxu0
        %5009 = vmatprep.mubr.f32.mxu0 0.0
        %5010 = vmatmul.mubr.f32.gmra.mxu0 %v3643
        %v5011 = vpop.f32.mrf.mxu0
        %v5012 = vadd.f32 0.0, %v5011
        %v5013 = vpop.f32.mrf.mxu0
        %5014 = vmatprep.mubr.f32.mxu0 0.0
        %5015 = vmatmul.mubr.f32.gmra.mxu0 %v3645
        %v5016 = vpop.f32.mrf.mxu0
        %v5017 = vadd.f32 0.0, %v5016
        %v5018 = vpop.f32.mrf.mxu0
        %5019 = vmatprep.mubr.f32.mxu0 0.0
        %5020 = vmatmul.mubr.f32.gmra.mxu0 %v3647
        %v5021 = vpop.f32.mrf.mxu0
        %v5022 = vadd.f32 0.0, %v5021
        %v5023 = vpop.f32.mrf.mxu0
        %5024 = vmatprep.mubr.f32.mxu0 0.0
        %5025 = vmatmul.mubr.f32.gmra.mxu0 %v3649
        %v5026 = vpop.f32.mrf.mxu0
        %v5027 = vadd.f32 0.0, %v5026
        %v5028 = vpop.f32.mrf.mxu0
        %5029 = vmatprep.mubr.f32.mxu0 0.0
        %5030 = vmatmul.mubr.f32.gmra.mxu0 %v3651
        %v5031 = vpop.f32.mrf.mxu0
        %v5032 = vadd.f32 0.0, %v5031
        %v5033 = vpop.f32.mrf.mxu0
        %5034 = vmatprep.mubr.f32.mxu0 0.0
        %5035 = vmatmul.mubr.f32.gmra.mxu0 %v3653
        %v5036 = vpop.f32.mrf.mxu0
        %v5037 = vadd.f32 0.0, %v5036
        %v5038 = vpop.f32.mrf.mxu0
        %5039 = vmatprep.mubr.f32.mxu0 0.0
        %5040 = vmatmul.mubr.f32.gmra.mxu0 %v3655
        %v5041 = vpop.f32.mrf.mxu0
        %v5042 = vadd.f32 0.0, %v5041
        %v5043 = vpop.f32.mrf.mxu0
        %5044 = vmatprep.mubr.f32.mxu0 0.0
        %5045 = vmatmul.mubr.f32.gmra.mxu0 %v3657
        %v5046 = vpop.f32.mrf.mxu0
        %v5047 = vadd.f32 0.0, %v5046
        %v5048 = vpop.f32.mrf.mxu0
        %5049 = vmatprep.mubr.f32.mxu0 0.0
        %5050 = vmatmul.mubr.f32.gmra.mxu0 %v3659
        %v5051 = vpop.f32.mrf.mxu0
        %v5052 = vadd.f32 0.0, %v5051
        %v5053 = vpop.f32.mrf.mxu0
        %5054 = vmatprep.mubr.f32.mxu0 0.0
        %5055 = vmatmul.mubr.f32.gmra.mxu0 %v3661
        %v5056 = vpop.f32.mrf.mxu0
        %v5057 = vadd.f32 0.0, %v5056
        %v5058 = vpop.f32.mrf.mxu0
        %5059 = vmatprep.mubr.f32.mxu0 0.0
        %5060 = vmatmul.mubr.f32.gmra.mxu0 %v3663
        %v5061 = vpop.f32.mrf.mxu0
        %v5062 = vadd.f32 0.0, %v5061
        %v5063 = vpop.f32.mrf.mxu0
        %5064 = vmatprep.mubr.f32.mxu0 0.0
        %5065 = vmatmul.mubr.f32.gmra.mxu0 %v3665
        %v5066 = vpop.f32.mrf.mxu0
        %v5067 = vadd.f32 0.0, %v5066
        %v5068 = vpop.f32.mrf.mxu0
        %5069 = vmatprep.mubr.f32.mxu0 0.0
        %5070 = vmatmul.mubr.f32.gmra.mxu0 %v4851
        %v5071 = vpop.f32.mrf.mxu0
        %v5072 = vadd.f32 0.0, %v5071
        %v5073 = vpop.f32.mrf.mxu0
        %5074 = vmatprep.mubr.f32.mxu0 0.0
        %5075 = vmatmul.mubr.f32.gmra.mxu0 %v4853
        %v5076 = vpop.f32.mrf.mxu0
        %v5077 = vadd.f32 0.0, %v5076
        %v5078 = vpop.f32.mrf.mxu0
        %5079 = vdwg.mxu0
        %v5080 = vadd.f32 %v4813, %v4922
        %v5081 = vadd.f32 %v4814, %v4927
        %v5082 = vadd.f32 %v4815, %v4932
        %v5083 = vadd.f32 %v4816, %v4937
        %v5084 = vadd.f32 %v4817, %v4942
        %v5085 = vadd.f32 %v4818, %v4947
        %v5086 = vadd.f32 %v4819, %v4952
        %v5087 = vadd.f32 %v4820, %v4957
        %v5088 = vadd.f32 %v4821, %v4962
        %v5089 = vadd.f32 %v4822, %v4967
        %v5090 = vadd.f32 %v4823, %v4972
        %v5091 = vadd.f32 %v4824, %v4977
        %v5092 = vadd.f32 %v4825, %v4982
        %v5093 = vadd.f32 %v4826, %v4987
        %v5094 = vadd.f32 %v4827, %v4992
        %v5095 = vadd.f32 %v4828, %v4997
        %v5096 = vadd.f32 %v4829, %v5002
        %v5097 = vadd.f32 %v4830, %v5007
        %v5098 = vadd.f32 %v4831, %v5012
        %v5099 = vadd.f32 %v4832, %v5017
        %v5100 = vadd.f32 %v4833, %v5022
        %v5101 = vadd.f32 %v4834, %v5027
        %v5102 = vadd.f32 %v4835, %v5032
        %v5103 = vadd.f32 %v4836, %v5037
        %v5104 = vadd.f32 %v4837, %v5042
        %v5105 = vadd.f32 %v4838, %v5047
        %v5106 = vadd.f32 %v4839, %v5052
        %v5107 = vadd.f32 %v4840, %v5057
        %v5108 = vadd.f32 %v4841, %v5062
        %v5109 = vadd.f32 %v4842, %v5067
        %v5110 = vadd.f32 %v4843, %v5072
        %v5111 = vadd.f32 %v4844, %v5077
        %v5112 = vrot.slane %v3397, 2
        %v5113 = vrot.slane %v3398, 2
        %v5114 = vsel %vm1156, %v5112, %v5113
        %v5115 = vrot.slane %v3399, 2
        %v5116 = vsel %vm1156, %v5113, %v5115
        %v5117 = vsel %vm3260, %v5114, 0
        %v5119 = vsel %vm3260, %v5116, 0
        %5121 = vmatprep.subr.mxu0 0.0
        %5122 = vmatpush1.msra.mxu0 0.0
        %5123 = vmatprep.subr.mxu0 0.0
        %5124 = vmatpush1.msra.mxu0 0.0
        %5125 = vmatprep.subr.mxu0 0.0
        %5126 = vmatpush1.msra.mxu0 0.0
        %5127 = vmatprep.subr.mxu0 0.0
        %5128 = vmatpush1.msra.mxu0 0.0
        %5129 = vmatprep.subr.mxu0 0.0
        %5130 = vmatpush1.msra.mxu0 0.0
        %5131 = vmatprep.subr.mxu0 0.0
        %5132 = vmatpush1.msra.mxu0 0.0
        %5133 = vmatprep.subr.mxu0 0.0
        %5134 = vmatpush1.msra.mxu0 0.0
        %5135 = vmatprep.subr.mxu0 0.0
        %5136 = vmatpush1.msra.mxu0 0.0
        %5137 = vmatprep.subr.mxu0 0.0
        %5138 = vmatpush1.msra.mxu0 %v3450
        %5139 = vmatprep.subr.mxu0 0.0
        %5140 = vmatpush1.msra.mxu0 %v3449
        %5141 = vmatprep.subr.mxu0 0.0
        %5142 = vmatpush1.msra.mxu0 %v3448
        %5143 = vmatprep.subr.mxu0 0.0
        %5144 = vmatpush1.msra.mxu0 %v3447
        %5145 = vmatprep.subr.mxu0 0.0
        %5146 = vmatpush1.msra.mxu0 %v3446
        %5147 = vmatprep.subr.mxu0 0.0
        %5148 = vmatpush1.msra.mxu0 %v3445
        %5149 = vmatprep.subr.mxu0 0.0
        %5150 = vmatpush1.msra.mxu0 %v3444
        %5151 = vmatprep.subr.mxu0 0.0
        %5152 = vmatpush1.msra.mxu0 %v3443
        %5153 = vmatprep.subr.mxu0 0.0
        %5154 = vmatpush2.msra.mxu0 0.0
        %5155 = vmatprep.subr.mxu0 0.0
        %5156 = vmatpush2.msra.mxu0 0.0
        %5157 = vmatprep.subr.mxu0 0.0
        %5158 = vmatpush2.msra.mxu0 0.0
        %5159 = vmatprep.subr.mxu0 0.0
        %5160 = vmatpush2.msra.mxu0 0.0
        %5161 = vmatprep.subr.mxu0 0.0
        %5162 = vmatpush2.msra.mxu0 0.0
        %5163 = vmatprep.subr.mxu0 0.0
        %5164 = vmatpush2.msra.mxu0 0.0
        %5165 = vmatprep.subr.mxu0 0.0
        %5166 = vmatpush2.msra.mxu0 0.0
        %5167 = vmatprep.subr.mxu0 0.0
        %5168 = vmatpush2.msra.mxu0 0.0
        %5169 = vmatprep.subr.mxu0 0.0
        %5170 = vmatpush2.msra.mxu0 0.0
        %5171 = vmatprep.subr.mxu0 0.0
        %5172 = vmatpush2.msra.mxu0 0.0
        %5173 = vmatprep.subr.mxu0 0.0
        %5174 = vmatpush2.msra.mxu0 0.0
        %5175 = vmatprep.subr.mxu0 0.0
        %5176 = vmatpush2.msra.mxu0 0.0
        %5177 = vmatprep.subr.mxu0 0.0
        %5178 = vmatpush2.msra.mxu0 0.0
        %5179 = vmatprep.subr.mxu0 0.0
        %5180 = vmatpush2.msra.mxu0 0.0
        %5181 = vmatprep.subr.mxu0 0.0
        %5182 = vmatpush2.msra.mxu0 0.0
        %5183 = vmatprep.subr.mxu0 0.0
        %5184 = vmatpush2.msra.mxu0 0.0
        %5185 = vmatprep.mubr.f32.mxu0 0.0
        %5186 = vmatmul.mubr.f32.gmra.mxu0 %v4265
        %v5187 = vpop.f32.mrf.mxu0
        %v5188 = vadd.f32 0.0, %v5187
        %v5189 = vpop.f32.mrf.mxu0
        %5190 = vmatprep.mubr.f32.mxu0 0.0
        %5191 = vmatmul.mubr.f32.gmra.mxu0 %v4267
        %v5192 = vpop.f32.mrf.mxu0
        %v5193 = vadd.f32 0.0, %v5192
        %v5194 = vpop.f32.mrf.mxu0
        %5195 = vmatprep.mubr.f32.mxu0 0.0
        %5196 = vmatmul.mubr.f32.gmra.mxu0 %v4269
        %v5197 = vpop.f32.mrf.mxu0
        %v5198 = vadd.f32 0.0, %v5197
        %v5199 = vpop.f32.mrf.mxu0
        %5200 = vmatprep.mubr.f32.mxu0 0.0
        %5201 = vmatmul.mubr.f32.gmra.mxu0 %v4271
        %v5202 = vpop.f32.mrf.mxu0
        %v5203 = vadd.f32 0.0, %v5202
        %v5204 = vpop.f32.mrf.mxu0
        %5205 = vmatprep.mubr.f32.mxu0 0.0
        %5206 = vmatmul.mubr.f32.gmra.mxu0 %v4273
        %v5207 = vpop.f32.mrf.mxu0
        %v5208 = vadd.f32 0.0, %v5207
        %v5209 = vpop.f32.mrf.mxu0
        %5210 = vmatprep.mubr.f32.mxu0 0.0
        %5211 = vmatmul.mubr.f32.gmra.mxu0 %v4275
        %v5212 = vpop.f32.mrf.mxu0
        %v5213 = vadd.f32 0.0, %v5212
        %v5214 = vpop.f32.mrf.mxu0
        %5215 = vmatprep.mubr.f32.mxu0 0.0
        %5216 = vmatmul.mubr.f32.gmra.mxu0 %v4277
        %v5217 = vpop.f32.mrf.mxu0
        %v5218 = vadd.f32 0.0, %v5217
        %v5219 = vpop.f32.mrf.mxu0
        %5220 = vmatprep.mubr.f32.mxu0 0.0
        %5221 = vmatmul.mubr.f32.gmra.mxu0 %v4279
        %v5222 = vpop.f32.mrf.mxu0
        %v5223 = vadd.f32 0.0, %v5222
        %v5224 = vpop.f32.mrf.mxu0
        %5225 = vmatprep.mubr.f32.mxu0 0.0
        %5226 = vmatmul.mubr.f32.gmra.mxu0 %v4281
        %v5227 = vpop.f32.mrf.mxu0
        %v5228 = vadd.f32 0.0, %v5227
        %v5229 = vpop.f32.mrf.mxu0
        %5230 = vmatprep.mubr.f32.mxu0 0.0
        %5231 = vmatmul.mubr.f32.gmra.mxu0 %v4283
        %v5232 = vpop.f32.mrf.mxu0
        %v5233 = vadd.f32 0.0, %v5232
        %v5234 = vpop.f32.mrf.mxu0
        %5235 = vmatprep.mubr.f32.mxu0 0.0
        %5236 = vmatmul.mubr.f32.gmra.mxu0 %v4285
        %v5237 = vpop.f32.mrf.mxu0
        %v5238 = vadd.f32 0.0, %v5237
        %v5239 = vpop.f32.mrf.mxu0
        %5240 = vmatprep.mubr.f32.mxu0 0.0
        %5241 = vmatmul.mubr.f32.gmra.mxu0 %v4287
        %v5242 = vpop.f32.mrf.mxu0
        %v5243 = vadd.f32 0.0, %v5242
        %v5244 = vpop.f32.mrf.mxu0
        %5245 = vmatprep.mubr.f32.mxu0 0.0
        %5246 = vmatmul.mubr.f32.gmra.mxu0 %v4289
        %v5247 = vpop.f32.mrf.mxu0
        %v5248 = vadd.f32 0.0, %v5247
        %v5249 = vpop.f32.mrf.mxu0
        %5250 = vmatprep.mubr.f32.mxu0 0.0
        %5251 = vmatmul.mubr.f32.gmra.mxu0 %v4291
        %v5252 = vpop.f32.mrf.mxu0
        %v5253 = vadd.f32 0.0, %v5252
        %v5254 = vpop.f32.mrf.mxu0
        %5255 = vmatprep.mubr.f32.mxu0 0.0
        %5256 = vmatmul.mubr.f32.gmra.mxu0 %v4293
        %v5257 = vpop.f32.mrf.mxu0
        %v5258 = vadd.f32 0.0, %v5257
        %v5259 = vpop.f32.mrf.mxu0
        %5260 = vmatprep.mubr.f32.mxu0 0.0
        %5261 = vmatmul.mubr.f32.gmra.mxu0 %v4295
        %v5262 = vpop.f32.mrf.mxu0
        %v5263 = vadd.f32 0.0, %v5262
        %v5264 = vpop.f32.mrf.mxu0
        %5265 = vmatprep.mubr.f32.mxu0 0.0
        %5266 = vmatmul.mubr.f32.gmra.mxu0 %v4297
        %v5267 = vpop.f32.mrf.mxu0
        %v5268 = vadd.f32 0.0, %v5267
        %v5269 = vpop.f32.mrf.mxu0
        %5270 = vmatprep.mubr.f32.mxu0 0.0
        %5271 = vmatmul.mubr.f32.gmra.mxu0 %v4299
        %v5272 = vpop.f32.mrf.mxu0
        %v5273 = vadd.f32 0.0, %v5272
        %v5274 = vpop.f32.mrf.mxu0
        %5275 = vmatprep.mubr.f32.mxu0 0.0
        %5276 = vmatmul.mubr.f32.gmra.mxu0 %v4301
        %v5277 = vpop.f32.mrf.mxu0
        %v5278 = vadd.f32 0.0, %v5277
        %v5279 = vpop.f32.mrf.mxu0
        %5280 = vmatprep.mubr.f32.mxu0 0.0
        %5281 = vmatmul.mubr.f32.gmra.mxu0 %v4303
        %v5282 = vpop.f32.mrf.mxu0
        %v5283 = vadd.f32 0.0, %v5282
        %v5284 = vpop.f32.mrf.mxu0
        %5285 = vmatprep.mubr.f32.mxu0 0.0
        %5286 = vmatmul.mubr.f32.gmra.mxu0 %v4305
        %v5287 = vpop.f32.mrf.mxu0
        %v5288 = vadd.f32 0.0, %v5287
        %v5289 = vpop.f32.mrf.mxu0
        %5290 = vmatprep.mubr.f32.mxu0 0.0
        %5291 = vmatmul.mubr.f32.gmra.mxu0 %v4307
        %v5292 = vpop.f32.mrf.mxu0
        %v5293 = vadd.f32 0.0, %v5292
        %v5294 = vpop.f32.mrf.mxu0
        %5295 = vmatprep.mubr.f32.mxu0 0.0
        %5296 = vmatmul.mubr.f32.gmra.mxu0 %v4309
        %v5297 = vpop.f32.mrf.mxu0
        %v5298 = vadd.f32 0.0, %v5297
        %v5299 = vpop.f32.mrf.mxu0
        %5300 = vmatprep.mubr.f32.mxu0 0.0
        %5301 = vmatmul.mubr.f32.gmra.mxu0 %v4311
        %v5302 = vpop.f32.mrf.mxu0
        %v5303 = vadd.f32 0.0, %v5302
        %v5304 = vpop.f32.mrf.mxu0
        %5305 = vmatprep.mubr.f32.mxu0 0.0
        %5306 = vmatmul.mubr.f32.gmra.mxu0 %v4313
        %v5307 = vpop.f32.mrf.mxu0
        %v5308 = vadd.f32 0.0, %v5307
        %v5309 = vpop.f32.mrf.mxu0
        %5310 = vmatprep.mubr.f32.mxu0 0.0
        %5311 = vmatmul.mubr.f32.gmra.mxu0 %v4315
        %v5312 = vpop.f32.mrf.mxu0
        %v5313 = vadd.f32 0.0, %v5312
        %v5314 = vpop.f32.mrf.mxu0
        %5315 = vmatprep.mubr.f32.mxu0 0.0
        %5316 = vmatmul.mubr.f32.gmra.mxu0 %v4317
        %v5317 = vpop.f32.mrf.mxu0
        %v5318 = vadd.f32 0.0, %v5317
        %v5319 = vpop.f32.mrf.mxu0
        %5320 = vmatprep.mubr.f32.mxu0 0.0
        %5321 = vmatmul.mubr.f32.gmra.mxu0 %v4319
        %v5322 = vpop.f32.mrf.mxu0
        %v5323 = vadd.f32 0.0, %v5322
        %v5324 = vpop.f32.mrf.mxu0
        %5325 = vmatprep.mubr.f32.mxu0 0.0
        %5326 = vmatmul.mubr.f32.gmra.mxu0 %v4321
        %v5327 = vpop.f32.mrf.mxu0
        %v5328 = vadd.f32 0.0, %v5327
        %v5329 = vpop.f32.mrf.mxu0
        %5330 = vmatprep.mubr.f32.mxu0 0.0
        %5331 = vmatmul.mubr.f32.gmra.mxu0 %v4323
        %v5332 = vpop.f32.mrf.mxu0
        %v5333 = vadd.f32 0.0, %v5332
        %v5334 = vpop.f32.mrf.mxu0
        %5335 = vmatprep.mubr.f32.mxu0 0.0
        %5336 = vmatmul.mubr.f32.gmra.mxu0 %v5117
        %v5337 = vpop.f32.mrf.mxu0
        %v5338 = vadd.f32 0.0, %v5337
        %v5339 = vpop.f32.mrf.mxu0
        %5340 = vmatprep.mubr.f32.mxu0 0.0
        %5341 = vmatmul.mubr.f32.gmra.mxu0 %v5119
        %v5342 = vpop.f32.mrf.mxu0
        %v5343 = vadd.f32 0.0, %v5342
        %v5344 = vpop.f32.mrf.mxu0
        %5345 = vdwg.mxu0
        %v5346 = vadd.f32 %v5080, %v5188
        %v5347 = vadd.f32 %v5081, %v5193
        %v5348 = vadd.f32 %v5082, %v5198
        %v5349 = vadd.f32 %v5083, %v5203
        %v5350 = vadd.f32 %v5084, %v5208
        %v5351 = vadd.f32 %v5085, %v5213
        %v5352 = vadd.f32 %v5086, %v5218
        %v5353 = vadd.f32 %v5087, %v5223
        %v5354 = vadd.f32 %v5088, %v5228
        %v5355 = vadd.f32 %v5089, %v5233
        %v5356 = vadd.f32 %v5090, %v5238
        %v5357 = vadd.f32 %v5091, %v5243
        %v5358 = vadd.f32 %v5092, %v5248
        %v5359 = vadd.f32 %v5093, %v5253
        %v5360 = vadd.f32 %v5094, %v5258
        %v5361 = vadd.f32 %v5095, %v5263
        %v5362 = vadd.f32 %v5096, %v5268
        %v5363 = vadd.f32 %v5097, %v5273
        %v5364 = vadd.f32 %v5098, %v5278
        %v5365 = vadd.f32 %v5099, %v5283
        %v5366 = vadd.f32 %v5100, %v5288
        %v5367 = vadd.f32 %v5101, %v5293
        %v5368 = vadd.f32 %v5102, %v5298
        %v5369 = vadd.f32 %v5103, %v5303
        %v5370 = vadd.f32 %v5104, %v5308
        %v5371 = vadd.f32 %v5105, %v5313
        %v5372 = vadd.f32 %v5106, %v5318
        %v5373 = vadd.f32 %v5107, %v5323
        %v5374 = vadd.f32 %v5108, %v5328
        %v5375 = vadd.f32 %v5109, %v5333
        %v5376 = vadd.f32 %v5110, %v5338
        %v5377 = vadd.f32 %v5111, %v5343
        %v5379 = vsel %vm3260, %v3400, 0
        %v5382 = vsel %vm3260, %v3401, 0
        %5384 = vmatprep.subr.mxu0 0.0
        %5385 = vmatpush1.msra.mxu0 0.0
        %5386 = vmatprep.subr.mxu0 0.0
        %5387 = vmatpush1.msra.mxu0 0.0
        %5388 = vmatprep.subr.mxu0 0.0
        %5389 = vmatpush1.msra.mxu0 0.0
        %5390 = vmatprep.subr.mxu0 0.0
        %5391 = vmatpush1.msra.mxu0 0.0
        %5392 = vmatprep.subr.mxu0 0.0
        %5393 = vmatpush1.msra.mxu0 0.0
        %5394 = vmatprep.subr.mxu0 0.0
        %5395 = vmatpush1.msra.mxu0 0.0
        %5396 = vmatprep.subr.mxu0 0.0
        %5397 = vmatpush1.msra.mxu0 0.0
        %5398 = vmatprep.subr.mxu0 0.0
        %5399 = vmatpush1.msra.mxu0 0.0
        %5400 = vmatprep.subr.mxu0 0.0
        %5401 = vmatpush1.msra.mxu0 %v3458
        %5402 = vmatprep.subr.mxu0 0.0
        %5403 = vmatpush1.msra.mxu0 %v3457
        %5404 = vmatprep.subr.mxu0 0.0
        %5405 = vmatpush1.msra.mxu0 %v3456
        %5406 = vmatprep.subr.mxu0 0.0
        %5407 = vmatpush1.msra.mxu0 %v3455
        %5408 = vmatprep.subr.mxu0 0.0
        %5409 = vmatpush1.msra.mxu0 %v3454
        %5410 = vmatprep.subr.mxu0 0.0
        %5411 = vmatpush1.msra.mxu0 %v3453
        %5412 = vmatprep.subr.mxu0 0.0
        %5413 = vmatpush1.msra.mxu0 %v3452
        %5414 = vmatprep.subr.mxu0 0.0
        %5415 = vmatpush1.msra.mxu0 %v3451
        %5416 = vmatprep.subr.mxu0 0.0
        %5417 = vmatpush2.msra.mxu0 0.0
        %5418 = vmatprep.subr.mxu0 0.0
        %5419 = vmatpush2.msra.mxu0 0.0
        %5420 = vmatprep.subr.mxu0 0.0
        %5421 = vmatpush2.msra.mxu0 0.0
        %5422 = vmatprep.subr.mxu0 0.0
        %5423 = vmatpush2.msra.mxu0 0.0
        %5424 = vmatprep.subr.mxu0 0.0
        %5425 = vmatpush2.msra.mxu0 0.0
        %5426 = vmatprep.subr.mxu0 0.0
        %5427 = vmatpush2.msra.mxu0 0.0
        %5428 = vmatprep.subr.mxu0 0.0
        %5429 = vmatpush2.msra.mxu0 0.0
        %5430 = vmatprep.subr.mxu0 0.0
        %5431 = vmatpush2.msra.mxu0 0.0
        %5432 = vmatprep.subr.mxu0 0.0
        %5433 = vmatpush2.msra.mxu0 0.0
        %5434 = vmatprep.subr.mxu0 0.0
        %5435 = vmatpush2.msra.mxu0 0.0
        %5436 = vmatprep.subr.mxu0 0.0
        %5437 = vmatpush2.msra.mxu0 0.0
        %5438 = vmatprep.subr.mxu0 0.0
        %5439 = vmatpush2.msra.mxu0 0.0
        %5440 = vmatprep.subr.mxu0 0.0
        %5441 = vmatpush2.msra.mxu0 0.0
        %5442 = vmatprep.subr.mxu0 0.0
        %5443 = vmatpush2.msra.mxu0 0.0
        %5444 = vmatprep.subr.mxu0 0.0
        %5445 = vmatpush2.msra.mxu0 0.0
        %5446 = vmatprep.subr.mxu0 0.0
        %5447 = vmatpush2.msra.mxu0 0.0
        %5448 = vmatprep.mubr.f32.mxu0 0.0
        %5449 = vmatmul.mubr.f32.gmra.mxu0 %v3900
        %v5450 = vpop.f32.mrf.mxu0
        %v5451 = vadd.f32 0.0, %v5450
        %v5452 = vpop.f32.mrf.mxu0
        %5453 = vmatprep.mubr.f32.mxu0 0.0
        %5454 = vmatmul.mubr.f32.gmra.mxu0 %v3902
        %v5455 = vpop.f32.mrf.mxu0
        %v5456 = vadd.f32 0.0, %v5455
        %v5457 = vpop.f32.mrf.mxu0
        %5458 = vmatprep.mubr.f32.mxu0 0.0
        %5459 = vmatmul.mubr.f32.gmra.mxu0 %v3904
        %v5460 = vpop.f32.mrf.mxu0
        %v5461 = vadd.f32 0.0, %v5460
        %v5462 = vpop.f32.mrf.mxu0
        %5463 = vmatprep.mubr.f32.mxu0 0.0
        %5464 = vmatmul.mubr.f32.gmra.mxu0 %v3906
        %v5465 = vpop.f32.mrf.mxu0
        %v5466 = vadd.f32 0.0, %v5465
        %v5467 = vpop.f32.mrf.mxu0
        %5468 = vmatprep.mubr.f32.mxu0 0.0
        %5469 = vmatmul.mubr.f32.gmra.mxu0 %v3908
        %v5470 = vpop.f32.mrf.mxu0
        %v5471 = vadd.f32 0.0, %v5470
        %v5472 = vpop.f32.mrf.mxu0
        %5473 = vmatprep.mubr.f32.mxu0 0.0
        %5474 = vmatmul.mubr.f32.gmra.mxu0 %v3910
        %v5475 = vpop.f32.mrf.mxu0
        %v5476 = vadd.f32 0.0, %v5475
        %v5477 = vpop.f32.mrf.mxu0
        %5478 = vmatprep.mubr.f32.mxu0 0.0
        %5479 = vmatmul.mubr.f32.gmra.mxu0 %v3912
        %v5480 = vpop.f32.mrf.mxu0
        %v5481 = vadd.f32 0.0, %v5480
        %v5482 = vpop.f32.mrf.mxu0
        %5483 = vmatprep.mubr.f32.mxu0 0.0
        %5484 = vmatmul.mubr.f32.gmra.mxu0 %v3914
        %v5485 = vpop.f32.mrf.mxu0
        %v5486 = vadd.f32 0.0, %v5485
        %v5487 = vpop.f32.mrf.mxu0
        %5488 = vmatprep.mubr.f32.mxu0 0.0
        %5489 = vmatmul.mubr.f32.gmra.mxu0 %v3916
        %v5490 = vpop.f32.mrf.mxu0
        %v5491 = vadd.f32 0.0, %v5490
        %v5492 = vpop.f32.mrf.mxu0
        %5493 = vmatprep.mubr.f32.mxu0 0.0
        %5494 = vmatmul.mubr.f32.gmra.mxu0 %v3918
        %v5495 = vpop.f32.mrf.mxu0
        %v5496 = vadd.f32 0.0, %v5495
        %v5497 = vpop.f32.mrf.mxu0
        %5498 = vmatprep.mubr.f32.mxu0 0.0
        %5499 = vmatmul.mubr.f32.gmra.mxu0 %v3920
        %v5500 = vpop.f32.mrf.mxu0
        %v5501 = vadd.f32 0.0, %v5500
        %v5502 = vpop.f32.mrf.mxu0
        %5503 = vmatprep.mubr.f32.mxu0 0.0
        %5504 = vmatmul.mubr.f32.gmra.mxu0 %v3922
        %v5505 = vpop.f32.mrf.mxu0
        %v5506 = vadd.f32 0.0, %v5505
        %v5507 = vpop.f32.mrf.mxu0
        %5508 = vmatprep.mubr.f32.mxu0 0.0
        %5509 = vmatmul.mubr.f32.gmra.mxu0 %v3924
        %v5510 = vpop.f32.mrf.mxu0
        %v5511 = vadd.f32 0.0, %v5510
        %v5512 = vpop.f32.mrf.mxu0
        %5513 = vmatprep.mubr.f32.mxu0 0.0
        %5514 = vmatmul.mubr.f32.gmra.mxu0 %v3926
        %v5515 = vpop.f32.mrf.mxu0
        %v5516 = vadd.f32 0.0, %v5515
        %v5517 = vpop.f32.mrf.mxu0
        %5518 = vmatprep.mubr.f32.mxu0 0.0
        %5519 = vmatmul.mubr.f32.gmra.mxu0 %v3928
        %v5520 = vpop.f32.mrf.mxu0
        %v5521 = vadd.f32 0.0, %v5520
        %v5522 = vpop.f32.mrf.mxu0
        %5523 = vmatprep.mubr.f32.mxu0 0.0
        %5524 = vmatmul.mubr.f32.gmra.mxu0 %v3930
        %v5525 = vpop.f32.mrf.mxu0
        %v5526 = vadd.f32 0.0, %v5525
        %v5527 = vpop.f32.mrf.mxu0
        %5528 = vmatprep.mubr.f32.mxu0 0.0
        %5529 = vmatmul.mubr.f32.gmra.mxu0 %v3932
        %v5530 = vpop.f32.mrf.mxu0
        %v5531 = vadd.f32 0.0, %v5530
        %v5532 = vpop.f32.mrf.mxu0
        %5533 = vmatprep.mubr.f32.mxu0 0.0
        %5534 = vmatmul.mubr.f32.gmra.mxu0 %v3934
        %v5535 = vpop.f32.mrf.mxu0
        %v5536 = vadd.f32 0.0, %v5535
        %v5537 = vpop.f32.mrf.mxu0
        %5538 = vmatprep.mubr.f32.mxu0 0.0
        %5539 = vmatmul.mubr.f32.gmra.mxu0 %v3936
        %v5540 = vpop.f32.mrf.mxu0
        %v5541 = vadd.f32 0.0, %v5540
        %v5542 = vpop.f32.mrf.mxu0
        %5543 = vmatprep.mubr.f32.mxu0 0.0
        %5544 = vmatmul.mubr.f32.gmra.mxu0 %v3938
        %v5545 = vpop.f32.mrf.mxu0
        %v5546 = vadd.f32 0.0, %v5545
        %v5547 = vpop.f32.mrf.mxu0
        %5548 = vmatprep.mubr.f32.mxu0 0.0
        %5549 = vmatmul.mubr.f32.gmra.mxu0 %v3940
        %v5550 = vpop.f32.mrf.mxu0
        %v5551 = vadd.f32 0.0, %v5550
        %v5552 = vpop.f32.mrf.mxu0
        %5553 = vmatprep.mubr.f32.mxu0 0.0
        %5554 = vmatmul.mubr.f32.gmra.mxu0 %v3942
        %v5555 = vpop.f32.mrf.mxu0
        %v5556 = vadd.f32 0.0, %v5555
        %v5557 = vpop.f32.mrf.mxu0
        %5558 = vmatprep.mubr.f32.mxu0 0.0
        %5559 = vmatmul.mubr.f32.gmra.mxu0 %v3944
        %v5560 = vpop.f32.mrf.mxu0
        %v5561 = vadd.f32 0.0, %v5560
        %v5562 = vpop.f32.mrf.mxu0
        %5563 = vmatprep.mubr.f32.mxu0 0.0
        %5564 = vmatmul.mubr.f32.gmra.mxu0 %v3946
        %v5565 = vpop.f32.mrf.mxu0
        %v5566 = vadd.f32 0.0, %v5565
        %v5567 = vpop.f32.mrf.mxu0
        %5568 = vmatprep.mubr.f32.mxu0 0.0
        %5569 = vmatmul.mubr.f32.gmra.mxu0 %v3948
        %v5570 = vpop.f32.mrf.mxu0
        %v5571 = vadd.f32 0.0, %v5570
        %v5572 = vpop.f32.mrf.mxu0
        %5573 = vmatprep.mubr.f32.mxu0 0.0
        %5574 = vmatmul.mubr.f32.gmra.mxu0 %v3950
        %v5575 = vpop.f32.mrf.mxu0
        %v5576 = vadd.f32 0.0, %v5575
        %v5577 = vpop.f32.mrf.mxu0
        %5578 = vmatprep.mubr.f32.mxu0 0.0
        %5579 = vmatmul.mubr.f32.gmra.mxu0 %v3952
        %v5580 = vpop.f32.mrf.mxu0
        %v5581 = vadd.f32 0.0, %v5580
        %v5582 = vpop.f32.mrf.mxu0
        %5583 = vmatprep.mubr.f32.mxu0 0.0
        %5584 = vmatmul.mubr.f32.gmra.mxu0 %v3954
        %v5585 = vpop.f32.mrf.mxu0
        %v5586 = vadd.f32 0.0, %v5585
        %v5587 = vpop.f32.mrf.mxu0
        %5588 = vmatprep.mubr.f32.mxu0 0.0
        %5589 = vmatmul.mubr.f32.gmra.mxu0 %v4583
        %v5590 = vpop.f32.mrf.mxu0
        %v5591 = vadd.f32 0.0, %v5590
        %v5592 = vpop.f32.mrf.mxu0
        %5593 = vmatprep.mubr.f32.mxu0 0.0
        %5594 = vmatmul.mubr.f32.gmra.mxu0 %v4586
        %v5595 = vpop.f32.mrf.mxu0
        %v5596 = vadd.f32 0.0, %v5595
        %v5597 = vpop.f32.mrf.mxu0
        %5598 = vmatprep.mubr.f32.mxu0 0.0
        %5599 = vmatmul.mubr.f32.gmra.mxu0 %v5379
        %v5600 = vpop.f32.mrf.mxu0
        %v5601 = vadd.f32 0.0, %v5600
        %v5602 = vpop.f32.mrf.mxu0
        %5603 = vmatprep.mubr.f32.mxu0 0.0
        %5604 = vmatmul.mubr.f32.gmra.mxu0 %v5382
        %v5605 = vpop.f32.mrf.mxu0
        %v5606 = vadd.f32 0.0, %v5605
        %v5607 = vpop.f32.mrf.mxu0
        %5608 = vdwg.mxu0
        %v5609 = vadd.f32 %v5346, %v5451
        %v5610 = vadd.f32 %v5347, %v5456
        %v5611 = vadd.f32 %v5348, %v5461
        %v5612 = vadd.f32 %v5349, %v5466
        %v5613 = vadd.f32 %v5350, %v5471
        %v5614 = vadd.f32 %v5351, %v5476
        %v5615 = vadd.f32 %v5352, %v5481
        %v5616 = vadd.f32 %v5353, %v5486
        %v5617 = vadd.f32 %v5354, %v5491
        %v5618 = vadd.f32 %v5355, %v5496
        %v5619 = vadd.f32 %v5356, %v5501
        %v5620 = vadd.f32 %v5357, %v5506
        %v5621 = vadd.f32 %v5358, %v5511
        %v5622 = vadd.f32 %v5359, %v5516
        %v5623 = vadd.f32 %v5360, %v5521
        %v5624 = vadd.f32 %v5361, %v5526
        %v5625 = vadd.f32 %v5362, %v5531
        %v5626 = vadd.f32 %v5363, %v5536
        %v5627 = vadd.f32 %v5364, %v5541
        %v5628 = vadd.f32 %v5365, %v5546
        %v5629 = vadd.f32 %v5366, %v5551
        %v5630 = vadd.f32 %v5367, %v5556
        %v5631 = vadd.f32 %v5368, %v5561
        %v5632 = vadd.f32 %v5369, %v5566
        %v5633 = vadd.f32 %v5370, %v5571
        %v5634 = vadd.f32 %v5371, %v5576
        %v5635 = vadd.f32 %v5372, %v5581
        %v5636 = vadd.f32 %v5373, %v5586
        %v5637 = vadd.f32 %v5374, %v5591
        %v5638 = vadd.f32 %v5375, %v5596
        %v5639 = vadd.f32 %v5376, %v5601
        %v5640 = vadd.f32 %v5377, %v5606
        %v5642 = vrot.slane %v3400, 1
        %v5643 = vrot.slane %v3401, 1
        %v5644 = vsel %vm496, %v5642, %v5643
        %v5645 = vrot.slane %v3402, 1
        %v5646 = vsel %vm496, %v5643, %v5645
        %v5647 = vsel %vm3260, %v5644, 0
        %v5649 = vsel %vm3260, %v5646, 0
        %5651 = vmatprep.subr.mxu0 0.0
        %5652 = vmatpush1.msra.mxu0 0.0
        %5653 = vmatprep.subr.mxu0 0.0
        %5654 = vmatpush1.msra.mxu0 0.0
        %5655 = vmatprep.subr.mxu0 0.0
        %5656 = vmatpush1.msra.mxu0 0.0
        %5657 = vmatprep.subr.mxu0 0.0
        %5658 = vmatpush1.msra.mxu0 0.0
        %5659 = vmatprep.subr.mxu0 0.0
        %5660 = vmatpush1.msra.mxu0 0.0
        %5661 = vmatprep.subr.mxu0 0.0
        %5662 = vmatpush1.msra.mxu0 0.0
        %5663 = vmatprep.subr.mxu0 0.0
        %5664 = vmatpush1.msra.mxu0 0.0
        %5665 = vmatprep.subr.mxu0 0.0
        %5666 = vmatpush1.msra.mxu0 0.0
        %5667 = vmatprep.subr.mxu0 0.0
        %5668 = vmatpush1.msra.mxu0 %v3466
        %5669 = vmatprep.subr.mxu0 0.0
        %5670 = vmatpush1.msra.mxu0 %v3465
        %5671 = vmatprep.subr.mxu0 0.0
        %5672 = vmatpush1.msra.mxu0 %v3464
        %5673 = vmatprep.subr.mxu0 0.0
        %5674 = vmatpush1.msra.mxu0 %v3463
        %5675 = vmatprep.subr.mxu0 0.0
        %5676 = vmatpush1.msra.mxu0 %v3462
        %5677 = vmatprep.subr.mxu0 0.0
        %5678 = vmatpush1.msra.mxu0 %v3461
        %5679 = vmatprep.subr.mxu0 0.0
        %5680 = vmatpush1.msra.mxu0 %v3460
        %5681 = vmatprep.subr.mxu0 0.0
        %5682 = vmatpush1.msra.mxu0 %v3459
        %5683 = vmatprep.subr.mxu0 0.0
        %5684 = vmatpush2.msra.mxu0 0.0
        %5685 = vmatprep.subr.mxu0 0.0
        %5686 = vmatpush2.msra.mxu0 0.0
        %5687 = vmatprep.subr.mxu0 0.0
        %5688 = vmatpush2.msra.mxu0 0.0
        %5689 = vmatprep.subr.mxu0 0.0
        %5690 = vmatpush2.msra.mxu0 0.0
        %5691 = vmatprep.subr.mxu0 0.0
        %5692 = vmatpush2.msra.mxu0 0.0
        %5693 = vmatprep.subr.mxu0 0.0
        %5694 = vmatpush2.msra.mxu0 0.0
        %5695 = vmatprep.subr.mxu0 0.0
        %5696 = vmatpush2.msra.mxu0 0.0
        %5697 = vmatprep.subr.mxu0 0.0
        %5698 = vmatpush2.msra.mxu0 0.0
        %5699 = vmatprep.subr.mxu0 0.0
        %5700 = vmatpush2.msra.mxu0 0.0
        %5701 = vmatprep.subr.mxu0 0.0
        %5702 = vmatpush2.msra.mxu0 0.0
        %5703 = vmatprep.subr.mxu0 0.0
        %5704 = vmatpush2.msra.mxu0 0.0
        %5705 = vmatprep.subr.mxu0 0.0
        %5706 = vmatpush2.msra.mxu0 0.0
        %5707 = vmatprep.subr.mxu0 0.0
        %5708 = vmatpush2.msra.mxu0 0.0
        %5709 = vmatprep.subr.mxu0 0.0
        %5710 = vmatpush2.msra.mxu0 0.0
        %5711 = vmatprep.subr.mxu0 0.0
        %5712 = vmatpush2.msra.mxu0 0.0
        %5713 = vmatprep.subr.mxu0 0.0
        %5714 = vmatpush2.msra.mxu0 0.0
        %5715 = vmatprep.mubr.f32.mxu0 0.0
        %5716 = vmatmul.mubr.f32.gmra.mxu0 %v3611
        %v5717 = vpop.f32.mrf.mxu0
        %v5718 = vadd.f32 0.0, %v5717
        %v5719 = vpop.f32.mrf.mxu0
        %5720 = vmatprep.mubr.f32.mxu0 0.0
        %5721 = vmatmul.mubr.f32.gmra.mxu0 %v3613
        %v5722 = vpop.f32.mrf.mxu0
        %v5723 = vadd.f32 0.0, %v5722
        %v5724 = vpop.f32.mrf.mxu0
        %5725 = vmatprep.mubr.f32.mxu0 0.0
        %5726 = vmatmul.mubr.f32.gmra.mxu0 %v3615
        %v5727 = vpop.f32.mrf.mxu0
        %v5728 = vadd.f32 0.0, %v5727
        %v5729 = vpop.f32.mrf.mxu0
        %5730 = vmatprep.mubr.f32.mxu0 0.0
        %5731 = vmatmul.mubr.f32.gmra.mxu0 %v3617
        %v5732 = vpop.f32.mrf.mxu0
        %v5733 = vadd.f32 0.0, %v5732
        %v5734 = vpop.f32.mrf.mxu0
        %5735 = vmatprep.mubr.f32.mxu0 0.0
        %5736 = vmatmul.mubr.f32.gmra.mxu0 %v3619
        %v5737 = vpop.f32.mrf.mxu0
        %v5738 = vadd.f32 0.0, %v5737
        %v5739 = vpop.f32.mrf.mxu0
        %5740 = vmatprep.mubr.f32.mxu0 0.0
        %5741 = vmatmul.mubr.f32.gmra.mxu0 %v3621
        %v5742 = vpop.f32.mrf.mxu0
        %v5743 = vadd.f32 0.0, %v5742
        %v5744 = vpop.f32.mrf.mxu0
        %5745 = vmatprep.mubr.f32.mxu0 0.0
        %5746 = vmatmul.mubr.f32.gmra.mxu0 %v3623
        %v5747 = vpop.f32.mrf.mxu0
        %v5748 = vadd.f32 0.0, %v5747
        %v5749 = vpop.f32.mrf.mxu0
        %5750 = vmatprep.mubr.f32.mxu0 0.0
        %5751 = vmatmul.mubr.f32.gmra.mxu0 %v3625
        %v5752 = vpop.f32.mrf.mxu0
        %v5753 = vadd.f32 0.0, %v5752
        %v5754 = vpop.f32.mrf.mxu0
        %5755 = vmatprep.mubr.f32.mxu0 0.0
        %5756 = vmatmul.mubr.f32.gmra.mxu0 %v3627
        %v5757 = vpop.f32.mrf.mxu0
        %v5758 = vadd.f32 0.0, %v5757
        %v5759 = vpop.f32.mrf.mxu0
        %5760 = vmatprep.mubr.f32.mxu0 0.0
        %5761 = vmatmul.mubr.f32.gmra.mxu0 %v3629
        %v5762 = vpop.f32.mrf.mxu0
        %v5763 = vadd.f32 0.0, %v5762
        %v5764 = vpop.f32.mrf.mxu0
        %5765 = vmatprep.mubr.f32.mxu0 0.0
        %5766 = vmatmul.mubr.f32.gmra.mxu0 %v3631
        %v5767 = vpop.f32.mrf.mxu0
        %v5768 = vadd.f32 0.0, %v5767
        %v5769 = vpop.f32.mrf.mxu0
        %5770 = vmatprep.mubr.f32.mxu0 0.0
        %5771 = vmatmul.mubr.f32.gmra.mxu0 %v3633
        %v5772 = vpop.f32.mrf.mxu0
        %v5773 = vadd.f32 0.0, %v5772
        %v5774 = vpop.f32.mrf.mxu0
        %5775 = vmatprep.mubr.f32.mxu0 0.0
        %5776 = vmatmul.mubr.f32.gmra.mxu0 %v3635
        %v5777 = vpop.f32.mrf.mxu0
        %v5778 = vadd.f32 0.0, %v5777
        %v5779 = vpop.f32.mrf.mxu0
        %5780 = vmatprep.mubr.f32.mxu0 0.0
        %5781 = vmatmul.mubr.f32.gmra.mxu0 %v3637
        %v5782 = vpop.f32.mrf.mxu0
        %v5783 = vadd.f32 0.0, %v5782
        %v5784 = vpop.f32.mrf.mxu0
        %5785 = vmatprep.mubr.f32.mxu0 0.0
        %5786 = vmatmul.mubr.f32.gmra.mxu0 %v3639
        %v5787 = vpop.f32.mrf.mxu0
        %v5788 = vadd.f32 0.0, %v5787
        %v5789 = vpop.f32.mrf.mxu0
        %5790 = vmatprep.mubr.f32.mxu0 0.0
        %5791 = vmatmul.mubr.f32.gmra.mxu0 %v3641
        %v5792 = vpop.f32.mrf.mxu0
        %v5793 = vadd.f32 0.0, %v5792
        %v5794 = vpop.f32.mrf.mxu0
        %5795 = vmatprep.mubr.f32.mxu0 0.0
        %5796 = vmatmul.mubr.f32.gmra.mxu0 %v3643
        %v5797 = vpop.f32.mrf.mxu0
        %v5798 = vadd.f32 0.0, %v5797
        %v5799 = vpop.f32.mrf.mxu0
        %5800 = vmatprep.mubr.f32.mxu0 0.0
        %5801 = vmatmul.mubr.f32.gmra.mxu0 %v3645
        %v5802 = vpop.f32.mrf.mxu0
        %v5803 = vadd.f32 0.0, %v5802
        %v5804 = vpop.f32.mrf.mxu0
        %5805 = vmatprep.mubr.f32.mxu0 0.0
        %5806 = vmatmul.mubr.f32.gmra.mxu0 %v3647
        %v5807 = vpop.f32.mrf.mxu0
        %v5808 = vadd.f32 0.0, %v5807
        %v5809 = vpop.f32.mrf.mxu0
        %5810 = vmatprep.mubr.f32.mxu0 0.0
        %5811 = vmatmul.mubr.f32.gmra.mxu0 %v3649
        %v5812 = vpop.f32.mrf.mxu0
        %v5813 = vadd.f32 0.0, %v5812
        %v5814 = vpop.f32.mrf.mxu0
        %5815 = vmatprep.mubr.f32.mxu0 0.0
        %5816 = vmatmul.mubr.f32.gmra.mxu0 %v3651
        %v5817 = vpop.f32.mrf.mxu0
        %v5818 = vadd.f32 0.0, %v5817
        %v5819 = vpop.f32.mrf.mxu0
        %5820 = vmatprep.mubr.f32.mxu0 0.0
        %5821 = vmatmul.mubr.f32.gmra.mxu0 %v3653
        %v5822 = vpop.f32.mrf.mxu0
        %v5823 = vadd.f32 0.0, %v5822
        %v5824 = vpop.f32.mrf.mxu0
        %5825 = vmatprep.mubr.f32.mxu0 0.0
        %5826 = vmatmul.mubr.f32.gmra.mxu0 %v3655
        %v5827 = vpop.f32.mrf.mxu0
        %v5828 = vadd.f32 0.0, %v5827
        %v5829 = vpop.f32.mrf.mxu0
        %5830 = vmatprep.mubr.f32.mxu0 0.0
        %5831 = vmatmul.mubr.f32.gmra.mxu0 %v3657
        %v5832 = vpop.f32.mrf.mxu0
        %v5833 = vadd.f32 0.0, %v5832
        %v5834 = vpop.f32.mrf.mxu0
        %5835 = vmatprep.mubr.f32.mxu0 0.0
        %5836 = vmatmul.mubr.f32.gmra.mxu0 %v3659
        %v5837 = vpop.f32.mrf.mxu0
        %v5838 = vadd.f32 0.0, %v5837
        %v5839 = vpop.f32.mrf.mxu0
        %5840 = vmatprep.mubr.f32.mxu0 0.0
        %5841 = vmatmul.mubr.f32.gmra.mxu0 %v3661
        %v5842 = vpop.f32.mrf.mxu0
        %v5843 = vadd.f32 0.0, %v5842
        %v5844 = vpop.f32.mrf.mxu0
        %5845 = vmatprep.mubr.f32.mxu0 0.0
        %5846 = vmatmul.mubr.f32.gmra.mxu0 %v3663
        %v5847 = vpop.f32.mrf.mxu0
        %v5848 = vadd.f32 0.0, %v5847
        %v5849 = vpop.f32.mrf.mxu0
        %5850 = vmatprep.mubr.f32.mxu0 0.0
        %5851 = vmatmul.mubr.f32.gmra.mxu0 %v3665
        %v5852 = vpop.f32.mrf.mxu0
        %v5853 = vadd.f32 0.0, %v5852
        %v5854 = vpop.f32.mrf.mxu0
        %5855 = vmatprep.mubr.f32.mxu0 0.0
        %5856 = vmatmul.mubr.f32.gmra.mxu0 %v4851
        %v5857 = vpop.f32.mrf.mxu0
        %v5858 = vadd.f32 0.0, %v5857
        %v5859 = vpop.f32.mrf.mxu0
        %5860 = vmatprep.mubr.f32.mxu0 0.0
        %5861 = vmatmul.mubr.f32.gmra.mxu0 %v4853
        %v5862 = vpop.f32.mrf.mxu0
        %v5863 = vadd.f32 0.0, %v5862
        %v5864 = vpop.f32.mrf.mxu0
        %5865 = vmatprep.mubr.f32.mxu0 0.0
        %5866 = vmatmul.mubr.f32.gmra.mxu0 %v5647
        %v5867 = vpop.f32.mrf.mxu0
        %v5868 = vadd.f32 0.0, %v5867
        %v5869 = vpop.f32.mrf.mxu0
        %5870 = vmatprep.mubr.f32.mxu0 0.0
        %5871 = vmatmul.mubr.f32.gmra.mxu0 %v5649
        %v5872 = vpop.f32.mrf.mxu0
        %v5873 = vadd.f32 0.0, %v5872
        %v5874 = vpop.f32.mrf.mxu0
        %5875 = vdwg.mxu0
        %v5876 = vadd.f32 %v5609, %v5718
        %v5877 = vadd.f32 %v5610, %v5723
        %v5878 = vadd.f32 %v5611, %v5728
        %v5879 = vadd.f32 %v5612, %v5733
        %v5880 = vadd.f32 %v5613, %v5738
        %v5881 = vadd.f32 %v5614, %v5743
        %v5882 = vadd.f32 %v5615, %v5748
        %v5883 = vadd.f32 %v5616, %v5753
        %v5884 = vadd.f32 %v5617, %v5758
        %v5885 = vadd.f32 %v5618, %v5763
        %v5886 = vadd.f32 %v5619, %v5768
        %v5887 = vadd.f32 %v5620, %v5773
        %v5888 = vadd.f32 %v5621, %v5778
        %v5889 = vadd.f32 %v5622, %v5783
        %v5890 = vadd.f32 %v5623, %v5788
        %v5891 = vadd.f32 %v5624, %v5793
        %v5892 = vadd.f32 %v5625, %v5798
        %v5893 = vadd.f32 %v5626, %v5803
        %v5894 = vadd.f32 %v5627, %v5808
        %v5895 = vadd.f32 %v5628, %v5813
        %v5896 = vadd.f32 %v5629, %v5818
        %v5897 = vadd.f32 %v5630, %v5823
        %v5898 = vadd.f32 %v5631, %v5828
        %v5899 = vadd.f32 %v5632, %v5833
        %v5900 = vadd.f32 %v5633, %v5838
        %v5901 = vadd.f32 %v5634, %v5843
        %v5902 = vadd.f32 %v5635, %v5848
        %v5903 = vadd.f32 %v5636, %v5853
        %v5904 = vadd.f32 %v5637, %v5858
        %v5905 = vadd.f32 %v5638, %v5863
        %v5906 = vadd.f32 %v5639, %v5868
        %v5907 = vadd.f32 %v5640, %v5873
        %v5908 = vrot.slane %v3400, 2
        %v5909 = vrot.slane %v3401, 2
        %v5910 = vsel %vm1156, %v5908, %v5909
        %v5911 = vrot.slane %v3402, 2
        %v5912 = vsel %vm1156, %v5909, %v5911
        %v5913 = vsel %vm3260, %v5910, 0
        %v5915 = vsel %vm3260, %v5912, 0
        %5917 = vmatprep.subr.mxu0 0.0
        %5918 = vmatpush1.msra.mxu0 0.0
        %5919 = vmatprep.subr.mxu0 0.0
        %5920 = vmatpush1.msra.mxu0 0.0
        %5921 = vmatprep.subr.mxu0 0.0
        %5922 = vmatpush1.msra.mxu0 0.0
        %5923 = vmatprep.subr.mxu0 0.0
        %5924 = vmatpush1.msra.mxu0 0.0
        %5925 = vmatprep.subr.mxu0 0.0
        %5926 = vmatpush1.msra.mxu0 0.0
        %5927 = vmatprep.subr.mxu0 0.0
        %5928 = vmatpush1.msra.mxu0 0.0
        %5929 = vmatprep.subr.mxu0 0.0
        %5930 = vmatpush1.msra.mxu0 0.0
        %5931 = vmatprep.subr.mxu0 0.0
        %5932 = vmatpush1.msra.mxu0 0.0
        %5933 = vmatprep.subr.mxu0 0.0
        %5934 = vmatpush1.msra.mxu0 %v3474
        %5935 = vmatprep.subr.mxu0 0.0
        %5936 = vmatpush1.msra.mxu0 %v3473
        %5937 = vmatprep.subr.mxu0 0.0
        %5938 = vmatpush1.msra.mxu0 %v3472
        %5939 = vmatprep.subr.mxu0 0.0
        %5940 = vmatpush1.msra.mxu0 %v3471
        %5941 = vmatprep.subr.mxu0 0.0
        %5942 = vmatpush1.msra.mxu0 %v3470
        %5943 = vmatprep.subr.mxu0 0.0
        %5944 = vmatpush1.msra.mxu0 %v3469
        %5945 = vmatprep.subr.mxu0 0.0
        %5946 = vmatpush1.msra.mxu0 %v3468
        %5947 = vmatprep.subr.mxu0 0.0
        %5948 = vmatpush1.msra.mxu0 %v3467
        %5949 = vmatprep.subr.mxu0 0.0
        %5950 = vmatpush2.msra.mxu0 0.0
        %5951 = vmatprep.subr.mxu0 0.0
        %5952 = vmatpush2.msra.mxu0 0.0
        %5953 = vmatprep.subr.mxu0 0.0
        %5954 = vmatpush2.msra.mxu0 0.0
        %5955 = vmatprep.subr.mxu0 0.0
        %5956 = vmatpush2.msra.mxu0 0.0
        %5957 = vmatprep.subr.mxu0 0.0
        %5958 = vmatpush2.msra.mxu0 0.0
        %5959 = vmatprep.subr.mxu0 0.0
        %5960 = vmatpush2.msra.mxu0 0.0
        %5961 = vmatprep.subr.mxu0 0.0
        %5962 = vmatpush2.msra.mxu0 0.0
        %5963 = vmatprep.subr.mxu0 0.0
        %5964 = vmatpush2.msra.mxu0 0.0
        %5965 = vmatprep.subr.mxu0 0.0
        %5966 = vmatpush2.msra.mxu0 0.0
        %5967 = vmatprep.subr.mxu0 0.0
        %5968 = vmatpush2.msra.mxu0 0.0
        %5969 = vmatprep.subr.mxu0 0.0
        %5970 = vmatpush2.msra.mxu0 0.0
        %5971 = vmatprep.subr.mxu0 0.0
        %5972 = vmatpush2.msra.mxu0 0.0
        %5973 = vmatprep.subr.mxu0 0.0
        %5974 = vmatpush2.msra.mxu0 0.0
        %5975 = vmatprep.subr.mxu0 0.0
        %5976 = vmatpush2.msra.mxu0 0.0
        %5977 = vmatprep.subr.mxu0 0.0
        %5978 = vmatpush2.msra.mxu0 0.0
        %5979 = vmatprep.subr.mxu0 0.0
        %5980 = vmatpush2.msra.mxu0 0.0
        %5981 = vmatprep.mubr.f32.mxu0 0.0
        %5982 = vmatmul.mubr.f32.gmra.mxu0 %v4269
        %v5983 = vpop.f32.mrf.mxu0
        %v5984 = vadd.f32 0.0, %v5983
        %v5985 = vpop.f32.mrf.mxu0
        %5986 = vmatprep.mubr.f32.mxu0 0.0
        %5987 = vmatmul.mubr.f32.gmra.mxu0 %v4271
        %v5988 = vpop.f32.mrf.mxu0
        %v5989 = vadd.f32 0.0, %v5988
        %v5990 = vpop.f32.mrf.mxu0
        %5991 = vmatprep.mubr.f32.mxu0 0.0
        %5992 = vmatmul.mubr.f32.gmra.mxu0 %v4273
        %v5993 = vpop.f32.mrf.mxu0
        %v5994 = vadd.f32 0.0, %v5993
        %v5995 = vpop.f32.mrf.mxu0
        %5996 = vmatprep.mubr.f32.mxu0 0.0
        %5997 = vmatmul.mubr.f32.gmra.mxu0 %v4275
        %v5998 = vpop.f32.mrf.mxu0
        %v5999 = vadd.f32 0.0, %v5998
        %v6000 = vpop.f32.mrf.mxu0
        %6001 = vmatprep.mubr.f32.mxu0 0.0
        %6002 = vmatmul.mubr.f32.gmra.mxu0 %v4277
        %v6003 = vpop.f32.mrf.mxu0
        %v6004 = vadd.f32 0.0, %v6003
        %v6005 = vpop.f32.mrf.mxu0
        %6006 = vmatprep.mubr.f32.mxu0 0.0
        %6007 = vmatmul.mubr.f32.gmra.mxu0 %v4279
        %v6008 = vpop.f32.mrf.mxu0
        %v6009 = vadd.f32 0.0, %v6008
        %v6010 = vpop.f32.mrf.mxu0
        %6011 = vmatprep.mubr.f32.mxu0 0.0
        %6012 = vmatmul.mubr.f32.gmra.mxu0 %v4281
        %v6013 = vpop.f32.mrf.mxu0
        %v6014 = vadd.f32 0.0, %v6013
        %v6015 = vpop.f32.mrf.mxu0
        %6016 = vmatprep.mubr.f32.mxu0 0.0
        %6017 = vmatmul.mubr.f32.gmra.mxu0 %v4283
        %v6018 = vpop.f32.mrf.mxu0
        %v6019 = vadd.f32 0.0, %v6018
        %v6020 = vpop.f32.mrf.mxu0
        %6021 = vmatprep.mubr.f32.mxu0 0.0
        %6022 = vmatmul.mubr.f32.gmra.mxu0 %v4285
        %v6023 = vpop.f32.mrf.mxu0
        %v6024 = vadd.f32 0.0, %v6023
        %v6025 = vpop.f32.mrf.mxu0
        %6026 = vmatprep.mubr.f32.mxu0 0.0
        %6027 = vmatmul.mubr.f32.gmra.mxu0 %v4287
        %v6028 = vpop.f32.mrf.mxu0
        %v6029 = vadd.f32 0.0, %v6028
        %v6030 = vpop.f32.mrf.mxu0
        %6031 = vmatprep.mubr.f32.mxu0 0.0
        %6032 = vmatmul.mubr.f32.gmra.mxu0 %v4289
        %v6033 = vpop.f32.mrf.mxu0
        %v6034 = vadd.f32 0.0, %v6033
        %v6035 = vpop.f32.mrf.mxu0
        %6036 = vmatprep.mubr.f32.mxu0 0.0
        %6037 = vmatmul.mubr.f32.gmra.mxu0 %v4291
        %v6038 = vpop.f32.mrf.mxu0
        %v6039 = vadd.f32 0.0, %v6038
        %v6040 = vpop.f32.mrf.mxu0
        %6041 = vmatprep.mubr.f32.mxu0 0.0
        %6042 = vmatmul.mubr.f32.gmra.mxu0 %v4293
        %v6043 = vpop.f32.mrf.mxu0
        %v6044 = vadd.f32 0.0, %v6043
        %v6045 = vpop.f32.mrf.mxu0
        %6046 = vmatprep.mubr.f32.mxu0 0.0
        %6047 = vmatmul.mubr.f32.gmra.mxu0 %v4295
        %v6048 = vpop.f32.mrf.mxu0
        %v6049 = vadd.f32 0.0, %v6048
        %v6050 = vpop.f32.mrf.mxu0
        %6051 = vmatprep.mubr.f32.mxu0 0.0
        %6052 = vmatmul.mubr.f32.gmra.mxu0 %v4297
        %v6053 = vpop.f32.mrf.mxu0
        %v6054 = vadd.f32 0.0, %v6053
        %v6055 = vpop.f32.mrf.mxu0
        %6056 = vmatprep.mubr.f32.mxu0 0.0
        %6057 = vmatmul.mubr.f32.gmra.mxu0 %v4299
        %v6058 = vpop.f32.mrf.mxu0
        %v6059 = vadd.f32 0.0, %v6058
        %v6060 = vpop.f32.mrf.mxu0
        %6061 = vmatprep.mubr.f32.mxu0 0.0
        %6062 = vmatmul.mubr.f32.gmra.mxu0 %v4301
        %v6063 = vpop.f32.mrf.mxu0
        %v6064 = vadd.f32 0.0, %v6063
        %v6065 = vpop.f32.mrf.mxu0
        %6066 = vmatprep.mubr.f32.mxu0 0.0
        %6067 = vmatmul.mubr.f32.gmra.mxu0 %v4303
        %v6068 = vpop.f32.mrf.mxu0
        %v6069 = vadd.f32 0.0, %v6068
        %v6070 = vpop.f32.mrf.mxu0
        %6071 = vmatprep.mubr.f32.mxu0 0.0
        %6072 = vmatmul.mubr.f32.gmra.mxu0 %v4305
        %v6073 = vpop.f32.mrf.mxu0
        %v6074 = vadd.f32 0.0, %v6073
        %v6075 = vpop.f32.mrf.mxu0
        %6076 = vmatprep.mubr.f32.mxu0 0.0
        %6077 = vmatmul.mubr.f32.gmra.mxu0 %v4307
        %v6078 = vpop.f32.mrf.mxu0
        %v6079 = vadd.f32 0.0, %v6078
        %v6080 = vpop.f32.mrf.mxu0
        %6081 = vmatprep.mubr.f32.mxu0 0.0
        %6082 = vmatmul.mubr.f32.gmra.mxu0 %v4309
        %v6083 = vpop.f32.mrf.mxu0
        %v6084 = vadd.f32 0.0, %v6083
        %v6085 = vpop.f32.mrf.mxu0
        %6086 = vmatprep.mubr.f32.mxu0 0.0
        %6087 = vmatmul.mubr.f32.gmra.mxu0 %v4311
        %v6088 = vpop.f32.mrf.mxu0
        %v6089 = vadd.f32 0.0, %v6088
        %v6090 = vpop.f32.mrf.mxu0
        %6091 = vmatprep.mubr.f32.mxu0 0.0
        %6092 = vmatmul.mubr.f32.gmra.mxu0 %v4313
        %v6093 = vpop.f32.mrf.mxu0
        %v6094 = vadd.f32 0.0, %v6093
        %v6095 = vpop.f32.mrf.mxu0
        %6096 = vmatprep.mubr.f32.mxu0 0.0
        %6097 = vmatmul.mubr.f32.gmra.mxu0 %v4315
        %v6098 = vpop.f32.mrf.mxu0
        %v6099 = vadd.f32 0.0, %v6098
        %v6100 = vpop.f32.mrf.mxu0
        %6101 = vmatprep.mubr.f32.mxu0 0.0
        %6102 = vmatmul.mubr.f32.gmra.mxu0 %v4317
        %v6103 = vpop.f32.mrf.mxu0
        %v6104 = vadd.f32 0.0, %v6103
        %v6105 = vpop.f32.mrf.mxu0
        %6106 = vmatprep.mubr.f32.mxu0 0.0
        %6107 = vmatmul.mubr.f32.gmra.mxu0 %v4319
        %v6108 = vpop.f32.mrf.mxu0
        %v6109 = vadd.f32 0.0, %v6108
        %v6110 = vpop.f32.mrf.mxu0
        %6111 = vmatprep.mubr.f32.mxu0 0.0
        %6112 = vmatmul.mubr.f32.gmra.mxu0 %v4321
        %v6113 = vpop.f32.mrf.mxu0
        %v6114 = vadd.f32 0.0, %v6113
        %v6115 = vpop.f32.mrf.mxu0
        %6116 = vmatprep.mubr.f32.mxu0 0.0
        %6117 = vmatmul.mubr.f32.gmra.mxu0 %v4323
        %v6118 = vpop.f32.mrf.mxu0
        %v6119 = vadd.f32 0.0, %v6118
        %v6120 = vpop.f32.mrf.mxu0
        %6121 = vmatprep.mubr.f32.mxu0 0.0
        %6122 = vmatmul.mubr.f32.gmra.mxu0 %v5117
        %v6123 = vpop.f32.mrf.mxu0
        %v6124 = vadd.f32 0.0, %v6123
        %v6125 = vpop.f32.mrf.mxu0
        %6126 = vmatprep.mubr.f32.mxu0 0.0
        %6127 = vmatmul.mubr.f32.gmra.mxu0 %v5119
        %v6128 = vpop.f32.mrf.mxu0
        %v6129 = vadd.f32 0.0, %v6128
        %v6130 = vpop.f32.mrf.mxu0
        %6131 = vmatprep.mubr.f32.mxu0 0.0
        %6132 = vmatmul.mubr.f32.gmra.mxu0 %v5913
        %v6133 = vpop.f32.mrf.mxu0
        %v6134 = vadd.f32 0.0, %v6133
        %v6135 = vpop.f32.mrf.mxu0
        %6136 = vmatprep.mubr.f32.mxu0 0.0
        %6137 = vmatmul.mubr.f32.gmra.mxu0 %v5915
        %v6138 = vpop.f32.mrf.mxu0
        %v6139 = vadd.f32 0.0, %v6138
        %v6140 = vpop.f32.mrf.mxu0
        %6141 = vdwg.mxu0
        %v6142 = vadd.f32 %v5876, %v5984
        %v6143 = vadd.f32 %v5877, %v5989
        %v6144 = vadd.f32 %v5878, %v5994
        %v6145 = vadd.f32 %v5879, %v5999
        %v6146 = vadd.f32 %v5880, %v6004
        %v6147 = vadd.f32 %v5881, %v6009
        %v6148 = vadd.f32 %v5882, %v6014
        %v6149 = vadd.f32 %v5883, %v6019
        %v6150 = vadd.f32 %v5884, %v6024
        %v6151 = vadd.f32 %v5885, %v6029
        %v6152 = vadd.f32 %v5886, %v6034
        %v6153 = vadd.f32 %v5887, %v6039
        %v6154 = vadd.f32 %v5888, %v6044
        %v6155 = vadd.f32 %v5889, %v6049
        %v6156 = vadd.f32 %v5890, %v6054
        %v6157 = vadd.f32 %v5891, %v6059
        %v6158 = vadd.f32 %v5892, %v6064
        %v6159 = vadd.f32 %v5893, %v6069
        %v6160 = vadd.f32 %v5894, %v6074
        %v6161 = vadd.f32 %v5895, %v6079
        %v6162 = vadd.f32 %v5896, %v6084
        %v6163 = vadd.f32 %v5897, %v6089
        %v6164 = vadd.f32 %v5898, %v6094
        %v6165 = vadd.f32 %v5899, %v6099
        %v6166 = vadd.f32 %v5900, %v6104
        %v6167 = vadd.f32 %v5901, %v6109
        %v6168 = vadd.f32 %v5902, %v6114
        %v6169 = vadd.f32 %v5903, %v6119
        %v6170 = vadd.f32 %v5904, %v6124
        %v6171 = vadd.f32 %v5905, %v6129
        %v6172 = vadd.f32 %v5906, %v6134
        %v6173 = vadd.f32 %v5907, %v6139
        %v6174 = vld [vmem:[%s5] sm:$0x1]
        %v6176 = vlaneseq
        %v6177 = vshrl.u32 %v6176, 7
        %v6178 = vsub.s32 0, %v6177
        %v6179 = vrot.slane %v6174, %v6178
        %v6181 = vmul.f32 %v6142, %v6179
        %v6182 = vmul.f32 %v6143, %v6179
        %v6183 = vmul.f32 %v6144, %v6179
        %v6184 = vmul.f32 %v6145, %v6179
        %v6185 = vmul.f32 %v6146, %v6179
        %v6186 = vmul.f32 %v6147, %v6179
        %v6187 = vmul.f32 %v6148, %v6179
        %v6188 = vmul.f32 %v6149, %v6179
        %v6189 = vmul.f32 %v6150, %v6179
        %v6190 = vmul.f32 %v6151, %v6179
        %v6191 = vmul.f32 %v6152, %v6179
        %v6192 = vmul.f32 %v6153, %v6179
        %v6193 = vmul.f32 %v6154, %v6179
        %v6194 = vmul.f32 %v6155, %v6179
        %v6195 = vmul.f32 %v6156, %v6179
        %v6196 = vmul.f32 %v6157, %v6179
        %v6197 = vmul.f32 %v6158, %v6179
        %v6198 = vmul.f32 %v6159, %v6179
        %v6199 = vmul.f32 %v6160, %v6179
        %v6200 = vmul.f32 %v6161, %v6179
        %v6201 = vmul.f32 %v6162, %v6179
        %v6202 = vmul.f32 %v6163, %v6179
        %v6203 = vmul.f32 %v6164, %v6179
        %v6204 = vmul.f32 %v6165, %v6179
        %v6205 = vmul.f32 %v6166, %v6179
        %v6206 = vmul.f32 %v6167, %v6179
        %v6207 = vmul.f32 %v6168, %v6179
        %v6208 = vmul.f32 %v6169, %v6179
        %v6209 = vmul.f32 %v6170, %v6179
        %v6210 = vmul.f32 %v6171, %v6179
        %v6211 = vmul.f32 %v6172, %v6179
        %v6212 = vmul.f32 %v6173, %v6179
        %v6213 = vld [vmem:[%s6] sm:$0x1]
        %v6215 = vlaneseq
        %v6216 = vshrl.u32 %v6215, 7
        %v6217 = vsub.s32 0, %v6216
        %v6218 = vrot.slane %v6213, %v6217
        %v6220 = vadd.f32 %v6181, %v6218
        %v6221 = vadd.f32 %v6182, %v6218
        %v6222 = vadd.f32 %v6183, %v6218
        %v6223 = vadd.f32 %v6184, %v6218
        %v6224 = vadd.f32 %v6185, %v6218
        %v6225 = vadd.f32 %v6186, %v6218
        %v6226 = vadd.f32 %v6187, %v6218
        %v6227 = vadd.f32 %v6188, %v6218
        %v6228 = vadd.f32 %v6189, %v6218
        %v6229 = vadd.f32 %v6190, %v6218
        %v6230 = vadd.f32 %v6191, %v6218
        %v6231 = vadd.f32 %v6192, %v6218
        %v6232 = vadd.f32 %v6193, %v6218
        %v6233 = vadd.f32 %v6194, %v6218
        %v6234 = vadd.f32 %v6195, %v6218
        %v6235 = vadd.f32 %v6196, %v6218
        %v6236 = vadd.f32 %v6197, %v6218
        %v6237 = vadd.f32 %v6198, %v6218
        %v6238 = vadd.f32 %v6199, %v6218
        %v6239 = vadd.f32 %v6200, %v6218
        %v6240 = vadd.f32 %v6201, %v6218
        %v6241 = vadd.f32 %v6202, %v6218
        %v6242 = vadd.f32 %v6203, %v6218
        %v6243 = vadd.f32 %v6204, %v6218
        %v6244 = vadd.f32 %v6205, %v6218
        %v6245 = vadd.f32 %v6206, %v6218
        %v6246 = vadd.f32 %v6207, %v6218
        %v6247 = vadd.f32 %v6208, %v6218
        %v6248 = vadd.f32 %v6209, %v6218
        %v6249 = vadd.f32 %v6210, %v6218
        %v6250 = vadd.f32 %v6211, %v6218
        %v6251 = vadd.f32 %v6212, %v6218
        %v6252 = vld [vmem:[%s7] sm:$0xff]
        %v6253 = vld [vmem:[%s7 + $0x8] sm:$0xff]
        %v6254 = vld [vmem:[%s7 + $0x10] sm:$0xff]
        %v6255 = vld [vmem:[%s7 + $0x18] sm:$0xff]
        %6256 = vmatprep.subr.mxu0 0.0
        %6257 = vmatpush1.msra.mxu0 0.0
        %6258 = vmatprep.subr.mxu0 0.0
        %6259 = vmatpush1.msra.mxu0 0.0
        %6260 = vmatprep.subr.mxu0 0.0
        %6261 = vmatpush1.msra.mxu0 0.0
        %6262 = vmatprep.subr.mxu0 0.0
        %6263 = vmatpush1.msra.mxu0 0.0
        %6264 = vmatprep.subr.mxu0 0.0
        %6265 = vmatpush1.msra.mxu0 0.0
        %6266 = vmatprep.subr.mxu0 0.0
        %6267 = vmatpush1.msra.mxu0 0.0
        %6268 = vmatprep.subr.mxu0 0.0
        %6269 = vmatpush1.msra.mxu0 0.0
        %6270 = vmatprep.subr.mxu0 0.0
        %6271 = vmatpush1.msra.mxu0 0.0
        %6272 = vmatprep.subr.mxu0 0.0
        %6273 = vmatpush1.msra.mxu0 0.0
        %6274 = vmatprep.subr.mxu0 0.0
        %6275 = vmatpush1.msra.mxu0 0.0
        %6276 = vmatprep.subr.mxu0 0.0
        %6277 = vmatpush1.msra.mxu0 0.0
        %6278 = vmatprep.subr.mxu0 0.0
        %6279 = vmatpush1.msra.mxu0 0.0
        %6280 = vmatprep.subr.mxu0 0.0
        %6281 = vmatpush1.msra.mxu0 %v6255
        %6282 = vmatprep.subr.mxu0 0.0
        %6283 = vmatpush1.msra.mxu0 %v6254
        %6284 = vmatprep.subr.mxu0 0.0
        %6285 = vmatpush1.msra.mxu0 %v6253
        %6286 = vmatprep.subr.mxu0 0.0
        %6287 = vmatpush1.msra.mxu0 %v6252
        %6288 = vmatprep.subr.mxu0 0.0
        %6289 = vmatpush2.msra.mxu0 0.0
        %6290 = vmatprep.subr.mxu0 0.0
        %6291 = vmatpush2.msra.mxu0 0.0
        %6292 = vmatprep.subr.mxu0 0.0
        %6293 = vmatpush2.msra.mxu0 0.0
        %6294 = vmatprep.subr.mxu0 0.0
        %6295 = vmatpush2.msra.mxu0 0.0
        %6296 = vmatprep.subr.mxu0 0.0
        %6297 = vmatpush2.msra.mxu0 0.0
        %6298 = vmatprep.subr.mxu0 0.0
        %6299 = vmatpush2.msra.mxu0 0.0
        %6300 = vmatprep.subr.mxu0 0.0
        %6301 = vmatpush2.msra.mxu0 0.0
        %6302 = vmatprep.subr.mxu0 0.0
        %6303 = vmatpush2.msra.mxu0 0.0
        %6304 = vmatprep.subr.mxu0 0.0
        %6305 = vmatpush2.msra.mxu0 0.0
        %6306 = vmatprep.subr.mxu0 0.0
        %6307 = vmatpush2.msra.mxu0 0.0
        %6308 = vmatprep.subr.mxu0 0.0
        %6309 = vmatpush2.msra.mxu0 0.0
        %6310 = vmatprep.subr.mxu0 0.0
        %6311 = vmatpush2.msra.mxu0 0.0
        %6312 = vmatprep.subr.mxu0 0.0
        %6313 = vmatpush2.msra.mxu0 0.0
        %6314 = vmatprep.subr.mxu0 0.0
        %6315 = vmatpush2.msra.mxu0 0.0
        %6316 = vmatprep.subr.mxu0 0.0
        %6317 = vmatpush2.msra.mxu0 0.0
        %6318 = vmatprep.subr.mxu0 0.0
        %6319 = vmatpush2.msra.mxu0 0.0
        %6320 = vmatprep.mubr.f32.mxu0 0.0
        %6321 = vmatmul.mubr.f32.gmra.mxu0 %v582
        %v6322 = vpop.f32.mrf.mxu0
        %v6323 = vadd.f32 0.0, %v6322
        %v6324 = vpop.f32.mrf.mxu0
        %6325 = vmatprep.mubr.f32.mxu0 0.0
        %6326 = vmatmul.mubr.f32.gmra.mxu0 %v584
        %v6327 = vpop.f32.mrf.mxu0
        %v6328 = vadd.f32 0.0, %v6327
        %v6329 = vpop.f32.mrf.mxu0
        %6330 = vmatprep.mubr.f32.mxu0 0.0
        %6331 = vmatmul.mubr.f32.gmra.mxu0 %v586
        %v6332 = vpop.f32.mrf.mxu0
        %v6333 = vadd.f32 0.0, %v6332
        %v6334 = vpop.f32.mrf.mxu0
        %6335 = vmatprep.mubr.f32.mxu0 0.0
        %6336 = vmatmul.mubr.f32.gmra.mxu0 %v588
        %v6337 = vpop.f32.mrf.mxu0
        %v6338 = vadd.f32 0.0, %v6337
        %v6339 = vpop.f32.mrf.mxu0
        %6340 = vmatprep.mubr.f32.mxu0 0.0
        %6341 = vmatmul.mubr.f32.gmra.mxu0 %v590
        %v6342 = vpop.f32.mrf.mxu0
        %v6343 = vadd.f32 0.0, %v6342
        %v6344 = vpop.f32.mrf.mxu0
        %6345 = vmatprep.mubr.f32.mxu0 0.0
        %6346 = vmatmul.mubr.f32.gmra.mxu0 %v592
        %v6347 = vpop.f32.mrf.mxu0
        %v6348 = vadd.f32 0.0, %v6347
        %v6349 = vpop.f32.mrf.mxu0
        %6350 = vmatprep.mubr.f32.mxu0 0.0
        %6351 = vmatmul.mubr.f32.gmra.mxu0 %v594
        %v6352 = vpop.f32.mrf.mxu0
        %v6353 = vadd.f32 0.0, %v6352
        %v6354 = vpop.f32.mrf.mxu0
        %6355 = vmatprep.mubr.f32.mxu0 0.0
        %6356 = vmatmul.mubr.f32.gmra.mxu0 %v596
        %v6357 = vpop.f32.mrf.mxu0
        %v6358 = vadd.f32 0.0, %v6357
        %v6359 = vpop.f32.mrf.mxu0
        %6360 = vmatprep.mubr.f32.mxu0 0.0
        %6361 = vmatmul.mubr.f32.gmra.mxu0 %v598
        %v6362 = vpop.f32.mrf.mxu0
        %v6363 = vadd.f32 0.0, %v6362
        %v6364 = vpop.f32.mrf.mxu0
        %6365 = vmatprep.mubr.f32.mxu0 0.0
        %6366 = vmatmul.mubr.f32.gmra.mxu0 %v600
        %v6367 = vpop.f32.mrf.mxu0
        %v6368 = vadd.f32 0.0, %v6367
        %v6369 = vpop.f32.mrf.mxu0
        %6370 = vmatprep.mubr.f32.mxu0 0.0
        %6371 = vmatmul.mubr.f32.gmra.mxu0 %v602
        %v6372 = vpop.f32.mrf.mxu0
        %v6373 = vadd.f32 0.0, %v6372
        %v6374 = vpop.f32.mrf.mxu0
        %6375 = vmatprep.mubr.f32.mxu0 0.0
        %6376 = vmatmul.mubr.f32.gmra.mxu0 %v604
        %v6377 = vpop.f32.mrf.mxu0
        %v6378 = vadd.f32 0.0, %v6377
        %v6379 = vpop.f32.mrf.mxu0
        %6380 = vmatprep.mubr.f32.mxu0 0.0
        %6381 = vmatmul.mubr.f32.gmra.mxu0 %v606
        %v6382 = vpop.f32.mrf.mxu0
        %v6383 = vadd.f32 0.0, %v6382
        %v6384 = vpop.f32.mrf.mxu0
        %6385 = vmatprep.mubr.f32.mxu0 0.0
        %6386 = vmatmul.mubr.f32.gmra.mxu0 %v608
        %v6387 = vpop.f32.mrf.mxu0
        %v6388 = vadd.f32 0.0, %v6387
        %v6389 = vpop.f32.mrf.mxu0
        %6390 = vmatprep.mubr.f32.mxu0 0.0
        %6391 = vmatmul.mubr.f32.gmra.mxu0 %v610
        %v6392 = vpop.f32.mrf.mxu0
        %v6393 = vadd.f32 0.0, %v6392
        %v6394 = vpop.f32.mrf.mxu0
        %6395 = vmatprep.mubr.f32.mxu0 0.0
        %6396 = vmatmul.mubr.f32.gmra.mxu0 %v612
        %v6397 = vpop.f32.mrf.mxu0
        %v6398 = vadd.f32 0.0, %v6397
        %v6399 = vpop.f32.mrf.mxu0
        %6400 = vmatprep.mubr.f32.mxu0 0.0
        %6401 = vmatmul.mubr.f32.gmra.mxu0 %v614
        %v6402 = vpop.f32.mrf.mxu0
        %v6403 = vadd.f32 0.0, %v6402
        %v6404 = vpop.f32.mrf.mxu0
        %6405 = vmatprep.mubr.f32.mxu0 0.0
        %6406 = vmatmul.mubr.f32.gmra.mxu0 %v616
        %v6407 = vpop.f32.mrf.mxu0
        %v6408 = vadd.f32 0.0, %v6407
        %v6409 = vpop.f32.mrf.mxu0
        %6410 = vmatprep.mubr.f32.mxu0 0.0
        %6411 = vmatmul.mubr.f32.gmra.mxu0 %v618
        %v6412 = vpop.f32.mrf.mxu0
        %v6413 = vadd.f32 0.0, %v6412
        %v6414 = vpop.f32.mrf.mxu0
        %6415 = vmatprep.mubr.f32.mxu0 0.0
        %6416 = vmatmul.mubr.f32.gmra.mxu0 %v620
        %v6417 = vpop.f32.mrf.mxu0
        %v6418 = vadd.f32 0.0, %v6417
        %v6419 = vpop.f32.mrf.mxu0
        %6420 = vmatprep.mubr.f32.mxu0 0.0
        %6421 = vmatmul.mubr.f32.gmra.mxu0 %v622
        %v6422 = vpop.f32.mrf.mxu0
        %v6423 = vadd.f32 0.0, %v6422
        %v6424 = vpop.f32.mrf.mxu0
        %6425 = vmatprep.mubr.f32.mxu0 0.0
        %6426 = vmatmul.mubr.f32.gmra.mxu0 %v624
        %v6427 = vpop.f32.mrf.mxu0
        %v6428 = vadd.f32 0.0, %v6427
        %v6429 = vpop.f32.mrf.mxu0
        %6430 = vmatprep.mubr.f32.mxu0 0.0
        %6431 = vmatmul.mubr.f32.gmra.mxu0 %v626
        %v6432 = vpop.f32.mrf.mxu0
        %v6433 = vadd.f32 0.0, %v6432
        %v6434 = vpop.f32.mrf.mxu0
        %6435 = vmatprep.mubr.f32.mxu0 0.0
        %6436 = vmatmul.mubr.f32.gmra.mxu0 %v628
        %v6437 = vpop.f32.mrf.mxu0
        %v6438 = vadd.f32 0.0, %v6437
        %v6439 = vpop.f32.mrf.mxu0
        %6440 = vmatprep.mubr.f32.mxu0 0.0
        %6441 = vmatmul.mubr.f32.gmra.mxu0 %v630
        %v6442 = vpop.f32.mrf.mxu0
        %v6443 = vadd.f32 0.0, %v6442
        %v6444 = vpop.f32.mrf.mxu0
        %6445 = vmatprep.mubr.f32.mxu0 0.0
        %6446 = vmatmul.mubr.f32.gmra.mxu0 %v632
        %v6447 = vpop.f32.mrf.mxu0
        %v6448 = vadd.f32 0.0, %v6447
        %v6449 = vpop.f32.mrf.mxu0
        %6450 = vmatprep.mubr.f32.mxu0 0.0
        %6451 = vmatmul.mubr.f32.gmra.mxu0 %v634
        %v6452 = vpop.f32.mrf.mxu0
        %v6453 = vadd.f32 0.0, %v6452
        %v6454 = vpop.f32.mrf.mxu0
        %6455 = vmatprep.mubr.f32.mxu0 0.0
        %6456 = vmatmul.mubr.f32.gmra.mxu0 %v636
        %v6457 = vpop.f32.mrf.mxu0
        %v6458 = vadd.f32 0.0, %v6457
        %v6459 = vpop.f32.mrf.mxu0
        %6460 = vmatprep.mubr.f32.mxu0 0.0
        %6461 = vmatmul.mubr.f32.gmra.mxu0 %v638
        %v6462 = vpop.f32.mrf.mxu0
        %v6463 = vadd.f32 0.0, %v6462
        %v6464 = vpop.f32.mrf.mxu0
        %6465 = vmatprep.mubr.f32.mxu0 0.0
        %6466 = vmatmul.mubr.f32.gmra.mxu0 %v640
        %v6467 = vpop.f32.mrf.mxu0
        %v6468 = vadd.f32 0.0, %v6467
        %v6469 = vpop.f32.mrf.mxu0
        %6470 = vmatprep.mubr.f32.mxu0 0.0
        %6471 = vmatmul.mubr.f32.gmra.mxu0 %v1827
        %v6472 = vpop.f32.mrf.mxu0
        %v6473 = vadd.f32 0.0, %v6472
        %v6474 = vpop.f32.mrf.mxu0
        %6475 = vmatprep.mubr.f32.mxu0 0.0
        %6476 = vmatmul.mubr.f32.gmra.mxu0 %v1829
        %v6477 = vpop.f32.mrf.mxu0
        %v6478 = vadd.f32 0.0, %v6477
        %v6479 = vpop.f32.mrf.mxu0
        %6480 = vdwg.mxu0
        %v6481 = vld [vmem:[%s8] sm:$0x1]
        %v6483 = vlaneseq
        %v6484 = vshrl.u32 %v6483, 7
        %v6485 = vsub.s32 0, %v6484
        %v6486 = vrot.slane %v6481, %v6485
        %v6488 = vmul.f32 %v6323, %v6486
        %v6489 = vmul.f32 %v6328, %v6486
        %v6490 = vmul.f32 %v6333, %v6486
        %v6491 = vmul.f32 %v6338, %v6486
        %v6492 = vmul.f32 %v6343, %v6486
        %v6493 = vmul.f32 %v6348, %v6486
        %v6494 = vmul.f32 %v6353, %v6486
        %v6495 = vmul.f32 %v6358, %v6486
        %v6496 = vmul.f32 %v6363, %v6486
        %v6497 = vmul.f32 %v6368, %v6486
        %v6498 = vmul.f32 %v6373, %v6486
        %v6499 = vmul.f32 %v6378, %v6486
        %v6500 = vmul.f32 %v6383, %v6486
        %v6501 = vmul.f32 %v6388, %v6486
        %v6502 = vmul.f32 %v6393, %v6486
        %v6503 = vmul.f32 %v6398, %v6486
        %v6504 = vmul.f32 %v6403, %v6486
        %v6505 = vmul.f32 %v6408, %v6486
        %v6506 = vmul.f32 %v6413, %v6486
        %v6507 = vmul.f32 %v6418, %v6486
        %v6508 = vmul.f32 %v6423, %v6486
        %v6509 = vmul.f32 %v6428, %v6486
        %v6510 = vmul.f32 %v6433, %v6486
        %v6511 = vmul.f32 %v6438, %v6486
        %v6512 = vmul.f32 %v6443, %v6486
        %v6513 = vmul.f32 %v6448, %v6486
        %v6514 = vmul.f32 %v6453, %v6486
        %v6515 = vmul.f32 %v6458, %v6486
        %v6516 = vmul.f32 %v6463, %v6486
        %v6517 = vmul.f32 %v6468, %v6486
        %v6518 = vmul.f32 %v6473, %v6486
        %v6519 = vmul.f32 %v6478, %v6486
        %v6520 = vld [vmem:[%s9] sm:$0x1]
        %v6522 = vlaneseq
        %v6523 = vshrl.u32 %v6522, 7
        %v6524 = vsub.s32 0, %v6523
        %v6525 = vrot.slane %v6520, %v6524
        %v6527 = vadd.f32 %v6488, %v6525
        %v6528 = vadd.f32 %v6489, %v6525
        %v6529 = vadd.f32 %v6490, %v6525
        %v6530 = vadd.f32 %v6491, %v6525
        %v6531 = vadd.f32 %v6492, %v6525
        %v6532 = vadd.f32 %v6493, %v6525
        %v6533 = vadd.f32 %v6494, %v6525
        %v6534 = vadd.f32 %v6495, %v6525
        %v6535 = vadd.f32 %v6496, %v6525
        %v6536 = vadd.f32 %v6497, %v6525
        %v6537 = vadd.f32 %v6498, %v6525
        %v6538 = vadd.f32 %v6499, %v6525
        %v6539 = vadd.f32 %v6500, %v6525
        %v6540 = vadd.f32 %v6501, %v6525
        %v6541 = vadd.f32 %v6502, %v6525
        %v6542 = vadd.f32 %v6503, %v6525
        %v6543 = vadd.f32 %v6504, %v6525
        %v6544 = vadd.f32 %v6505, %v6525
        %v6545 = vadd.f32 %v6506, %v6525
        %v6546 = vadd.f32 %v6507, %v6525
        %v6547 = vadd.f32 %v6508, %v6525
        %v6548 = vadd.f32 %v6509, %v6525
        %v6549 = vadd.f32 %v6510, %v6525
        %v6550 = vadd.f32 %v6511, %v6525
        %v6551 = vadd.f32 %v6512, %v6525
        %v6552 = vadd.f32 %v6513, %v6525
        %v6553 = vadd.f32 %v6514, %v6525
        %v6554 = vadd.f32 %v6515, %v6525
        %v6555 = vadd.f32 %v6516, %v6525
        %v6556 = vadd.f32 %v6517, %v6525
        %v6557 = vadd.f32 %v6518, %v6525
        %v6558 = vadd.f32 %v6519, %v6525
        %v6559 = vadd.f32 %v6220, %v6527
        %v6560 = vadd.f32 %v6221, %v6528
        %v6561 = vadd.f32 %v6222, %v6529
        %v6562 = vadd.f32 %v6223, %v6530
        %v6563 = vadd.f32 %v6224, %v6531
        %v6564 = vadd.f32 %v6225, %v6532
        %v6565 = vadd.f32 %v6226, %v6533
        %v6566 = vadd.f32 %v6227, %v6534
        %v6567 = vadd.f32 %v6228, %v6535
        %v6568 = vadd.f32 %v6229, %v6536
        %v6569 = vadd.f32 %v6230, %v6537
        %v6570 = vadd.f32 %v6231, %v6538
        %v6571 = vadd.f32 %v6232, %v6539
        %v6572 = vadd.f32 %v6233, %v6540
        %v6573 = vadd.f32 %v6234, %v6541
        %v6574 = vadd.f32 %v6235, %v6542
        %v6575 = vadd.f32 %v6236, %v6543
        %v6576 = vadd.f32 %v6237, %v6544
        %v6577 = vadd.f32 %v6238, %v6545
        %v6578 = vadd.f32 %v6239, %v6546
        %v6579 = vadd.f32 %v6240, %v6547
        %v6580 = vadd.f32 %v6241, %v6548
        %v6581 = vadd.f32 %v6242, %v6549
        %v6582 = vadd.f32 %v6243, %v6550
        %v6583 = vadd.f32 %v6244, %v6551
        %v6584 = vadd.f32 %v6245, %v6552
        %v6585 = vadd.f32 %v6246, %v6553
        %v6586 = vadd.f32 %v6247, %v6554
        %v6587 = vadd.f32 %v6248, %v6555
        %v6588 = vadd.f32 %v6249, %v6556
        %v6589 = vadd.f32 %v6250, %v6557
        %v6590 = vadd.f32 %v6251, %v6558
        %v6591 = vmax.f32 %v6559, 0.0
        %v6592 = vmax.f32 %v6560, 0.0
        %v6593 = vmax.f32 %v6561, 0.0
        %v6594 = vmax.f32 %v6562, 0.0
        %v6595 = vmax.f32 %v6563, 0.0
        %v6596 = vmax.f32 %v6564, 0.0
        %v6597 = vmax.f32 %v6565, 0.0
        %v6598 = vmax.f32 %v6566, 0.0
        %v6599 = vmax.f32 %v6567, 0.0
        %v6600 = vmax.f32 %v6568, 0.0
        %v6601 = vmax.f32 %v6569, 0.0
        %v6602 = vmax.f32 %v6570, 0.0
        %v6603 = vmax.f32 %v6571, 0.0
        %v6604 = vmax.f32 %v6572, 0.0
        %v6605 = vmax.f32 %v6573, 0.0
        %v6606 = vmax.f32 %v6574, 0.0
        %v6607 = vmax.f32 %v6575, 0.0
        %v6608 = vmax.f32 %v6576, 0.0
        %v6609 = vmax.f32 %v6577, 0.0
        %v6610 = vmax.f32 %v6578, 0.0
        %v6611 = vmax.f32 %v6579, 0.0
        %v6612 = vmax.f32 %v6580, 0.0
        %v6613 = vmax.f32 %v6581, 0.0
        %v6614 = vmax.f32 %v6582, 0.0
        %v6615 = vmax.f32 %v6583, 0.0
        %v6616 = vmax.f32 %v6584, 0.0
        %v6617 = vmax.f32 %v6585, 0.0
        %v6618 = vmax.f32 %v6586, 0.0
        %v6619 = vmax.f32 %v6587, 0.0
        %v6620 = vmax.f32 %v6588, 0.0
        %v6621 = vmax.f32 %v6589, 0.0
        %v6622 = vmax.f32 %v6590, 0.0
        %6623 = vst.msk [vmem:[%s352] sm:$0xff] %vm3260, %v6591
        %6624 = vst.msk [vmem:[%s352 + $0x8] sm:$0xff] %vm3260, %v6592
        %6625 = vst.msk [vmem:[%s352 + $0x10] sm:$0xff] %vm3260, %v6593
        %6626 = vst.msk [vmem:[%s352 + $0x18] sm:$0xff] %vm3260, %v6594
        %6627 = vst.msk [vmem:[%s352 + $0x20] sm:$0xff] %vm3260, %v6595
        %6628 = vst.msk [vmem:[%s352 + $0x28] sm:$0xff] %vm3260, %v6596
        %6629 = vst.msk [vmem:[%s352 + $0x30] sm:$0xff] %vm3260, %v6597
        %6630 = vst.msk [vmem:[%s352 + $0x38] sm:$0xff] %vm3260, %v6598
        %6631 = vst.msk [vmem:[%s352 + $0x40] sm:$0xff] %vm3260, %v6599
        %6632 = vst.msk [vmem:[%s352 + $0x48] sm:$0xff] %vm3260, %v6600
        %6633 = vst.msk [vmem:[%s352 + $0x50] sm:$0xff] %vm3260, %v6601
        %6634 = vst.msk [vmem:[%s352 + $0x58] sm:$0xff] %vm3260, %v6602
        %6635 = vst.msk [vmem:[%s352 + $0x60] sm:$0xff] %vm3260, %v6603
        %6636 = vst.msk [vmem:[%s352 + $0x68] sm:$0xff] %vm3260, %v6604
        %6637 = vst.msk [vmem:[%s352 + $0x70] sm:$0xff] %vm3260, %v6605
        %6638 = vst.msk [vmem:[%s352 + $0x78] sm:$0xff] %vm3260, %v6606
        %6639 = vst.msk [vmem:[%s352 + $0x80] sm:$0xff] %vm3260, %v6607
        %6640 = vst.msk [vmem:[%s352 + $0x88] sm:$0xff] %vm3260, %v6608
        %6641 = vst.msk [vmem:[%s352 + $0x90] sm:$0xff] %vm3260, %v6609
        %6642 = vst.msk [vmem:[%s352 + $0x98] sm:$0xff] %vm3260, %v6610
        %6643 = vst.msk [vmem:[%s352 + $0xa0] sm:$0xff] %vm3260, %v6611
        %6644 = vst.msk [vmem:[%s352 + $0xa8] sm:$0xff] %vm3260, %v6612
        %6645 = vst.msk [vmem:[%s352 + $0xb0] sm:$0xff] %vm3260, %v6613
        %6646 = vst.msk [vmem:[%s352 + $0xb8] sm:$0xff] %vm3260, %v6614
        %6647 = vst.msk [vmem:[%s352 + $0xc0] sm:$0xff] %vm3260, %v6615
        %6648 = vst.msk [vmem:[%s352 + $0xc8] sm:$0xff] %vm3260, %v6616
        %6649 = vst.msk [vmem:[%s352 + $0xd0] sm:$0xff] %vm3260, %v6617
        %6650 = vst.msk [vmem:[%s352 + $0xd8] sm:$0xff] %vm3260, %v6618
        %6651 = vst.msk [vmem:[%s352 + $0xe0] sm:$0xff] %vm3260, %v6619
        %6652 = vst.msk [vmem:[%s352 + $0xe8] sm:$0xff] %vm3260, %v6620
        %6653 = vst.msk [vmem:[%s352 + $0xf0] sm:$0xff] %vm3260, %v6621
        %6654 = vst.msk [vmem:[%s352 + $0xf8] sm:$0xff] %vm3260, %v6622
        %s6655 = sand.u32 %s247, 1
        %s6656 = scalar_lea.sflag [#allocation4], %s6655
        %s6657 = sand.u32 %s247, 1
        %s6658 = smul.addr %s6657, 256
        %s6659 = scalar_lea.vmem [#allocation3], %s6658
        // Predicated region
        $region61: #{tpu_custom_call.1} parent=59 // pred_check
          %p6660 = pneg %p257
        $region62: #{tpu_custom_call.1} parent=59 // pred_check_branch
          %6662 = sbr.rel (%p6660) target = $region64
        $region63: #{tpu_custom_call.1} parent=59 // pred_region
          %s6664 = ssub.s32 4096, 4096
          %6665 = vsyncadd %s6656, %s6664
          %s6666 = smul.addr %s24, 32
          %s6667 = smul.addr %s6666, 128
          %s6668 = scalar_lea.hbm %s10, %s6667
          %s6669 = sshll.u32 %s6659, 4
          %s6670 = int_to_ptr.vmem [resolvable:$true] %s6669
          %6675 = dma.vmem_to_hbm [thread:$0]  %s6670, 4096, %s6668, %s6656, 128, 128, 8
        $region64: #{tpu_custom_call.1} parent=59 // pred_fallthru
          _
      $region60: #{tpu_custom_call.1} parent=5 // pred_fallthru
        _
      %p6676 = scmp.le.s32.totalorder 2, %s19
      // Predicated region
      $region65: #{tpu_custom_call.1} parent=5 // pred_check
        %p6677 = pneg %p6676
      $region66: #{tpu_custom_call.1} parent=5 // pred_check_branch
        %6679 = sbr.rel (%p6677) target = $region68
      $region67: #{tpu_custom_call.1} parent=5 // pred_region
        %s6680 = ssub.s32 %s19, 2
        // Predicated region
        $region69: #{tpu_custom_call.1} parent=67 // pred_check
          %p6681 = pneg %p263
        $region70: #{tpu_custom_call.1} parent=67 // pred_check_branch
          %6683 = sbr.rel (%p6681) target = $region72
        $region71: #{tpu_custom_call.1} parent=67 // pred_region
          %s6684 = sand.u32 %s248, 1
          %s6685 = scalar_lea.sflag [#allocation4], %s6684
          %s6686 = sand.u32 %s248, 1
          %s6687 = smul.addr %s6686, 256
          %s6688 = scalar_lea.vmem [#allocation3], %s6687
          %6689 = dma.done %s6685, 4096
        $region72: #{tpu_custom_call.1} parent=67 // pred_fallthru
          _
      $region68: #{tpu_custom_call.1} parent=5 // pred_fallthru
        _
    $region6: #{tpu_custom_call.1} parent=1 // loop_footer
      %s23 = sadd.s32 1, %s19
    $region7: #{tpu_custom_call.1} parent=1 // loop_footer_branch
      %18 = sbr.rel target = $region3
    $region8: #{tpu_custom_call.1} parent=1 // loop_exit
      _
    %6690 = vsyncpa [#allocation4], 1
    %s6691 = scalar_lea.sflag [#allocation4], 1
    %6692 = vsyncpa %s6691, 1

</llo_original>
